<compile_context>
chip_gen: v6e
topology: v6e:2x2x1
jax: 0.10.0
libtpu: 0.0.40
codegen_flags: <defaults>
</compile_context>

<pallas_src>
import functools

import jax
import jax.numpy as jnp
from jax.experimental import pallas as pl
from jax.experimental.pallas import tpu as pltpu


# ----------------------------- fused Pallas kernel ---------------------------

def _decoder_kernel(
    tgt_ref, mem_ref,
    wqkv_s_ref, bqkv_s_ref, wo_s_ref, bo_s_ref,
    wq_c_ref, bq_c_ref, wkv_c_ref, bkv_c_ref, wo_c_ref, bo_c_ref,
    w1_ref, b1_ref, w2_ref, b2_ref,
    g1_ref, be1_ref, g2_ref, be2_ref, g3_ref, be3_ref,
    o_ref,
    *, num_layers, num_heads, batch_block, eps, matmul_dtype,
):
    """Full decoder stack for `batch_block` batch elements (grid axis = batch blocks)."""
    f32 = jnp.float32
    md = matmul_dtype
    Bq = batch_block
    rows_t, E = tgt_ref.shape
    rows_m = mem_ref.shape[0]
    T = rows_t // Bq
    S = rows_m // Bq
    hd = E // num_heads

    x = tgt_ref[...]                      # (Bq*T, E) f32 activations
    mem = mem_ref[...]                    # (Bq*S, E) matmul dtype

    # Weights (already fused + cast in the wrapper); loaded once, reused by every
    # layer (layers share parameters: deepcopy init in the reference module).
    wqkv_s = wqkv_s_ref[...]; wo_s_w = wo_s_ref[...]
    wq_c = wq_c_ref[...];     wkv_c = wkv_c_ref[...]; wo_c_w = wo_c_ref[...]
    w1 = w1_ref[...];         w2 = w2_ref[...]
    F = w1.shape[1]

    # Hoist all loop-invariant broadcasts (JAX does not CSE broadcast_in_dim).
    bqkv_s = jnp.broadcast_to(bqkv_s_ref[...], (rows_t, 3 * E))
    bo_s   = jnp.broadcast_to(bo_s_ref[...],   (rows_t, E))
    bq_c   = jnp.broadcast_to(bq_c_ref[...],   (rows_t, E))
    bo_c   = jnp.broadcast_to(bo_c_ref[...],   (rows_t, E))
    b1     = jnp.broadcast_to(b1_ref[...],     (rows_t, F))
    b2     = jnp.broadcast_to(b2_ref[...],     (rows_t, E))
    g1  = jnp.broadcast_to(g1_ref[...],  (rows_t, E)); be1 = jnp.broadcast_to(be1_ref[...], (rows_t, E))
    g2  = jnp.broadcast_to(g2_ref[...],  (rows_t, E)); be2 = jnp.broadcast_to(be2_ref[...], (rows_t, E))
    g3  = jnp.broadcast_to(g3_ref[...],  (rows_t, E)); be3 = jnp.broadcast_to(be3_ref[...], (rows_t, E))
    bkv_c  = jnp.broadcast_to(bkv_c_ref[...],  (rows_m, 2 * E))

    def mha(q2, k3, v3, wo, bo_b):
        # q2: (Bq*T, E) f32 query projection (softmax scale already folded into Wq/bq).
        # k3, v3: (Bq, S_kv, E) matmul-dtype keys / values.
        q3 = q2.reshape(Bq, T, E).astype(md)
        heads = []
        for h in range(num_heads):
            lo = h * hd
            qh = q3[:, :, lo:lo + hd]
            kh = k3[:, :, lo:lo + hd]
            vh = v3[:, :, lo:lo + hd]
            # batched over the Bq batch elements in this block
            s = jnp.einsum("btd,bsd->bts", qh, kh, preferred_element_type=f32)
            s = s - jnp.max(s, axis=-1, keepdims=True)
            p = jnp.exp(s)
            denom = jnp.sum(p, axis=-1, keepdims=True)
            r = pl.reciprocal(denom, approx=True)     # EUP slot (free beside VPU work)
            r = r * (2.0 - denom * r)                 # one Newton step -> near-exact
            p = (p * r).astype(md)
            heads.append(jnp.einsum("bts,bsd->btd", p, vh, preferred_element_type=f32))
        # concat(heads) -> ONE (rows,E)@(E,E) output projection (not H tiny K=hd dots).
        o = jnp.concatenate(heads, axis=-1).reshape(rows_t, E).astype(md)
        return jnp.dot(o, wo, preferred_element_type=f32) + bo_b

    def add_ln(a, b, g, beta):
        z = a + b
        mu = jnp.mean(z, axis=-1, keepdims=True)
        zc = z - mu
        var = jnp.mean(zc * zc, axis=-1, keepdims=True)
        return zc * jax.lax.rsqrt(var + eps) * g + beta

    # Cross-attention K/V depend only on `memory` and the shared weights -> computed
    # once over the whole Bq*S slab and reused by every layer.
    kv_c = jnp.dot(mem, wkv_c, preferred_element_type=f32) + bkv_c
    kv_c3 = kv_c.reshape(Bq, S, 2 * E).astype(md)
    k_c3 = kv_c3[:, :, :E]
    v_c3 = kv_c3[:, :, E:]

    def layer(x):
        # ---- self-attention + add & norm (fused QKV over the whole row slab) ----
        qkv = jnp.dot(x.astype(md), wqkv_s, preferred_element_type=f32) + bqkv_s
        kv3 = qkv[:, E:].reshape(Bq, T, 2 * E).astype(md)
        sa = mha(qkv[:, :E], kv3[:, :, :E], kv3[:, :, E:], wo_s_w, bo_s)
        x = add_ln(x, sa, g1, be1)
        # ---- cross-attention + add & norm ----
        q = jnp.dot(x.astype(md), wq_c, preferred_element_type=f32) + bq_c
        ca = mha(q, k_c3, v_c3, wo_c_w, bo_c)
        x = add_ln(x, ca, g2, be2)
        # ---- feed-forward (ReLU) + add & norm ----
        h = jnp.maximum(jnp.dot(x.astype(md), w1, preferred_element_type=f32) + b1, 0.0)
        ff = jnp.dot(h.astype(md), w2, preferred_element_type=f32) + b2
        return add_ln(x, ff, g3, be3)

    if num_layers <= 4:
        for _ in range(num_layers):       # shallow: unrolled, fully visible to the scheduler
            x = layer(x)
    else:                                 # deep: shared weights -> loop-invariant body
        x = jax.lax.fori_loop(0, num_layers, lambda i, xx: layer(xx), x)

    o_ref[...] = x.astype(o_ref.dtype)


# ------------------------------- wrapper --------------------------------------

def _pick_batch_block(batch, tgt_len):
    """Pack rows toward the MXU's 128-256-row sweet spot while keeping >=2 grid steps
    when possible (so both v7x TensorCores get work)."""
    cap = max(1, 256 // max(tgt_len, 1))
    divisors = [d for d in range(1, batch + 1) if batch % d == 0 and d <= cap]
    multi_step = [d for d in divisors if batch // d >= 2]
    pool = multi_step if multi_step else divisors
    return max(pool) if pool else 1


def prepare_decoder_params(params, num_heads, matmul_dtype=jnp.bfloat16):
    """One-time weight fusion: QKV/KV concat, softmax-scale fold into the Q projection,
    bias reshape, matmul-dtype cast.  Call once at setup, not per forward."""
    p = params
    sa, ca = p["self_attn"], p["cross_attn"]
    E = sa["wq"].shape[0]
    hd = E // num_heads
    scale = float(hd) ** -0.5
    f32 = jnp.float32
    md = matmul_dtype

    wqkv_s = jnp.concatenate([sa["wq"] * scale, sa["wk"], sa["wv"]], axis=1).astype(md)   # (E, 3E)
    bqkv_s = jnp.concatenate([sa["bq"] * scale, sa["bk"], sa["bv"]]).reshape(1, 3 * E).astype(f32)
    wo_s, bo_s = sa["wo"].astype(md), sa["bo"].reshape(1, E).astype(f32)

    wq_c = (ca["wq"] * scale).astype(md)
    bq_c = (ca["bq"] * scale).reshape(1, E).astype(f32)
    wkv_c = jnp.concatenate([ca["wk"], ca["wv"]], axis=1).astype(md)                       # (E, 2E)
    bkv_c = jnp.concatenate([ca["bk"], ca["bv"]]).reshape(1, 2 * E).astype(f32)
    wo_c, bo_c = ca["wo"].astype(md), ca["bo"].reshape(1, E).astype(f32)

    F = p["w1"].shape[1]
    return (
        wqkv_s, bqkv_s, wo_s, bo_s,
        wq_c, bq_c, wkv_c, bkv_c, wo_c, bo_c,
        p["w1"].astype(md), p["b1"].reshape(1, F).astype(f32),
        p["w2"].astype(md), p["b2"].reshape(1, E).astype(f32),
        p["norm1_g"].reshape(1, E).astype(f32), p["norm1_b"].reshape(1, E).astype(f32),
        p["norm2_g"].reshape(1, E).astype(f32), p["norm2_b"].reshape(1, E).astype(f32),
        p["norm3_g"].reshape(1, E).astype(f32), p["norm3_b"].reshape(1, E).astype(f32),
    )


def transformer_decoder(tgt, memory, fused_params, num_layers, num_heads,
                        *, batch_block=None, eps=1e-5, matmul_dtype=jnp.bfloat16):
    """tgt: (B, T, E), memory: (B, S, E) -> (B, T, E).  norm=None (reference default)."""
    B, T, E = tgt.shape
    S = memory.shape[1]
    b_blk = batch_block if batch_block is not None else _pick_batch_block(B, T)
    assert B % b_blk == 0, "batch_block must divide the batch size"
    grid = (B // b_blk,)

    kern = functools.partial(
        _decoder_kernel, num_layers=num_layers, num_heads=num_heads,
        batch_block=b_blk, eps=eps, matmul_dtype=matmul_dtype)

    tgt_flat = tgt.reshape(B * T, E).astype(jnp.float32)          # residual path stays f32
    mem_flat = memory.reshape(B * S, E).astype(matmul_dtype)      # only feeds the K/V matmul

    def build_and_run(single_buffer_weights):
        def weight_spec(arr):
            # Constant block index -> weights stay resident in VMEM across the grid.
            if single_buffer_weights:
                # No double buffer for never-changing blocks (halves weight VMEM; v7x).
                return pl.BlockSpec(arr.shape, lambda b: (0, 0),
                                    pipeline_mode=pl.Buffered(1))
            return pl.BlockSpec(arr.shape, lambda b: (0, 0))

        f = pl.pallas_call(
            kern,
            out_shape=jax.ShapeDtypeStruct((B * T, E), jnp.float32),
            grid=grid,
            in_specs=[
                pl.BlockSpec((b_blk * T, E), lambda b: (b, 0)),   # tgt rows of this block
                pl.BlockSpec((b_blk * S, E), lambda b: (b, 0)),   # memory rows of this block
            ] + [weight_spec(w) for w in fused_params],
            out_specs=pl.BlockSpec((b_blk * T, E), lambda b: (b, 0)),
            compiler_params=pltpu.CompilerParams(dimension_semantics=("parallel",)),
        )
        return f(tgt_flat, mem_flat, *fused_params)

    try:
        out = build_and_run(True)
    except Exception:  # pipeline_mode=Buffered(1) unsupported -> default double-buffered specs
        out = build_and_run(False)
    return out.reshape(B, T, E)


# --------------------------- pure-JAX reference --------------------------------

def _ref_mha(q_in, kv_in, p, num_heads):
    B, T, E = q_in.shape
    S = kv_in.shape[1]
    hd = E // num_heads
    q = (q_in.reshape(B * T, E) @ p["wq"] + p["bq"]).reshape(B, T, num_heads, hd)
    k = (kv_in.reshape(B * S, E) @ p["wk"] + p["bk"]).reshape(B, S, num_heads, hd)
    v = (kv_in.reshape(B * S, E) @ p["wv"] + p["bv"]).reshape(B, S, num_heads, hd)
    s = jnp.einsum("bthd,bshd->bhts", q, k) * (float(hd) ** -0.5)
    w = jax.nn.softmax(s, axis=-1)
    o = jnp.einsum("bhts,bshd->bthd", w, v).reshape(B * T, E)
    o = o @ p["wo"] + p["bo"]
    return o.reshape(B, T, E)


def _ref_ln(z, g, b, eps=1e-5):
    m = jnp.mean(z, -1, keepdims=True)
    v = jnp.mean((z - m) ** 2, -1, keepdims=True)
    return (z - m) / jnp.sqrt(v + eps) * g + b


def _ref_decoder(tgt, memory, p, num_layers, num_heads):
    x = tgt
    for _ in range(num_layers):
        sa = _ref_mha(x, x, p["self_attn"], num_heads)
        x = _ref_ln(x + sa, p["norm1_g"], p["norm1_b"])
        ca = _ref_mha(x, memory, p["cross_attn"], num_heads)
        x = _ref_ln(x + ca, p["norm2_g"], p["norm2_b"])
        h = jnp.maximum(x @ p["w1"] + p["b1"], 0.0)
        ff = h @ p["w2"] + p["b2"]
        x = _ref_ln(x + ff, p["norm3_g"], p["norm3_b"])
    return x


# ----------------------------------- main ---------------------------------------

def init_params(key, embed_dim, feedforward_dim):
    ks = jax.random.split(key, 4)

    def attn_params(k4):
        ka, kb, kc, kd = jax.random.split(k4, 4)
        mk = lambda kk: 0.05 * jax.random.normal(kk, (embed_dim, embed_dim), jnp.float32)
        return {
            "wq": mk(ka), "bq": jnp.zeros((embed_dim,), jnp.float32),
            "wk": mk(kb), "bk": jnp.zeros((embed_dim,), jnp.float32),
            "wv": mk(kc), "bv": jnp.zeros((embed_dim,), jnp.float32),
            "wo": mk(kd), "bo": jnp.zeros((embed_dim,), jnp.float32),
        }

    return {
        "self_attn": attn_params(ks[0]),
        "cross_attn": attn_params(ks[1]),
        "w1": 0.05 * jax.random.normal(ks[2], (embed_dim, feedforward_dim), jnp.float32),
        "b1": jnp.zeros((feedforward_dim,), jnp.float32),
        "w2": 0.05 * jax.random.normal(ks[3], (feedforward_dim, embed_dim), jnp.float32),
        "b2": jnp.zeros((embed_dim,), jnp.float32),
        "norm1_g": jnp.ones((embed_dim,), jnp.float32),
        "norm1_b": jnp.zeros((embed_dim,), jnp.float32),
        "norm2_g": jnp.ones((embed_dim,), jnp.float32),
        "norm2_b": jnp.zeros((embed_dim,), jnp.float32),
        "norm3_g": jnp.ones((embed_dim,), jnp.float32),
        "norm3_b": jnp.zeros((embed_dim,), jnp.float32),
    }


if __name__ == "__main__":
    B, T, S, E = 2, 8, 8, 32
    num_heads, ffn_dim, num_layers = 4, 64, 2

    key = jax.random.PRNGKey(0)
    k_tgt, k_mem, k_par = jax.random.split(key, 3)
    tgt = jax.random.normal(k_tgt, (B, T, E), jnp.float32)
    memory = jax.random.normal(k_mem, (B, S, E), jnp.float32)
    params = init_params(k_par, E, ffn_dim)

    fused = prepare_decoder_params(params, num_heads)   # one-time weight fusion / bf16 cast
    out = transformer_decoder(tgt, memory, fused, num_layers, num_heads)
    out = jax.block_until_ready(out)

    ref = _ref_decoder(tgt, memory, params, num_layers, num_heads)
    assert out.shape == (B, T, E)
    # bf16 matmul operands (f32 accumulation) vs. the pure-f32 reference -> loosened tol.
    assert jnp.allclose(out, ref, atol=3e-2, rtol=3e-2), "mismatch vs JAX reference"

    print("KERNEL_OK")
</pallas_src>

<mosaic_0001>
module attributes {stable_mosaic.version = 11 : i64} {
  func.func @_decoder_kernel(%arg0: i32, %arg1: memref<8x32xf32, #tpu.memory_space<vmem>>, %arg2: memref<8x32xbf16, #tpu.memory_space<vmem>>, %arg3: memref<32x96xbf16, #tpu.memory_space<vmem>>, %arg4: memref<1x96xf32, #tpu.memory_space<vmem>>, %arg5: memref<32x32xbf16, #tpu.memory_space<vmem>>, %arg6: memref<1x32xf32, #tpu.memory_space<vmem>>, %arg7: memref<32x32xbf16, #tpu.memory_space<vmem>>, %arg8: memref<1x32xf32, #tpu.memory_space<vmem>>, %arg9: memref<32x64xbf16, #tpu.memory_space<vmem>>, %arg10: memref<1x64xf32, #tpu.memory_space<vmem>>, %arg11: memref<32x32xbf16, #tpu.memory_space<vmem>>, %arg12: memref<1x32xf32, #tpu.memory_space<vmem>>, %arg13: memref<32x64xbf16, #tpu.memory_space<vmem>>, %arg14: memref<1x64xf32, #tpu.memory_space<vmem>>, %arg15: memref<64x32xbf16, #tpu.memory_space<vmem>>, %arg16: memref<1x32xf32, #tpu.memory_space<vmem>>, %arg17: memref<1x32xf32, #tpu.memory_space<vmem>>, %arg18: memref<1x32xf32, #tpu.memory_space<vmem>>, %arg19: memref<1x32xf32, #tpu.memory_space<vmem>>, %arg20: memref<1x32xf32, #tpu.memory_space<vmem>>, %arg21: memref<1x32xf32, #tpu.memory_space<vmem>>, %arg22: memref<1x32xf32, #tpu.memory_space<vmem>>, %arg23: memref<8x32xf32, #tpu.memory_space<vmem>>) attributes {dimension_semantics = [#tpu.dimension_semantics<parallel>], iteration_bounds = array<i64: 2>, scalar_prefetch = 0 : i64, scratch_operands = 0 : i64, tpu.core_type = #tpu.core_type<tc>, window_params = [{transform_indices = @transform_0, window_bounds = array<i64: 8, 32>}, {transform_indices = @transform_1, window_bounds = array<i64: 8, 32>}, {pipeline_mode = #tpu.pipeline_mode<synchronous>, transform_indices = @transform_2, window_bounds = array<i64: 32, 96>}, {pipeline_mode = #tpu.pipeline_mode<synchronous>, transform_indices = @transform_3, window_bounds = array<i64: 1, 96>}, {pipeline_mode = #tpu.pipeline_mode<synchronous>, transform_indices = @transform_4, window_bounds = array<i64: 32, 32>}, {pipeline_mode = #tpu.pipeline_mode<synchronous>, transform_indices = @transform_5, window_bounds = array<i64: 1, 32>}, {pipeline_mode = #tpu.pipeline_mode<synchronous>, transform_indices = @transform_6, window_bounds = array<i64: 32, 32>}, {pipeline_mode = #tpu.pipeline_mode<synchronous>, transform_indices = @transform_7, window_bounds = array<i64: 1, 32>}, {pipeline_mode = #tpu.pipeline_mode<synchronous>, transform_indices = @transform_8, window_bounds = array<i64: 32, 64>}, {pipeline_mode = #tpu.pipeline_mode<synchronous>, transform_indices = @transform_9, window_bounds = array<i64: 1, 64>}, {pipeline_mode = #tpu.pipeline_mode<synchronous>, transform_indices = @transform_10, window_bounds = array<i64: 32, 32>}, {pipeline_mode = #tpu.pipeline_mode<synchronous>, transform_indices = @transform_11, window_bounds = array<i64: 1, 32>}, {pipeline_mode = #tpu.pipeline_mode<synchronous>, transform_indices = @transform_12, window_bounds = array<i64: 32, 64>}, {pipeline_mode = #tpu.pipeline_mode<synchronous>, transform_indices = @transform_13, window_bounds = array<i64: 1, 64>}, {pipeline_mode = #tpu.pipeline_mode<synchronous>, transform_indices = @transform_14, window_bounds = array<i64: 64, 32>}, {pipeline_mode = #tpu.pipeline_mode<synchronous>, transform_indices = @transform_15, window_bounds = array<i64: 1, 32>}, {pipeline_mode = #tpu.pipeline_mode<synchronous>, transform_indices = @transform_16, window_bounds = array<i64: 1, 32>}, {pipeline_mode = #tpu.pipeline_mode<synchronous>, transform_indices = @transform_17, window_bounds = array<i64: 1, 32>}, {pipeline_mode = #tpu.pipeline_mode<synchronous>, transform_indices = @transform_18, window_bounds = array<i64: 1, 32>}, {pipeline_mode = #tpu.pipeline_mode<synchronous>, transform_indices = @transform_19, window_bounds = array<i64: 1, 32>}, {pipeline_mode = #tpu.pipeline_mode<synchronous>, transform_indices = @transform_20, window_bounds = array<i64: 1, 32>}, {pipeline_mode = #tpu.pipeline_mode<synchronous>, transform_indices = @transform_21, window_bounds = array<i64: 1, 32>}, {transform_indices = @transform_22, window_bounds = array<i64: 8, 32>}]} {
    %c0 = arith.constant 0 : index
    %c0_0 = arith.constant 0 : index
    %0 = vector.load %arg1[%c0, %c0_0] : memref<8x32xf32, #tpu.memory_space<vmem>>, vector<8x32xf32>
    %c0_1 = arith.constant 0 : index
    %c0_2 = arith.constant 0 : index
    %1 = vector.load %arg2[%c0_1, %c0_2] : memref<8x32xbf16, #tpu.memory_space<vmem>>, vector<8x32xbf16>
    %c0_3 = arith.constant 0 : index
    %c0_4 = arith.constant 0 : index
    %2 = vector.load %arg3[%c0_3, %c0_4] : memref<32x96xbf16, #tpu.memory_space<vmem>>, vector<32x96xbf16>
    %c0_5 = arith.constant 0 : index
    %c0_6 = arith.constant 0 : index
    %3 = vector.load %arg5[%c0_5, %c0_6] : memref<32x32xbf16, #tpu.memory_space<vmem>>, vector<32x32xbf16>
    %c0_7 = arith.constant 0 : index
    %c0_8 = arith.constant 0 : index
    %4 = vector.load %arg7[%c0_7, %c0_8] : memref<32x32xbf16, #tpu.memory_space<vmem>>, vector<32x32xbf16>
    %c0_9 = arith.constant 0 : index
    %c0_10 = arith.constant 0 : index
    %5 = vector.load %arg9[%c0_9, %c0_10] : memref<32x64xbf16, #tpu.memory_space<vmem>>, vector<32x64xbf16>
    %c0_11 = arith.constant 0 : index
    %c0_12 = arith.constant 0 : index
    %6 = vector.load %arg11[%c0_11, %c0_12] : memref<32x32xbf16, #tpu.memory_space<vmem>>, vector<32x32xbf16>
    %c0_13 = arith.constant 0 : index
    %c0_14 = arith.constant 0 : index
    %7 = vector.load %arg13[%c0_13, %c0_14] : memref<32x64xbf16, #tpu.memory_space<vmem>>, vector<32x64xbf16>
    %c0_15 = arith.constant 0 : index
    %c0_16 = arith.constant 0 : index
    %8 = vector.load %arg15[%c0_15, %c0_16] : memref<64x32xbf16, #tpu.memory_space<vmem>>, vector<64x32xbf16>
    %c0_17 = arith.constant 0 : index
    %c0_18 = arith.constant 0 : index
    %9 = vector.load %arg4[%c0_17, %c0_18] : memref<1x96xf32, #tpu.memory_space<vmem>>, vector<1x96xf32>
    %10 = vector.shape_cast %9 : vector<1x96xf32> to vector<1x96xf32>
    %11 = vector.broadcast %10 : vector<1x96xf32> to vector<8x96xf32>
    %c0_19 = arith.constant 0 : index
    %c0_20 = arith.constant 0 : index
    %12 = vector.load %arg6[%c0_19, %c0_20] : memref<1x32xf32, #tpu.memory_space<vmem>>, vector<1x32xf32>
    %13 = vector.shape_cast %12 : vector<1x32xf32> to vector<1x32xf32>
    %14 = vector.broadcast %13 : vector<1x32xf32> to vector<8x32xf32>
    %c0_21 = arith.constant 0 : index
    %c0_22 = arith.constant 0 : index
    %15 = vector.load %arg8[%c0_21, %c0_22] : memref<1x32xf32, #tpu.memory_space<vmem>>, vector<1x32xf32>
    %16 = vector.shape_cast %15 : vector<1x32xf32> to vector<1x32xf32>
    %17 = vector.broadcast %16 : vector<1x32xf32> to vector<8x32xf32>
    %c0_23 = arith.constant 0 : index
    %c0_24 = arith.constant 0 : index
    %18 = vector.load %arg12[%c0_23, %c0_24] : memref<1x32xf32, #tpu.memory_space<vmem>>, vector<1x32xf32>
    %19 = vector.shape_cast %18 : vector<1x32xf32> to vector<1x32xf32>
    %20 = vector.broadcast %19 : vector<1x32xf32> to vector<8x32xf32>
    %c0_25 = arith.constant 0 : index
    %c0_26 = arith.constant 0 : index
    %21 = vector.load %arg14[%c0_25, %c0_26] : memref<1x64xf32, #tpu.memory_space<vmem>>, vector<1x64xf32>
    %22 = vector.shape_cast %21 : vector<1x64xf32> to vector<1x64xf32>
    %23 = vector.broadcast %22 : vector<1x64xf32> to vector<8x64xf32>
    %c0_27 = arith.constant 0 : index
    %c0_28 = arith.constant 0 : index
    %24 = vector.load %arg16[%c0_27, %c0_28] : memref<1x32xf32, #tpu.memory_space<vmem>>, vector<1x32xf32>
    %25 = vector.shape_cast %24 : vector<1x32xf32> to vector<1x32xf32>
    %26 = vector.broadcast %25 : vector<1x32xf32> to vector<8x32xf32>
    %c0_29 = arith.constant 0 : index
    %c0_30 = arith.constant 0 : index
    %27 = vector.load %arg17[%c0_29, %c0_30] : memref<1x32xf32, #tpu.memory_space<vmem>>, vector<1x32xf32>
    %28 = vector.shape_cast %27 : vector<1x32xf32> to vector<1x32xf32>
    %29 = vector.broadcast %28 : vector<1x32xf32> to vector<8x32xf32>
    %c0_31 = arith.constant 0 : index
    %c0_32 = arith.constant 0 : index
    %30 = vector.load %arg18[%c0_31, %c0_32] : memref<1x32xf32, #tpu.memory_space<vmem>>, vector<1x32xf32>
    %31 = vector.shape_cast %30 : vector<1x32xf32> to vector<1x32xf32>
    %32 = vector.broadcast %31 : vector<1x32xf32> to vector<8x32xf32>
    %c0_33 = arith.constant 0 : index
    %c0_34 = arith.constant 0 : index
    %33 = vector.load %arg19[%c0_33, %c0_34] : memref<1x32xf32, #tpu.memory_space<vmem>>, vector<1x32xf32>
    %34 = vector.shape_cast %33 : vector<1x32xf32> to vector<1x32xf32>
    %35 = vector.broadcast %34 : vector<1x32xf32> to vector<8x32xf32>
    %c0_35 = arith.constant 0 : index
    %c0_36 = arith.constant 0 : index
    %36 = vector.load %arg20[%c0_35, %c0_36] : memref<1x32xf32, #tpu.memory_space<vmem>>, vector<1x32xf32>
    %37 = vector.shape_cast %36 : vector<1x32xf32> to vector<1x32xf32>
    %38 = vector.broadcast %37 : vector<1x32xf32> to vector<8x32xf32>
    %c0_37 = arith.constant 0 : index
    %c0_38 = arith.constant 0 : index
    %39 = vector.load %arg21[%c0_37, %c0_38] : memref<1x32xf32, #tpu.memory_space<vmem>>, vector<1x32xf32>
    %40 = vector.shape_cast %39 : vector<1x32xf32> to vector<1x32xf32>
    %41 = vector.broadcast %40 : vector<1x32xf32> to vector<8x32xf32>
    %c0_39 = arith.constant 0 : index
    %c0_40 = arith.constant 0 : index
    %42 = vector.load %arg22[%c0_39, %c0_40] : memref<1x32xf32, #tpu.memory_space<vmem>>, vector<1x32xf32>
    %43 = vector.shape_cast %42 : vector<1x32xf32> to vector<1x32xf32>
    %44 = vector.broadcast %43 : vector<1x32xf32> to vector<8x32xf32>
    %c0_41 = arith.constant 0 : index
    %c0_42 = arith.constant 0 : index
    %45 = vector.load %arg10[%c0_41, %c0_42] : memref<1x64xf32, #tpu.memory_space<vmem>>, vector<1x64xf32>
    %46 = vector.shape_cast %45 : vector<1x64xf32> to vector<1x64xf32>
    %47 = vector.broadcast %46 : vector<1x64xf32> to vector<8x64xf32>
    %cst = arith.constant dense<0.000000e+00> : vector<8x64xf32>
    %48 = tpu.matmul %1, %5, %cst {dimension_numbers = #tpu.dot_dimension_numbers<[1], [0], [0], [1], [0, 0, 1, 1], [], []>} : vector<8x32xbf16>, vector<32x64xbf16>, vector<8x64xf32> -> vector<8x64xf32>
    %49 = arith.addf %48, %47 : vector<8x64xf32>
    %50 = vector.shape_cast %49 : vector<8x64xf32> to vector<1x8x64xf32>
    %51 = arith.truncf %50 : vector<1x8x64xf32> to vector<1x8x64xbf16>
    %52 = vector.extract_strided_slice %51 {offsets = [0, 0, 0], sizes = [1, 8, 32], strides = [1, 1, 1]} : vector<1x8x64xbf16> to vector<1x8x32xbf16>
    %53 = vector.extract_strided_slice %51 {offsets = [0, 0, 32], sizes = [1, 8, 32], strides = [1, 1, 1]} : vector<1x8x64xbf16> to vector<1x8x32xbf16>
    %54 = arith.truncf %0 : vector<8x32xf32> to vector<8x32xbf16>
    %cst_43 = arith.constant dense<0.000000e+00> : vector<8x96xf32>
    %55 = tpu.matmul %54, %2, %cst_43 {dimension_numbers = #tpu.dot_dimension_numbers<[1], [0], [0], [1], [0, 0, 1, 1], [], []>} : vector<8x32xbf16>, vector<32x96xbf16>, vector<8x96xf32> -> vector<8x96xf32>
    %56 = arith.addf %55, %11 : vector<8x96xf32>
    %57 = vector.extract_strided_slice %56 {offsets = [0, 32], sizes = [8, 64], strides = [1, 1]} : vector<8x96xf32> to vector<8x64xf32>
    %58 = vector.shape_cast %57 : vector<8x64xf32> to vector<1x8x64xf32>
    %59 = arith.truncf %58 : vector<1x8x64xf32> to vector<1x8x64xbf16>
    %60 = vector.extract_strided_slice %56 {offsets = [0, 0], sizes = [8, 32], strides = [1, 1]} : vector<8x96xf32> to vector<8x32xf32>
    %61 = vector.extract_strided_slice %59 {offsets = [0, 0, 0], sizes = [1, 8, 32], strides = [1, 1, 1]} : vector<1x8x64xbf16> to vector<1x8x32xbf16>
    %62 = vector.extract_strided_slice %59 {offsets = [0, 0, 32], sizes = [1, 8, 32], strides = [1, 1, 1]} : vector<1x8x64xbf16> to vector<1x8x32xbf16>
    %63 = vector.shape_cast %60 : vector<8x32xf32> to vector<1x8x32xf32>
    %64 = arith.truncf %63 : vector<1x8x32xf32> to vector<1x8x32xbf16>
    %65 = vector.extract_strided_slice %64 {offsets = [0, 0, 0], sizes = [1, 8, 8], strides = [1, 1, 1]} : vector<1x8x32xbf16> to vector<1x8x8xbf16>
    %66 = vector.extract_strided_slice %61 {offsets = [0, 0, 0], sizes = [1, 8, 8], strides = [1, 1, 1]} : vector<1x8x32xbf16> to vector<1x8x8xbf16>
    %67 = vector.extract_strided_slice %62 {offsets = [0, 0, 0], sizes = [1, 8, 8], strides = [1, 1, 1]} : vector<1x8x32xbf16> to vector<1x8x8xbf16>
    "tpu.trace_start"() <{level = 10 : i32, message = "btd,bsd->bts"}> : () -> ()
    %cst_44 = arith.constant dense<0.000000e+00> : vector<1x8x8xf32>
    %68 = tpu.matmul %65, %66, %cst_44 {dimension_numbers = #tpu.dot_dimension_numbers<[2], [2], [1], [1], [0, 0, 0, 1, 1, 1], [0], [0]>} : vector<1x8x8xbf16>, vector<1x8x8xbf16>, vector<1x8x8xf32> -> vector<1x8x8xf32>
    "tpu.trace_stop"() : () -> ()
    %cst_45 = arith.constant dense<0xFF800000> : vector<1x8xf32>
    %69 = vector.multi_reduction <maximumf>, %68, %cst_45 [2] : vector<1x8x8xf32> to vector<1x8xf32>
    %70 = vector.shape_cast %69 : vector<1x8xf32> to vector<1x8x1xf32>
    %71 = vector.broadcast %70 : vector<1x8x1xf32> to vector<1x8x8xf32>
    %72 = arith.subf %68, %71 : vector<1x8x8xf32>
    %73 = math.exp %72 : vector<1x8x8xf32>
    %cst_46 = arith.constant dense<0.000000e+00> : vector<1x8xf32>
    %74 = vector.multi_reduction <add>, %73, %cst_46 [2] : vector<1x8x8xf32> to vector<1x8xf32>
    %75 = vector.shape_cast %74 : vector<1x8xf32> to vector<1x8x1xf32>
    %76 = tpu.reciprocal %75 {approx = true} : vector<1x8x1xf32> -> vector<1x8x1xf32>
    %77 = arith.mulf %75, %76 : vector<1x8x1xf32>
    %cst_47 = arith.constant 2.000000e+00 : f32
    %78 = vector.broadcast %cst_47 : f32 to vector<1x8x1xf32>
    %79 = arith.subf %78, %77 : vector<1x8x1xf32>
    %80 = arith.mulf %76, %79 : vector<1x8x1xf32>
    %81 = vector.broadcast %80 : vector<1x8x1xf32> to vector<1x8x8xf32>
    %82 = arith.mulf %73, %81 : vector<1x8x8xf32>
    %83 = arith.truncf %82 : vector<1x8x8xf32> to vector<1x8x8xbf16>
    "tpu.trace_start"() <{level = 10 : i32, message = "bts,bsd->btd"}> : () -> ()
    %cst_48 = arith.constant dense<0.000000e+00> : vector<1x8x8xf32>
    %84 = tpu.matmul %83, %67, %cst_48 {dimension_numbers = #tpu.dot_dimension_numbers<[2], [1], [1], [2], [0, 0, 0, 1, 1, 2], [0], [0]>} : vector<1x8x8xbf16>, vector<1x8x8xbf16>, vector<1x8x8xf32> -> vector<1x8x8xf32>
    "tpu.trace_stop"() : () -> ()
    %85 = vector.extract_strided_slice %64 {offsets = [0, 0, 8], sizes = [1, 8, 8], strides = [1, 1, 1]} : vector<1x8x32xbf16> to vector<1x8x8xbf16>
    %86 = vector.extract_strided_slice %61 {offsets = [0, 0, 8], sizes = [1, 8, 8], strides = [1, 1, 1]} : vector<1x8x32xbf16> to vector<1x8x8xbf16>
    %87 = vector.extract_strided_slice %62 {offsets = [0, 0, 8], sizes = [1, 8, 8], strides = [1, 1, 1]} : vector<1x8x32xbf16> to vector<1x8x8xbf16>
    "tpu.trace_start"() <{level = 10 : i32, message = "btd,bsd->bts"}> : () -> ()
    %cst_49 = arith.constant dense<0.000000e+00> : vector<1x8x8xf32>
    %88 = tpu.matmul %85, %86, %cst_49 {dimension_numbers = #tpu.dot_dimension_numbers<[2], [2], [1], [1], [0, 0, 0, 1, 1, 1], [0], [0]>} : vector<1x8x8xbf16>, vector<1x8x8xbf16>, vector<1x8x8xf32> -> vector<1x8x8xf32>
    "tpu.trace_stop"() : () -> ()
    %cst_50 = arith.constant dense<0xFF800000> : vector<1x8xf32>
    %89 = vector.multi_reduction <maximumf>, %88, %cst_50 [2] : vector<1x8x8xf32> to vector<1x8xf32>
    %90 = vector.shape_cast %89 : vector<1x8xf32> to vector<1x8x1xf32>
    %91 = vector.broadcast %90 : vector<1x8x1xf32> to vector<1x8x8xf32>
    %92 = arith.subf %88, %91 : vector<1x8x8xf32>
    %93 = math.exp %92 : vector<1x8x8xf32>
    %cst_51 = arith.constant dense<0.000000e+00> : vector<1x8xf32>
    %94 = vector.multi_reduction <add>, %93, %cst_51 [2] : vector<1x8x8xf32> to vector<1x8xf32>
    %95 = vector.shape_cast %94 : vector<1x8xf32> to vector<1x8x1xf32>
    %96 = tpu.reciprocal %95 {approx = true} : vector<1x8x1xf32> -> vector<1x8x1xf32>
    %97 = arith.mulf %95, %96 : vector<1x8x1xf32>
    %cst_52 = arith.constant 2.000000e+00 : f32
    %98 = vector.broadcast %cst_52 : f32 to vector<1x8x1xf32>
    %99 = arith.subf %98, %97 : vector<1x8x1xf32>
    %100 = arith.mulf %96, %99 : vector<1x8x1xf32>
    %101 = vector.broadcast %100 : vector<1x8x1xf32> to vector<1x8x8xf32>
    %102 = arith.mulf %93, %101 : vector<1x8x8xf32>
    %103 = arith.truncf %102 : vector<1x8x8xf32> to vector<1x8x8xbf16>
    "tpu.trace_start"() <{level = 10 : i32, message = "bts,bsd->btd"}> : () -> ()
    %cst_53 = arith.constant dense<0.000000e+00> : vector<1x8x8xf32>
    %104 = tpu.matmul %103, %87, %cst_53 {dimension_numbers = #tpu.dot_dimension_numbers<[2], [1], [1], [2], [0, 0, 0, 1, 1, 2], [0], [0]>} : vector<1x8x8xbf16>, vector<1x8x8xbf16>, vector<1x8x8xf32> -> vector<1x8x8xf32>
    "tpu.trace_stop"() : () -> ()
    %105 = vector.extract_strided_slice %64 {offsets = [0, 0, 16], sizes = [1, 8, 8], strides = [1, 1, 1]} : vector<1x8x32xbf16> to vector<1x8x8xbf16>
    %106 = vector.extract_strided_slice %61 {offsets = [0, 0, 16], sizes = [1, 8, 8], strides = [1, 1, 1]} : vector<1x8x32xbf16> to vector<1x8x8xbf16>
    %107 = vector.extract_strided_slice %62 {offsets = [0, 0, 16], sizes = [1, 8, 8], strides = [1, 1, 1]} : vector<1x8x32xbf16> to vector<1x8x8xbf16>
    "tpu.trace_start"() <{level = 10 : i32, message = "btd,bsd->bts"}> : () -> ()
    %cst_54 = arith.constant dense<0.000000e+00> : vector<1x8x8xf32>
    %108 = tpu.matmul %105, %106, %cst_54 {dimension_numbers = #tpu.dot_dimension_numbers<[2], [2], [1], [1], [0, 0, 0, 1, 1, 1], [0], [0]>} : vector<1x8x8xbf16>, vector<1x8x8xbf16>, vector<1x8x8xf32> -> vector<1x8x8xf32>
    "tpu.trace_stop"() : () -> ()
    %cst_55 = arith.constant dense<0xFF800000> : vector<1x8xf32>
    %109 = vector.multi_reduction <maximumf>, %108, %cst_55 [2] : vector<1x8x8xf32> to vector<1x8xf32>
    %110 = vector.shape_cast %109 : vector<1x8xf32> to vector<1x8x1xf32>
    %111 = vector.broadcast %110 : vector<1x8x1xf32> to vector<1x8x8xf32>
    %112 = arith.subf %108, %111 : vector<1x8x8xf32>
    %113 = math.exp %112 : vector<1x8x8xf32>
    %cst_56 = arith.constant dense<0.000000e+00> : vector<1x8xf32>
    %114 = vector.multi_reduction <add>, %113, %cst_56 [2] : vector<1x8x8xf32> to vector<1x8xf32>
    %115 = vector.shape_cast %114 : vector<1x8xf32> to vector<1x8x1xf32>
    %116 = tpu.reciprocal %115 {approx = true} : vector<1x8x1xf32> -> vector<1x8x1xf32>
    %117 = arith.mulf %115, %116 : vector<1x8x1xf32>
    %cst_57 = arith.constant 2.000000e+00 : f32
    %118 = vector.broadcast %cst_57 : f32 to vector<1x8x1xf32>
    %119 = arith.subf %118, %117 : vector<1x8x1xf32>
    %120 = arith.mulf %116, %119 : vector<1x8x1xf32>
    %121 = vector.broadcast %120 : vector<1x8x1xf32> to vector<1x8x8xf32>
    %122 = arith.mulf %113, %121 : vector<1x8x8xf32>
    %123 = arith.truncf %122 : vector<1x8x8xf32> to vector<1x8x8xbf16>
    "tpu.trace_start"() <{level = 10 : i32, message = "bts,bsd->btd"}> : () -> ()
    %cst_58 = arith.constant dense<0.000000e+00> : vector<1x8x8xf32>
    %124 = tpu.matmul %123, %107, %cst_58 {dimension_numbers = #tpu.dot_dimension_numbers<[2], [1], [1], [2], [0, 0, 0, 1, 1, 2], [0], [0]>} : vector<1x8x8xbf16>, vector<1x8x8xbf16>, vector<1x8x8xf32> -> vector<1x8x8xf32>
    "tpu.trace_stop"() : () -> ()
    %125 = vector.extract_strided_slice %64 {offsets = [0, 0, 24], sizes = [1, 8, 8], strides = [1, 1, 1]} : vector<1x8x32xbf16> to vector<1x8x8xbf16>
    %126 = vector.extract_strided_slice %61 {offsets = [0, 0, 24], sizes = [1, 8, 8], strides = [1, 1, 1]} : vector<1x8x32xbf16> to vector<1x8x8xbf16>
    %127 = vector.extract_strided_slice %62 {offsets = [0, 0, 24], sizes = [1, 8, 8], strides = [1, 1, 1]} : vector<1x8x32xbf16> to vector<1x8x8xbf16>
    "tpu.trace_start"() <{level = 10 : i32, message = "btd,bsd->bts"}> : () -> ()
    %cst_59 = arith.constant dense<0.000000e+00> : vector<1x8x8xf32>
    %128 = tpu.matmul %125, %126, %cst_59 {dimension_numbers = #tpu.dot_dimension_numbers<[2], [2], [1], [1], [0, 0, 0, 1, 1, 1], [0], [0]>} : vector<1x8x8xbf16>, vector<1x8x8xbf16>, vector<1x8x8xf32> -> vector<1x8x8xf32>
    "tpu.trace_stop"() : () -> ()
    %cst_60 = arith.constant dense<0xFF800000> : vector<1x8xf32>
    %129 = vector.multi_reduction <maximumf>, %128, %cst_60 [2] : vector<1x8x8xf32> to vector<1x8xf32>
    %130 = vector.shape_cast %129 : vector<1x8xf32> to vector<1x8x1xf32>
    %131 = vector.broadcast %130 : vector<1x8x1xf32> to vector<1x8x8xf32>
    %132 = arith.subf %128, %131 : vector<1x8x8xf32>
    %133 = math.exp %132 : vector<1x8x8xf32>
    %cst_61 = arith.constant dense<0.000000e+00> : vector<1x8xf32>
    %134 = vector.multi_reduction <add>, %133, %cst_61 [2] : vector<1x8x8xf32> to vector<1x8xf32>
    %135 = vector.shape_cast %134 : vector<1x8xf32> to vector<1x8x1xf32>
    %136 = tpu.reciprocal %135 {approx = true} : vector<1x8x1xf32> -> vector<1x8x1xf32>
    %137 = arith.mulf %135, %136 : vector<1x8x1xf32>
    %cst_62 = arith.constant 2.000000e+00 : f32
    %138 = vector.broadcast %cst_62 : f32 to vector<1x8x1xf32>
    %139 = arith.subf %138, %137 : vector<1x8x1xf32>
    %140 = arith.mulf %136, %139 : vector<1x8x1xf32>
    %141 = vector.broadcast %140 : vector<1x8x1xf32> to vector<1x8x8xf32>
    %142 = arith.mulf %133, %141 : vector<1x8x8xf32>
    %143 = arith.truncf %142 : vector<1x8x8xf32> to vector<1x8x8xbf16>
    "tpu.trace_start"() <{level = 10 : i32, message = "bts,bsd->btd"}> : () -> ()
    %cst_63 = arith.constant dense<0.000000e+00> : vector<1x8x8xf32>
    %144 = tpu.matmul %143, %127, %cst_63 {dimension_numbers = #tpu.dot_dimension_numbers<[2], [1], [1], [2], [0, 0, 0, 1, 1, 2], [0], [0]>} : vector<1x8x8xbf16>, vector<1x8x8xbf16>, vector<1x8x8xf32> -> vector<1x8x8xf32>
    "tpu.trace_stop"() : () -> ()
    %145 = tpu.concatenate %84, %104, %124, %144 in 2 : vector<1x8x8xf32>, vector<1x8x8xf32>, vector<1x8x8xf32>, vector<1x8x8xf32> -> vector<1x8x32xf32>
    %146 = vector.shape_cast %145 : vector<1x8x32xf32> to vector<8x32xf32>
    %147 = arith.truncf %146 : vector<8x32xf32> to vector<8x32xbf16>
    %cst_64 = arith.constant dense<0.000000e+00> : vector<8x32xf32>
    %148 = tpu.matmul %147, %3, %cst_64 {dimension_numbers = #tpu.dot_dimension_numbers<[1], [0], [0], [1], [0, 0, 1, 1], [], []>} : vector<8x32xbf16>, vector<32x32xbf16>, vector<8x32xf32> -> vector<8x32xf32>
    %149 = arith.addf %148, %14 : vector<8x32xf32>
    %150 = arith.addf %0, %149 : vector<8x32xf32>
    %cst_65 = arith.constant dense<0.000000e+00> : vector<8xf32>
    %151 = vector.multi_reduction <add>, %150, %cst_65 [1] : vector<8x32xf32> to vector<8xf32>
    %152 = vector.shape_cast %151 : vector<8xf32> to vector<8x1xf32>
    %cst_66 = arith.constant 3.200000e+01 : f32
    %153 = vector.broadcast %cst_66 : f32 to vector<8x1xf32>
    %154 = arith.divf %152, %153 : vector<8x1xf32>
    %155 = vector.broadcast %154 : vector<8x1xf32> to vector<8x32xf32>
    %156 = arith.subf %150, %155 : vector<8x32xf32>
    %157 = arith.mulf %156, %156 : vector<8x32xf32>
    %cst_67 = arith.constant dense<0.000000e+00> : vector<8xf32>
    %158 = vector.multi_reduction <add>, %157, %cst_67 [1] : vector<8x32xf32> to vector<8xf32>
    %159 = vector.shape_cast %158 : vector<8xf32> to vector<8x1xf32>
    %cst_68 = arith.constant 3.200000e+01 : f32
    %160 = vector.broadcast %cst_68 : f32 to vector<8x1xf32>
    %161 = arith.divf %159, %160 : vector<8x1xf32>
    %cst_69 = arith.constant 9.99999974E-6 : f32
    %162 = vector.broadcast %cst_69 : f32 to vector<8x1xf32>
    %163 = arith.addf %161, %162 : vector<8x1xf32>
    %164 = math.rsqrt %163 : vector<8x1xf32>
    %165 = vector.broadcast %164 : vector<8x1xf32> to vector<8x32xf32>
    %166 = arith.mulf %156, %165 : vector<8x32xf32>
    %167 = arith.mulf %166, %29 : vector<8x32xf32>
    %168 = arith.addf %167, %32 : vector<8x32xf32>
    %169 = arith.truncf %168 : vector<8x32xf32> to vector<8x32xbf16>
    %cst_70 = arith.constant dense<0.000000e+00> : vector<8x32xf32>
    %170 = tpu.matmul %169, %4, %cst_70 {dimension_numbers = #tpu.dot_dimension_numbers<[1], [0], [0], [1], [0, 0, 1, 1], [], []>} : vector<8x32xbf16>, vector<32x32xbf16>, vector<8x32xf32> -> vector<8x32xf32>
    %171 = arith.addf %170, %17 : vector<8x32xf32>
    %172 = vector.shape_cast %171 : vector<8x32xf32> to vector<1x8x32xf32>
    %173 = arith.truncf %172 : vector<1x8x32xf32> to vector<1x8x32xbf16>
    %174 = vector.extract_strided_slice %173 {offsets = [0, 0, 0], sizes = [1, 8, 8], strides = [1, 1, 1]} : vector<1x8x32xbf16> to vector<1x8x8xbf16>
    %175 = vector.extract_strided_slice %52 {offsets = [0, 0, 0], sizes = [1, 8, 8], strides = [1, 1, 1]} : vector<1x8x32xbf16> to vector<1x8x8xbf16>
    %176 = vector.extract_strided_slice %53 {offsets = [0, 0, 0], sizes = [1, 8, 8], strides = [1, 1, 1]} : vector<1x8x32xbf16> to vector<1x8x8xbf16>
    "tpu.trace_start"() <{level = 10 : i32, message = "btd,bsd->bts"}> : () -> ()
    %cst_71 = arith.constant dense<0.000000e+00> : vector<1x8x8xf32>
    %177 = tpu.matmul %174, %175, %cst_71 {dimension_numbers = #tpu.dot_dimension_numbers<[2], [2], [1], [1], [0, 0, 0, 1, 1, 1], [0], [0]>} : vector<1x8x8xbf16>, vector<1x8x8xbf16>, vector<1x8x8xf32> -> vector<1x8x8xf32>
    "tpu.trace_stop"() : () -> ()
    %cst_72 = arith.constant dense<0xFF800000> : vector<1x8xf32>
    %178 = vector.multi_reduction <maximumf>, %177, %cst_72 [2] : vector<1x8x8xf32> to vector<1x8xf32>
    %179 = vector.shape_cast %178 : vector<1x8xf32> to vector<1x8x1xf32>
    %180 = vector.broadcast %179 : vector<1x8x1xf32> to vector<1x8x8xf32>
    %181 = arith.subf %177, %180 : vector<1x8x8xf32>
    %182 = math.exp %181 : vector<1x8x8xf32>
    %cst_73 = arith.constant dense<0.000000e+00> : vector<1x8xf32>
    %183 = vector.multi_reduction <add>, %182, %cst_73 [2] : vector<1x8x8xf32> to vector<1x8xf32>
    %184 = vector.shape_cast %183 : vector<1x8xf32> to vector<1x8x1xf32>
    %185 = tpu.reciprocal %184 {approx = true} : vector<1x8x1xf32> -> vector<1x8x1xf32>
    %186 = arith.mulf %184, %185 : vector<1x8x1xf32>
    %cst_74 = arith.constant 2.000000e+00 : f32
    %187 = vector.broadcast %cst_74 : f32 to vector<1x8x1xf32>
    %188 = arith.subf %187, %186 : vector<1x8x1xf32>
    %189 = arith.mulf %185, %188 : vector<1x8x1xf32>
    %190 = vector.broadcast %189 : vector<1x8x1xf32> to vector<1x8x8xf32>
    %191 = arith.mulf %182, %190 : vector<1x8x8xf32>
    %192 = arith.truncf %191 : vector<1x8x8xf32> to vector<1x8x8xbf16>
    "tpu.trace_start"() <{level = 10 : i32, message = "bts,bsd->btd"}> : () -> ()
    %cst_75 = arith.constant dense<0.000000e+00> : vector<1x8x8xf32>
    %193 = tpu.matmul %192, %176, %cst_75 {dimension_numbers = #tpu.dot_dimension_numbers<[2], [1], [1], [2], [0, 0, 0, 1, 1, 2], [0], [0]>} : vector<1x8x8xbf16>, vector<1x8x8xbf16>, vector<1x8x8xf32> -> vector<1x8x8xf32>
    "tpu.trace_stop"() : () -> ()
    %194 = vector.extract_strided_slice %173 {offsets = [0, 0, 8], sizes = [1, 8, 8], strides = [1, 1, 1]} : vector<1x8x32xbf16> to vector<1x8x8xbf16>
    %195 = vector.extract_strided_slice %52 {offsets = [0, 0, 8], sizes = [1, 8, 8], strides = [1, 1, 1]} : vector<1x8x32xbf16> to vector<1x8x8xbf16>
    %196 = vector.extract_strided_slice %53 {offsets = [0, 0, 8], sizes = [1, 8, 8], strides = [1, 1, 1]} : vector<1x8x32xbf16> to vector<1x8x8xbf16>
    "tpu.trace_start"() <{level = 10 : i32, message = "btd,bsd->bts"}> : () -> ()
    %cst_76 = arith.constant dense<0.000000e+00> : vector<1x8x8xf32>
    %197 = tpu.matmul %194, %195, %cst_76 {dimension_numbers = #tpu.dot_dimension_numbers<[2], [2], [1], [1], [0, 0, 0, 1, 1, 1], [0], [0]>} : vector<1x8x8xbf16>, vector<1x8x8xbf16>, vector<1x8x8xf32> -> vector<1x8x8xf32>
    "tpu.trace_stop"() : () -> ()
    %cst_77 = arith.constant dense<0xFF800000> : vector<1x8xf32>
    %198 = vector.multi_reduction <maximumf>, %197, %cst_77 [2] : vector<1x8x8xf32> to vector<1x8xf32>
    %199 = vector.shape_cast %198 : vector<1x8xf32> to vector<1x8x1xf32>
    %200 = vector.broadcast %199 : vector<1x8x1xf32> to vector<1x8x8xf32>
    %201 = arith.subf %197, %200 : vector<1x8x8xf32>
    %202 = math.exp %201 : vector<1x8x8xf32>
    %cst_78 = arith.constant dense<0.000000e+00> : vector<1x8xf32>
    %203 = vector.multi_reduction <add>, %202, %cst_78 [2] : vector<1x8x8xf32> to vector<1x8xf32>
    %204 = vector.shape_cast %203 : vector<1x8xf32> to vector<1x8x1xf32>
    %205 = tpu.reciprocal %204 {approx = true} : vector<1x8x1xf32> -> vector<1x8x1xf32>
    %206 = arith.mulf %204, %205 : vector<1x8x1xf32>
    %cst_79 = arith.constant 2.000000e+00 : f32
    %207 = vector.broadcast %cst_79 : f32 to vector<1x8x1xf32>
    %208 = arith.subf %207, %206 : vector<1x8x1xf32>
    %209 = arith.mulf %205, %208 : vector<1x8x1xf32>
    %210 = vector.broadcast %209 : vector<1x8x1xf32> to vector<1x8x8xf32>
    %211 = arith.mulf %202, %210 : vector<1x8x8xf32>
    %212 = arith.truncf %211 : vector<1x8x8xf32> to vector<1x8x8xbf16>
    "tpu.trace_start"() <{level = 10 : i32, message = "bts,bsd->btd"}> : () -> ()
    %cst_80 = arith.constant dense<0.000000e+00> : vector<1x8x8xf32>
    %213 = tpu.matmul %212, %196, %cst_80 {dimension_numbers = #tpu.dot_dimension_numbers<[2], [1], [1], [2], [0, 0, 0, 1, 1, 2], [0], [0]>} : vector<1x8x8xbf16>, vector<1x8x8xbf16>, vector<1x8x8xf32> -> vector<1x8x8xf32>
    "tpu.trace_stop"() : () -> ()
    %214 = vector.extract_strided_slice %173 {offsets = [0, 0, 16], sizes = [1, 8, 8], strides = [1, 1, 1]} : vector<1x8x32xbf16> to vector<1x8x8xbf16>
    %215 = vector.extract_strided_slice %52 {offsets = [0, 0, 16], sizes = [1, 8, 8], strides = [1, 1, 1]} : vector<1x8x32xbf16> to vector<1x8x8xbf16>
    %216 = vector.extract_strided_slice %53 {offsets = [0, 0, 16], sizes = [1, 8, 8], strides = [1, 1, 1]} : vector<1x8x32xbf16> to vector<1x8x8xbf16>
    "tpu.trace_start"() <{level = 10 : i32, message = "btd,bsd->bts"}> : () -> ()
    %cst_81 = arith.constant dense<0.000000e+00> : vector<1x8x8xf32>
    %217 = tpu.matmul %214, %215, %cst_81 {dimension_numbers = #tpu.dot_dimension_numbers<[2], [2], [1], [1], [0, 0, 0, 1, 1, 1], [0], [0]>} : vector<1x8x8xbf16>, vector<1x8x8xbf16>, vector<1x8x8xf32> -> vector<1x8x8xf32>
    "tpu.trace_stop"() : () -> ()
    %cst_82 = arith.constant dense<0xFF800000> : vector<1x8xf32>
    %218 = vector.multi_reduction <maximumf>, %217, %cst_82 [2] : vector<1x8x8xf32> to vector<1x8xf32>
    %219 = vector.shape_cast %218 : vector<1x8xf32> to vector<1x8x1xf32>
    %220 = vector.broadcast %219 : vector<1x8x1xf32> to vector<1x8x8xf32>
    %221 = arith.subf %217, %220 : vector<1x8x8xf32>
    %222 = math.exp %221 : vector<1x8x8xf32>
    %cst_83 = arith.constant dense<0.000000e+00> : vector<1x8xf32>
    %223 = vector.multi_reduction <add>, %222, %cst_83 [2] : vector<1x8x8xf32> to vector<1x8xf32>
    %224 = vector.shape_cast %223 : vector<1x8xf32> to vector<1x8x1xf32>
    %225 = tpu.reciprocal %224 {approx = true} : vector<1x8x1xf32> -> vector<1x8x1xf32>
    %226 = arith.mulf %224, %225 : vector<1x8x1xf32>
    %cst_84 = arith.constant 2.000000e+00 : f32
    %227 = vector.broadcast %cst_84 : f32 to vector<1x8x1xf32>
    %228 = arith.subf %227, %226 : vector<1x8x1xf32>
    %229 = arith.mulf %225, %228 : vector<1x8x1xf32>
    %230 = vector.broadcast %229 : vector<1x8x1xf32> to vector<1x8x8xf32>
    %231 = arith.mulf %222, %230 : vector<1x8x8xf32>
    %232 = arith.truncf %231 : vector<1x8x8xf32> to vector<1x8x8xbf16>
    "tpu.trace_start"() <{level = 10 : i32, message = "bts,bsd->btd"}> : () -> ()
    %cst_85 = arith.constant dense<0.000000e+00> : vector<1x8x8xf32>
    %233 = tpu.matmul %232, %216, %cst_85 {dimension_numbers = #tpu.dot_dimension_numbers<[2], [1], [1], [2], [0, 0, 0, 1, 1, 2], [0], [0]>} : vector<1x8x8xbf16>, vector<1x8x8xbf16>, vector<1x8x8xf32> -> vector<1x8x8xf32>
    "tpu.trace_stop"() : () -> ()
    %234 = vector.extract_strided_slice %173 {offsets = [0, 0, 24], sizes = [1, 8, 8], strides = [1, 1, 1]} : vector<1x8x32xbf16> to vector<1x8x8xbf16>
    %235 = vector.extract_strided_slice %52 {offsets = [0, 0, 24], sizes = [1, 8, 8], strides = [1, 1, 1]} : vector<1x8x32xbf16> to vector<1x8x8xbf16>
    %236 = vector.extract_strided_slice %53 {offsets = [0, 0, 24], sizes = [1, 8, 8], strides = [1, 1, 1]} : vector<1x8x32xbf16> to vector<1x8x8xbf16>
    "tpu.trace_start"() <{level = 10 : i32, message = "btd,bsd->bts"}> : () -> ()
    %cst_86 = arith.constant dense<0.000000e+00> : vector<1x8x8xf32>
    %237 = tpu.matmul %234, %235, %cst_86 {dimension_numbers = #tpu.dot_dimension_numbers<[2], [2], [1], [1], [0, 0, 0, 1, 1, 1], [0], [0]>} : vector<1x8x8xbf16>, vector<1x8x8xbf16>, vector<1x8x8xf32> -> vector<1x8x8xf32>
    "tpu.trace_stop"() : () -> ()
    %cst_87 = arith.constant dense<0xFF800000> : vector<1x8xf32>
    %238 = vector.multi_reduction <maximumf>, %237, %cst_87 [2] : vector<1x8x8xf32> to vector<1x8xf32>
    %239 = vector.shape_cast %238 : vector<1x8xf32> to vector<1x8x1xf32>
    %240 = vector.broadcast %239 : vector<1x8x1xf32> to vector<1x8x8xf32>
    %241 = arith.subf %237, %240 : vector<1x8x8xf32>
    %242 = math.exp %241 : vector<1x8x8xf32>
    %cst_88 = arith.constant dense<0.000000e+00> : vector<1x8xf32>
    %243 = vector.multi_reduction <add>, %242, %cst_88 [2] : vector<1x8x8xf32> to vector<1x8xf32>
    %244 = vector.shape_cast %243 : vector<1x8xf32> to vector<1x8x1xf32>
    %245 = tpu.reciprocal %244 {approx = true} : vector<1x8x1xf32> -> vector<1x8x1xf32>
    %246 = arith.mulf %244, %245 : vector<1x8x1xf32>
    %cst_89 = arith.constant 2.000000e+00 : f32
    %247 = vector.broadcast %cst_89 : f32 to vector<1x8x1xf32>
    %248 = arith.subf %247, %246 : vector<1x8x1xf32>
    %249 = arith.mulf %245, %248 : vector<1x8x1xf32>
    %250 = vector.broadcast %249 : vector<1x8x1xf32> to vector<1x8x8xf32>
    %251 = arith.mulf %242, %250 : vector<1x8x8xf32>
    %252 = arith.truncf %251 : vector<1x8x8xf32> to vector<1x8x8xbf16>
    "tpu.trace_start"() <{level = 10 : i32, message = "bts,bsd->btd"}> : () -> ()
    %cst_90 = arith.constant dense<0.000000e+00> : vector<1x8x8xf32>
    %253 = tpu.matmul %252, %236, %cst_90 {dimension_numbers = #tpu.dot_dimension_numbers<[2], [1], [1], [2], [0, 0, 0, 1, 1, 2], [0], [0]>} : vector<1x8x8xbf16>, vector<1x8x8xbf16>, vector<1x8x8xf32> -> vector<1x8x8xf32>
    "tpu.trace_stop"() : () -> ()
    %254 = tpu.concatenate %193, %213, %233, %253 in 2 : vector<1x8x8xf32>, vector<1x8x8xf32>, vector<1x8x8xf32>, vector<1x8x8xf32> -> vector<1x8x32xf32>
    %255 = vector.shape_cast %254 : vector<1x8x32xf32> to vector<8x32xf32>
    %256 = arith.truncf %255 : vector<8x32xf32> to vector<8x32xbf16>
    %cst_91 = arith.constant dense<0.000000e+00> : vector<8x32xf32>
    %257 = tpu.matmul %256, %6, %cst_91 {dimension_numbers = #tpu.dot_dimension_numbers<[1], [0], [0], [1], [0, 0, 1, 1], [], []>} : vector<8x32xbf16>, vector<32x32xbf16>, vector<8x32xf32> -> vector<8x32xf32>
    %258 = arith.addf %257, %20 : vector<8x32xf32>
    %259 = arith.addf %168, %258 : vector<8x32xf32>
    %cst_92 = arith.constant dense<0.000000e+00> : vector<8xf32>
    %260 = vector.multi_reduction <add>, %259, %cst_92 [1] : vector<8x32xf32> to vector<8xf32>
    %261 = vector.shape_cast %260 : vector<8xf32> to vector<8x1xf32>
    %cst_93 = arith.constant 3.200000e+01 : f32
    %262 = vector.broadcast %cst_93 : f32 to vector<8x1xf32>
    %263 = arith.divf %261, %262 : vector<8x1xf32>
    %264 = vector.broadcast %263 : vector<8x1xf32> to vector<8x32xf32>
    %265 = arith.subf %259, %264 : vector<8x32xf32>
    %266 = arith.mulf %265, %265 : vector<8x32xf32>
    %cst_94 = arith.constant dense<0.000000e+00> : vector<8xf32>
    %267 = vector.multi_reduction <add>, %266, %cst_94 [1] : vector<8x32xf32> to vector<8xf32>
    %268 = vector.shape_cast %267 : vector<8xf32> to vector<8x1xf32>
    %cst_95 = arith.constant 3.200000e+01 : f32
    %269 = vector.broadcast %cst_95 : f32 to vector<8x1xf32>
    %270 = arith.divf %268, %269 : vector<8x1xf32>
    %cst_96 = arith.constant 9.99999974E-6 : f32
    %271 = vector.broadcast %cst_96 : f32 to vector<8x1xf32>
    %272 = arith.addf %270, %271 : vector<8x1xf32>
    %273 = math.rsqrt %272 : vector<8x1xf32>
    %274 = vector.broadcast %273 : vector<8x1xf32> to vector<8x32xf32>
    %275 = arith.mulf %265, %274 : vector<8x32xf32>
    %276 = arith.mulf %275, %35 : vector<8x32xf32>
    %277 = arith.addf %276, %38 : vector<8x32xf32>
    %278 = arith.truncf %277 : vector<8x32xf32> to vector<8x32xbf16>
    %cst_97 = arith.constant dense<0.000000e+00> : vector<8x64xf32>
    %279 = tpu.matmul %278, %7, %cst_97 {dimension_numbers = #tpu.dot_dimension_numbers<[1], [0], [0], [1], [0, 0, 1, 1], [], []>} : vector<8x32xbf16>, vector<32x64xbf16>, vector<8x64xf32> -> vector<8x64xf32>
    %280 = arith.addf %279, %23 : vector<8x64xf32>
    %cst_98 = arith.constant 0.000000e+00 : f32
    %281 = vector.broadcast %cst_98 : f32 to vector<8x64xf32>
    %282 = arith.maximumf %280, %281 : vector<8x64xf32>
    %283 = arith.truncf %282 : vector<8x64xf32> to vector<8x64xbf16>
    %cst_99 = arith.constant dense<0.000000e+00> : vector<8x32xf32>
    %284 = tpu.matmul %283, %8, %cst_99 {dimension_numbers = #tpu.dot_dimension_numbers<[1], [0], [0], [1], [0, 0, 1, 1], [], []>} : vector<8x64xbf16>, vector<64x32xbf16>, vector<8x32xf32> -> vector<8x32xf32>
    %285 = arith.addf %284, %26 : vector<8x32xf32>
    %286 = arith.addf %277, %285 : vector<8x32xf32>
    %cst_100 = arith.constant dense<0.000000e+00> : vector<8xf32>
    %287 = vector.multi_reduction <add>, %286, %cst_100 [1] : vector<8x32xf32> to vector<8xf32>
    %288 = vector.shape_cast %287 : vector<8xf32> to vector<8x1xf32>
    %cst_101 = arith.constant 3.200000e+01 : f32
    %289 = vector.broadcast %cst_101 : f32 to vector<8x1xf32>
    %290 = arith.divf %288, %289 : vector<8x1xf32>
    %291 = vector.broadcast %290 : vector<8x1xf32> to vector<8x32xf32>
    %292 = arith.subf %286, %291 : vector<8x32xf32>
    %293 = arith.mulf %292, %292 : vector<8x32xf32>
    %cst_102 = arith.constant dense<0.000000e+00> : vector<8xf32>
    %294 = vector.multi_reduction <add>, %293, %cst_102 [1] : vector<8x32xf32> to vector<8xf32>
    %295 = vector.shape_cast %294 : vector<8xf32> to vector<8x1xf32>
    %cst_103 = arith.constant 3.200000e+01 : f32
    %296 = vector.broadcast %cst_103 : f32 to vector<8x1xf32>
    %297 = arith.divf %295, %296 : vector<8x1xf32>
    %cst_104 = arith.constant 9.99999974E-6 : f32
    %298 = vector.broadcast %cst_104 : f32 to vector<8x1xf32>
    %299 = arith.addf %297, %298 : vector<8x1xf32>
    %300 = math.rsqrt %299 : vector<8x1xf32>
    %301 = vector.broadcast %300 : vector<8x1xf32> to vector<8x32xf32>
    %302 = arith.mulf %292, %301 : vector<8x32xf32>
    %303 = arith.mulf %302, %41 : vector<8x32xf32>
    %304 = arith.addf %303, %44 : vector<8x32xf32>
    %305 = arith.truncf %304 : vector<8x32xf32> to vector<8x32xbf16>
    %cst_105 = arith.constant dense<0.000000e+00> : vector<8x96xf32>
    %306 = tpu.matmul %305, %2, %cst_105 {dimension_numbers = #tpu.dot_dimension_numbers<[1], [0], [0], [1], [0, 0, 1, 1], [], []>} : vector<8x32xbf16>, vector<32x96xbf16>, vector<8x96xf32> -> vector<8x96xf32>
    %307 = arith.addf %306, %11 : vector<8x96xf32>
    %308 = vector.extract_strided_slice %307 {offsets = [0, 32], sizes = [8, 64], strides = [1, 1]} : vector<8x96xf32> to vector<8x64xf32>
    %309 = vector.shape_cast %308 : vector<8x64xf32> to vector<1x8x64xf32>
    %310 = arith.truncf %309 : vector<1x8x64xf32> to vector<1x8x64xbf16>
    %311 = vector.extract_strided_slice %307 {offsets = [0, 0], sizes = [8, 32], strides = [1, 1]} : vector<8x96xf32> to vector<8x32xf32>
    %312 = vector.extract_strided_slice %310 {offsets = [0, 0, 0], sizes = [1, 8, 32], strides = [1, 1, 1]} : vector<1x8x64xbf16> to vector<1x8x32xbf16>
    %313 = vector.extract_strided_slice %310 {offsets = [0, 0, 32], sizes = [1, 8, 32], strides = [1, 1, 1]} : vector<1x8x64xbf16> to vector<1x8x32xbf16>
    %314 = vector.shape_cast %311 : vector<8x32xf32> to vector<1x8x32xf32>
    %315 = arith.truncf %314 : vector<1x8x32xf32> to vector<1x8x32xbf16>
    %316 = vector.extract_strided_slice %315 {offsets = [0, 0, 0], sizes = [1, 8, 8], strides = [1, 1, 1]} : vector<1x8x32xbf16> to vector<1x8x8xbf16>
    %317 = vector.extract_strided_slice %312 {offsets = [0, 0, 0], sizes = [1, 8, 8], strides = [1, 1, 1]} : vector<1x8x32xbf16> to vector<1x8x8xbf16>
    %318 = vector.extract_strided_slice %313 {offsets = [0, 0, 0], sizes = [1, 8, 8], strides = [1, 1, 1]} : vector<1x8x32xbf16> to vector<1x8x8xbf16>
    "tpu.trace_start"() <{level = 10 : i32, message = "btd,bsd->bts"}> : () -> ()
    %cst_106 = arith.constant dense<0.000000e+00> : vector<1x8x8xf32>
    %319 = tpu.matmul %316, %317, %cst_106 {dimension_numbers = #tpu.dot_dimension_numbers<[2], [2], [1], [1], [0, 0, 0, 1, 1, 1], [0], [0]>} : vector<1x8x8xbf16>, vector<1x8x8xbf16>, vector<1x8x8xf32> -> vector<1x8x8xf32>
    "tpu.trace_stop"() : () -> ()
    %cst_107 = arith.constant dense<0xFF800000> : vector<1x8xf32>
    %320 = vector.multi_reduction <maximumf>, %319, %cst_107 [2] : vector<1x8x8xf32> to vector<1x8xf32>
    %321 = vector.shape_cast %320 : vector<1x8xf32> to vector<1x8x1xf32>
    %322 = vector.broadcast %321 : vector<1x8x1xf32> to vector<1x8x8xf32>
    %323 = arith.subf %319, %322 : vector<1x8x8xf32>
    %324 = math.exp %323 : vector<1x8x8xf32>
    %cst_108 = arith.constant dense<0.000000e+00> : vector<1x8xf32>
    %325 = vector.multi_reduction <add>, %324, %cst_108 [2] : vector<1x8x8xf32> to vector<1x8xf32>
    %326 = vector.shape_cast %325 : vector<1x8xf32> to vector<1x8x1xf32>
    %327 = tpu.reciprocal %326 {approx = true} : vector<1x8x1xf32> -> vector<1x8x1xf32>
    %328 = arith.mulf %326, %327 : vector<1x8x1xf32>
    %cst_109 = arith.constant 2.000000e+00 : f32
    %329 = vector.broadcast %cst_109 : f32 to vector<1x8x1xf32>
    %330 = arith.subf %329, %328 : vector<1x8x1xf32>
    %331 = arith.mulf %327, %330 : vector<1x8x1xf32>
    %332 = vector.broadcast %331 : vector<1x8x1xf32> to vector<1x8x8xf32>
    %333 = arith.mulf %324, %332 : vector<1x8x8xf32>
    %334 = arith.truncf %333 : vector<1x8x8xf32> to vector<1x8x8xbf16>
    "tpu.trace_start"() <{level = 10 : i32, message = "bts,bsd->btd"}> : () -> ()
    %cst_110 = arith.constant dense<0.000000e+00> : vector<1x8x8xf32>
    %335 = tpu.matmul %334, %318, %cst_110 {dimension_numbers = #tpu.dot_dimension_numbers<[2], [1], [1], [2], [0, 0, 0, 1, 1, 2], [0], [0]>} : vector<1x8x8xbf16>, vector<1x8x8xbf16>, vector<1x8x8xf32> -> vector<1x8x8xf32>
    "tpu.trace_stop"() : () -> ()
    %336 = vector.extract_strided_slice %315 {offsets = [0, 0, 8], sizes = [1, 8, 8], strides = [1, 1, 1]} : vector<1x8x32xbf16> to vector<1x8x8xbf16>
    %337 = vector.extract_strided_slice %312 {offsets = [0, 0, 8], sizes = [1, 8, 8], strides = [1, 1, 1]} : vector<1x8x32xbf16> to vector<1x8x8xbf16>
    %338 = vector.extract_strided_slice %313 {offsets = [0, 0, 8], sizes = [1, 8, 8], strides = [1, 1, 1]} : vector<1x8x32xbf16> to vector<1x8x8xbf16>
    "tpu.trace_start"() <{level = 10 : i32, message = "btd,bsd->bts"}> : () -> ()
    %cst_111 = arith.constant dense<0.000000e+00> : vector<1x8x8xf32>
    %339 = tpu.matmul %336, %337, %cst_111 {dimension_numbers = #tpu.dot_dimension_numbers<[2], [2], [1], [1], [0, 0, 0, 1, 1, 1], [0], [0]>} : vector<1x8x8xbf16>, vector<1x8x8xbf16>, vector<1x8x8xf32> -> vector<1x8x8xf32>
    "tpu.trace_stop"() : () -> ()
    %cst_112 = arith.constant dense<0xFF800000> : vector<1x8xf32>
    %340 = vector.multi_reduction <maximumf>, %339, %cst_112 [2] : vector<1x8x8xf32> to vector<1x8xf32>
    %341 = vector.shape_cast %340 : vector<1x8xf32> to vector<1x8x1xf32>
    %342 = vector.broadcast %341 : vector<1x8x1xf32> to vector<1x8x8xf32>
    %343 = arith.subf %339, %342 : vector<1x8x8xf32>
    %344 = math.exp %343 : vector<1x8x8xf32>
    %cst_113 = arith.constant dense<0.000000e+00> : vector<1x8xf32>
    %345 = vector.multi_reduction <add>, %344, %cst_113 [2] : vector<1x8x8xf32> to vector<1x8xf32>
    %346 = vector.shape_cast %345 : vector<1x8xf32> to vector<1x8x1xf32>
    %347 = tpu.reciprocal %346 {approx = true} : vector<1x8x1xf32> -> vector<1x8x1xf32>
    %348 = arith.mulf %346, %347 : vector<1x8x1xf32>
    %cst_114 = arith.constant 2.000000e+00 : f32
    %349 = vector.broadcast %cst_114 : f32 to vector<1x8x1xf32>
    %350 = arith.subf %349, %348 : vector<1x8x1xf32>
    %351 = arith.mulf %347, %350 : vector<1x8x1xf32>
    %352 = vector.broadcast %351 : vector<1x8x1xf32> to vector<1x8x8xf32>
    %353 = arith.mulf %344, %352 : vector<1x8x8xf32>
    %354 = arith.truncf %353 : vector<1x8x8xf32> to vector<1x8x8xbf16>
    "tpu.trace_start"() <{level = 10 : i32, message = "bts,bsd->btd"}> : () -> ()
    %cst_115 = arith.constant dense<0.000000e+00> : vector<1x8x8xf32>
    %355 = tpu.matmul %354, %338, %cst_115 {dimension_numbers = #tpu.dot_dimension_numbers<[2], [1], [1], [2], [0, 0, 0, 1, 1, 2], [0], [0]>} : vector<1x8x8xbf16>, vector<1x8x8xbf16>, vector<1x8x8xf32> -> vector<1x8x8xf32>
    "tpu.trace_stop"() : () -> ()
    %356 = vector.extract_strided_slice %315 {offsets = [0, 0, 16], sizes = [1, 8, 8], strides = [1, 1, 1]} : vector<1x8x32xbf16> to vector<1x8x8xbf16>
    %357 = vector.extract_strided_slice %312 {offsets = [0, 0, 16], sizes = [1, 8, 8], strides = [1, 1, 1]} : vector<1x8x32xbf16> to vector<1x8x8xbf16>
    %358 = vector.extract_strided_slice %313 {offsets = [0, 0, 16], sizes = [1, 8, 8], strides = [1, 1, 1]} : vector<1x8x32xbf16> to vector<1x8x8xbf16>
    "tpu.trace_start"() <{level = 10 : i32, message = "btd,bsd->bts"}> : () -> ()
    %cst_116 = arith.constant dense<0.000000e+00> : vector<1x8x8xf32>
    %359 = tpu.matmul %356, %357, %cst_116 {dimension_numbers = #tpu.dot_dimension_numbers<[2], [2], [1], [1], [0, 0, 0, 1, 1, 1], [0], [0]>} : vector<1x8x8xbf16>, vector<1x8x8xbf16>, vector<1x8x8xf32> -> vector<1x8x8xf32>
    "tpu.trace_stop"() : () -> ()
    %cst_117 = arith.constant dense<0xFF800000> : vector<1x8xf32>
    %360 = vector.multi_reduction <maximumf>, %359, %cst_117 [2] : vector<1x8x8xf32> to vector<1x8xf32>
    %361 = vector.shape_cast %360 : vector<1x8xf32> to vector<1x8x1xf32>
    %362 = vector.broadcast %361 : vector<1x8x1xf32> to vector<1x8x8xf32>
    %363 = arith.subf %359, %362 : vector<1x8x8xf32>
    %364 = math.exp %363 : vector<1x8x8xf32>
    %cst_118 = arith.constant dense<0.000000e+00> : vector<1x8xf32>
    %365 = vector.multi_reduction <add>, %364, %cst_118 [2] : vector<1x8x8xf32> to vector<1x8xf32>
    %366 = vector.shape_cast %365 : vector<1x8xf32> to vector<1x8x1xf32>
    %367 = tpu.reciprocal %366 {approx = true} : vector<1x8x1xf32> -> vector<1x8x1xf32>
    %368 = arith.mulf %366, %367 : vector<1x8x1xf32>
    %cst_119 = arith.constant 2.000000e+00 : f32
    %369 = vector.broadcast %cst_119 : f32 to vector<1x8x1xf32>
    %370 = arith.subf %369, %368 : vector<1x8x1xf32>
    %371 = arith.mulf %367, %370 : vector<1x8x1xf32>
    %372 = vector.broadcast %371 : vector<1x8x1xf32> to vector<1x8x8xf32>
    %373 = arith.mulf %364, %372 : vector<1x8x8xf32>
    %374 = arith.truncf %373 : vector<1x8x8xf32> to vector<1x8x8xbf16>
    "tpu.trace_start"() <{level = 10 : i32, message = "bts,bsd->btd"}> : () -> ()
    %cst_120 = arith.constant dense<0.000000e+00> : vector<1x8x8xf32>
    %375 = tpu.matmul %374, %358, %cst_120 {dimension_numbers = #tpu.dot_dimension_numbers<[2], [1], [1], [2], [0, 0, 0, 1, 1, 2], [0], [0]>} : vector<1x8x8xbf16>, vector<1x8x8xbf16>, vector<1x8x8xf32> -> vector<1x8x8xf32>
    "tpu.trace_stop"() : () -> ()
    %376 = vector.extract_strided_slice %315 {offsets = [0, 0, 24], sizes = [1, 8, 8], strides = [1, 1, 1]} : vector<1x8x32xbf16> to vector<1x8x8xbf16>
    %377 = vector.extract_strided_slice %312 {offsets = [0, 0, 24], sizes = [1, 8, 8], strides = [1, 1, 1]} : vector<1x8x32xbf16> to vector<1x8x8xbf16>
    %378 = vector.extract_strided_slice %313 {offsets = [0, 0, 24], sizes = [1, 8, 8], strides = [1, 1, 1]} : vector<1x8x32xbf16> to vector<1x8x8xbf16>
    "tpu.trace_start"() <{level = 10 : i32, message = "btd,bsd->bts"}> : () -> ()
    %cst_121 = arith.constant dense<0.000000e+00> : vector<1x8x8xf32>
    %379 = tpu.matmul %376, %377, %cst_121 {dimension_numbers = #tpu.dot_dimension_numbers<[2], [2], [1], [1], [0, 0, 0, 1, 1, 1], [0], [0]>} : vector<1x8x8xbf16>, vector<1x8x8xbf16>, vector<1x8x8xf32> -> vector<1x8x8xf32>
    "tpu.trace_stop"() : () -> ()
    %cst_122 = arith.constant dense<0xFF800000> : vector<1x8xf32>
    %380 = vector.multi_reduction <maximumf>, %379, %cst_122 [2] : vector<1x8x8xf32> to vector<1x8xf32>
    %381 = vector.shape_cast %380 : vector<1x8xf32> to vector<1x8x1xf32>
    %382 = vector.broadcast %381 : vector<1x8x1xf32> to vector<1x8x8xf32>
    %383 = arith.subf %379, %382 : vector<1x8x8xf32>
    %384 = math.exp %383 : vector<1x8x8xf32>
    %cst_123 = arith.constant dense<0.000000e+00> : vector<1x8xf32>
    %385 = vector.multi_reduction <add>, %384, %cst_123 [2] : vector<1x8x8xf32> to vector<1x8xf32>
    %386 = vector.shape_cast %385 : vector<1x8xf32> to vector<1x8x1xf32>
    %387 = tpu.reciprocal %386 {approx = true} : vector<1x8x1xf32> -> vector<1x8x1xf32>
    %388 = arith.mulf %386, %387 : vector<1x8x1xf32>
    %cst_124 = arith.constant 2.000000e+00 : f32
    %389 = vector.broadcast %cst_124 : f32 to vector<1x8x1xf32>
    %390 = arith.subf %389, %388 : vector<1x8x1xf32>
    %391 = arith.mulf %387, %390 : vector<1x8x1xf32>
    %392 = vector.broadcast %391 : vector<1x8x1xf32> to vector<1x8x8xf32>
    %393 = arith.mulf %384, %392 : vector<1x8x8xf32>
    %394 = arith.truncf %393 : vector<1x8x8xf32> to vector<1x8x8xbf16>
    "tpu.trace_start"() <{level = 10 : i32, message = "bts,bsd->btd"}> : () -> ()
    %cst_125 = arith.constant dense<0.000000e+00> : vector<1x8x8xf32>
    %395 = tpu.matmul %394, %378, %cst_125 {dimension_numbers = #tpu.dot_dimension_numbers<[2], [1], [1], [2], [0, 0, 0, 1, 1, 2], [0], [0]>} : vector<1x8x8xbf16>, vector<1x8x8xbf16>, vector<1x8x8xf32> -> vector<1x8x8xf32>
    "tpu.trace_stop"() : () -> ()
    %396 = tpu.concatenate %335, %355, %375, %395 in 2 : vector<1x8x8xf32>, vector<1x8x8xf32>, vector<1x8x8xf32>, vector<1x8x8xf32> -> vector<1x8x32xf32>
    %397 = vector.shape_cast %396 : vector<1x8x32xf32> to vector<8x32xf32>
    %398 = arith.truncf %397 : vector<8x32xf32> to vector<8x32xbf16>
    %cst_126 = arith.constant dense<0.000000e+00> : vector<8x32xf32>
    %399 = tpu.matmul %398, %3, %cst_126 {dimension_numbers = #tpu.dot_dimension_numbers<[1], [0], [0], [1], [0, 0, 1, 1], [], []>} : vector<8x32xbf16>, vector<32x32xbf16>, vector<8x32xf32> -> vector<8x32xf32>
    %400 = arith.addf %399, %14 : vector<8x32xf32>
    %401 = arith.addf %304, %400 : vector<8x32xf32>
    %cst_127 = arith.constant dense<0.000000e+00> : vector<8xf32>
    %402 = vector.multi_reduction <add>, %401, %cst_127 [1] : vector<8x32xf32> to vector<8xf32>
    %403 = vector.shape_cast %402 : vector<8xf32> to vector<8x1xf32>
    %cst_128 = arith.constant 3.200000e+01 : f32
    %404 = vector.broadcast %cst_128 : f32 to vector<8x1xf32>
    %405 = arith.divf %403, %404 : vector<8x1xf32>
    %406 = vector.broadcast %405 : vector<8x1xf32> to vector<8x32xf32>
    %407 = arith.subf %401, %406 : vector<8x32xf32>
    %408 = arith.mulf %407, %407 : vector<8x32xf32>
    %cst_129 = arith.constant dense<0.000000e+00> : vector<8xf32>
    %409 = vector.multi_reduction <add>, %408, %cst_129 [1] : vector<8x32xf32> to vector<8xf32>
    %410 = vector.shape_cast %409 : vector<8xf32> to vector<8x1xf32>
    %cst_130 = arith.constant 3.200000e+01 : f32
    %411 = vector.broadcast %cst_130 : f32 to vector<8x1xf32>
    %412 = arith.divf %410, %411 : vector<8x1xf32>
    %cst_131 = arith.constant 9.99999974E-6 : f32
    %413 = vector.broadcast %cst_131 : f32 to vector<8x1xf32>
    %414 = arith.addf %412, %413 : vector<8x1xf32>
    %415 = math.rsqrt %414 : vector<8x1xf32>
    %416 = vector.broadcast %415 : vector<8x1xf32> to vector<8x32xf32>
    %417 = arith.mulf %407, %416 : vector<8x32xf32>
    %418 = arith.mulf %417, %29 : vector<8x32xf32>
    %419 = arith.addf %418, %32 : vector<8x32xf32>
    %420 = arith.truncf %419 : vector<8x32xf32> to vector<8x32xbf16>
    %cst_132 = arith.constant dense<0.000000e+00> : vector<8x32xf32>
    %421 = tpu.matmul %420, %4, %cst_132 {dimension_numbers = #tpu.dot_dimension_numbers<[1], [0], [0], [1], [0, 0, 1, 1], [], []>} : vector<8x32xbf16>, vector<32x32xbf16>, vector<8x32xf32> -> vector<8x32xf32>
    %422 = arith.addf %421, %17 : vector<8x32xf32>
    %423 = vector.shape_cast %422 : vector<8x32xf32> to vector<1x8x32xf32>
    %424 = arith.truncf %423 : vector<1x8x32xf32> to vector<1x8x32xbf16>
    %425 = vector.extract_strided_slice %424 {offsets = [0, 0, 0], sizes = [1, 8, 8], strides = [1, 1, 1]} : vector<1x8x32xbf16> to vector<1x8x8xbf16>
    %426 = vector.extract_strided_slice %52 {offsets = [0, 0, 0], sizes = [1, 8, 8], strides = [1, 1, 1]} : vector<1x8x32xbf16> to vector<1x8x8xbf16>
    %427 = vector.extract_strided_slice %53 {offsets = [0, 0, 0], sizes = [1, 8, 8], strides = [1, 1, 1]} : vector<1x8x32xbf16> to vector<1x8x8xbf16>
    "tpu.trace_start"() <{level = 10 : i32, message = "btd,bsd->bts"}> : () -> ()
    %cst_133 = arith.constant dense<0.000000e+00> : vector<1x8x8xf32>
    %428 = tpu.matmul %425, %426, %cst_133 {dimension_numbers = #tpu.dot_dimension_numbers<[2], [2], [1], [1], [0, 0, 0, 1, 1, 1], [0], [0]>} : vector<1x8x8xbf16>, vector<1x8x8xbf16>, vector<1x8x8xf32> -> vector<1x8x8xf32>
    "tpu.trace_stop"() : () -> ()
    %cst_134 = arith.constant dense<0xFF800000> : vector<1x8xf32>
    %429 = vector.multi_reduction <maximumf>, %428, %cst_134 [2] : vector<1x8x8xf32> to vector<1x8xf32>
    %430 = vector.shape_cast %429 : vector<1x8xf32> to vector<1x8x1xf32>
    %431 = vector.broadcast %430 : vector<1x8x1xf32> to vector<1x8x8xf32>
    %432 = arith.subf %428, %431 : vector<1x8x8xf32>
    %433 = math.exp %432 : vector<1x8x8xf32>
    %cst_135 = arith.constant dense<0.000000e+00> : vector<1x8xf32>
    %434 = vector.multi_reduction <add>, %433, %cst_135 [2] : vector<1x8x8xf32> to vector<1x8xf32>
    %435 = vector.shape_cast %434 : vector<1x8xf32> to vector<1x8x1xf32>
    %436 = tpu.reciprocal %435 {approx = true} : vector<1x8x1xf32> -> vector<1x8x1xf32>
    %437 = arith.mulf %435, %436 : vector<1x8x1xf32>
    %cst_136 = arith.constant 2.000000e+00 : f32
    %438 = vector.broadcast %cst_136 : f32 to vector<1x8x1xf32>
    %439 = arith.subf %438, %437 : vector<1x8x1xf32>
    %440 = arith.mulf %436, %439 : vector<1x8x1xf32>
    %441 = vector.broadcast %440 : vector<1x8x1xf32> to vector<1x8x8xf32>
    %442 = arith.mulf %433, %441 : vector<1x8x8xf32>
    %443 = arith.truncf %442 : vector<1x8x8xf32> to vector<1x8x8xbf16>
    "tpu.trace_start"() <{level = 10 : i32, message = "bts,bsd->btd"}> : () -> ()
    %cst_137 = arith.constant dense<0.000000e+00> : vector<1x8x8xf32>
    %444 = tpu.matmul %443, %427, %cst_137 {dimension_numbers = #tpu.dot_dimension_numbers<[2], [1], [1], [2], [0, 0, 0, 1, 1, 2], [0], [0]>} : vector<1x8x8xbf16>, vector<1x8x8xbf16>, vector<1x8x8xf32> -> vector<1x8x8xf32>
    "tpu.trace_stop"() : () -> ()
    %445 = vector.extract_strided_slice %424 {offsets = [0, 0, 8], sizes = [1, 8, 8], strides = [1, 1, 1]} : vector<1x8x32xbf16> to vector<1x8x8xbf16>
    %446 = vector.extract_strided_slice %52 {offsets = [0, 0, 8], sizes = [1, 8, 8], strides = [1, 1, 1]} : vector<1x8x32xbf16> to vector<1x8x8xbf16>
    %447 = vector.extract_strided_slice %53 {offsets = [0, 0, 8], sizes = [1, 8, 8], strides = [1, 1, 1]} : vector<1x8x32xbf16> to vector<1x8x8xbf16>
    "tpu.trace_start"() <{level = 10 : i32, message = "btd,bsd->bts"}> : () -> ()
    %cst_138 = arith.constant dense<0.000000e+00> : vector<1x8x8xf32>
    %448 = tpu.matmul %445, %446, %cst_138 {dimension_numbers = #tpu.dot_dimension_numbers<[2], [2], [1], [1], [0, 0, 0, 1, 1, 1], [0], [0]>} : vector<1x8x8xbf16>, vector<1x8x8xbf16>, vector<1x8x8xf32> -> vector<1x8x8xf32>
    "tpu.trace_stop"() : () -> ()
    %cst_139 = arith.constant dense<0xFF800000> : vector<1x8xf32>
    %449 = vector.multi_reduction <maximumf>, %448, %cst_139 [2] : vector<1x8x8xf32> to vector<1x8xf32>
    %450 = vector.shape_cast %449 : vector<1x8xf32> to vector<1x8x1xf32>
    %451 = vector.broadcast %450 : vector<1x8x1xf32> to vector<1x8x8xf32>
    %452 = arith.subf %448, %451 : vector<1x8x8xf32>
    %453 = math.exp %452 : vector<1x8x8xf32>
    %cst_140 = arith.constant dense<0.000000e+00> : vector<1x8xf32>
    %454 = vector.multi_reduction <add>, %453, %cst_140 [2] : vector<1x8x8xf32> to vector<1x8xf32>
    %455 = vector.shape_cast %454 : vector<1x8xf32> to vector<1x8x1xf32>
    %456 = tpu.reciprocal %455 {approx = true} : vector<1x8x1xf32> -> vector<1x8x1xf32>
    %457 = arith.mulf %455, %456 : vector<1x8x1xf32>
    %cst_141 = arith.constant 2.000000e+00 : f32
    %458 = vector.broadcast %cst_141 : f32 to vector<1x8x1xf32>
    %459 = arith.subf %458, %457 : vector<1x8x1xf32>
    %460 = arith.mulf %456, %459 : vector<1x8x1xf32>
    %461 = vector.broadcast %460 : vector<1x8x1xf32> to vector<1x8x8xf32>
    %462 = arith.mulf %453, %461 : vector<1x8x8xf32>
    %463 = arith.truncf %462 : vector<1x8x8xf32> to vector<1x8x8xbf16>
    "tpu.trace_start"() <{level = 10 : i32, message = "bts,bsd->btd"}> : () -> ()
    %cst_142 = arith.constant dense<0.000000e+00> : vector<1x8x8xf32>
    %464 = tpu.matmul %463, %447, %cst_142 {dimension_numbers = #tpu.dot_dimension_numbers<[2], [1], [1], [2], [0, 0, 0, 1, 1, 2], [0], [0]>} : vector<1x8x8xbf16>, vector<1x8x8xbf16>, vector<1x8x8xf32> -> vector<1x8x8xf32>
    "tpu.trace_stop"() : () -> ()
    %465 = vector.extract_strided_slice %424 {offsets = [0, 0, 16], sizes = [1, 8, 8], strides = [1, 1, 1]} : vector<1x8x32xbf16> to vector<1x8x8xbf16>
    %466 = vector.extract_strided_slice %52 {offsets = [0, 0, 16], sizes = [1, 8, 8], strides = [1, 1, 1]} : vector<1x8x32xbf16> to vector<1x8x8xbf16>
    %467 = vector.extract_strided_slice %53 {offsets = [0, 0, 16], sizes = [1, 8, 8], strides = [1, 1, 1]} : vector<1x8x32xbf16> to vector<1x8x8xbf16>
    "tpu.trace_start"() <{level = 10 : i32, message = "btd,bsd->bts"}> : () -> ()
    %cst_143 = arith.constant dense<0.000000e+00> : vector<1x8x8xf32>
    %468 = tpu.matmul %465, %466, %cst_143 {dimension_numbers = #tpu.dot_dimension_numbers<[2], [2], [1], [1], [0, 0, 0, 1, 1, 1], [0], [0]>} : vector<1x8x8xbf16>, vector<1x8x8xbf16>, vector<1x8x8xf32> -> vector<1x8x8xf32>
    "tpu.trace_stop"() : () -> ()
    %cst_144 = arith.constant dense<0xFF800000> : vector<1x8xf32>
    %469 = vector.multi_reduction <maximumf>, %468, %cst_144 [2] : vector<1x8x8xf32> to vector<1x8xf32>
    %470 = vector.shape_cast %469 : vector<1x8xf32> to vector<1x8x1xf32>
    %471 = vector.broadcast %470 : vector<1x8x1xf32> to vector<1x8x8xf32>
    %472 = arith.subf %468, %471 : vector<1x8x8xf32>
    %473 = math.exp %472 : vector<1x8x8xf32>
    %cst_145 = arith.constant dense<0.000000e+00> : vector<1x8xf32>
    %474 = vector.multi_reduction <add>, %473, %cst_145 [2] : vector<1x8x8xf32> to vector<1x8xf32>
    %475 = vector.shape_cast %474 : vector<1x8xf32> to vector<1x8x1xf32>
    %476 = tpu.reciprocal %475 {approx = true} : vector<1x8x1xf32> -> vector<1x8x1xf32>
    %477 = arith.mulf %475, %476 : vector<1x8x1xf32>
    %cst_146 = arith.constant 2.000000e+00 : f32
    %478 = vector.broadcast %cst_146 : f32 to vector<1x8x1xf32>
    %479 = arith.subf %478, %477 : vector<1x8x1xf32>
    %480 = arith.mulf %476, %479 : vector<1x8x1xf32>
    %481 = vector.broadcast %480 : vector<1x8x1xf32> to vector<1x8x8xf32>
    %482 = arith.mulf %473, %481 : vector<1x8x8xf32>
    %483 = arith.truncf %482 : vector<1x8x8xf32> to vector<1x8x8xbf16>
    "tpu.trace_start"() <{level = 10 : i32, message = "bts,bsd->btd"}> : () -> ()
    %cst_147 = arith.constant dense<0.000000e+00> : vector<1x8x8xf32>
    %484 = tpu.matmul %483, %467, %cst_147 {dimension_numbers = #tpu.dot_dimension_numbers<[2], [1], [1], [2], [0, 0, 0, 1, 1, 2], [0], [0]>} : vector<1x8x8xbf16>, vector<1x8x8xbf16>, vector<1x8x8xf32> -> vector<1x8x8xf32>
    "tpu.trace_stop"() : () -> ()
    %485 = vector.extract_strided_slice %424 {offsets = [0, 0, 24], sizes = [1, 8, 8], strides = [1, 1, 1]} : vector<1x8x32xbf16> to vector<1x8x8xbf16>
    %486 = vector.extract_strided_slice %52 {offsets = [0, 0, 24], sizes = [1, 8, 8], strides = [1, 1, 1]} : vector<1x8x32xbf16> to vector<1x8x8xbf16>
    %487 = vector.extract_strided_slice %53 {offsets = [0, 0, 24], sizes = [1, 8, 8], strides = [1, 1, 1]} : vector<1x8x32xbf16> to vector<1x8x8xbf16>
    "tpu.trace_start"() <{level = 10 : i32, message = "btd,bsd->bts"}> : () -> ()
    %cst_148 = arith.constant dense<0.000000e+00> : vector<1x8x8xf32>
    %488 = tpu.matmul %485, %486, %cst_148 {dimension_numbers = #tpu.dot_dimension_numbers<[2], [2], [1], [1], [0, 0, 0, 1, 1, 1], [0], [0]>} : vector<1x8x8xbf16>, vector<1x8x8xbf16>, vector<1x8x8xf32> -> vector<1x8x8xf32>
    "tpu.trace_stop"() : () -> ()
    %cst_149 = arith.constant dense<0xFF800000> : vector<1x8xf32>
    %489 = vector.multi_reduction <maximumf>, %488, %cst_149 [2] : vector<1x8x8xf32> to vector<1x8xf32>
    %490 = vector.shape_cast %489 : vector<1x8xf32> to vector<1x8x1xf32>
    %491 = vector.broadcast %490 : vector<1x8x1xf32> to vector<1x8x8xf32>
    %492 = arith.subf %488, %491 : vector<1x8x8xf32>
    %493 = math.exp %492 : vector<1x8x8xf32>
    %cst_150 = arith.constant dense<0.000000e+00> : vector<1x8xf32>
    %494 = vector.multi_reduction <add>, %493, %cst_150 [2] : vector<1x8x8xf32> to vector<1x8xf32>
    %495 = vector.shape_cast %494 : vector<1x8xf32> to vector<1x8x1xf32>
    %496 = tpu.reciprocal %495 {approx = true} : vector<1x8x1xf32> -> vector<1x8x1xf32>
    %497 = arith.mulf %495, %496 : vector<1x8x1xf32>
    %cst_151 = arith.constant 2.000000e+00 : f32
    %498 = vector.broadcast %cst_151 : f32 to vector<1x8x1xf32>
    %499 = arith.subf %498, %497 : vector<1x8x1xf32>
    %500 = arith.mulf %496, %499 : vector<1x8x1xf32>
    %501 = vector.broadcast %500 : vector<1x8x1xf32> to vector<1x8x8xf32>
    %502 = arith.mulf %493, %501 : vector<1x8x8xf32>
    %503 = arith.truncf %502 : vector<1x8x8xf32> to vector<1x8x8xbf16>
    "tpu.trace_start"() <{level = 10 : i32, message = "bts,bsd->btd"}> : () -> ()
    %cst_152 = arith.constant dense<0.000000e+00> : vector<1x8x8xf32>
    %504 = tpu.matmul %503, %487, %cst_152 {dimension_numbers = #tpu.dot_dimension_numbers<[2], [1], [1], [2], [0, 0, 0, 1, 1, 2], [0], [0]>} : vector<1x8x8xbf16>, vector<1x8x8xbf16>, vector<1x8x8xf32> -> vector<1x8x8xf32>
    "tpu.trace_stop"() : () -> ()
    %505 = tpu.concatenate %444, %464, %484, %504 in 2 : vector<1x8x8xf32>, vector<1x8x8xf32>, vector<1x8x8xf32>, vector<1x8x8xf32> -> vector<1x8x32xf32>
    %506 = vector.shape_cast %505 : vector<1x8x32xf32> to vector<8x32xf32>
    %507 = arith.truncf %506 : vector<8x32xf32> to vector<8x32xbf16>
    %cst_153 = arith.constant dense<0.000000e+00> : vector<8x32xf32>
    %508 = tpu.matmul %507, %6, %cst_153 {dimension_numbers = #tpu.dot_dimension_numbers<[1], [0], [0], [1], [0, 0, 1, 1], [], []>} : vector<8x32xbf16>, vector<32x32xbf16>, vector<8x32xf32> -> vector<8x32xf32>
    %509 = arith.addf %508, %20 : vector<8x32xf32>
    %510 = arith.addf %419, %509 : vector<8x32xf32>
    %cst_154 = arith.constant dense<0.000000e+00> : vector<8xf32>
    %511 = vector.multi_reduction <add>, %510, %cst_154 [1] : vector<8x32xf32> to vector<8xf32>
    %512 = vector.shape_cast %511 : vector<8xf32> to vector<8x1xf32>
    %cst_155 = arith.constant 3.200000e+01 : f32
    %513 = vector.broadcast %cst_155 : f32 to vector<8x1xf32>
    %514 = arith.divf %512, %513 : vector<8x1xf32>
    %515 = vector.broadcast %514 : vector<8x1xf32> to vector<8x32xf32>
    %516 = arith.subf %510, %515 : vector<8x32xf32>
    %517 = arith.mulf %516, %516 : vector<8x32xf32>
    %cst_156 = arith.constant dense<0.000000e+00> : vector<8xf32>
    %518 = vector.multi_reduction <add>, %517, %cst_156 [1] : vector<8x32xf32> to vector<8xf32>
    %519 = vector.shape_cast %518 : vector<8xf32> to vector<8x1xf32>
    %cst_157 = arith.constant 3.200000e+01 : f32
    %520 = vector.broadcast %cst_157 : f32 to vector<8x1xf32>
    %521 = arith.divf %519, %520 : vector<8x1xf32>
    %cst_158 = arith.constant 9.99999974E-6 : f32
    %522 = vector.broadcast %cst_158 : f32 to vector<8x1xf32>
    %523 = arith.addf %521, %522 : vector<8x1xf32>
    %524 = math.rsqrt %523 : vector<8x1xf32>
    %525 = vector.broadcast %524 : vector<8x1xf32> to vector<8x32xf32>
    %526 = arith.mulf %516, %525 : vector<8x32xf32>
    %527 = arith.mulf %526, %35 : vector<8x32xf32>
    %528 = arith.addf %527, %38 : vector<8x32xf32>
    %529 = arith.truncf %528 : vector<8x32xf32> to vector<8x32xbf16>
    %cst_159 = arith.constant dense<0.000000e+00> : vector<8x64xf32>
    %530 = tpu.matmul %529, %7, %cst_159 {dimension_numbers = #tpu.dot_dimension_numbers<[1], [0], [0], [1], [0, 0, 1, 1], [], []>} : vector<8x32xbf16>, vector<32x64xbf16>, vector<8x64xf32> -> vector<8x64xf32>
    %531 = arith.addf %530, %23 : vector<8x64xf32>
    %cst_160 = arith.constant 0.000000e+00 : f32
    %532 = vector.broadcast %cst_160 : f32 to vector<8x64xf32>
    %533 = arith.maximumf %531, %532 : vector<8x64xf32>
    %534 = arith.truncf %533 : vector<8x64xf32> to vector<8x64xbf16>
    %cst_161 = arith.constant dense<0.000000e+00> : vector<8x32xf32>
    %535 = tpu.matmul %534, %8, %cst_161 {dimension_numbers = #tpu.dot_dimension_numbers<[1], [0], [0], [1], [0, 0, 1, 1], [], []>} : vector<8x64xbf16>, vector<64x32xbf16>, vector<8x32xf32> -> vector<8x32xf32>
    %536 = arith.addf %535, %26 : vector<8x32xf32>
    %537 = arith.addf %528, %536 : vector<8x32xf32>
    %cst_162 = arith.constant dense<0.000000e+00> : vector<8xf32>
    %538 = vector.multi_reduction <add>, %537, %cst_162 [1] : vector<8x32xf32> to vector<8xf32>
    %539 = vector.shape_cast %538 : vector<8xf32> to vector<8x1xf32>
    %cst_163 = arith.constant 3.200000e+01 : f32
    %540 = vector.broadcast %cst_163 : f32 to vector<8x1xf32>
    %541 = arith.divf %539, %540 : vector<8x1xf32>
    %542 = vector.broadcast %541 : vector<8x1xf32> to vector<8x32xf32>
    %543 = arith.subf %537, %542 : vector<8x32xf32>
    %544 = arith.mulf %543, %543 : vector<8x32xf32>
    %cst_164 = arith.constant dense<0.000000e+00> : vector<8xf32>
    %545 = vector.multi_reduction <add>, %544, %cst_164 [1] : vector<8x32xf32> to vector<8xf32>
    %546 = vector.shape_cast %545 : vector<8xf32> to vector<8x1xf32>
    %cst_165 = arith.constant 3.200000e+01 : f32
    %547 = vector.broadcast %cst_165 : f32 to vector<8x1xf32>
    %548 = arith.divf %546, %547 : vector<8x1xf32>
    %cst_166 = arith.constant 9.99999974E-6 : f32
    %549 = vector.broadcast %cst_166 : f32 to vector<8x1xf32>
    %550 = arith.addf %548, %549 : vector<8x1xf32>
    %551 = math.rsqrt %550 : vector<8x1xf32>
    %552 = vector.broadcast %551 : vector<8x1xf32> to vector<8x32xf32>
    %553 = arith.mulf %543, %552 : vector<8x32xf32>
    %554 = arith.mulf %553, %41 : vector<8x32xf32>
    %555 = arith.addf %554, %44 : vector<8x32xf32>
    %c0_167 = arith.constant 0 : index
    %c0_168 = arith.constant 0 : index
    %556 = vector.load %arg23[%c0_167, %c0_168] : memref<8x32xf32, #tpu.memory_space<vmem>>, vector<8x32xf32>
    tpu.vector_store %arg23[%c0_167, %c0_168], %555 {strides = array<i32>} : memref<8x32xf32, #tpu.memory_space<vmem>>, vector<8x32xf32>,
    return
  }
  func.func @transform_0(%arg0: i32) -> (i32, i32) {
    %c0_i32 = arith.constant 0 : i32
    %c0_i32_0 = arith.constant 0 : i32
    return %arg0, %c0_i32 : i32, i32
  }
  func.func @transform_1(%arg0: i32) -> (i32, i32) {
    %c0_i32 = arith.constant 0 : i32
    %c0_i32_0 = arith.constant 0 : i32
    return %arg0, %c0_i32 : i32, i32
  }
  func.func @transform_2(%arg0: i32) -> (i32, i32) {
    %c0_i32 = arith.constant 0 : i32
    %c0_i32_0 = arith.constant 0 : i32
    %c0_i32_1 = arith.constant 0 : i32
    return %c0_i32, %c0_i32_0 : i32, i32
  }
  func.func @transform_3(%arg0: i32) -> (i32, i32) {
    %c0_i32 = arith.constant 0 : i32
    %c0_i32_0 = arith.constant 0 : i32
    %c0_i32_1 = arith.constant 0 : i32
    return %c0_i32, %c0_i32_0 : i32, i32
  }
  func.func @transform_4(%arg0: i32) -> (i32, i32) {
    %c0_i32 = arith.constant 0 : i32
    %c0_i32_0 = arith.constant 0 : i32
    %c0_i32_1 = arith.constant 0 : i32
    return %c0_i32, %c0_i32_0 : i32, i32
  }
  func.func @transform_5(%arg0: i32) -> (i32, i32) {
    %c0_i32 = arith.constant 0 : i32
    %c0_i32_0 = arith.constant 0 : i32
    %c0_i32_1 = arith.constant 0 : i32
    return %c0_i32, %c0_i32_0 : i32, i32
  }
  func.func @transform_6(%arg0: i32) -> (i32, i32) {
    %c0_i32 = arith.constant 0 : i32
    %c0_i32_0 = arith.constant 0 : i32
    %c0_i32_1 = arith.constant 0 : i32
    return %c0_i32, %c0_i32_0 : i32, i32
  }
  func.func @transform_7(%arg0: i32) -> (i32, i32) {
    %c0_i32 = arith.constant 0 : i32
    %c0_i32_0 = arith.constant 0 : i32
    %c0_i32_1 = arith.constant 0 : i32
    return %c0_i32, %c0_i32_0 : i32, i32
  }
  func.func @transform_8(%arg0: i32) -> (i32, i32) {
    %c0_i32 = arith.constant 0 : i32
    %c0_i32_0 = arith.constant 0 : i32
    %c0_i32_1 = arith.constant 0 : i32
    return %c0_i32, %c0_i32_0 : i32, i32
  }
  func.func @transform_9(%arg0: i32) -> (i32, i32) {
    %c0_i32 = arith.constant 0 : i32
    %c0_i32_0 = arith.constant 0 : i32
    %c0_i32_1 = arith.constant 0 : i32
    return %c0_i32, %c0_i32_0 : i32, i32
  }
  func.func @transform_10(%arg0: i32) -> (i32, i32) {
    %c0_i32 = arith.constant 0 : i32
    %c0_i32_0 = arith.constant 0 : i32
    %c0_i32_1 = arith.constant 0 : i32
    return %c0_i32, %c0_i32_0 : i32, i32
  }
  func.func @transform_11(%arg0: i32) -> (i32, i32) {
    %c0_i32 = arith.constant 0 : i32
    %c0_i32_0 = arith.constant 0 : i32
    %c0_i32_1 = arith.constant 0 : i32
    return %c0_i32, %c0_i32_0 : i32, i32
  }
  func.func @transform_12(%arg0: i32) -> (i32, i32) {
    %c0_i32 = arith.constant 0 : i32
    %c0_i32_0 = arith.constant 0 : i32
    %c0_i32_1 = arith.constant 0 : i32
    return %c0_i32, %c0_i32_0 : i32, i32
  }
  func.func @transform_13(%arg0: i32) -> (i32, i32) {
    %c0_i32 = arith.constant 0 : i32
    %c0_i32_0 = arith.constant 0 : i32
    %c0_i32_1 = arith.constant 0 : i32
    return %c0_i32, %c0_i32_0 : i32, i32
  }
  func.func @transform_14(%arg0: i32) -> (i32, i32) {
    %c0_i32 = arith.constant 0 : i32
    %c0_i32_0 = arith.constant 0 : i32
    %c0_i32_1 = arith.constant 0 : i32
    return %c0_i32, %c0_i32_0 : i32, i32
  }
  func.func @transform_15(%arg0: i32) -> (i32, i32) {
    %c0_i32 = arith.constant 0 : i32
    %c0_i32_0 = arith.constant 0 : i32
    %c0_i32_1 = arith.constant 0 : i32
    return %c0_i32, %c0_i32_0 : i32, i32
  }
  func.func @transform_16(%arg0: i32) -> (i32, i32) {
    %c0_i32 = arith.constant 0 : i32
    %c0_i32_0 = arith.constant 0 : i32
    %c0_i32_1 = arith.constant 0 : i32
    return %c0_i32, %c0_i32_0 : i32, i32
  }
  func.func @transform_17(%arg0: i32) -> (i32, i32) {
    %c0_i32 = arith.constant 0 : i32
    %c0_i32_0 = arith.constant 0 : i32
    %c0_i32_1 = arith.constant 0 : i32
    return %c0_i32, %c0_i32_0 : i32, i32
  }
  func.func @transform_18(%arg0: i32) -> (i32, i32) {
    %c0_i32 = arith.constant 0 : i32
    %c0_i32_0 = arith.constant 0 : i32
    %c0_i32_1 = arith.constant 0 : i32
    return %c0_i32, %c0_i32_0 : i32, i32
  }
  func.func @transform_19(%arg0: i32) -> (i32, i32) {
    %c0_i32 = arith.constant 0 : i32
    %c0_i32_0 = arith.constant 0 : i32
    %c0_i32_1 = arith.constant 0 : i32
    return %c0_i32, %c0_i32_0 : i32, i32
  }
  func.func @transform_20(%arg0: i32) -> (i32, i32) {
    %c0_i32 = arith.constant 0 : i32
    %c0_i32_0 = arith.constant 0 : i32
    %c0_i32_1 = arith.constant 0 : i32
    return %c0_i32, %c0_i32_0 : i32, i32
  }
  func.func @transform_21(%arg0: i32) -> (i32, i32) {
    %c0_i32 = arith.constant 0 : i32
    %c0_i32_0 = arith.constant 0 : i32
    %c0_i32_1 = arith.constant 0 : i32
    return %c0_i32, %c0_i32_0 : i32, i32
  }
  func.func @transform_22(%arg0: i32) -> (i32, i32) {
    %c0_i32 = arith.constant 0 : i32
    %c0_i32_0 = arith.constant 0 : i32
    return %arg0, %c0_i32 : i32, i32
  }
}

module attributes {stable_mosaic.version = 11 : i64} {
  func.func @_decoder_kernel(%arg0: i32, %arg1: memref<8x32xf32, #tpu.memory_space<vmem>>, %arg2: memref<8x32xbf16, #tpu.memory_space<vmem>>, %arg3: memref<32x96xbf16, #tpu.memory_space<vmem>>, %arg4: memref<1x96xf32, #tpu.memory_space<vmem>>, %arg5: memref<32x32xbf16, #tpu.memory_space<vmem>>, %arg6: memref<1x32xf32, #tpu.memory_space<vmem>>, %arg7: memref<32x32xbf16, #tpu.memory_space<vmem>>, %arg8: memref<1x32xf32, #tpu.memory_space<vmem>>, %arg9: memref<32x64xbf16, #tpu.memory_space<vmem>>, %arg10: memref<1x64xf32, #tpu.memory_space<vmem>>, %arg11: memref<32x32xbf16, #tpu.memory_space<vmem>>, %arg12: memref<1x32xf32, #tpu.memory_space<vmem>>, %arg13: memref<32x64xbf16, #tpu.memory_space<vmem>>, %arg14: memref<1x64xf32, #tpu.memory_space<vmem>>, %arg15: memref<64x32xbf16, #tpu.memory_space<vmem>>, %arg16: memref<1x32xf32, #tpu.memory_space<vmem>>, %arg17: memref<1x32xf32, #tpu.memory_space<vmem>>, %arg18: memref<1x32xf32, #tpu.memory_space<vmem>>, %arg19: memref<1x32xf32, #tpu.memory_space<vmem>>, %arg20: memref<1x32xf32, #tpu.memory_space<vmem>>, %arg21: memref<1x32xf32, #tpu.memory_space<vmem>>, %arg22: memref<1x32xf32, #tpu.memory_space<vmem>>, %arg23: memref<8x32xf32, #tpu.memory_space<vmem>>) attributes {dimension_semantics = [#tpu.dimension_semantics<parallel>], iteration_bounds = array<i64: 2>, scalar_prefetch = 0 : i64, scratch_operands = 0 : i64, tpu.core_type = #tpu.core_type<tc>, window_params = [{transform_indices = @transform_0, window_bounds = array<i64: 8, 32>}, {transform_indices = @transform_1, window_bounds = array<i64: 8, 32>}, {pipeline_mode = #tpu.pipeline_mode<synchronous>, transform_indices = @transform_2, window_bounds = array<i64: 32, 96>}, {pipeline_mode = #tpu.pipeline_mode<synchronous>, transform_indices = @transform_3, window_bounds = array<i64: 1, 96>}, {pipeline_mode = #tpu.pipeline_mode<synchronous>, transform_indices = @transform_4, window_bounds = array<i64: 32, 32>}, {pipeline_mode = #tpu.pipeline_mode<synchronous>, transform_indices = @transform_5, window_bounds = array<i64: 1, 32>}, {pipeline_mode = #tpu.pipeline_mode<synchronous>, transform_indices = @transform_6, window_bounds = array<i64: 32, 32>}, {pipeline_mode = #tpu.pipeline_mode<synchronous>, transform_indices = @transform_7, window_bounds = array<i64: 1, 32>}, {pipeline_mode = #tpu.pipeline_mode<synchronous>, transform_indices = @transform_8, window_bounds = array<i64: 32, 64>}, {pipeline_mode = #tpu.pipeline_mode<synchronous>, transform_indices = @transform_9, window_bounds = array<i64: 1, 64>}, {pipeline_mode = #tpu.pipeline_mode<synchronous>, transform_indices = @transform_10, window_bounds = array<i64: 32, 32>}, {pipeline_mode = #tpu.pipeline_mode<synchronous>, transform_indices = @transform_11, window_bounds = array<i64: 1, 32>}, {pipeline_mode = #tpu.pipeline_mode<synchronous>, transform_indices = @transform_12, window_bounds = array<i64: 32, 64>}, {pipeline_mode = #tpu.pipeline_mode<synchronous>, transform_indices = @transform_13, window_bounds = array<i64: 1, 64>}, {pipeline_mode = #tpu.pipeline_mode<synchronous>, transform_indices = @transform_14, window_bounds = array<i64: 64, 32>}, {pipeline_mode = #tpu.pipeline_mode<synchronous>, transform_indices = @transform_15, window_bounds = array<i64: 1, 32>}, {pipeline_mode = #tpu.pipeline_mode<synchronous>, transform_indices = @transform_16, window_bounds = array<i64: 1, 32>}, {pipeline_mode = #tpu.pipeline_mode<synchronous>, transform_indices = @transform_17, window_bounds = array<i64: 1, 32>}, {pipeline_mode = #tpu.pipeline_mode<synchronous>, transform_indices = @transform_18, window_bounds = array<i64: 1, 32>}, {pipeline_mode = #tpu.pipeline_mode<synchronous>, transform_indices = @transform_19, window_bounds = array<i64: 1, 32>}, {pipeline_mode = #tpu.pipeline_mode<synchronous>, transform_indices = @transform_20, window_bounds = array<i64: 1, 32>}, {pipeline_mode = #tpu.pipeline_mode<synchronous>, transform_indices = @transform_21, window_bounds = array<i64: 1, 32>}, {transform_indices = @transform_22, window_bounds = array<i64: 8, 32>}]} {
    %c0 = arith.constant 0 : index
    %c0_0 = arith.constant 0 : index
    %0 = vector.load %arg1[%c0, %c0_0] : memref<8x32xf32, #tpu.memory_space<vmem>>, vector<8x32xf32>
    %c0_1 = arith.constant 0 : index
    %c0_2 = arith.constant 0 : index
    %1 = vector.load %arg2[%c0_1, %c0_2] : memref<8x32xbf16, #tpu.memory_space<vmem>>, vector<8x32xbf16>
    %c0_3 = arith.constant 0 : index
    %c0_4 = arith.constant 0 : index
    %2 = vector.load %arg3[%c0_3, %c0_4] : memref<32x96xbf16, #tpu.memory_space<vmem>>, vector<32x96xbf16>
    %c0_5 = arith.constant 0 : index
    %c0_6 = arith.constant 0 : index
    %3 = vector.load %arg5[%c0_5, %c0_6] : memref<32x32xbf16, #tpu.memory_space<vmem>>, vector<32x32xbf16>
    %c0_7 = arith.constant 0 : index
    %c0_8 = arith.constant 0 : index
    %4 = vector.load %arg7[%c0_7, %c0_8] : memref<32x32xbf16, #tpu.memory_space<vmem>>, vector<32x32xbf16>
    %c0_9 = arith.constant 0 : index
    %c0_10 = arith.constant 0 : index
    %5 = vector.load %arg9[%c0_9, %c0_10] : memref<32x64xbf16, #tpu.memory_space<vmem>>, vector<32x64xbf16>
    %c0_11 = arith.constant 0 : index
    %c0_12 = arith.constant 0 : index
    %6 = vector.load %arg11[%c0_11, %c0_12] : memref<32x32xbf16, #tpu.memory_space<vmem>>, vector<32x32xbf16>
    %c0_13 = arith.constant 0 : index
    %c0_14 = arith.constant 0 : index
    %7 = vector.load %arg13[%c0_13, %c0_14] : memref<32x64xbf16, #tpu.memory_space<vmem>>, vector<32x64xbf16>
    %c0_15 = arith.constant 0 : index
    %c0_16 = arith.constant 0 : index
    %8 = vector.load %arg15[%c0_15, %c0_16] : memref<64x32xbf16, #tpu.memory_space<vmem>>, vector<64x32xbf16>
    %c0_17 = arith.constant 0 : index
    %c0_18 = arith.constant 0 : index
    %9 = vector.load %arg4[%c0_17, %c0_18] : memref<1x96xf32, #tpu.memory_space<vmem>>, vector<1x96xf32>
    %10 = vector.shape_cast %9 : vector<1x96xf32> to vector<1x96xf32>
    %11 = vector.broadcast %10 : vector<1x96xf32> to vector<8x96xf32>
    %c0_19 = arith.constant 0 : index
    %c0_20 = arith.constant 0 : index
    %12 = vector.load %arg6[%c0_19, %c0_20] : memref<1x32xf32, #tpu.memory_space<vmem>>, vector<1x32xf32>
    %13 = vector.shape_cast %12 : vector<1x32xf32> to vector<1x32xf32>
    %14 = vector.broadcast %13 : vector<1x32xf32> to vector<8x32xf32>
    %c0_21 = arith.constant 0 : index
    %c0_22 = arith.constant 0 : index
    %15 = vector.load %arg8[%c0_21, %c0_22] : memref<1x32xf32, #tpu.memory_space<vmem>>, vector<1x32xf32>
    %16 = vector.shape_cast %15 : vector<1x32xf32> to vector<1x32xf32>
    %17 = vector.broadcast %16 : vector<1x32xf32> to vector<8x32xf32>
    %c0_23 = arith.constant 0 : index
    %c0_24 = arith.constant 0 : index
    %18 = vector.load %arg12[%c0_23, %c0_24] : memref<1x32xf32, #tpu.memory_space<vmem>>, vector<1x32xf32>
    %19 = vector.shape_cast %18 : vector<1x32xf32> to vector<1x32xf32>
    %20 = vector.broadcast %19 : vector<1x32xf32> to vector<8x32xf32>
    %c0_25 = arith.constant 0 : index
    %c0_26 = arith.constant 0 : index
    %21 = vector.load %arg14[%c0_25, %c0_26] : memref<1x64xf32, #tpu.memory_space<vmem>>, vector<1x64xf32>
    %22 = vector.shape_cast %21 : vector<1x64xf32> to vector<1x64xf32>
    %23 = vector.broadcast %22 : vector<1x64xf32> to vector<8x64xf32>
    %c0_27 = arith.constant 0 : index
    %c0_28 = arith.constant 0 : index
    %24 = vector.load %arg16[%c0_27, %c0_28] : memref<1x32xf32, #tpu.memory_space<vmem>>, vector<1x32xf32>
    %25 = vector.shape_cast %24 : vector<1x32xf32> to vector<1x32xf32>
    %26 = vector.broadcast %25 : vector<1x32xf32> to vector<8x32xf32>
    %c0_29 = arith.constant 0 : index
    %c0_30 = arith.constant 0 : index
    %27 = vector.load %arg17[%c0_29, %c0_30] : memref<1x32xf32, #tpu.memory_space<vmem>>, vector<1x32xf32>
    %28 = vector.shape_cast %27 : vector<1x32xf32> to vector<1x32xf32>
    %29 = vector.broadcast %28 : vector<1x32xf32> to vector<8x32xf32>
    %c0_31 = arith.constant 0 : index
    %c0_32 = arith.constant 0 : index
    %30 = vector.load %arg18[%c0_31, %c0_32] : memref<1x32xf32, #tpu.memory_space<vmem>>, vector<1x32xf32>
    %31 = vector.shape_cast %30 : vector<1x32xf32> to vector<1x32xf32>
    %32 = vector.broadcast %31 : vector<1x32xf32> to vector<8x32xf32>
    %c0_33 = arith.constant 0 : index
    %c0_34 = arith.constant 0 : index
    %33 = vector.load %arg19[%c0_33, %c0_34] : memref<1x32xf32, #tpu.memory_space<vmem>>, vector<1x32xf32>
    %34 = vector.shape_cast %33 : vector<1x32xf32> to vector<1x32xf32>
    %35 = vector.broadcast %34 : vector<1x32xf32> to vector<8x32xf32>
    %c0_35 = arith.constant 0 : index
    %c0_36 = arith.constant 0 : index
    %36 = vector.load %arg20[%c0_35, %c0_36] : memref<1x32xf32, #tpu.memory_space<vmem>>, vector<1x32xf32>
    %37 = vector.shape_cast %36 : vector<1x32xf32> to vector<1x32xf32>
    %38 = vector.broadcast %37 : vector<1x32xf32> to vector<8x32xf32>
    %c0_37 = arith.constant 0 : index
    %c0_38 = arith.constant 0 : index
    %39 = vector.load %arg21[%c0_37, %c0_38] : memref<1x32xf32, #tpu.memory_space<vmem>>, vector<1x32xf32>
    %40 = vector.shape_cast %39 : vector<1x32xf32> to vector<1x32xf32>
    %41 = vector.broadcast %40 : vector<1x32xf32> to vector<8x32xf32>
    %c0_39 = arith.constant 0 : index
    %c0_40 = arith.constant 0 : index
    %42 = vector.load %arg22[%c0_39, %c0_40] : memref<1x32xf32, #tpu.memory_space<vmem>>, vector<1x32xf32>
    %43 = vector.shape_cast %42 : vector<1x32xf32> to vector<1x32xf32>
    %44 = vector.broadcast %43 : vector<1x32xf32> to vector<8x32xf32>
    %c0_41 = arith.constant 0 : index
    %c0_42 = arith.constant 0 : index
    %45 = vector.load %arg10[%c0_41, %c0_42] : memref<1x64xf32, #tpu.memory_space<vmem>>, vector<1x64xf32>
    %46 = vector.shape_cast %45 : vector<1x64xf32> to vector<1x64xf32>
    %47 = vector.broadcast %46 : vector<1x64xf32> to vector<8x64xf32>
    %cst = arith.constant dense<0.000000e+00> : vector<8x64xf32>
    %48 = tpu.matmul %1, %5, %cst {dimension_numbers = #tpu.dot_dimension_numbers<[1], [0], [0], [1], [0, 0, 1, 1], [], []>} : vector<8x32xbf16>, vector<32x64xbf16>, vector<8x64xf32> -> vector<8x64xf32>
    %49 = arith.addf %48, %47 : vector<8x64xf32>
    %50 = vector.shape_cast %49 : vector<8x64xf32> to vector<1x8x64xf32>
    %51 = arith.truncf %50 : vector<1x8x64xf32> to vector<1x8x64xbf16>
    %52 = vector.extract_strided_slice %51 {offsets = [0, 0, 0], sizes = [1, 8, 32], strides = [1, 1, 1]} : vector<1x8x64xbf16> to vector<1x8x32xbf16>
    %53 = vector.extract_strided_slice %51 {offsets = [0, 0, 32], sizes = [1, 8, 32], strides = [1, 1, 1]} : vector<1x8x64xbf16> to vector<1x8x32xbf16>
    %54 = arith.truncf %0 : vector<8x32xf32> to vector<8x32xbf16>
    %cst_43 = arith.constant dense<0.000000e+00> : vector<8x96xf32>
    %55 = tpu.matmul %54, %2, %cst_43 {dimension_numbers = #tpu.dot_dimension_numbers<[1], [0], [0], [1], [0, 0, 1, 1], [], []>} : vector<8x32xbf16>, vector<32x96xbf16>, vector<8x96xf32> -> vector<8x96xf32>
    %56 = arith.addf %55, %11 : vector<8x96xf32>
    %57 = vector.extract_strided_slice %56 {offsets = [0, 32], sizes = [8, 64], strides = [1, 1]} : vector<8x96xf32> to vector<8x64xf32>
    %58 = vector.shape_cast %57 : vector<8x64xf32> to vector<1x8x64xf32>
    %59 = arith.truncf %58 : vector<1x8x64xf32> to vector<1x8x64xbf16>
    %60 = vector.extract_strided_slice %56 {offsets = [0, 0], sizes = [8, 32], strides = [1, 1]} : vector<8x96xf32> to vector<8x32xf32>
    %61 = vector.extract_strided_slice %59 {offsets = [0, 0, 0], sizes = [1, 8, 32], strides = [1, 1, 1]} : vector<1x8x64xbf16> to vector<1x8x32xbf16>
    %62 = vector.extract_strided_slice %59 {offsets = [0, 0, 32], sizes = [1, 8, 32], strides = [1, 1, 1]} : vector<1x8x64xbf16> to vector<1x8x32xbf16>
    %63 = vector.shape_cast %60 : vector<8x32xf32> to vector<1x8x32xf32>
    %64 = arith.truncf %63 : vector<1x8x32xf32> to vector<1x8x32xbf16>
    %65 = vector.extract_strided_slice %64 {offsets = [0, 0, 0], sizes = [1, 8, 8], strides = [1, 1, 1]} : vector<1x8x32xbf16> to vector<1x8x8xbf16>
    %66 = vector.extract_strided_slice %61 {offsets = [0, 0, 0], sizes = [1, 8, 8], strides = [1, 1, 1]} : vector<1x8x32xbf16> to vector<1x8x8xbf16>
    %67 = vector.extract_strided_slice %62 {offsets = [0, 0, 0], sizes = [1, 8, 8], strides = [1, 1, 1]} : vector<1x8x32xbf16> to vector<1x8x8xbf16>
    "tpu.trace_start"() <{level = 10 : i32, message = "btd,bsd->bts"}> : () -> ()
    %cst_44 = arith.constant dense<0.000000e+00> : vector<1x8x8xf32>
    %68 = tpu.matmul %65, %66, %cst_44 {dimension_numbers = #tpu.dot_dimension_numbers<[2], [2], [1], [1], [0, 0, 0, 1, 1, 1], [0], [0]>} : vector<1x8x8xbf16>, vector<1x8x8xbf16>, vector<1x8x8xf32> -> vector<1x8x8xf32>
    "tpu.trace_stop"() : () -> ()
    %cst_45 = arith.constant dense<0xFF800000> : vector<1x8xf32>
    %69 = vector.multi_reduction <maximumf>, %68, %cst_45 [2] : vector<1x8x8xf32> to vector<1x8xf32>
    %70 = vector.shape_cast %69 : vector<1x8xf32> to vector<1x8x1xf32>
    %71 = vector.broadcast %70 : vector<1x8x1xf32> to vector<1x8x8xf32>
    %72 = arith.subf %68, %71 : vector<1x8x8xf32>
    %73 = math.exp %72 : vector<1x8x8xf32>
    %cst_46 = arith.constant dense<0.000000e+00> : vector<1x8xf32>
    %74 = vector.multi_reduction <add>, %73, %cst_46 [2] : vector<1x8x8xf32> to vector<1x8xf32>
    %75 = vector.shape_cast %74 : vector<1x8xf32> to vector<1x8x1xf32>
    %76 = tpu.reciprocal %75 {approx = true} : vector<1x8x1xf32> -> vector<1x8x1xf32>
    %77 = arith.mulf %75, %76 : vector<1x8x1xf32>
    %cst_47 = arith.constant 2.000000e+00 : f32
    %78 = vector.broadcast %cst_47 : f32 to vector<1x8x1xf32>
    %79 = arith.subf %78, %77 : vector<1x8x1xf32>
    %80 = arith.mulf %76, %79 : vector<1x8x1xf32>
    %81 = vector.broadcast %80 : vector<1x8x1xf32> to vector<1x8x8xf32>
    %82 = arith.mulf %73, %81 : vector<1x8x8xf32>
    %83 = arith.truncf %82 : vector<1x8x8xf32> to vector<1x8x8xbf16>
    "tpu.trace_start"() <{level = 10 : i32, message = "bts,bsd->btd"}> : () -> ()
    %cst_48 = arith.constant dense<0.000000e+00> : vector<1x8x8xf32>
    %84 = tpu.matmul %83, %67, %cst_48 {dimension_numbers = #tpu.dot_dimension_numbers<[2], [1], [1], [2], [0, 0, 0, 1, 1, 2], [0], [0]>} : vector<1x8x8xbf16>, vector<1x8x8xbf16>, vector<1x8x8xf32> -> vector<1x8x8xf32>
    "tpu.trace_stop"() : () -> ()
    %85 = vector.extract_strided_slice %64 {offsets = [0, 0, 8], sizes = [1, 8, 8], strides = [1, 1, 1]} : vector<1x8x32xbf16> to vector<1x8x8xbf16>
    %86 = vector.extract_strided_slice %61 {offsets = [0, 0, 8], sizes = [1, 8, 8], strides = [1, 1, 1]} : vector<1x8x32xbf16> to vector<1x8x8xbf16>
    %87 = vector.extract_strided_slice %62 {offsets = [0, 0, 8], sizes = [1, 8, 8], strides = [1, 1, 1]} : vector<1x8x32xbf16> to vector<1x8x8xbf16>
    "tpu.trace_start"() <{level = 10 : i32, message = "btd,bsd->bts"}> : () -> ()
    %cst_49 = arith.constant dense<0.000000e+00> : vector<1x8x8xf32>
    %88 = tpu.matmul %85, %86, %cst_49 {dimension_numbers = #tpu.dot_dimension_numbers<[2], [2], [1], [1], [0, 0, 0, 1, 1, 1], [0], [0]>} : vector<1x8x8xbf16>, vector<1x8x8xbf16>, vector<1x8x8xf32> -> vector<1x8x8xf32>
    "tpu.trace_stop"() : () -> ()
    %cst_50 = arith.constant dense<0xFF800000> : vector<1x8xf32>
    %89 = vector.multi_reduction <maximumf>, %88, %cst_50 [2] : vector<1x8x8xf32> to vector<1x8xf32>
    %90 = vector.shape_cast %89 : vector<1x8xf32> to vector<1x8x1xf32>
    %91 = vector.broadcast %90 : vector<1x8x1xf32> to vector<1x8x8xf32>
    %92 = arith.subf %88, %91 : vector<1x8x8xf32>
    %93 = math.exp %92 : vector<1x8x8xf32>
    %cst_51 = arith.constant dense<0.000000e+00> : vector<1x8xf32>
    %94 = vector.multi_reduction <add>, %93, %cst_51 [2] : vector<1x8x8xf32> to vector<1x8xf32>
    %95 = vector.shape_cast %94 : vector<1x8xf32> to vector<1x8x1xf32>
    %96 = tpu.reciprocal %95 {approx = true} : vector<1x8x1xf32> -> vector<1x8x1xf32>
    %97 = arith.mulf %95, %96 : vector<1x8x1xf32>
    %cst_52 = arith.constant 2.000000e+00 : f32
    %98 = vector.broadcast %cst_52 : f32 to vector<1x8x1xf32>
    %99 = arith.subf %98, %97 : vector<1x8x1xf32>
    %100 = arith.mulf %96, %99 : vector<1x8x1xf32>
    %101 = vector.broadcast %100 : vector<1x8x1xf32> to vector<1x8x8xf32>
    %102 = arith.mulf %93, %101 : vector<1x8x8xf32>
    %103 = arith.truncf %102 : vector<1x8x8xf32> to vector<1x8x8xbf16>
    "tpu.trace_start"() <{level = 10 : i32, message = "bts,bsd->btd"}> : () -> ()
    %cst_53 = arith.constant dense<0.000000e+00> : vector<1x8x8xf32>
    %104 = tpu.matmul %103, %87, %cst_53 {dimension_numbers = #tpu.dot_dimension_numbers<[2], [1], [1], [2], [0, 0, 0, 1, 1, 2], [0], [0]>} : vector<1x8x8xbf16>, vector<1x8x8xbf16>, vector<1x8x8xf32> -> vector<1x8x8xf32>
    "tpu.trace_stop"() : () -> ()
    %105 = vector.extract_strided_slice %64 {offsets = [0, 0, 16], sizes = [1, 8, 8], strides = [1, 1, 1]} : vector<1x8x32xbf16> to vector<1x8x8xbf16>
    %106 = vector.extract_strided_slice %61 {offsets = [0, 0, 16], sizes = [1, 8, 8], strides = [1, 1, 1]} : vector<1x8x32xbf16> to vector<1x8x8xbf16>
    %107 = vector.extract_strided_slice %62 {offsets = [0, 0, 16], sizes = [1, 8, 8], strides = [1, 1, 1]} : vector<1x8x32xbf16> to vector<1x8x8xbf16>
    "tpu.trace_start"() <{level = 10 : i32, message = "btd,bsd->bts"}> : () -> ()
    %cst_54 = arith.constant dense<0.000000e+00> : vector<1x8x8xf32>
    %108 = tpu.matmul %105, %106, %cst_54 {dimension_numbers = #tpu.dot_dimension_numbers<[2], [2], [1], [1], [0, 0, 0, 1, 1, 1], [0], [0]>} : vector<1x8x8xbf16>, vector<1x8x8xbf16>, vector<1x8x8xf32> -> vector<1x8x8xf32>
    "tpu.trace_stop"() : () -> ()
    %cst_55 = arith.constant dense<0xFF800000> : vector<1x8xf32>
    %109 = vector.multi_reduction <maximumf>, %108, %cst_55 [2] : vector<1x8x8xf32> to vector<1x8xf32>
    %110 = vector.shape_cast %109 : vector<1x8xf32> to vector<1x8x1xf32>
    %111 = vector.broadcast %110 : vector<1x8x1xf32> to vector<1x8x8xf32>
    %112 = arith.subf %108, %111 : vector<1x8x8xf32>
    %113 = math.exp %112 : vector<1x8x8xf32>
    %cst_56 = arith.constant dense<0.000000e+00> : vector<1x8xf32>
    %114 = vector.multi_reduction <add>, %113, %cst_56 [2] : vector<1x8x8xf32> to vector<1x8xf32>
    %115 = vector.shape_cast %114 : vector<1x8xf32> to vector<1x8x1xf32>
    %116 = tpu.reciprocal %115 {approx = true} : vector<1x8x1xf32> -> vector<1x8x1xf32>
    %117 = arith.mulf %115, %116 : vector<1x8x1xf32>
    %cst_57 = arith.constant 2.000000e+00 : f32
    %118 = vector.broadcast %cst_57 : f32 to vector<1x8x1xf32>
    %119 = arith.subf %118, %117 : vector<1x8x1xf32>
    %120 = arith.mulf %116, %119 : vector<1x8x1xf32>
    %121 = vector.broadcast %120 : vector<1x8x1xf32> to vector<1x8x8xf32>
    %122 = arith.mulf %113, %121 : vector<1x8x8xf32>
    %123 = arith.truncf %122 : vector<1x8x8xf32> to vector<1x8x8xbf16>
    "tpu.trace_start"() <{level = 10 : i32, message = "bts,bsd->btd"}> : () -> ()
    %cst_58 = arith.constant dense<0.000000e+00> : vector<1x8x8xf32>
    %124 = tpu.matmul %123, %107, %cst_58 {dimension_numbers = #tpu.dot_dimension_numbers<[2], [1], [1], [2], [0, 0, 0, 1, 1, 2], [0], [0]>} : vector<1x8x8xbf16>, vector<1x8x8xbf16>, vector<1x8x8xf32> -> vector<1x8x8xf32>
    "tpu.trace_stop"() : () -> ()
    %125 = vector.extract_strided_slice %64 {offsets = [0, 0, 24], sizes = [1, 8, 8], strides = [1, 1, 1]} : vector<1x8x32xbf16> to vector<1x8x8xbf16>
    %126 = vector.extract_strided_slice %61 {offsets = [0, 0, 24], sizes = [1, 8, 8], strides = [1, 1, 1]} : vector<1x8x32xbf16> to vector<1x8x8xbf16>
    %127 = vector.extract_strided_slice %62 {offsets = [0, 0, 24], sizes = [1, 8, 8], strides = [1, 1, 1]} : vector<1x8x32xbf16> to vector<1x8x8xbf16>
    "tpu.trace_start"() <{level = 10 : i32, message = "btd,bsd->bts"}> : () -> ()
    %cst_59 = arith.constant dense<0.000000e+00> : vector<1x8x8xf32>
    %128 = tpu.matmul %125, %126, %cst_59 {dimension_numbers = #tpu.dot_dimension_numbers<[2], [2], [1], [1], [0, 0, 0, 1, 1, 1], [0], [0]>} : vector<1x8x8xbf16>, vector<1x8x8xbf16>, vector<1x8x8xf32> -> vector<1x8x8xf32>
    "tpu.trace_stop"() : () -> ()
    %cst_60 = arith.constant dense<0xFF800000> : vector<1x8xf32>
    %129 = vector.multi_reduction <maximumf>, %128, %cst_60 [2] : vector<1x8x8xf32> to vector<1x8xf32>
    %130 = vector.shape_cast %129 : vector<1x8xf32> to vector<1x8x1xf32>
    %131 = vector.broadcast %130 : vector<1x8x1xf32> to vector<1x8x8xf32>
    %132 = arith.subf %128, %131 : vector<1x8x8xf32>
    %133 = math.exp %132 : vector<1x8x8xf32>
    %cst_61 = arith.constant dense<0.000000e+00> : vector<1x8xf32>
    %134 = vector.multi_reduction <add>, %133, %cst_61 [2] : vector<1x8x8xf32> to vector<1x8xf32>
    %135 = vector.shape_cast %134 : vector<1x8xf32> to vector<1x8x1xf32>
    %136 = tpu.reciprocal %135 {approx = true} : vector<1x8x1xf32> -> vector<1x8x1xf32>
    %137 = arith.mulf %135, %136 : vector<1x8x1xf32>
    %cst_62 = arith.constant 2.000000e+00 : f32
    %138 = vector.broadcast %cst_62 : f32 to vector<1x8x1xf32>
    %139 = arith.subf %138, %137 : vector<1x8x1xf32>
    %140 = arith.mulf %136, %139 : vector<1x8x1xf32>
    %141 = vector.broadcast %140 : vector<1x8x1xf32> to vector<1x8x8xf32>
    %142 = arith.mulf %133, %141 : vector<1x8x8xf32>
    %143 = arith.truncf %142 : vector<1x8x8xf32> to vector<1x8x8xbf16>
    "tpu.trace_start"() <{level = 10 : i32, message = "bts,bsd->btd"}> : () -> ()
    %cst_63 = arith.constant dense<0.000000e+00> : vector<1x8x8xf32>
    %144 = tpu.matmul %143, %127, %cst_63 {dimension_numbers = #tpu.dot_dimension_numbers<[2], [1], [1], [2], [0, 0, 0, 1, 1, 2], [0], [0]>} : vector<1x8x8xbf16>, vector<1x8x8xbf16>, vector<1x8x8xf32> -> vector<1x8x8xf32>
    "tpu.trace_stop"() : () -> ()
    %145 = tpu.concatenate %84, %104, %124, %144 in 2 : vector<1x8x8xf32>, vector<1x8x8xf32>, vector<1x8x8xf32>, vector<1x8x8xf32> -> vector<1x8x32xf32>
    %146 = vector.shape_cast %145 : vector<1x8x32xf32> to vector<8x32xf32>
    %147 = arith.truncf %146 : vector<8x32xf32> to vector<8x32xbf16>
    %cst_64 = arith.constant dense<0.000000e+00> : vector<8x32xf32>
    %148 = tpu.matmul %147, %3, %cst_64 {dimension_numbers = #tpu.dot_dimension_numbers<[1], [0], [0], [1], [0, 0, 1, 1], [], []>} : vector<8x32xbf16>, vector<32x32xbf16>, vector<8x32xf32> -> vector<8x32xf32>
    %149 = arith.addf %148, %14 : vector<8x32xf32>
    %150 = arith.addf %0, %149 : vector<8x32xf32>
    %cst_65 = arith.constant dense<0.000000e+00> : vector<8xf32>
    %151 = vector.multi_reduction <add>, %150, %cst_65 [1] : vector<8x32xf32> to vector<8xf32>
    %152 = vector.shape_cast %151 : vector<8xf32> to vector<8x1xf32>
    %cst_66 = arith.constant 3.200000e+01 : f32
    %153 = vector.broadcast %cst_66 : f32 to vector<8x1xf32>
    %154 = arith.divf %152, %153 : vector<8x1xf32>
    %155 = vector.broadcast %154 : vector<8x1xf32> to vector<8x32xf32>
    %156 = arith.subf %150, %155 : vector<8x32xf32>
    %157 = arith.mulf %156, %156 : vector<8x32xf32>
    %cst_67 = arith.constant dense<0.000000e+00> : vector<8xf32>
    %158 = vector.multi_reduction <add>, %157, %cst_67 [1] : vector<8x32xf32> to vector<8xf32>
    %159 = vector.shape_cast %158 : vector<8xf32> to vector<8x1xf32>
    %cst_68 = arith.constant 3.200000e+01 : f32
    %160 = vector.broadcast %cst_68 : f32 to vector<8x1xf32>
    %161 = arith.divf %159, %160 : vector<8x1xf32>
    %cst_69 = arith.constant 9.99999974E-6 : f32
    %162 = vector.broadcast %cst_69 : f32 to vector<8x1xf32>
    %163 = arith.addf %161, %162 : vector<8x1xf32>
    %164 = math.rsqrt %163 : vector<8x1xf32>
    %165 = vector.broadcast %164 : vector<8x1xf32> to vector<8x32xf32>
    %166 = arith.mulf %156, %165 : vector<8x32xf32>
    %167 = arith.mulf %166, %29 : vector<8x32xf32>
    %168 = arith.addf %167, %32 : vector<8x32xf32>
    %169 = arith.truncf %168 : vector<8x32xf32> to vector<8x32xbf16>
    %cst_70 = arith.constant dense<0.000000e+00> : vector<8x32xf32>
    %170 = tpu.matmul %169, %4, %cst_70 {dimension_numbers = #tpu.dot_dimension_numbers<[1], [0], [0], [1], [0, 0, 1, 1], [], []>} : vector<8x32xbf16>, vector<32x32xbf16>, vector<8x32xf32> -> vector<8x32xf32>
    %171 = arith.addf %170, %17 : vector<8x32xf32>
    %172 = vector.shape_cast %171 : vector<8x32xf32> to vector<1x8x32xf32>
    %173 = arith.truncf %172 : vector<1x8x32xf32> to vector<1x8x32xbf16>
    %174 = vector.extract_strided_slice %173 {offsets = [0, 0, 0], sizes = [1, 8, 8], strides = [1, 1, 1]} : vector<1x8x32xbf16> to vector<1x8x8xbf16>
    %175 = vector.extract_strided_slice %52 {offsets = [0, 0, 0], sizes = [1, 8, 8], strides = [1, 1, 1]} : vector<1x8x32xbf16> to vector<1x8x8xbf16>
    %176 = vector.extract_strided_slice %53 {offsets = [0, 0, 0], sizes = [1, 8, 8], strides = [1, 1, 1]} : vector<1x8x32xbf16> to vector<1x8x8xbf16>
    "tpu.trace_start"() <{level = 10 : i32, message = "btd,bsd->bts"}> : () -> ()
    %cst_71 = arith.constant dense<0.000000e+00> : vector<1x8x8xf32>
    %177 = tpu.matmul %174, %175, %cst_71 {dimension_numbers = #tpu.dot_dimension_numbers<[2], [2], [1], [1], [0, 0, 0, 1, 1, 1], [0], [0]>} : vector<1x8x8xbf16>, vector<1x8x8xbf16>, vector<1x8x8xf32> -> vector<1x8x8xf32>
    "tpu.trace_stop"() : () -> ()
    %cst_72 = arith.constant dense<0xFF800000> : vector<1x8xf32>
    %178 = vector.multi_reduction <maximumf>, %177, %cst_72 [2] : vector<1x8x8xf32> to vector<1x8xf32>
    %179 = vector.shape_cast %178 : vector<1x8xf32> to vector<1x8x1xf32>
    %180 = vector.broadcast %179 : vector<1x8x1xf32> to vector<1x8x8xf32>
    %181 = arith.subf %177, %180 : vector<1x8x8xf32>
    %182 = math.exp %181 : vector<1x8x8xf32>
    %cst_73 = arith.constant dense<0.000000e+00> : vector<1x8xf32>
    %183 = vector.multi_reduction <add>, %182, %cst_73 [2] : vector<1x8x8xf32> to vector<1x8xf32>
    %184 = vector.shape_cast %183 : vector<1x8xf32> to vector<1x8x1xf32>
    %185 = tpu.reciprocal %184 {approx = true} : vector<1x8x1xf32> -> vector<1x8x1xf32>
    %186 = arith.mulf %184, %185 : vector<1x8x1xf32>
    %cst_74 = arith.constant 2.000000e+00 : f32
    %187 = vector.broadcast %cst_74 : f32 to vector<1x8x1xf32>
    %188 = arith.subf %187, %186 : vector<1x8x1xf32>
    %189 = arith.mulf %185, %188 : vector<1x8x1xf32>
    %190 = vector.broadcast %189 : vector<1x8x1xf32> to vector<1x8x8xf32>
    %191 = arith.mulf %182, %190 : vector<1x8x8xf32>
    %192 = arith.truncf %191 : vector<1x8x8xf32> to vector<1x8x8xbf16>
    "tpu.trace_start"() <{level = 10 : i32, message = "bts,bsd->btd"}> : () -> ()
    %cst_75 = arith.constant dense<0.000000e+00> : vector<1x8x8xf32>
    %193 = tpu.matmul %192, %176, %cst_75 {dimension_numbers = #tpu.dot_dimension_numbers<[2], [1], [1], [2], [0, 0, 0, 1, 1, 2], [0], [0]>} : vector<1x8x8xbf16>, vector<1x8x8xbf16>, vector<1x8x8xf32> -> vector<1x8x8xf32>
    "tpu.trace_stop"() : () -> ()
    %194 = vector.extract_strided_slice %173 {offsets = [0, 0, 8], sizes = [1, 8, 8], strides = [1, 1, 1]} : vector<1x8x32xbf16> to vector<1x8x8xbf16>
    %195 = vector.extract_strided_slice %52 {offsets = [0, 0, 8], sizes = [1, 8, 8], strides = [1, 1, 1]} : vector<1x8x32xbf16> to vector<1x8x8xbf16>
    %196 = vector.extract_strided_slice %53 {offsets = [0, 0, 8], sizes = [1, 8, 8], strides = [1, 1, 1]} : vector<1x8x32xbf16> to vector<1x8x8xbf16>
    "tpu.trace_start"() <{level = 10 : i32, message = "btd,bsd->bts"}> : () -> ()
    %cst_76 = arith.constant dense<0.000000e+00> : vector<1x8x8xf32>
    %197 = tpu.matmul %194, %195, %cst_76 {dimension_numbers = #tpu.dot_dimension_numbers<[2], [2], [1], [1], [0, 0, 0, 1, 1, 1], [0], [0]>} : vector<1x8x8xbf16>, vector<1x8x8xbf16>, vector<1x8x8xf32> -> vector<1x8x8xf32>
    "tpu.trace_stop"() : () -> ()
    %cst_77 = arith.constant dense<0xFF800000> : vector<1x8xf32>
    %198 = vector.multi_reduction <maximumf>, %197, %cst_77 [2] : vector<1x8x8xf32> to vector<1x8xf32>
    %199 = vector.shape_cast %198 : vector<1x8xf32> to vector<1x8x1xf32>
    %200 = vector.broadcast %199 : vector<1x8x1xf32> to vector<1x8x8xf32>
    %201 = arith.subf %197, %200 : vector<1x8x8xf32>
    %202 = math.exp %201 : vector<1x8x8xf32>
    %cst_78 = arith.constant dense<0.000000e+00> : vector<1x8xf32>
    %203 = vector.multi_reduction <add>, %202, %cst_78 [2] : vector<1x8x8xf32> to vector<1x8xf32>
    %204 = vector.shape_cast %203 : vector<1x8xf32> to vector<1x8x1xf32>
    %205 = tpu.reciprocal %204 {approx = true} : vector<1x8x1xf32> -> vector<1x8x1xf32>
    %206 = arith.mulf %204, %205 : vector<1x8x1xf32>
    %cst_79 = arith.constant 2.000000e+00 : f32
    %207 = vector.broadcast %cst_79 : f32 to vector<1x8x1xf32>
    %208 = arith.subf %207, %206 : vector<1x8x1xf32>
    %209 = arith.mulf %205, %208 : vector<1x8x1xf32>
    %210 = vector.broadcast %209 : vector<1x8x1xf32> to vector<1x8x8xf32>
    %211 = arith.mulf %202, %210 : vector<1x8x8xf32>
    %212 = arith.truncf %211 : vector<1x8x8xf32> to vector<1x8x8xbf16>
    "tpu.trace_start"() <{level = 10 : i32, message = "bts,bsd->btd"}> : () -> ()
    %cst_80 = arith.constant dense<0.000000e+00> : vector<1x8x8xf32>
    %213 = tpu.matmul %212, %196, %cst_80 {dimension_numbers = #tpu.dot_dimension_numbers<[2], [1], [1], [2], [0, 0, 0, 1, 1, 2], [0], [0]>} : vector<1x8x8xbf16>, vector<1x8x8xbf16>, vector<1x8x8xf32> -> vector<1x8x8xf32>
    "tpu.trace_stop"() : () -> ()
    %214 = vector.extract_strided_slice %173 {offsets = [0, 0, 16], sizes = [1, 8, 8], strides = [1, 1, 1]} : vector<1x8x32xbf16> to vector<1x8x8xbf16>
    %215 = vector.extract_strided_slice %52 {offsets = [0, 0, 16], sizes = [1, 8, 8], strides = [1, 1, 1]} : vector<1x8x32xbf16> to vector<1x8x8xbf16>
    %216 = vector.extract_strided_slice %53 {offsets = [0, 0, 16], sizes = [1, 8, 8], strides = [1, 1, 1]} : vector<1x8x32xbf16> to vector<1x8x8xbf16>
    "tpu.trace_start"() <{level = 10 : i32, message = "btd,bsd->bts"}> : () -> ()
    %cst_81 = arith.constant dense<0.000000e+00> : vector<1x8x8xf32>
    %217 = tpu.matmul %214, %215, %cst_81 {dimension_numbers = #tpu.dot_dimension_numbers<[2], [2], [1], [1], [0, 0, 0, 1, 1, 1], [0], [0]>} : vector<1x8x8xbf16>, vector<1x8x8xbf16>, vector<1x8x8xf32> -> vector<1x8x8xf32>
    "tpu.trace_stop"() : () -> ()
    %cst_82 = arith.constant dense<0xFF800000> : vector<1x8xf32>
    %218 = vector.multi_reduction <maximumf>, %217, %cst_82 [2] : vector<1x8x8xf32> to vector<1x8xf32>
    %219 = vector.shape_cast %218 : vector<1x8xf32> to vector<1x8x1xf32>
    %220 = vector.broadcast %219 : vector<1x8x1xf32> to vector<1x8x8xf32>
    %221 = arith.subf %217, %220 : vector<1x8x8xf32>
    %222 = math.exp %221 : vector<1x8x8xf32>
    %cst_83 = arith.constant dense<0.000000e+00> : vector<1x8xf32>
    %223 = vector.multi_reduction <add>, %222, %cst_83 [2] : vector<1x8x8xf32> to vector<1x8xf32>
    %224 = vector.shape_cast %223 : vector<1x8xf32> to vector<1x8x1xf32>
    %225 = tpu.reciprocal %224 {approx = true} : vector<1x8x1xf32> -> vector<1x8x1xf32>
    %226 = arith.mulf %224, %225 : vector<1x8x1xf32>
    %cst_84 = arith.constant 2.000000e+00 : f32
    %227 = vector.broadcast %cst_84 : f32 to vector<1x8x1xf32>
    %228 = arith.subf %227, %226 : vector<1x8x1xf32>
    %229 = arith.mulf %225, %228 : vector<1x8x1xf32>
    %230 = vector.broadcast %229 : vector<1x8x1xf32> to vector<1x8x8xf32>
    %231 = arith.mulf %222, %230 : vector<1x8x8xf32>
    %232 = arith.truncf %231 : vector<1x8x8xf32> to vector<1x8x8xbf16>
    "tpu.trace_start"() <{level = 10 : i32, message = "bts,bsd->btd"}> : () -> ()
    %cst_85 = arith.constant dense<0.000000e+00> : vector<1x8x8xf32>
    %233 = tpu.matmul %232, %216, %cst_85 {dimension_numbers = #tpu.dot_dimension_numbers<[2], [1], [1], [2], [0, 0, 0, 1, 1, 2], [0], [0]>} : vector<1x8x8xbf16>, vector<1x8x8xbf16>, vector<1x8x8xf32> -> vector<1x8x8xf32>
    "tpu.trace_stop"() : () -> ()
    %234 = vector.extract_strided_slice %173 {offsets = [0, 0, 24], sizes = [1, 8, 8], strides = [1, 1, 1]} : vector<1x8x32xbf16> to vector<1x8x8xbf16>
    %235 = vector.extract_strided_slice %52 {offsets = [0, 0, 24], sizes = [1, 8, 8], strides = [1, 1, 1]} : vector<1x8x32xbf16> to vector<1x8x8xbf16>
    %236 = vector.extract_strided_slice %53 {offsets = [0, 0, 24], sizes = [1, 8, 8], strides = [1, 1, 1]} : vector<1x8x32xbf16> to vector<1x8x8xbf16>
    "tpu.trace_start"() <{level = 10 : i32, message = "btd,bsd->bts"}> : () -> ()
    %cst_86 = arith.constant dense<0.000000e+00> : vector<1x8x8xf32>
    %237 = tpu.matmul %234, %235, %cst_86 {dimension_numbers = #tpu.dot_dimension_numbers<[2], [2], [1], [1], [0, 0, 0, 1, 1, 1], [0], [0]>} : vector<1x8x8xbf16>, vector<1x8x8xbf16>, vector<1x8x8xf32> -> vector<1x8x8xf32>
    "tpu.trace_stop"() : () -> ()
    %cst_87 = arith.constant dense<0xFF800000> : vector<1x8xf32>
    %238 = vector.multi_reduction <maximumf>, %237, %cst_87 [2] : vector<1x8x8xf32> to vector<1x8xf32>
    %239 = vector.shape_cast %238 : vector<1x8xf32> to vector<1x8x1xf32>
    %240 = vector.broadcast %239 : vector<1x8x1xf32> to vector<1x8x8xf32>
    %241 = arith.subf %237, %240 : vector<1x8x8xf32>
    %242 = math.exp %241 : vector<1x8x8xf32>
    %cst_88 = arith.constant dense<0.000000e+00> : vector<1x8xf32>
    %243 = vector.multi_reduction <add>, %242, %cst_88 [2] : vector<1x8x8xf32> to vector<1x8xf32>
    %244 = vector.shape_cast %243 : vector<1x8xf32> to vector<1x8x1xf32>
    %245 = tpu.reciprocal %244 {approx = true} : vector<1x8x1xf32> -> vector<1x8x1xf32>
    %246 = arith.mulf %244, %245 : vector<1x8x1xf32>
    %cst_89 = arith.constant 2.000000e+00 : f32
    %247 = vector.broadcast %cst_89 : f32 to vector<1x8x1xf32>
    %248 = arith.subf %247, %246 : vector<1x8x1xf32>
    %249 = arith.mulf %245, %248 : vector<1x8x1xf32>
    %250 = vector.broadcast %249 : vector<1x8x1xf32> to vector<1x8x8xf32>
    %251 = arith.mulf %242, %250 : vector<1x8x8xf32>
    %252 = arith.truncf %251 : vector<1x8x8xf32> to vector<1x8x8xbf16>
    "tpu.trace_start"() <{level = 10 : i32, message = "bts,bsd->btd"}> : () -> ()
    %cst_90 = arith.constant dense<0.000000e+00> : vector<1x8x8xf32>
    %253 = tpu.matmul %252, %236, %cst_90 {dimension_numbers = #tpu.dot_dimension_numbers<[2], [1], [1], [2], [0, 0, 0, 1, 1, 2], [0], [0]>} : vector<1x8x8xbf16>, vector<1x8x8xbf16>, vector<1x8x8xf32> -> vector<1x8x8xf32>
    "tpu.trace_stop"() : () -> ()
    %254 = tpu.concatenate %193, %213, %233, %253 in 2 : vector<1x8x8xf32>, vector<1x8x8xf32>, vector<1x8x8xf32>, vector<1x8x8xf32> -> vector<1x8x32xf32>
    %255 = vector.shape_cast %254 : vector<1x8x32xf32> to vector<8x32xf32>
    %256 = arith.truncf %255 : vector<8x32xf32> to vector<8x32xbf16>
    %cst_91 = arith.constant dense<0.000000e+00> : vector<8x32xf32>
    %257 = tpu.matmul %256, %6, %cst_91 {dimension_numbers = #tpu.dot_dimension_numbers<[1], [0], [0], [1], [0, 0, 1, 1], [], []>} : vector<8x32xbf16>, vector<32x32xbf16>, vector<8x32xf32> -> vector<8x32xf32>
    %258 = arith.addf %257, %20 : vector<8x32xf32>
    %259 = arith.addf %168, %258 : vector<8x32xf32>
    %cst_92 = arith.constant dense<0.000000e+00> : vector<8xf32>
    %260 = vector.multi_reduction <add>, %259, %cst_92 [1] : vector<8x32xf32> to vector<8xf32>
    %261 = vector.shape_cast %260 : vector<8xf32> to vector<8x1xf32>
    %cst_93 = arith.constant 3.200000e+01 : f32
    %262 = vector.broadcast %cst_93 : f32 to vector<8x1xf32>
    %263 = arith.divf %261, %262 : vector<8x1xf32>
    %264 = vector.broadcast %263 : vector<8x1xf32> to vector<8x32xf32>
    %265 = arith.subf %259, %264 : vector<8x32xf32>
    %266 = arith.mulf %265, %265 : vector<8x32xf32>
    %cst_94 = arith.constant dense<0.000000e+00> : vector<8xf32>
    %267 = vector.multi_reduction <add>, %266, %cst_94 [1] : vector<8x32xf32> to vector<8xf32>
    %268 = vector.shape_cast %267 : vector<8xf32> to vector<8x1xf32>
    %cst_95 = arith.constant 3.200000e+01 : f32
    %269 = vector.broadcast %cst_95 : f32 to vector<8x1xf32>
    %270 = arith.divf %268, %269 : vector<8x1xf32>
    %cst_96 = arith.constant 9.99999974E-6 : f32
    %271 = vector.broadcast %cst_96 : f32 to vector<8x1xf32>
    %272 = arith.addf %270, %271 : vector<8x1xf32>
    %273 = math.rsqrt %272 : vector<8x1xf32>
    %274 = vector.broadcast %273 : vector<8x1xf32> to vector<8x32xf32>
    %275 = arith.mulf %265, %274 : vector<8x32xf32>
    %276 = arith.mulf %275, %35 : vector<8x32xf32>
    %277 = arith.addf %276, %38 : vector<8x32xf32>
    %278 = arith.truncf %277 : vector<8x32xf32> to vector<8x32xbf16>
    %cst_97 = arith.constant dense<0.000000e+00> : vector<8x64xf32>
    %279 = tpu.matmul %278, %7, %cst_97 {dimension_numbers = #tpu.dot_dimension_numbers<[1], [0], [0], [1], [0, 0, 1, 1], [], []>} : vector<8x32xbf16>, vector<32x64xbf16>, vector<8x64xf32> -> vector<8x64xf32>
    %280 = arith.addf %279, %23 : vector<8x64xf32>
    %cst_98 = arith.constant 0.000000e+00 : f32
    %281 = vector.broadcast %cst_98 : f32 to vector<8x64xf32>
    %282 = arith.maximumf %280, %281 : vector<8x64xf32>
    %283 = arith.truncf %282 : vector<8x64xf32> to vector<8x64xbf16>
    %cst_99 = arith.constant dense<0.000000e+00> : vector<8x32xf32>
    %284 = tpu.matmul %283, %8, %cst_99 {dimension_numbers = #tpu.dot_dimension_numbers<[1], [0], [0], [1], [0, 0, 1, 1], [], []>} : vector<8x64xbf16>, vector<64x32xbf16>, vector<8x32xf32> -> vector<8x32xf32>
    %285 = arith.addf %284, %26 : vector<8x32xf32>
    %286 = arith.addf %277, %285 : vector<8x32xf32>
    %cst_100 = arith.constant dense<0.000000e+00> : vector<8xf32>
    %287 = vector.multi_reduction <add>, %286, %cst_100 [1] : vector<8x32xf32> to vector<8xf32>
    %288 = vector.shape_cast %287 : vector<8xf32> to vector<8x1xf32>
    %cst_101 = arith.constant 3.200000e+01 : f32
    %289 = vector.broadcast %cst_101 : f32 to vector<8x1xf32>
    %290 = arith.divf %288, %289 : vector<8x1xf32>
    %291 = vector.broadcast %290 : vector<8x1xf32> to vector<8x32xf32>
    %292 = arith.subf %286, %291 : vector<8x32xf32>
    %293 = arith.mulf %292, %292 : vector<8x32xf32>
    %cst_102 = arith.constant dense<0.000000e+00> : vector<8xf32>
    %294 = vector.multi_reduction <add>, %293, %cst_102 [1] : vector<8x32xf32> to vector<8xf32>
    %295 = vector.shape_cast %294 : vector<8xf32> to vector<8x1xf32>
    %cst_103 = arith.constant 3.200000e+01 : f32
    %296 = vector.broadcast %cst_103 : f32 to vector<8x1xf32>
    %297 = arith.divf %295, %296 : vector<8x1xf32>
    %cst_104 = arith.constant 9.99999974E-6 : f32
    %298 = vector.broadcast %cst_104 : f32 to vector<8x1xf32>
    %299 = arith.addf %297, %298 : vector<8x1xf32>
    %300 = math.rsqrt %299 : vector<8x1xf32>
    %301 = vector.broadcast %300 : vector<8x1xf32> to vector<8x32xf32>
    %302 = arith.mulf %292, %301 : vector<8x32xf32>
    %303 = arith.mulf %302, %41 : vector<8x32xf32>
    %304 = arith.addf %303, %44 : vector<8x32xf32>
    %305 = arith.truncf %304 : vector<8x32xf32> to vector<8x32xbf16>
    %cst_105 = arith.constant dense<0.000000e+00> : vector<8x96xf32>
    %306 = tpu.matmul %305, %2, %cst_105 {dimension_numbers = #tpu.dot_dimension_numbers<[1], [0], [0], [1], [0, 0, 1, 1], [], []>} : vector<8x32xbf16>, vector<32x96xbf16>, vector<8x96xf32> -> vector<8x96xf32>
    %307 = arith.addf %306, %11 : vector<8x96xf32>
    %308 = vector.extract_strided_slice %307 {offsets = [0, 32], sizes = [8, 64], strides = [1, 1]} : vector<8x96xf32> to vector<8x64xf32>
    %309 = vector.shape_cast %308 : vector<8x64xf32> to vector<1x8x64xf32>
    %310 = arith.truncf %309 : vector<1x8x64xf32> to vector<1x8x64xbf16>
    %311 = vector.extract_strided_slice %307 {offsets = [0, 0], sizes = [8, 32], strides = [1, 1]} : vector<8x96xf32> to vector<8x32xf32>
    %312 = vector.extract_strided_slice %310 {offsets = [0, 0, 0], sizes = [1, 8, 32], strides = [1, 1, 1]} : vector<1x8x64xbf16> to vector<1x8x32xbf16>
    %313 = vector.extract_strided_slice %310 {offsets = [0, 0, 32], sizes = [1, 8, 32], strides = [1, 1, 1]} : vector<1x8x64xbf16> to vector<1x8x32xbf16>
    %314 = vector.shape_cast %311 : vector<8x32xf32> to vector<1x8x32xf32>
    %315 = arith.truncf %314 : vector<1x8x32xf32> to vector<1x8x32xbf16>
    %316 = vector.extract_strided_slice %315 {offsets = [0, 0, 0], sizes = [1, 8, 8], strides = [1, 1, 1]} : vector<1x8x32xbf16> to vector<1x8x8xbf16>
    %317 = vector.extract_strided_slice %312 {offsets = [0, 0, 0], sizes = [1, 8, 8], strides = [1, 1, 1]} : vector<1x8x32xbf16> to vector<1x8x8xbf16>
    %318 = vector.extract_strided_slice %313 {offsets = [0, 0, 0], sizes = [1, 8, 8], strides = [1, 1, 1]} : vector<1x8x32xbf16> to vector<1x8x8xbf16>
    "tpu.trace_start"() <{level = 10 : i32, message = "btd,bsd->bts"}> : () -> ()
    %cst_106 = arith.constant dense<0.000000e+00> : vector<1x8x8xf32>
    %319 = tpu.matmul %316, %317, %cst_106 {dimension_numbers = #tpu.dot_dimension_numbers<[2], [2], [1], [1], [0, 0, 0, 1, 1, 1], [0], [0]>} : vector<1x8x8xbf16>, vector<1x8x8xbf16>, vector<1x8x8xf32> -> vector<1x8x8xf32>
    "tpu.trace_stop"() : () -> ()
    %cst_107 = arith.constant dense<0xFF800000> : vector<1x8xf32>
    %320 = vector.multi_reduction <maximumf>, %319, %cst_107 [2] : vector<1x8x8xf32> to vector<1x8xf32>
    %321 = vector.shape_cast %320 : vector<1x8xf32> to vector<1x8x1xf32>
    %322 = vector.broadcast %321 : vector<1x8x1xf32> to vector<1x8x8xf32>
    %323 = arith.subf %319, %322 : vector<1x8x8xf32>
    %324 = math.exp %323 : vector<1x8x8xf32>
    %cst_108 = arith.constant dense<0.000000e+00> : vector<1x8xf32>
    %325 = vector.multi_reduction <add>, %324, %cst_108 [2] : vector<1x8x8xf32> to vector<1x8xf32>
    %326 = vector.shape_cast %325 : vector<1x8xf32> to vector<1x8x1xf32>
    %327 = tpu.reciprocal %326 {approx = true} : vector<1x8x1xf32> -> vector<1x8x1xf32>
    %328 = arith.mulf %326, %327 : vector<1x8x1xf32>
    %cst_109 = arith.constant 2.000000e+00 : f32
    %329 = vector.broadcast %cst_109 : f32 to vector<1x8x1xf32>
    %330 = arith.subf %329, %328 : vector<1x8x1xf32>
    %331 = arith.mulf %327, %330 : vector<1x8x1xf32>
    %332 = vector.broadcast %331 : vector<1x8x1xf32> to vector<1x8x8xf32>
    %333 = arith.mulf %324, %332 : vector<1x8x8xf32>
    %334 = arith.truncf %333 : vector<1x8x8xf32> to vector<1x8x8xbf16>
    "tpu.trace_start"() <{level = 10 : i32, message = "bts,bsd->btd"}> : () -> ()
    %cst_110 = arith.constant dense<0.000000e+00> : vector<1x8x8xf32>
    %335 = tpu.matmul %334, %318, %cst_110 {dimension_numbers = #tpu.dot_dimension_numbers<[2], [1], [1], [2], [0, 0, 0, 1, 1, 2], [0], [0]>} : vector<1x8x8xbf16>, vector<1x8x8xbf16>, vector<1x8x8xf32> -> vector<1x8x8xf32>
    "tpu.trace_stop"() : () -> ()
    %336 = vector.extract_strided_slice %315 {offsets = [0, 0, 8], sizes = [1, 8, 8], strides = [1, 1, 1]} : vector<1x8x32xbf16> to vector<1x8x8xbf16>
    %337 = vector.extract_strided_slice %312 {offsets = [0, 0, 8], sizes = [1, 8, 8], strides = [1, 1, 1]} : vector<1x8x32xbf16> to vector<1x8x8xbf16>
    %338 = vector.extract_strided_slice %313 {offsets = [0, 0, 8], sizes = [1, 8, 8], strides = [1, 1, 1]} : vector<1x8x32xbf16> to vector<1x8x8xbf16>
    "tpu.trace_start"() <{level = 10 : i32, message = "btd,bsd->bts"}> : () -> ()
    %cst_111 = arith.constant dense<0.000000e+00> : vector<1x8x8xf32>
    %339 = tpu.matmul %336, %337, %cst_111 {dimension_numbers = #tpu.dot_dimension_numbers<[2], [2], [1], [1], [0, 0, 0, 1, 1, 1], [0], [0]>} : vector<1x8x8xbf16>, vector<1x8x8xbf16>, vector<1x8x8xf32> -> vector<1x8x8xf32>
    "tpu.trace_stop"() : () -> ()
    %cst_112 = arith.constant dense<0xFF800000> : vector<1x8xf32>
    %340 = vector.multi_reduction <maximumf>, %339, %cst_112 [2] : vector<1x8x8xf32> to vector<1x8xf32>
    %341 = vector.shape_cast %340 : vector<1x8xf32> to vector<1x8x1xf32>
    %342 = vector.broadcast %341 : vector<1x8x1xf32> to vector<1x8x8xf32>
    %343 = arith.subf %339, %342 : vector<1x8x8xf32>
    %344 = math.exp %343 : vector<1x8x8xf32>
    %cst_113 = arith.constant dense<0.000000e+00> : vector<1x8xf32>
    %345 = vector.multi_reduction <add>, %344, %cst_113 [2] : vector<1x8x8xf32> to vector<1x8xf32>
    %346 = vector.shape_cast %345 : vector<1x8xf32> to vector<1x8x1xf32>
    %347 = tpu.reciprocal %346 {approx = true} : vector<1x8x1xf32> -> vector<1x8x1xf32>
    %348 = arith.mulf %346, %347 : vector<1x8x1xf32>
    %cst_114 = arith.constant 2.000000e+00 : f32
    %349 = vector.broadcast %cst_114 : f32 to vector<1x8x1xf32>
    %350 = arith.subf %349, %348 : vector<1x8x1xf32>
    %351 = arith.mulf %347, %350 : vector<1x8x1xf32>
    %352 = vector.broadcast %351 : vector<1x8x1xf32> to vector<1x8x8xf32>
    %353 = arith.mulf %344, %352 : vector<1x8x8xf32>
    %354 = arith.truncf %353 : vector<1x8x8xf32> to vector<1x8x8xbf16>
    "tpu.trace_start"() <{level = 10 : i32, message = "bts,bsd->btd"}> : () -> ()
    %cst_115 = arith.constant dense<0.000000e+00> : vector<1x8x8xf32>
    %355 = tpu.matmul %354, %338, %cst_115 {dimension_numbers = #tpu.dot_dimension_numbers<[2], [1], [1], [2], [0, 0, 0, 1, 1, 2], [0], [0]>} : vector<1x8x8xbf16>, vector<1x8x8xbf16>, vector<1x8x8xf32> -> vector<1x8x8xf32>
    "tpu.trace_stop"() : () -> ()
    %356 = vector.extract_strided_slice %315 {offsets = [0, 0, 16], sizes = [1, 8, 8], strides = [1, 1, 1]} : vector<1x8x32xbf16> to vector<1x8x8xbf16>
    %357 = vector.extract_strided_slice %312 {offsets = [0, 0, 16], sizes = [1, 8, 8], strides = [1, 1, 1]} : vector<1x8x32xbf16> to vector<1x8x8xbf16>
    %358 = vector.extract_strided_slice %313 {offsets = [0, 0, 16], sizes = [1, 8, 8], strides = [1, 1, 1]} : vector<1x8x32xbf16> to vector<1x8x8xbf16>
    "tpu.trace_start"() <{level = 10 : i32, message = "btd,bsd->bts"}> : () -> ()
    %cst_116 = arith.constant dense<0.000000e+00> : vector<1x8x8xf32>
    %359 = tpu.matmul %356, %357, %cst_116 {dimension_numbers = #tpu.dot_dimension_numbers<[2], [2], [1], [1], [0, 0, 0, 1, 1, 1], [0], [0]>} : vector<1x8x8xbf16>, vector<1x8x8xbf16>, vector<1x8x8xf32> -> vector<1x8x8xf32>
    "tpu.trace_stop"() : () -> ()
    %cst_117 = arith.constant dense<0xFF800000> : vector<1x8xf32>
    %360 = vector.multi_reduction <maximumf>, %359, %cst_117 [2] : vector<1x8x8xf32> to vector<1x8xf32>
    %361 = vector.shape_cast %360 : vector<1x8xf32> to vector<1x8x1xf32>
    %362 = vector.broadcast %361 : vector<1x8x1xf32> to vector<1x8x8xf32>
    %363 = arith.subf %359, %362 : vector<1x8x8xf32>
    %364 = math.exp %363 : vector<1x8x8xf32>
    %cst_118 = arith.constant dense<0.000000e+00> : vector<1x8xf32>
    %365 = vector.multi_reduction <add>, %364, %cst_118 [2] : vector<1x8x8xf32> to vector<1x8xf32>
    %366 = vector.shape_cast %365 : vector<1x8xf32> to vector<1x8x1xf32>
    %367 = tpu.reciprocal %366 {approx = true} : vector<1x8x1xf32> -> vector<1x8x1xf32>
    %368 = arith.mulf %366, %367 : vector<1x8x1xf32>
    %cst_119 = arith.constant 2.000000e+00 : f32
    %369 = vector.broadcast %cst_119 : f32 to vector<1x8x1xf32>
    %370 = arith.subf %369, %368 : vector<1x8x1xf32>
    %371 = arith.mulf %367, %370 : vector<1x8x1xf32>
    %372 = vector.broadcast %371 : vector<1x8x1xf32> to vector<1x8x8xf32>
    %373 = arith.mulf %364, %372 : vector<1x8x8xf32>
    %374 = arith.truncf %373 : vector<1x8x8xf32> to vector<1x8x8xbf16>
    "tpu.trace_start"() <{level = 10 : i32, message = "bts,bsd->btd"}> : () -> ()
    %cst_120 = arith.constant dense<0.000000e+00> : vector<1x8x8xf32>
    %375 = tpu.matmul %374, %358, %cst_120 {dimension_numbers = #tpu.dot_dimension_numbers<[2], [1], [1], [2], [0, 0, 0, 1, 1, 2], [0], [0]>} : vector<1x8x8xbf16>, vector<1x8x8xbf16>, vector<1x8x8xf32> -> vector<1x8x8xf32>
    "tpu.trace_stop"() : () -> ()
    %376 = vector.extract_strided_slice %315 {offsets = [0, 0, 24], sizes = [1, 8, 8], strides = [1, 1, 1]} : vector<1x8x32xbf16> to vector<1x8x8xbf16>
    %377 = vector.extract_strided_slice %312 {offsets = [0, 0, 24], sizes = [1, 8, 8], strides = [1, 1, 1]} : vector<1x8x32xbf16> to vector<1x8x8xbf16>
    %378 = vector.extract_strided_slice %313 {offsets = [0, 0, 24], sizes = [1, 8, 8], strides = [1, 1, 1]} : vector<1x8x32xbf16> to vector<1x8x8xbf16>
    "tpu.trace_start"() <{level = 10 : i32, message = "btd,bsd->bts"}> : () -> ()
    %cst_121 = arith.constant dense<0.000000e+00> : vector<1x8x8xf32>
    %379 = tpu.matmul %376, %377, %cst_121 {dimension_numbers = #tpu.dot_dimension_numbers<[2], [2], [1], [1], [0, 0, 0, 1, 1, 1], [0], [0]>} : vector<1x8x8xbf16>, vector<1x8x8xbf16>, vector<1x8x8xf32> -> vector<1x8x8xf32>
    "tpu.trace_stop"() : () -> ()
    %cst_122 = arith.constant dense<0xFF800000> : vector<1x8xf32>
    %380 = vector.multi_reduction <maximumf>, %379, %cst_122 [2] : vector<1x8x8xf32> to vector<1x8xf32>
    %381 = vector.shape_cast %380 : vector<1x8xf32> to vector<1x8x1xf32>
    %382 = vector.broadcast %381 : vector<1x8x1xf32> to vector<1x8x8xf32>
    %383 = arith.subf %379, %382 : vector<1x8x8xf32>
    %384 = math.exp %383 : vector<1x8x8xf32>
    %cst_123 = arith.constant dense<0.000000e+00> : vector<1x8xf32>
    %385 = vector.multi_reduction <add>, %384, %cst_123 [2] : vector<1x8x8xf32> to vector<1x8xf32>
    %386 = vector.shape_cast %385 : vector<1x8xf32> to vector<1x8x1xf32>
    %387 = tpu.reciprocal %386 {approx = true} : vector<1x8x1xf32> -> vector<1x8x1xf32>
    %388 = arith.mulf %386, %387 : vector<1x8x1xf32>
    %cst_124 = arith.constant 2.000000e+00 : f32
    %389 = vector.broadcast %cst_124 : f32 to vector<1x8x1xf32>
    %390 = arith.subf %389, %388 : vector<1x8x1xf32>
    %391 = arith.mulf %387, %390 : vector<1x8x1xf32>
    %392 = vector.broadcast %391 : vector<1x8x1xf32> to vector<1x8x8xf32>
    %393 = arith.mulf %384, %392 : vector<1x8x8xf32>
    %394 = arith.truncf %393 : vector<1x8x8xf32> to vector<1x8x8xbf16>
    "tpu.trace_start"() <{level = 10 : i32, message = "bts,bsd->btd"}> : () -> ()
    %cst_125 = arith.constant dense<0.000000e+00> : vector<1x8x8xf32>
    %395 = tpu.matmul %394, %378, %cst_125 {dimension_numbers = #tpu.dot_dimension_numbers<[2], [1], [1], [2], [0, 0, 0, 1, 1, 2], [0], [0]>} : vector<1x8x8xbf16>, vector<1x8x8xbf16>, vector<1x8x8xf32> -> vector<1x8x8xf32>
    "tpu.trace_stop"() : () -> ()
    %396 = tpu.concatenate %335, %355, %375, %395 in 2 : vector<1x8x8xf32>, vector<1x8x8xf32>, vector<1x8x8xf32>, vector<1x8x8xf32> -> vector<1x8x32xf32>
    %397 = vector.shape_cast %396 : vector<1x8x32xf32> to vector<8x32xf32>
    %398 = arith.truncf %397 : vector<8x32xf32> to vector<8x32xbf16>
    %cst_126 = arith.constant dense<0.000000e+00> : vector<8x32xf32>
    %399 = tpu.matmul %398, %3, %cst_126 {dimension_numbers = #tpu.dot_dimension_numbers<[1], [0], [0], [1], [0, 0, 1, 1], [], []>} : vector<8x32xbf16>, vector<32x32xbf16>, vector<8x32xf32> -> vector<8x32xf32>
    %400 = arith.addf %399, %14 : vector<8x32xf32>
    %401 = arith.addf %304, %400 : vector<8x32xf32>
    %cst_127 = arith.constant dense<0.000000e+00> : vector<8xf32>
    %402 = vector.multi_reduction <add>, %401, %cst_127 [1] : vector<8x32xf32> to vector<8xf32>
    %403 = vector.shape_cast %402 : vector<8xf32> to vector<8x1xf32>
    %cst_128 = arith.constant 3.200000e+01 : f32
    %404 = vector.broadcast %cst_128 : f32 to vector<8x1xf32>
    %405 = arith.divf %403, %404 : vector<8x1xf32>
    %406 = vector.broadcast %405 : vector<8x1xf32> to vector<8x32xf32>
    %407 = arith.subf %401, %406 : vector<8x32xf32>
    %408 = arith.mulf %407, %407 : vector<8x32xf32>
    %cst_129 = arith.constant dense<0.000000e+00> : vector<8xf32>
    %409 = vector.multi_reduction <add>, %408, %cst_129 [1] : vector<8x32xf32> to vector<8xf32>
    %410 = vector.shape_cast %409 : vector<8xf32> to vector<8x1xf32>
    %cst_130 = arith.constant 3.200000e+01 : f32
    %411 = vector.broadcast %cst_130 : f32 to vector<8x1xf32>
    %412 = arith.divf %410, %411 : vector<8x1xf32>
    %cst_131 = arith.constant 9.99999974E-6 : f32
    %413 = vector.broadcast %cst_131 : f32 to vector<8x1xf32>
    %414 = arith.addf %412, %413 : vector<8x1xf32>
    %415 = math.rsqrt %414 : vector<8x1xf32>
    %416 = vector.broadcast %415 : vector<8x1xf32> to vector<8x32xf32>
    %417 = arith.mulf %407, %416 : vector<8x32xf32>
    %418 = arith.mulf %417, %29 : vector<8x32xf32>
    %419 = arith.addf %418, %32 : vector<8x32xf32>
    %420 = arith.truncf %419 : vector<8x32xf32> to vector<8x32xbf16>
    %cst_132 = arith.constant dense<0.000000e+00> : vector<8x32xf32>
    %421 = tpu.matmul %420, %4, %cst_132 {dimension_numbers = #tpu.dot_dimension_numbers<[1], [0], [0], [1], [0, 0, 1, 1], [], []>} : vector<8x32xbf16>, vector<32x32xbf16>, vector<8x32xf32> -> vector<8x32xf32>
    %422 = arith.addf %421, %17 : vector<8x32xf32>
    %423 = vector.shape_cast %422 : vector<8x32xf32> to vector<1x8x32xf32>
    %424 = arith.truncf %423 : vector<1x8x32xf32> to vector<1x8x32xbf16>
    %425 = vector.extract_strided_slice %424 {offsets = [0, 0, 0], sizes = [1, 8, 8], strides = [1, 1, 1]} : vector<1x8x32xbf16> to vector<1x8x8xbf16>
    %426 = vector.extract_strided_slice %52 {offsets = [0, 0, 0], sizes = [1, 8, 8], strides = [1, 1, 1]} : vector<1x8x32xbf16> to vector<1x8x8xbf16>
    %427 = vector.extract_strided_slice %53 {offsets = [0, 0, 0], sizes = [1, 8, 8], strides = [1, 1, 1]} : vector<1x8x32xbf16> to vector<1x8x8xbf16>
    "tpu.trace_start"() <{level = 10 : i32, message = "btd,bsd->bts"}> : () -> ()
    %cst_133 = arith.constant dense<0.000000e+00> : vector<1x8x8xf32>
    %428 = tpu.matmul %425, %426, %cst_133 {dimension_numbers = #tpu.dot_dimension_numbers<[2], [2], [1], [1], [0, 0, 0, 1, 1, 1], [0], [0]>} : vector<1x8x8xbf16>, vector<1x8x8xbf16>, vector<1x8x8xf32> -> vector<1x8x8xf32>
    "tpu.trace_stop"() : () -> ()
    %cst_134 = arith.constant dense<0xFF800000> : vector<1x8xf32>
    %429 = vector.multi_reduction <maximumf>, %428, %cst_134 [2] : vector<1x8x8xf32> to vector<1x8xf32>
    %430 = vector.shape_cast %429 : vector<1x8xf32> to vector<1x8x1xf32>
    %431 = vector.broadcast %430 : vector<1x8x1xf32> to vector<1x8x8xf32>
    %432 = arith.subf %428, %431 : vector<1x8x8xf32>
    %433 = math.exp %432 : vector<1x8x8xf32>
    %cst_135 = arith.constant dense<0.000000e+00> : vector<1x8xf32>
    %434 = vector.multi_reduction <add>, %433, %cst_135 [2] : vector<1x8x8xf32> to vector<1x8xf32>
    %435 = vector.shape_cast %434 : vector<1x8xf32> to vector<1x8x1xf32>
    %436 = tpu.reciprocal %435 {approx = true} : vector<1x8x1xf32> -> vector<1x8x1xf32>
    %437 = arith.mulf %435, %436 : vector<1x8x1xf32>
    %cst_136 = arith.constant 2.000000e+00 : f32
    %438 = vector.broadcast %cst_136 : f32 to vector<1x8x1xf32>
    %439 = arith.subf %438, %437 : vector<1x8x1xf32>
    %440 = arith.mulf %436, %439 : vector<1x8x1xf32>
    %441 = vector.broadcast %440 : vector<1x8x1xf32> to vector<1x8x8xf32>
    %442 = arith.mulf %433, %441 : vector<1x8x8xf32>
    %443 = arith.truncf %442 : vector<1x8x8xf32> to vector<1x8x8xbf16>
    "tpu.trace_start"() <{level = 10 : i32, message = "bts,bsd->btd"}> : () -> ()
    %cst_137 = arith.constant dense<0.000000e+00> : vector<1x8x8xf32>
    %444 = tpu.matmul %443, %427, %cst_137 {dimension_numbers = #tpu.dot_dimension_numbers<[2], [1], [1], [2], [0, 0, 0, 1, 1, 2], [0], [0]>} : vector<1x8x8xbf16>, vector<1x8x8xbf16>, vector<1x8x8xf32> -> vector<1x8x8xf32>
    "tpu.trace_stop"() : () -> ()
    %445 = vector.extract_strided_slice %424 {offsets = [0, 0, 8], sizes = [1, 8, 8], strides = [1, 1, 1]} : vector<1x8x32xbf16> to vector<1x8x8xbf16>
    %446 = vector.extract_strided_slice %52 {offsets = [0, 0, 8], sizes = [1, 8, 8], strides = [1, 1, 1]} : vector<1x8x32xbf16> to vector<1x8x8xbf16>
    %447 = vector.extract_strided_slice %53 {offsets = [0, 0, 8], sizes = [1, 8, 8], strides = [1, 1, 1]} : vector<1x8x32xbf16> to vector<1x8x8xbf16>
    "tpu.trace_start"() <{level = 10 : i32, message = "btd,bsd->bts"}> : () -> ()
    %cst_138 = arith.constant dense<0.000000e+00> : vector<1x8x8xf32>
    %448 = tpu.matmul %445, %446, %cst_138 {dimension_numbers = #tpu.dot_dimension_numbers<[2], [2], [1], [1], [0, 0, 0, 1, 1, 1], [0], [0]>} : vector<1x8x8xbf16>, vector<1x8x8xbf16>, vector<1x8x8xf32> -> vector<1x8x8xf32>
    "tpu.trace_stop"() : () -> ()
    %cst_139 = arith.constant dense<0xFF800000> : vector<1x8xf32>
    %449 = vector.multi_reduction <maximumf>, %448, %cst_139 [2] : vector<1x8x8xf32> to vector<1x8xf32>
    %450 = vector.shape_cast %449 : vector<1x8xf32> to vector<1x8x1xf32>
    %451 = vector.broadcast %450 : vector<1x8x1xf32> to vector<1x8x8xf32>
    %452 = arith.subf %448, %451 : vector<1x8x8xf32>
    %453 = math.exp %452 : vector<1x8x8xf32>
    %cst_140 = arith.constant dense<0.000000e+00> : vector<1x8xf32>
    %454 = vector.multi_reduction <add>, %453, %cst_140 [2] : vector<1x8x8xf32> to vector<1x8xf32>
    %455 = vector.shape_cast %454 : vector<1x8xf32> to vector<1x8x1xf32>
    %456 = tpu.reciprocal %455 {approx = true} : vector<1x8x1xf32> -> vector<1x8x1xf32>
    %457 = arith.mulf %455, %456 : vector<1x8x1xf32>
    %cst_141 = arith.constant 2.000000e+00 : f32
    %458 = vector.broadcast %cst_141 : f32 to vector<1x8x1xf32>
    %459 = arith.subf %458, %457 : vector<1x8x1xf32>
    %460 = arith.mulf %456, %459 : vector<1x8x1xf32>
    %461 = vector.broadcast %460 : vector<1x8x1xf32> to vector<1x8x8xf32>
    %462 = arith.mulf %453, %461 : vector<1x8x8xf32>
    %463 = arith.truncf %462 : vector<1x8x8xf32> to vector<1x8x8xbf16>
    "tpu.trace_start"() <{level = 10 : i32, message = "bts,bsd->btd"}> : () -> ()
    %cst_142 = arith.constant dense<0.000000e+00> : vector<1x8x8xf32>
    %464 = tpu.matmul %463, %447, %cst_142 {dimension_numbers = #tpu.dot_dimension_numbers<[2], [1], [1], [2], [0, 0, 0, 1, 1, 2], [0], [0]>} : vector<1x8x8xbf16>, vector<1x8x8xbf16>, vector<1x8x8xf32> -> vector<1x8x8xf32>
    "tpu.trace_stop"() : () -> ()
    %465 = vector.extract_strided_slice %424 {offsets = [0, 0, 16], sizes = [1, 8, 8], strides = [1, 1, 1]} : vector<1x8x32xbf16> to vector<1x8x8xbf16>
    %466 = vector.extract_strided_slice %52 {offsets = [0, 0, 16], sizes = [1, 8, 8], strides = [1, 1, 1]} : vector<1x8x32xbf16> to vector<1x8x8xbf16>
    %467 = vector.extract_strided_slice %53 {offsets = [0, 0, 16], sizes = [1, 8, 8], strides = [1, 1, 1]} : vector<1x8x32xbf16> to vector<1x8x8xbf16>
    "tpu.trace_start"() <{level = 10 : i32, message = "btd,bsd->bts"}> : () -> ()
    %cst_143 = arith.constant dense<0.000000e+00> : vector<1x8x8xf32>
    %468 = tpu.matmul %465, %466, %cst_143 {dimension_numbers = #tpu.dot_dimension_numbers<[2], [2], [1], [1], [0, 0, 0, 1, 1, 1], [0], [0]>} : vector<1x8x8xbf16>, vector<1x8x8xbf16>, vector<1x8x8xf32> -> vector<1x8x8xf32>
    "tpu.trace_stop"() : () -> ()
    %cst_144 = arith.constant dense<0xFF800000> : vector<1x8xf32>
    %469 = vector.multi_reduction <maximumf>, %468, %cst_144 [2] : vector<1x8x8xf32> to vector<1x8xf32>
    %470 = vector.shape_cast %469 : vector<1x8xf32> to vector<1x8x1xf32>
    %471 = vector.broadcast %470 : vector<1x8x1xf32> to vector<1x8x8xf32>
    %472 = arith.subf %468, %471 : vector<1x8x8xf32>
    %473 = math.exp %472 : vector<1x8x8xf32>
    %cst_145 = arith.constant dense<0.000000e+00> : vector<1x8xf32>
    %474 = vector.multi_reduction <add>, %473, %cst_145 [2] : vector<1x8x8xf32> to vector<1x8xf32>
    %475 = vector.shape_cast %474 : vector<1x8xf32> to vector<1x8x1xf32>
    %476 = tpu.reciprocal %475 {approx = true} : vector<1x8x1xf32> -> vector<1x8x1xf32>
    %477 = arith.mulf %475, %476 : vector<1x8x1xf32>
    %cst_146 = arith.constant 2.000000e+00 : f32
    %478 = vector.broadcast %cst_146 : f32 to vector<1x8x1xf32>
    %479 = arith.subf %478, %477 : vector<1x8x1xf32>
    %480 = arith.mulf %476, %479 : vector<1x8x1xf32>
    %481 = vector.broadcast %480 : vector<1x8x1xf32> to vector<1x8x8xf32>
    %482 = arith.mulf %473, %481 : vector<1x8x8xf32>
    %483 = arith.truncf %482 : vector<1x8x8xf32> to vector<1x8x8xbf16>
    "tpu.trace_start"() <{level = 10 : i32, message = "bts,bsd->btd"}> : () -> ()
    %cst_147 = arith.constant dense<0.000000e+00> : vector<1x8x8xf32>
    %484 = tpu.matmul %483, %467, %cst_147 {dimension_numbers = #tpu.dot_dimension_numbers<[2], [1], [1], [2], [0, 0, 0, 1, 1, 2], [0], [0]>} : vector<1x8x8xbf16>, vector<1x8x8xbf16>, vector<1x8x8xf32> -> vector<1x8x8xf32>
    "tpu.trace_stop"() : () -> ()
    %485 = vector.extract_strided_slice %424 {offsets = [0, 0, 24], sizes = [1, 8, 8], strides = [1, 1, 1]} : vector<1x8x32xbf16> to vector<1x8x8xbf16>
    %486 = vector.extract_strided_slice %52 {offsets = [0, 0, 24], sizes = [1, 8, 8], strides = [1, 1, 1]} : vector<1x8x32xbf16> to vector<1x8x8xbf16>
    %487 = vector.extract_strided_slice %53 {offsets = [0, 0, 24], sizes = [1, 8, 8], strides = [1, 1, 1]} : vector<1x8x32xbf16> to vector<1x8x8xbf16>
    "tpu.trace_start"() <{level = 10 : i32, message = "btd,bsd->bts"}> : () -> ()
    %cst_148 = arith.constant dense<0.000000e+00> : vector<1x8x8xf32>
    %488 = tpu.matmul %485, %486, %cst_148 {dimension_numbers = #tpu.dot_dimension_numbers<[2], [2], [1], [1], [0, 0, 0, 1, 1, 1], [0], [0]>} : vector<1x8x8xbf16>, vector<1x8x8xbf16>, vector<1x8x8xf32> -> vector<1x8x8xf32>
    "tpu.trace_stop"() : () -> ()
    %cst_149 = arith.constant dense<0xFF800000> : vector<1x8xf32>
    %489 = vector.multi_reduction <maximumf>, %488, %cst_149 [2] : vector<1x8x8xf32> to vector<1x8xf32>
    %490 = vector.shape_cast %489 : vector<1x8xf32> to vector<1x8x1xf32>
    %491 = vector.broadcast %490 : vector<1x8x1xf32> to vector<1x8x8xf32>
    %492 = arith.subf %488, %491 : vector<1x8x8xf32>
    %493 = math.exp %492 : vector<1x8x8xf32>
    %cst_150 = arith.constant dense<0.000000e+00> : vector<1x8xf32>
    %494 = vector.multi_reduction <add>, %493, %cst_150 [2] : vector<1x8x8xf32> to vector<1x8xf32>
    %495 = vector.shape_cast %494 : vector<1x8xf32> to vector<1x8x1xf32>
    %496 = tpu.reciprocal %495 {approx = true} : vector<1x8x1xf32> -> vector<1x8x1xf32>
    %497 = arith.mulf %495, %496 : vector<1x8x1xf32>
    %cst_151 = arith.constant 2.000000e+00 : f32
    %498 = vector.broadcast %cst_151 : f32 to vector<1x8x1xf32>
    %499 = arith.subf %498, %497 : vector<1x8x1xf32>
    %500 = arith.mulf %496, %499 : vector<1x8x1xf32>
    %501 = vector.broadcast %500 : vector<1x8x1xf32> to vector<1x8x8xf32>
    %502 = arith.mulf %493, %501 : vector<1x8x8xf32>
    %503 = arith.truncf %502 : vector<1x8x8xf32> to vector<1x8x8xbf16>
    "tpu.trace_start"() <{level = 10 : i32, message = "bts,bsd->btd"}> : () -> ()
    %cst_152 = arith.constant dense<0.000000e+00> : vector<1x8x8xf32>
    %504 = tpu.matmul %503, %487, %cst_152 {dimension_numbers = #tpu.dot_dimension_numbers<[2], [1], [1], [2], [0, 0, 0, 1, 1, 2], [0], [0]>} : vector<1x8x8xbf16>, vector<1x8x8xbf16>, vector<1x8x8xf32> -> vector<1x8x8xf32>
    "tpu.trace_stop"() : () -> ()
    %505 = tpu.concatenate %444, %464, %484, %504 in 2 : vector<1x8x8xf32>, vector<1x8x8xf32>, vector<1x8x8xf32>, vector<1x8x8xf32> -> vector<1x8x32xf32>
    %506 = vector.shape_cast %505 : vector<1x8x32xf32> to vector<8x32xf32>
    %507 = arith.truncf %506 : vector<8x32xf32> to vector<8x32xbf16>
    %cst_153 = arith.constant dense<0.000000e+00> : vector<8x32xf32>
    %508 = tpu.matmul %507, %6, %cst_153 {dimension_numbers = #tpu.dot_dimension_numbers<[1], [0], [0], [1], [0, 0, 1, 1], [], []>} : vector<8x32xbf16>, vector<32x32xbf16>, vector<8x32xf32> -> vector<8x32xf32>
    %509 = arith.addf %508, %20 : vector<8x32xf32>
    %510 = arith.addf %419, %509 : vector<8x32xf32>
    %cst_154 = arith.constant dense<0.000000e+00> : vector<8xf32>
    %511 = vector.multi_reduction <add>, %510, %cst_154 [1] : vector<8x32xf32> to vector<8xf32>
    %512 = vector.shape_cast %511 : vector<8xf32> to vector<8x1xf32>
    %cst_155 = arith.constant 3.200000e+01 : f32
    %513 = vector.broadcast %cst_155 : f32 to vector<8x1xf32>
    %514 = arith.divf %512, %513 : vector<8x1xf32>
    %515 = vector.broadcast %514 : vector<8x1xf32> to vector<8x32xf32>
    %516 = arith.subf %510, %515 : vector<8x32xf32>
    %517 = arith.mulf %516, %516 : vector<8x32xf32>
    %cst_156 = arith.constant dense<0.000000e+00> : vector<8xf32>
    %518 = vector.multi_reduction <add>, %517, %cst_156 [1] : vector<8x32xf32> to vector<8xf32>
    %519 = vector.shape_cast %518 : vector<8xf32> to vector<8x1xf32>
    %cst_157 = arith.constant 3.200000e+01 : f32
    %520 = vector.broadcast %cst_157 : f32 to vector<8x1xf32>
    %521 = arith.divf %519, %520 : vector<8x1xf32>
    %cst_158 = arith.constant 9.99999974E-6 : f32
    %522 = vector.broadcast %cst_158 : f32 to vector<8x1xf32>
    %523 = arith.addf %521, %522 : vector<8x1xf32>
    %524 = math.rsqrt %523 : vector<8x1xf32>
    %525 = vector.broadcast %524 : vector<8x1xf32> to vector<8x32xf32>
    %526 = arith.mulf %516, %525 : vector<8x32xf32>
    %527 = arith.mulf %526, %35 : vector<8x32xf32>
    %528 = arith.addf %527, %38 : vector<8x32xf32>
    %529 = arith.truncf %528 : vector<8x32xf32> to vector<8x32xbf16>
    %cst_159 = arith.constant dense<0.000000e+00> : vector<8x64xf32>
    %530 = tpu.matmul %529, %7, %cst_159 {dimension_numbers = #tpu.dot_dimension_numbers<[1], [0], [0], [1], [0, 0, 1, 1], [], []>} : vector<8x32xbf16>, vector<32x64xbf16>, vector<8x64xf32> -> vector<8x64xf32>
    %531 = arith.addf %530, %23 : vector<8x64xf32>
    %cst_160 = arith.constant 0.000000e+00 : f32
    %532 = vector.broadcast %cst_160 : f32 to vector<8x64xf32>
    %533 = arith.maximumf %531, %532 : vector<8x64xf32>
    %534 = arith.truncf %533 : vector<8x64xf32> to vector<8x64xbf16>
    %cst_161 = arith.constant dense<0.000000e+00> : vector<8x32xf32>
    %535 = tpu.matmul %534, %8, %cst_161 {dimension_numbers = #tpu.dot_dimension_numbers<[1], [0], [0], [1], [0, 0, 1, 1], [], []>} : vector<8x64xbf16>, vector<64x32xbf16>, vector<8x32xf32> -> vector<8x32xf32>
    %536 = arith.addf %535, %26 : vector<8x32xf32>
    %537 = arith.addf %528, %536 : vector<8x32xf32>
    %cst_162 = arith.constant dense<0.000000e+00> : vector<8xf32>
    %538 = vector.multi_reduction <add>, %537, %cst_162 [1] : vector<8x32xf32> to vector<8xf32>
    %539 = vector.shape_cast %538 : vector<8xf32> to vector<8x1xf32>
    %cst_163 = arith.constant 3.200000e+01 : f32
    %540 = vector.broadcast %cst_163 : f32 to vector<8x1xf32>
    %541 = arith.divf %539, %540 : vector<8x1xf32>
    %542 = vector.broadcast %541 : vector<8x1xf32> to vector<8x32xf32>
    %543 = arith.subf %537, %542 : vector<8x32xf32>
    %544 = arith.mulf %543, %543 : vector<8x32xf32>
    %cst_164 = arith.constant dense<0.000000e+00> : vector<8xf32>
    %545 = vector.multi_reduction <add>, %544, %cst_164 [1] : vector<8x32xf32> to vector<8xf32>
    %546 = vector.shape_cast %545 : vector<8xf32> to vector<8x1xf32>
    %cst_165 = arith.constant 3.200000e+01 : f32
    %547 = vector.broadcast %cst_165 : f32 to vector<8x1xf32>
    %548 = arith.divf %546, %547 : vector<8x1xf32>
    %cst_166 = arith.constant 9.99999974E-6 : f32
    %549 = vector.broadcast %cst_166 : f32 to vector<8x1xf32>
    %550 = arith.addf %548, %549 : vector<8x1xf32>
    %551 = math.rsqrt %550 : vector<8x1xf32>
    %552 = vector.broadcast %551 : vector<8x1xf32> to vector<8x32xf32>
    %553 = arith.mulf %543, %552 : vector<8x32xf32>
    %554 = arith.mulf %553, %41 : vector<8x32xf32>
    %555 = arith.addf %554, %44 : vector<8x32xf32>
    %c0_167 = arith.constant 0 : index
    %c0_168 = arith.constant 0 : index
    %556 = vector.load %arg23[%c0_167, %c0_168] : memref<8x32xf32, #tpu.memory_space<vmem>>, vector<8x32xf32>
    tpu.vector_store %arg23[%c0_167, %c0_168], %555 {strides = array<i32>} : memref<8x32xf32, #tpu.memory_space<vmem>>, vector<8x32xf32>,
    return
  }
  func.func @transform_0(%arg0: i32) -> (i32, i32) {
    %c0_i32 = arith.constant 0 : i32
    %c0_i32_0 = arith.constant 0 : i32
    return %arg0, %c0_i32 : i32, i32
  }
  func.func @transform_1(%arg0: i32) -> (i32, i32) {
    %c0_i32 = arith.constant 0 : i32
    %c0_i32_0 = arith.constant 0 : i32
    return %arg0, %c0_i32 : i32, i32
  }
  func.func @transform_2(%arg0: i32) -> (i32, i32) {
    %c0_i32 = arith.constant 0 : i32
    %c0_i32_0 = arith.constant 0 : i32
    %c0_i32_1 = arith.constant 0 : i32
    return %c0_i32, %c0_i32_0 : i32, i32
  }
  func.func @transform_3(%arg0: i32) -> (i32, i32) {
    %c0_i32 = arith.constant 0 : i32
    %c0_i32_0 = arith.constant 0 : i32
    %c0_i32_1 = arith.constant 0 : i32
    return %c0_i32, %c0_i32_0 : i32, i32
  }
  func.func @transform_4(%arg0: i32) -> (i32, i32) {
    %c0_i32 = arith.constant 0 : i32
    %c0_i32_0 = arith.constant 0 : i32
    %c0_i32_1 = arith.constant 0 : i32
    return %c0_i32, %c0_i32_0 : i32, i32
  }
  func.func @transform_5(%arg0: i32) -> (i32, i32) {
    %c0_i32 = arith.constant 0 : i32
    %c0_i32_0 = arith.constant 0 : i32
    %c0_i32_1 = arith.constant 0 : i32
    return %c0_i32, %c0_i32_0 : i32, i32
  }
  func.func @transform_6(%arg0: i32) -> (i32, i32) {
    %c0_i32 = arith.constant 0 : i32
    %c0_i32_0 = arith.constant 0 : i32
    %c0_i32_1 = arith.constant 0 : i32
    return %c0_i32, %c0_i32_0 : i32, i32
  }
  func.func @transform_7(%arg0: i32) -> (i32, i32) {
    %c0_i32 = arith.constant 0 : i32
    %c0_i32_0 = arith.constant 0 : i32
    %c0_i32_1 = arith.constant 0 : i32
    return %c0_i32, %c0_i32_0 : i32, i32
  }
  func.func @transform_8(%arg0: i32) -> (i32, i32) {
    %c0_i32 = arith.constant 0 : i32
    %c0_i32_0 = arith.constant 0 : i32
    %c0_i32_1 = arith.constant 0 : i32
    return %c0_i32, %c0_i32_0 : i32, i32
  }
  func.func @transform_9(%arg0: i32) -> (i32, i32) {
    %c0_i32 = arith.constant 0 : i32
    %c0_i32_0 = arith.constant 0 : i32
    %c0_i32_1 = arith.constant 0 : i32
    return %c0_i32, %c0_i32_0 : i32, i32
  }
  func.func @transform_10(%arg0: i32) -> (i32, i32) {
    %c0_i32 = arith.constant 0 : i32
    %c0_i32_0 = arith.constant 0 : i32
    %c0_i32_1 = arith.constant 0 : i32
    return %c0_i32, %c0_i32_0 : i32, i32
  }
  func.func @transform_11(%arg0: i32) -> (i32, i32) {
    %c0_i32 = arith.constant 0 : i32
    %c0_i32_0 = arith.constant 0 : i32
    %c0_i32_1 = arith.constant 0 : i32
    return %c0_i32, %c0_i32_0 : i32, i32
  }
  func.func @transform_12(%arg0: i32) -> (i32, i32) {
    %c0_i32 = arith.constant 0 : i32
    %c0_i32_0 = arith.constant 0 : i32
    %c0_i32_1 = arith.constant 0 : i32
    return %c0_i32, %c0_i32_0 : i32, i32
  }
  func.func @transform_13(%arg0: i32) -> (i32, i32) {
    %c0_i32 = arith.constant 0 : i32
    %c0_i32_0 = arith.constant 0 : i32
    %c0_i32_1 = arith.constant 0 : i32
    return %c0_i32, %c0_i32_0 : i32, i32
  }
  func.func @transform_14(%arg0: i32) -> (i32, i32) {
    %c0_i32 = arith.constant 0 : i32
    %c0_i32_0 = arith.constant 0 : i32
    %c0_i32_1 = arith.constant 0 : i32
    return %c0_i32, %c0_i32_0 : i32, i32
  }
  func.func @transform_15(%arg0: i32) -> (i32, i32) {
    %c0_i32 = arith.constant 0 : i32
    %c0_i32_0 = arith.constant 0 : i32
    %c0_i32_1 = arith.constant 0 : i32
    return %c0_i32, %c0_i32_0 : i32, i32
  }
  func.func @transform_16(%arg0: i32) -> (i32, i32) {
    %c0_i32 = arith.constant 0 : i32
    %c0_i32_0 = arith.constant 0 : i32
    %c0_i32_1 = arith.constant 0 : i32
    return %c0_i32, %c0_i32_0 : i32, i32
  }
  func.func @transform_17(%arg0: i32) -> (i32, i32) {
    %c0_i32 = arith.constant 0 : i32
    %c0_i32_0 = arith.constant 0 : i32
    %c0_i32_1 = arith.constant 0 : i32
    return %c0_i32, %c0_i32_0 : i32, i32
  }
  func.func @transform_18(%arg0: i32) -> (i32, i32) {
    %c0_i32 = arith.constant 0 : i32
    %c0_i32_0 = arith.constant 0 : i32
    %c0_i32_1 = arith.constant 0 : i32
    return %c0_i32, %c0_i32_0 : i32, i32
  }
  func.func @transform_19(%arg0: i32) -> (i32, i32) {
    %c0_i32 = arith.constant 0 : i32
    %c0_i32_0 = arith.constant 0 : i32
    %c0_i32_1 = arith.constant 0 : i32
    return %c0_i32, %c0_i32_0 : i32, i32
  }
  func.func @transform_20(%arg0: i32) -> (i32, i32) {
    %c0_i32 = arith.constant 0 : i32
    %c0_i32_0 = arith.constant 0 : i32
    %c0_i32_1 = arith.constant 0 : i32
    return %c0_i32, %c0_i32_0 : i32, i32
  }
  func.func @transform_21(%arg0: i32) -> (i32, i32) {
    %c0_i32 = arith.constant 0 : i32
    %c0_i32_0 = arith.constant 0 : i32
    %c0_i32_1 = arith.constant 0 : i32
    return %c0_i32, %c0_i32_0 : i32, i32
  }
  func.func @transform_22(%arg0: i32) -> (i32, i32) {
    %c0_i32 = arith.constant 0 : i32
    %c0_i32_0 = arith.constant 0 : i32
    return %arg0, %c0_i32 : i32, i32
  }
}

</mosaic_0001>

<llo_original>
// kernel: tpu_custom_call.1
$region0: #{tpu_custom_call.1}
  #allocation0 [shape = 'u32[]', space=smem, size = 0x4, offset = 0x4, fixed_abs, tag = 'smem constant byte address 0x4 - core index']
  #allocation1 [shape = 'u32[144,128]{1,0:T(1,128)}', space=vmem, size = 0x12000, scoped, tag = 'internal scratch']
  %s0 = inlined_call_operand.vmem [shape: f32[16,32], index: 0, kind: input, shape index: {}]
  %s1 = inlined_call_operand.hbm [shape: bf16[16,32], index: 1, kind: input, shape index: {}]
  %s2 = inlined_call_operand.vmem [shape: bf16[32,96], index: 2, kind: input, shape index: {}]
  %s3 = inlined_call_operand.vmem [shape: f32[1,96], index: 3, kind: input, shape index: {}]
  %s4 = inlined_call_operand.vmem [shape: bf16[32,32], index: 4, kind: input, shape index: {}]
  %s5 = inlined_call_operand.vmem [shape: f32[1,32], index: 5, kind: input, shape index: {}]
  %s6 = inlined_call_operand.hbm [shape: bf16[32,32], index: 6, kind: input, shape index: {}]
  %s7 = inlined_call_operand.vmem [shape: f32[1,32], index: 7, kind: input, shape index: {}]
  %s8 = inlined_call_operand.hbm [shape: bf16[32,64], index: 8, kind: input, shape index: {}]
  %s9 = inlined_call_operand.vmem [shape: f32[1,64], index: 9, kind: input, shape index: {}]
  %s10 = inlined_call_operand.hbm [shape: bf16[32,32], index: 10, kind: input, shape index: {}]
  %s11 = inlined_call_operand.vmem [shape: f32[1,32], index: 11, kind: input, shape index: {}]
  %s12 = inlined_call_operand.hbm [shape: bf16[32,64], index: 12, kind: input, shape index: {}]
  %s13 = inlined_call_operand.vmem [shape: f32[1,64], index: 13, kind: input, shape index: {}]
  %s14 = inlined_call_operand.vmem [shape: bf16[64,32], index: 14, kind: input, shape index: {}]
  %s15 = inlined_call_operand.vmem [shape: f32[1,32], index: 15, kind: input, shape index: {}]
  %s16 = inlined_call_operand.vmem [shape: f32[1,32], index: 16, kind: input, shape index: {}]
  %s17 = inlined_call_operand.vmem [shape: f32[1,32], index: 17, kind: input, shape index: {}]
  %s18 = inlined_call_operand.vmem [shape: f32[1,32], index: 18, kind: input, shape index: {}]
  %s19 = inlined_call_operand.vmem [shape: f32[1,32], index: 19, kind: input, shape index: {}]
  %s20 = inlined_call_operand.vmem [shape: f32[1,32], index: 20, kind: input, shape index: {}]
  %s21 = inlined_call_operand.vmem [shape: f32[1,32], index: 21, kind: input, shape index: {}]
  %s22 = inlined_call_operand.hbm [shape: f32[16,32], index: 22, kind: output, shape index: {}]
  %s23 = sld [smem:[#allocation0]]
  $region141: #{tpu_custom_call.1} parent=0
    _
  %s25 = ssub.s32 1, %s23
  %s26 = scalar_select 0, %s25, %s23
  $region1: #{tpu_custom_call.1} parent=0
    #allocation2 [shape = 'u8[4096]{0}', space=vmem, size = 0x1000, scoped, tag = 'input window, operand 1']
    #allocation3 [shape = 's32[2]{0}', space=sflag, size = 0x8, scoped, tag = 'scoped memory for tpu_custom_call.1']
    #allocation4 [shape = 's32[2]{0}', space=sflag, size = 0x8, scoped, tag = 'scoped memory for tpu_custom_call.1']
    #allocation5 [shape = 'u8[8192]{0}', space=vmem, size = 0x2000, scoped, tag = 'input window, operand 6, single buffered']
    #allocation6 [shape = 's32[1]{0}', space=sflag, size = 0x4, scoped, tag = 'scoped memory for tpu_custom_call.1']
    #allocation7 [shape = 'u8[8192]{0}', space=vmem, size = 0x2000, scoped, tag = 'input window, operand 8, single buffered']
    #allocation8 [shape = 'u8[8192]{0}', space=vmem, size = 0x2000, scoped, tag = 'input window, operand 10, single buffered']
    #allocation9 [shape = 's32[1]{0}', space=sflag, size = 0x4, scoped, tag = 'scoped memory for tpu_custom_call.1']
    #allocation10 [shape = 'u8[8192]{0}', space=vmem, size = 0x2000, scoped, tag = 'input window, operand 12, single buffered']
    #allocation11 [shape = 'u8[8192]{0}', space=vmem, size = 0x2000, scoped, tag = 'output window, operand 0']
    %27 = vsyncpa [#allocation3], 0
    %s28 = scalar_lea.sflag [#allocation3], 1
    %29 = vsyncpa %s28, 0
    %30 = vsyncpa [#allocation6], 0
    %31 = vsyncpa [#allocation9], 0
    %32 = vsyncpa [#allocation4], 0
    %s33 = scalar_lea.sflag [#allocation4], 1
    %34 = vsyncpa %s33, 0
    loop: start=0, step=1, limit=4
    $region2: #{tpu_custom_call.1} parent=1 // loop_pre_header
      _
    $region3: #{tpu_custom_call.1} parent=1 // loop_header
      %s36 = sphi 0, %s40
      %p37 = scmp.ge.s32.totalorder %s36, 4
      %s46 = sphi 0, %s48
      %s49 = sphi 0, %s46
      %s50 = sphi 0, %s49
      %s66 = sphi 0, %s50
      %s72 = sphi 0, %s74
      %s75 = sphi 0, %s72
      %s76 = sphi 0, %s75
      %s92 = sphi 0, %s76
      %s96 = sphi 0, %s96
      %s98 = sphi 0, %s96
      %s99 = sphi 0, %s98
      %s113 = sphi 0, %s99
      %s117 = sphi 0, %s117
      %s119 = sphi 0, %s117
      %s120 = sphi 0, %s119
      %s134 = sphi 0, %s120
      %s138 = sphi 0, %s138
      %s140 = sphi 0, %s138
      %s141 = sphi 0, %s140
      %s155 = sphi 0, %s141
      %s159 = sphi 0, %s159
      %s161 = sphi 0, %s159
      %s162 = sphi 0, %s161
      %s176 = sphi 0, %s162
      %s180 = sphi 0, %s180
      %s182 = sphi 0, %s180
      %s183 = sphi 0, %s182
      %s197 = sphi 0, %s183
      %s201 = sphi 0, %s201
      %s203 = sphi 0, %s201
      %s204 = sphi 0, %s203
      %s218 = sphi 0, %s204
      %s222 = sphi 0, %s222
      %s224 = sphi 0, %s222
      %s225 = sphi 0, %s224
      %s239 = sphi 0, %s225
      %s243 = sphi 0, %s243
      %s245 = sphi 0, %s243
      %s246 = sphi 0, %s245
      %s260 = sphi 0, %s246
      %s264 = sphi 0, %s264
      %s266 = sphi 0, %s264
      %s267 = sphi 0, %s266
      %s281 = sphi 0, %s267
      %s285 = sphi 0, %s285
      %s287 = sphi 0, %s285
      %s288 = sphi 0, %s287
      %s302 = sphi 0, %s288
      %s306 = sphi 0, %s306
      %s308 = sphi 0, %s306
      %s309 = sphi 0, %s308
      %s323 = sphi 0, %s309
      %s327 = sphi 0, %s327
      %s329 = sphi 0, %s327
      %s330 = sphi 0, %s329
      %s344 = sphi 0, %s330
      %s348 = sphi 0, %s348
      %s350 = sphi 0, %s348
      %s351 = sphi 0, %s350
      %s365 = sphi 0, %s351
      %s369 = sphi 0, %s369
      %s371 = sphi 0, %s369
      %s372 = sphi 0, %s371
      %s386 = sphi 0, %s372
      %s390 = sphi 0, %s390
      %s392 = sphi 0, %s390
      %s393 = sphi 0, %s392
      %s407 = sphi 0, %s393
      %s411 = sphi 0, %s411
      %s413 = sphi 0, %s411
      %s414 = sphi 0, %s413
      %s428 = sphi 0, %s414
      %s432 = sphi 0, %s432
      %s434 = sphi 0, %s432
      %s435 = sphi 0, %s434
      %s449 = sphi 0, %s435
      %s453 = sphi 0, %s453
      %s455 = sphi 0, %s453
      %s456 = sphi 0, %s455
      %s470 = sphi 0, %s456
      %s474 = sphi 0, %s474
      %s476 = sphi 0, %s474
      %s477 = sphi 0, %s476
      %s491 = sphi 0, %s477
      %s495 = sphi 0, %s495
      %s497 = sphi 0, %s495
      %s498 = sphi 0, %s497
      %s512 = sphi 0, %s498
      %s518 = sphi 0, %s520
      %s521 = sphi 0, %s518
      %s522 = sphi 0, %s521
      %s538 = sphi 0, %s522
    $region4: #{tpu_custom_call.1} parent=1 // loop_header_branch
      %39 = sbr.rel (%p37) target = $region8
    $region5: #{tpu_custom_call.1} parent=1 // loop_body
      %s41 = ssub.s32 %s36, 1
      %s42 = ssub.s32 %s36, 2
      %s43 = sadd.s32 %s36, 1
      %s44 = ssub.s32 %s36, %s43
      %p45 = scmp.eq.s32.totalorder %s44, 0
      %s47 = sadd.s32 %s46, 1
      %s48 = scalar_select %p45, %s46, %s47
      %p51 = pneg %p45
      %p52 = scmp.eq.s32.totalorder %s36, 1
      %p53 = por %p51, %p52
      %p54 = scmp.ne.s32.totalorder %s46, %s49
      %p55 = scmp.eq.s32.totalorder %s36, 0
      %p56 = por %p54, %p55
      %p57 = scmp.ne.s32.totalorder %s46, %s49
      %p58 = scmp.eq.s32.totalorder %s41, 1
      %p59 = por %p57, %p58
      %p60 = scmp.ne.s32.totalorder %s49, %s50
      %p61 = scmp.eq.s32.totalorder %s41, 0
      %p62 = por %p60, %p61
      %p63 = scmp.ne.s32.totalorder %s49, %s50
      %p64 = scmp.eq.s32.totalorder %s42, 1
      %p65 = por %p63, %p64
      %p67 = scmp.ne.s32.totalorder %s50, %s66
      %p68 = scmp.eq.s32.totalorder %s42, 0
      %p69 = por %p67, %p68
      %s70 = ssub.s32 %s36, %s43
      %p71 = scmp.eq.s32.totalorder %s70, 0
      %s73 = sadd.s32 %s72, 1
      %s74 = scalar_select %p71, %s72, %s73
      %p77 = pneg %p71
      %p78 = scmp.eq.s32.totalorder %s36, 1
      %p79 = por %p77, %p78
      %p80 = scmp.ne.s32.totalorder %s72, %s75
      %p81 = scmp.eq.s32.totalorder %s36, 0
      %p82 = por %p80, %p81
      %p83 = scmp.ne.s32.totalorder %s72, %s75
      %p84 = scmp.eq.s32.totalorder %s41, 1
      %p85 = por %p83, %p84
      %p86 = scmp.ne.s32.totalorder %s75, %s76
      %p87 = scmp.eq.s32.totalorder %s41, 0
      %p88 = por %p86, %p87
      %p89 = scmp.ne.s32.totalorder %s75, %s76
      %p90 = scmp.eq.s32.totalorder %s42, 1
      %p91 = por %p89, %p90
      %p93 = scmp.ne.s32.totalorder %s76, %s92
      %p94 = scmp.eq.s32.totalorder %s42, 0
      %p95 = por %p93, %p94
      %s97 = sadd.s32 %s96, 1
      %p100 = scmp.eq.s32.totalorder %s36, 1
      %p101 = scmp.ne.s32.totalorder %s96, %s98
      %p102 = scmp.eq.s32.totalorder %s36, 0
      %p103 = por %p101, %p102
      %p104 = scmp.ne.s32.totalorder %s96, %s98
      %p105 = scmp.eq.s32.totalorder %s41, 1
      %p106 = por %p104, %p105
      %p107 = scmp.ne.s32.totalorder %s98, %s99
      %p108 = scmp.eq.s32.totalorder %s41, 0
      %p109 = por %p107, %p108
      %p110 = scmp.ne.s32.totalorder %s98, %s99
      %p111 = scmp.eq.s32.totalorder %s42, 1
      %p112 = por %p110, %p111
      %p114 = scmp.ne.s32.totalorder %s99, %s113
      %p115 = scmp.eq.s32.totalorder %s42, 0
      %p116 = por %p114, %p115
      %s118 = sadd.s32 %s117, 1
      %p121 = scmp.eq.s32.totalorder %s36, 1
      %p122 = scmp.ne.s32.totalorder %s117, %s119
      %p123 = scmp.eq.s32.totalorder %s36, 0
      %p124 = por %p122, %p123
      %p125 = scmp.ne.s32.totalorder %s117, %s119
      %p126 = scmp.eq.s32.totalorder %s41, 1
      %p127 = por %p125, %p126
      %p128 = scmp.ne.s32.totalorder %s119, %s120
      %p129 = scmp.eq.s32.totalorder %s41, 0
      %p130 = por %p128, %p129
      %p131 = scmp.ne.s32.totalorder %s119, %s120
      %p132 = scmp.eq.s32.totalorder %s42, 1
      %p133 = por %p131, %p132
      %p135 = scmp.ne.s32.totalorder %s120, %s134
      %p136 = scmp.eq.s32.totalorder %s42, 0
      %p137 = por %p135, %p136
      %s139 = sadd.s32 %s138, 1
      %p142 = scmp.eq.s32.totalorder %s36, 1
      %p143 = scmp.ne.s32.totalorder %s138, %s140
      %p144 = scmp.eq.s32.totalorder %s36, 0
      %p145 = por %p143, %p144
      %p146 = scmp.ne.s32.totalorder %s138, %s140
      %p147 = scmp.eq.s32.totalorder %s41, 1
      %p148 = por %p146, %p147
      %p149 = scmp.ne.s32.totalorder %s140, %s141
      %p150 = scmp.eq.s32.totalorder %s41, 0
      %p151 = por %p149, %p150
      %p152 = scmp.ne.s32.totalorder %s140, %s141
      %p153 = scmp.eq.s32.totalorder %s42, 1
      %p154 = por %p152, %p153
      %p156 = scmp.ne.s32.totalorder %s141, %s155
      %p157 = scmp.eq.s32.totalorder %s42, 0
      %p158 = por %p156, %p157
      %s160 = sadd.s32 %s159, 1
      %p163 = scmp.eq.s32.totalorder %s36, 1
      %p164 = scmp.ne.s32.totalorder %s159, %s161
      %p165 = scmp.eq.s32.totalorder %s36, 0
      %p166 = por %p164, %p165
      %p167 = scmp.ne.s32.totalorder %s159, %s161
      %p168 = scmp.eq.s32.totalorder %s41, 1
      %p169 = por %p167, %p168
      %p170 = scmp.ne.s32.totalorder %s161, %s162
      %p171 = scmp.eq.s32.totalorder %s41, 0
      %p172 = por %p170, %p171
      %p173 = scmp.ne.s32.totalorder %s161, %s162
      %p174 = scmp.eq.s32.totalorder %s42, 1
      %p175 = por %p173, %p174
      %p177 = scmp.ne.s32.totalorder %s162, %s176
      %p178 = scmp.eq.s32.totalorder %s42, 0
      %p179 = por %p177, %p178
      %s181 = sadd.s32 %s180, 1
      %p184 = scmp.eq.s32.totalorder %s36, 1
      %p185 = scmp.ne.s32.totalorder %s180, %s182
      %p186 = scmp.eq.s32.totalorder %s36, 0
      %p187 = por %p185, %p186
      %p188 = scmp.ne.s32.totalorder %s180, %s182
      %p189 = scmp.eq.s32.totalorder %s41, 1
      %p190 = por %p188, %p189
      %p191 = scmp.ne.s32.totalorder %s182, %s183
      %p192 = scmp.eq.s32.totalorder %s41, 0
      %p193 = por %p191, %p192
      %p194 = scmp.ne.s32.totalorder %s182, %s183
      %p195 = scmp.eq.s32.totalorder %s42, 1
      %p196 = por %p194, %p195
      %p198 = scmp.ne.s32.totalorder %s183, %s197
      %p199 = scmp.eq.s32.totalorder %s42, 0
      %p200 = por %p198, %p199
      %s202 = sadd.s32 %s201, 1
      %p205 = scmp.eq.s32.totalorder %s36, 1
      %p206 = scmp.ne.s32.totalorder %s201, %s203
      %p207 = scmp.eq.s32.totalorder %s36, 0
      %p208 = por %p206, %p207
      %p209 = scmp.ne.s32.totalorder %s201, %s203
      %p210 = scmp.eq.s32.totalorder %s41, 1
      %p211 = por %p209, %p210
      %p212 = scmp.ne.s32.totalorder %s203, %s204
      %p213 = scmp.eq.s32.totalorder %s41, 0
      %p214 = por %p212, %p213
      %p215 = scmp.ne.s32.totalorder %s203, %s204
      %p216 = scmp.eq.s32.totalorder %s42, 1
      %p217 = por %p215, %p216
      %p219 = scmp.ne.s32.totalorder %s204, %s218
      %p220 = scmp.eq.s32.totalorder %s42, 0
      %p221 = por %p219, %p220
      %s223 = sadd.s32 %s222, 1
      %p226 = scmp.eq.s32.totalorder %s36, 1
      %p227 = scmp.ne.s32.totalorder %s222, %s224
      %p228 = scmp.eq.s32.totalorder %s36, 0
      %p229 = por %p227, %p228
      %p230 = scmp.ne.s32.totalorder %s222, %s224
      %p231 = scmp.eq.s32.totalorder %s41, 1
      %p232 = por %p230, %p231
      %p233 = scmp.ne.s32.totalorder %s224, %s225
      %p234 = scmp.eq.s32.totalorder %s41, 0
      %p235 = por %p233, %p234
      %p236 = scmp.ne.s32.totalorder %s224, %s225
      %p237 = scmp.eq.s32.totalorder %s42, 1
      %p238 = por %p236, %p237
      %p240 = scmp.ne.s32.totalorder %s225, %s239
      %p241 = scmp.eq.s32.totalorder %s42, 0
      %p242 = por %p240, %p241
      %s244 = sadd.s32 %s243, 1
      %p247 = scmp.eq.s32.totalorder %s36, 1
      %p248 = scmp.ne.s32.totalorder %s243, %s245
      %p249 = scmp.eq.s32.totalorder %s36, 0
      %p250 = por %p248, %p249
      %p251 = scmp.ne.s32.totalorder %s243, %s245
      %p252 = scmp.eq.s32.totalorder %s41, 1
      %p253 = por %p251, %p252
      %p254 = scmp.ne.s32.totalorder %s245, %s246
      %p255 = scmp.eq.s32.totalorder %s41, 0
      %p256 = por %p254, %p255
      %p257 = scmp.ne.s32.totalorder %s245, %s246
      %p258 = scmp.eq.s32.totalorder %s42, 1
      %p259 = por %p257, %p258
      %p261 = scmp.ne.s32.totalorder %s246, %s260
      %p262 = scmp.eq.s32.totalorder %s42, 0
      %p263 = por %p261, %p262
      %s265 = sadd.s32 %s264, 1
      %p268 = scmp.eq.s32.totalorder %s36, 1
      %p269 = scmp.ne.s32.totalorder %s264, %s266
      %p270 = scmp.eq.s32.totalorder %s36, 0
      %p271 = por %p269, %p270
      %p272 = scmp.ne.s32.totalorder %s264, %s266
      %p273 = scmp.eq.s32.totalorder %s41, 1
      %p274 = por %p272, %p273
      %p275 = scmp.ne.s32.totalorder %s266, %s267
      %p276 = scmp.eq.s32.totalorder %s41, 0
      %p277 = por %p275, %p276
      %p278 = scmp.ne.s32.totalorder %s266, %s267
      %p279 = scmp.eq.s32.totalorder %s42, 1
      %p280 = por %p278, %p279
      %p282 = scmp.ne.s32.totalorder %s267, %s281
      %p283 = scmp.eq.s32.totalorder %s42, 0
      %p284 = por %p282, %p283
      %s286 = sadd.s32 %s285, 1
      %p289 = scmp.eq.s32.totalorder %s36, 1
      %p290 = scmp.ne.s32.totalorder %s285, %s287
      %p291 = scmp.eq.s32.totalorder %s36, 0
      %p292 = por %p290, %p291
      %p293 = scmp.ne.s32.totalorder %s285, %s287
      %p294 = scmp.eq.s32.totalorder %s41, 1
      %p295 = por %p293, %p294
      %p296 = scmp.ne.s32.totalorder %s287, %s288
      %p297 = scmp.eq.s32.totalorder %s41, 0
      %p298 = por %p296, %p297
      %p299 = scmp.ne.s32.totalorder %s287, %s288
      %p300 = scmp.eq.s32.totalorder %s42, 1
      %p301 = por %p299, %p300
      %p303 = scmp.ne.s32.totalorder %s288, %s302
      %p304 = scmp.eq.s32.totalorder %s42, 0
      %p305 = por %p303, %p304
      %s307 = sadd.s32 %s306, 1
      %p310 = scmp.eq.s32.totalorder %s36, 1
      %p311 = scmp.ne.s32.totalorder %s306, %s308
      %p312 = scmp.eq.s32.totalorder %s36, 0
      %p313 = por %p311, %p312
      %p314 = scmp.ne.s32.totalorder %s306, %s308
      %p315 = scmp.eq.s32.totalorder %s41, 1
      %p316 = por %p314, %p315
      %p317 = scmp.ne.s32.totalorder %s308, %s309
      %p318 = scmp.eq.s32.totalorder %s41, 0
      %p319 = por %p317, %p318
      %p320 = scmp.ne.s32.totalorder %s308, %s309
      %p321 = scmp.eq.s32.totalorder %s42, 1
      %p322 = por %p320, %p321
      %p324 = scmp.ne.s32.totalorder %s309, %s323
      %p325 = scmp.eq.s32.totalorder %s42, 0
      %p326 = por %p324, %p325
      %s328 = sadd.s32 %s327, 1
      %p331 = scmp.eq.s32.totalorder %s36, 1
      %p332 = scmp.ne.s32.totalorder %s327, %s329
      %p333 = scmp.eq.s32.totalorder %s36, 0
      %p334 = por %p332, %p333
      %p335 = scmp.ne.s32.totalorder %s327, %s329
      %p336 = scmp.eq.s32.totalorder %s41, 1
      %p337 = por %p335, %p336
      %p338 = scmp.ne.s32.totalorder %s329, %s330
      %p339 = scmp.eq.s32.totalorder %s41, 0
      %p340 = por %p338, %p339
      %p341 = scmp.ne.s32.totalorder %s329, %s330
      %p342 = scmp.eq.s32.totalorder %s42, 1
      %p343 = por %p341, %p342
      %p345 = scmp.ne.s32.totalorder %s330, %s344
      %p346 = scmp.eq.s32.totalorder %s42, 0
      %p347 = por %p345, %p346
      %s349 = sadd.s32 %s348, 1
      %p352 = scmp.eq.s32.totalorder %s36, 1
      %p353 = scmp.ne.s32.totalorder %s348, %s350
      %p354 = scmp.eq.s32.totalorder %s36, 0
      %p355 = por %p353, %p354
      %p356 = scmp.ne.s32.totalorder %s348, %s350
      %p357 = scmp.eq.s32.totalorder %s41, 1
      %p358 = por %p356, %p357
      %p359 = scmp.ne.s32.totalorder %s350, %s351
      %p360 = scmp.eq.s32.totalorder %s41, 0
      %p361 = por %p359, %p360
      %p362 = scmp.ne.s32.totalorder %s350, %s351
      %p363 = scmp.eq.s32.totalorder %s42, 1
      %p364 = por %p362, %p363
      %p366 = scmp.ne.s32.totalorder %s351, %s365
      %p367 = scmp.eq.s32.totalorder %s42, 0
      %p368 = por %p366, %p367
      %s370 = sadd.s32 %s369, 1
      %p373 = scmp.eq.s32.totalorder %s36, 1
      %p374 = scmp.ne.s32.totalorder %s369, %s371
      %p375 = scmp.eq.s32.totalorder %s36, 0
      %p376 = por %p374, %p375
      %p377 = scmp.ne.s32.totalorder %s369, %s371
      %p378 = scmp.eq.s32.totalorder %s41, 1
      %p379 = por %p377, %p378
      %p380 = scmp.ne.s32.totalorder %s371, %s372
      %p381 = scmp.eq.s32.totalorder %s41, 0
      %p382 = por %p380, %p381
      %p383 = scmp.ne.s32.totalorder %s371, %s372
      %p384 = scmp.eq.s32.totalorder %s42, 1
      %p385 = por %p383, %p384
      %p387 = scmp.ne.s32.totalorder %s372, %s386
      %p388 = scmp.eq.s32.totalorder %s42, 0
      %p389 = por %p387, %p388
      %s391 = sadd.s32 %s390, 1
      %p394 = scmp.eq.s32.totalorder %s36, 1
      %p395 = scmp.ne.s32.totalorder %s390, %s392
      %p396 = scmp.eq.s32.totalorder %s36, 0
      %p397 = por %p395, %p396
      %p398 = scmp.ne.s32.totalorder %s390, %s392
      %p399 = scmp.eq.s32.totalorder %s41, 1
      %p400 = por %p398, %p399
      %p401 = scmp.ne.s32.totalorder %s392, %s393
      %p402 = scmp.eq.s32.totalorder %s41, 0
      %p403 = por %p401, %p402
      %p404 = scmp.ne.s32.totalorder %s392, %s393
      %p405 = scmp.eq.s32.totalorder %s42, 1
      %p406 = por %p404, %p405
      %p408 = scmp.ne.s32.totalorder %s393, %s407
      %p409 = scmp.eq.s32.totalorder %s42, 0
      %p410 = por %p408, %p409
      %s412 = sadd.s32 %s411, 1
      %p415 = scmp.eq.s32.totalorder %s36, 1
      %p416 = scmp.ne.s32.totalorder %s411, %s413
      %p417 = scmp.eq.s32.totalorder %s36, 0
      %p418 = por %p416, %p417
      %p419 = scmp.ne.s32.totalorder %s411, %s413
      %p420 = scmp.eq.s32.totalorder %s41, 1
      %p421 = por %p419, %p420
      %p422 = scmp.ne.s32.totalorder %s413, %s414
      %p423 = scmp.eq.s32.totalorder %s41, 0
      %p424 = por %p422, %p423
      %p425 = scmp.ne.s32.totalorder %s413, %s414
      %p426 = scmp.eq.s32.totalorder %s42, 1
      %p427 = por %p425, %p426
      %p429 = scmp.ne.s32.totalorder %s414, %s428
      %p430 = scmp.eq.s32.totalorder %s42, 0
      %p431 = por %p429, %p430
      %s433 = sadd.s32 %s432, 1
      %p436 = scmp.eq.s32.totalorder %s36, 1
      %p437 = scmp.ne.s32.totalorder %s432, %s434
      %p438 = scmp.eq.s32.totalorder %s36, 0
      %p439 = por %p437, %p438
      %p440 = scmp.ne.s32.totalorder %s432, %s434
      %p441 = scmp.eq.s32.totalorder %s41, 1
      %p442 = por %p440, %p441
      %p443 = scmp.ne.s32.totalorder %s434, %s435
      %p444 = scmp.eq.s32.totalorder %s41, 0
      %p445 = por %p443, %p444
      %p446 = scmp.ne.s32.totalorder %s434, %s435
      %p447 = scmp.eq.s32.totalorder %s42, 1
      %p448 = por %p446, %p447
      %p450 = scmp.ne.s32.totalorder %s435, %s449
      %p451 = scmp.eq.s32.totalorder %s42, 0
      %p452 = por %p450, %p451
      %s454 = sadd.s32 %s453, 1
      %p457 = scmp.eq.s32.totalorder %s36, 1
      %p458 = scmp.ne.s32.totalorder %s453, %s455
      %p459 = scmp.eq.s32.totalorder %s36, 0
      %p460 = por %p458, %p459
      %p461 = scmp.ne.s32.totalorder %s453, %s455
      %p462 = scmp.eq.s32.totalorder %s41, 1
      %p463 = por %p461, %p462
      %p464 = scmp.ne.s32.totalorder %s455, %s456
      %p465 = scmp.eq.s32.totalorder %s41, 0
      %p466 = por %p464, %p465
      %p467 = scmp.ne.s32.totalorder %s455, %s456
      %p468 = scmp.eq.s32.totalorder %s42, 1
      %p469 = por %p467, %p468
      %p471 = scmp.ne.s32.totalorder %s456, %s470
      %p472 = scmp.eq.s32.totalorder %s42, 0
      %p473 = por %p471, %p472
      %s475 = sadd.s32 %s474, 1
      %p478 = scmp.eq.s32.totalorder %s36, 1
      %p479 = scmp.ne.s32.totalorder %s474, %s476
      %p480 = scmp.eq.s32.totalorder %s36, 0
      %p481 = por %p479, %p480
      %p482 = scmp.ne.s32.totalorder %s474, %s476
      %p483 = scmp.eq.s32.totalorder %s41, 1
      %p484 = por %p482, %p483
      %p485 = scmp.ne.s32.totalorder %s476, %s477
      %p486 = scmp.eq.s32.totalorder %s41, 0
      %p487 = por %p485, %p486
      %p488 = scmp.ne.s32.totalorder %s476, %s477
      %p489 = scmp.eq.s32.totalorder %s42, 1
      %p490 = por %p488, %p489
      %p492 = scmp.ne.s32.totalorder %s477, %s491
      %p493 = scmp.eq.s32.totalorder %s42, 0
      %p494 = por %p492, %p493
      %s496 = sadd.s32 %s495, 1
      %p499 = scmp.eq.s32.totalorder %s36, 1
      %p500 = scmp.ne.s32.totalorder %s495, %s497
      %p501 = scmp.eq.s32.totalorder %s36, 0
      %p502 = por %p500, %p501
      %p503 = scmp.ne.s32.totalorder %s495, %s497
      %p504 = scmp.eq.s32.totalorder %s41, 1
      %p505 = por %p503, %p504
      %p506 = scmp.ne.s32.totalorder %s497, %s498
      %p507 = scmp.eq.s32.totalorder %s41, 0
      %p508 = por %p506, %p507
      %p509 = scmp.ne.s32.totalorder %s497, %s498
      %p510 = scmp.eq.s32.totalorder %s42, 1
      %p511 = por %p509, %p510
      %p513 = scmp.ne.s32.totalorder %s498, %s512
      %p514 = scmp.eq.s32.totalorder %s42, 0
      %p515 = por %p513, %p514
      %s516 = ssub.s32 %s36, %s43
      %p517 = scmp.eq.s32.totalorder %s516, 0
      %s519 = sadd.s32 %s518, 1
      %s520 = scalar_select %p517, %s518, %s519
      %p523 = pneg %p517
      %p524 = scmp.eq.s32.totalorder %s36, 1
      %p525 = por %p523, %p524
      %p526 = scmp.ne.s32.totalorder %s518, %s521
      %p527 = scmp.eq.s32.totalorder %s36, 0
      %p528 = por %p526, %p527
      %p529 = scmp.ne.s32.totalorder %s518, %s521
      %p530 = scmp.eq.s32.totalorder %s41, 1
      %p531 = por %p529, %p530
      %p532 = scmp.ne.s32.totalorder %s521, %s522
      %p533 = scmp.eq.s32.totalorder %s41, 0
      %p534 = por %p532, %p533
      %p535 = scmp.ne.s32.totalorder %s521, %s522
      %p536 = scmp.eq.s32.totalorder %s42, 1
      %p537 = por %p535, %p536
      %p539 = scmp.ne.s32.totalorder %s522, %s538
      %p540 = scmp.eq.s32.totalorder %s42, 0
      %p541 = por %p539, %p540
      %p542 = scmp.le.s32.totalorder 1, %s36
      %p543 = scmp.lt.s32.totalorder %s36, 3
      %p544 = pnand %p542, %p543
      %p545 = pneg %p544
      // Predicated region
      $region9: #{tpu_custom_call.1} parent=5 // pred_check
        _
      $region10: #{tpu_custom_call.1} parent=5 // pred_check_branch
        %547 = sbr.rel (%p544) target = $region12
      $region11: #{tpu_custom_call.1} parent=5 // pred_region
        %s548 = ssub.s32 %s36, 1
        // Predicated region
        $region13: #{tpu_custom_call.1} parent=11 // pred_check
          %p549 = pneg %p109
        $region14: #{tpu_custom_call.1} parent=11 // pred_check_branch
          %551 = sbr.rel (%p549) target = $region16
        $region15: #{tpu_custom_call.1} parent=11 // pred_region
          _
        $region16: #{tpu_custom_call.1} parent=11 // pred_fallthru
          _
        // Predicated region
        $region17: #{tpu_custom_call.1} parent=11 // pred_check
          %p552 = pneg %p130
        $region18: #{tpu_custom_call.1} parent=11 // pred_check_branch
          %554 = sbr.rel (%p552) target = $region20
        $region19: #{tpu_custom_call.1} parent=11 // pred_region
          _
        $region20: #{tpu_custom_call.1} parent=11 // pred_fallthru
          _
        // Predicated region
        $region21: #{tpu_custom_call.1} parent=11 // pred_check
          %p555 = pneg %p151
        $region22: #{tpu_custom_call.1} parent=11 // pred_check_branch
          %557 = sbr.rel (%p555) target = $region24
        $region23: #{tpu_custom_call.1} parent=11 // pred_region
          _
        $region24: #{tpu_custom_call.1} parent=11 // pred_fallthru
          _
        // Predicated region
        $region25: #{tpu_custom_call.1} parent=11 // pred_check
          %p558 = pneg %p172
        $region26: #{tpu_custom_call.1} parent=11 // pred_check_branch
          %560 = sbr.rel (%p558) target = $region28
        $region27: #{tpu_custom_call.1} parent=11 // pred_region
          _
        $region28: #{tpu_custom_call.1} parent=11 // pred_fallthru
          _
        // Predicated region
        $region29: #{tpu_custom_call.1} parent=11 // pred_check
          %p561 = pneg %p193
        $region30: #{tpu_custom_call.1} parent=11 // pred_check_branch
          %563 = sbr.rel (%p561) target = $region32
        $region31: #{tpu_custom_call.1} parent=11 // pred_region
          %s565 = ssub.s32 256, 256
          %566 = vsyncadd [#allocation6], %s565
          %s567 = sshll.u32 [#allocation5], 4
          %s568 = int_to_ptr.vmem [resolvable:$true] %s567
          %573 = dma.hbm_to_vmem [thread:$0]  %s6, 256, %s568, [#allocation6], 64, 64, 4
        $region32: #{tpu_custom_call.1} parent=11 // pred_fallthru
          _
        // Predicated region
        $region33: #{tpu_custom_call.1} parent=11 // pred_check
          %p574 = pneg %p214
        $region34: #{tpu_custom_call.1} parent=11 // pred_check_branch
          %576 = sbr.rel (%p574) target = $region36
        $region35: #{tpu_custom_call.1} parent=11 // pred_region
          _
        $region36: #{tpu_custom_call.1} parent=11 // pred_fallthru
          _
        // Predicated region
        $region37: #{tpu_custom_call.1} parent=11 // pred_check
          %p577 = pneg %p235
        $region38: #{tpu_custom_call.1} parent=11 // pred_check_branch
          %579 = sbr.rel (%p577) target = $region40
        $region39: #{tpu_custom_call.1} parent=11 // pred_region
          %s581 = ssub.s32 256, 256
          %582 = vsyncadd [#allocation6], %s581
          %s583 = sshll.u32 [#allocation7], 4
          %s584 = int_to_ptr.vmem [resolvable:$true] %s583
          %589 = dma.hbm_to_vmem [thread:$0]  %s8, 256, %s584, [#allocation6], 64, 64, 4
        $region40: #{tpu_custom_call.1} parent=11 // pred_fallthru
          _
        // Predicated region
        $region41: #{tpu_custom_call.1} parent=11 // pred_check
          %p590 = pneg %p256
        $region42: #{tpu_custom_call.1} parent=11 // pred_check_branch
          %592 = sbr.rel (%p590) target = $region44
        $region43: #{tpu_custom_call.1} parent=11 // pred_region
          _
        $region44: #{tpu_custom_call.1} parent=11 // pred_fallthru
          _
        // Predicated region
        $region45: #{tpu_custom_call.1} parent=11 // pred_check
          %p593 = pneg %p277
        $region46: #{tpu_custom_call.1} parent=11 // pred_check_branch
          %595 = sbr.rel (%p593) target = $region48
        $region47: #{tpu_custom_call.1} parent=11 // pred_region
          %s597 = ssub.s32 256, 256
          %598 = vsyncadd [#allocation9], %s597
          %s599 = sshll.u32 [#allocation8], 4
          %s600 = int_to_ptr.vmem [resolvable:$true] %s599
          %605 = dma.hbm_to_vmem [thread:$0]  %s10, 256, %s600, [#allocation9], 64, 64, 4
        $region48: #{tpu_custom_call.1} parent=11 // pred_fallthru
          _
        // Predicated region
        $region49: #{tpu_custom_call.1} parent=11 // pred_check
          %p606 = pneg %p298
        $region50: #{tpu_custom_call.1} parent=11 // pred_check_branch
          %608 = sbr.rel (%p606) target = $region52
        $region51: #{tpu_custom_call.1} parent=11 // pred_region
          _
        $region52: #{tpu_custom_call.1} parent=11 // pred_fallthru
          _
        // Predicated region
        $region53: #{tpu_custom_call.1} parent=11 // pred_check
          %p609 = pneg %p319
        $region54: #{tpu_custom_call.1} parent=11 // pred_check_branch
          %611 = sbr.rel (%p609) target = $region56
        $region55: #{tpu_custom_call.1} parent=11 // pred_region
          %s613 = ssub.s32 256, 256
          %614 = vsyncadd [#allocation9], %s613
          %s615 = sshll.u32 [#allocation10], 4
          %s616 = int_to_ptr.vmem [resolvable:$true] %s615
          %621 = dma.hbm_to_vmem [thread:$0]  %s12, 256, %s616, [#allocation9], 64, 64, 4
        $region56: #{tpu_custom_call.1} parent=11 // pred_fallthru
          _
        // Predicated region
        $region57: #{tpu_custom_call.1} parent=11 // pred_check
          %p622 = pneg %p340
        $region58: #{tpu_custom_call.1} parent=11 // pred_check_branch
          %624 = sbr.rel (%p622) target = $region60
        $region59: #{tpu_custom_call.1} parent=11 // pred_region
          _
        $region60: #{tpu_custom_call.1} parent=11 // pred_fallthru
          _
        // Predicated region
        $region61: #{tpu_custom_call.1} parent=11 // pred_check
          %p625 = pneg %p361
        $region62: #{tpu_custom_call.1} parent=11 // pred_check_branch
          %627 = sbr.rel (%p625) target = $region64
        $region63: #{tpu_custom_call.1} parent=11 // pred_region
          _
        $region64: #{tpu_custom_call.1} parent=11 // pred_fallthru
          _
        // Predicated region
        $region65: #{tpu_custom_call.1} parent=11 // pred_check
          %p628 = pneg %p382
        $region66: #{tpu_custom_call.1} parent=11 // pred_check_branch
          %630 = sbr.rel (%p628) target = $region68
        $region67: #{tpu_custom_call.1} parent=11 // pred_region
          _
        $region68: #{tpu_custom_call.1} parent=11 // pred_fallthru
          _
        // Predicated region
        $region69: #{tpu_custom_call.1} parent=11 // pred_check
          %p631 = pneg %p403
        $region70: #{tpu_custom_call.1} parent=11 // pred_check_branch
          %633 = sbr.rel (%p631) target = $region72
        $region71: #{tpu_custom_call.1} parent=11 // pred_region
          _
        $region72: #{tpu_custom_call.1} parent=11 // pred_fallthru
          _
        // Predicated region
        $region73: #{tpu_custom_call.1} parent=11 // pred_check
          %p634 = pneg %p424
        $region74: #{tpu_custom_call.1} parent=11 // pred_check_branch
          %636 = sbr.rel (%p634) target = $region76
        $region75: #{tpu_custom_call.1} parent=11 // pred_region
          _
        $region76: #{tpu_custom_call.1} parent=11 // pred_fallthru
          _
        // Predicated region
        $region77: #{tpu_custom_call.1} parent=11 // pred_check
          %p637 = pneg %p445
        $region78: #{tpu_custom_call.1} parent=11 // pred_check_branch
          %639 = sbr.rel (%p637) target = $region80
        $region79: #{tpu_custom_call.1} parent=11 // pred_region
          _
        $region80: #{tpu_custom_call.1} parent=11 // pred_fallthru
          _
        // Predicated region
        $region81: #{tpu_custom_call.1} parent=11 // pred_check
          %p640 = pneg %p466
        $region82: #{tpu_custom_call.1} parent=11 // pred_check_branch
          %642 = sbr.rel (%p640) target = $region84
        $region83: #{tpu_custom_call.1} parent=11 // pred_region
          _
        $region84: #{tpu_custom_call.1} parent=11 // pred_fallthru
          _
        // Predicated region
        $region85: #{tpu_custom_call.1} parent=11 // pred_check
          %p643 = pneg %p487
        $region86: #{tpu_custom_call.1} parent=11 // pred_check_branch
          %645 = sbr.rel (%p643) target = $region88
        $region87: #{tpu_custom_call.1} parent=11 // pred_region
          _
        $region88: #{tpu_custom_call.1} parent=11 // pred_fallthru
          _
        // Predicated region
        $region89: #{tpu_custom_call.1} parent=11 // pred_check
          %p646 = pneg %p508
        $region90: #{tpu_custom_call.1} parent=11 // pred_check_branch
          %648 = sbr.rel (%p646) target = $region92
        $region91: #{tpu_custom_call.1} parent=11 // pred_region
          _
        $region92: #{tpu_custom_call.1} parent=11 // pred_fallthru
          _
      $region12: #{tpu_custom_call.1} parent=5 // pred_fallthru
        _
      %p649 = scmp.lt.s32.totalorder %s36, 2
      // Predicated region
      $region93: #{tpu_custom_call.1} parent=5 // pred_check
        %p650 = pneg %p649
      $region94: #{tpu_custom_call.1} parent=5 // pred_check_branch
        %652 = sbr.rel (%p650) target = $region96
      $region95: #{tpu_custom_call.1} parent=5 // pred_region
        // Predicated region
        $region97: #{tpu_custom_call.1} parent=95 // pred_check
          %p653 = pneg %p56
        $region98: #{tpu_custom_call.1} parent=95 // pred_check_branch
          %655 = sbr.rel (%p653) target = $region100
        $region99: #{tpu_custom_call.1} parent=95 // pred_region
          %p656 = scmp.lt.s32.totalorder %s36, 1
          %s657 = scalar_select %p656, %s36, 1
          %s658 = smul.addr %s657, 8
          %s659 = scalar_lea.vmem %s0, %s658
        $region100: #{tpu_custom_call.1} parent=95 // pred_fallthru
          _
        // Predicated region
        $region101: #{tpu_custom_call.1} parent=95 // pred_check
          %p660 = pneg %p82
        $region102: #{tpu_custom_call.1} parent=95 // pred_check_branch
          %662 = sbr.rel (%p660) target = $region104
        $region103: #{tpu_custom_call.1} parent=95 // pred_region
          %s663 = sand.u32 %s72, 1
          %s664 = scalar_lea.sflag [#allocation3], %s663
          %s665 = sand.u32 %s72, 1
          %s666 = smul.addr %s665, 4
          %s667 = scalar_lea.vmem [#allocation2], %s666
          %s669 = ssub.s32 64, 64
          %670 = vsyncadd %s664, %s669
          %s671 = smul.addr %s36, 64
          %s672 = scalar_lea.hbm %s1, %s671
          %s674 = sshll.u32 %s667, 4
          %s675 = int_to_ptr.vmem [resolvable:$true] %s674
          %677 = dma.hbm_to_vmem [thread:$0]  %s672, 64, %s675, %s664
        $region104: #{tpu_custom_call.1} parent=95 // pred_fallthru
          _
      $region96: #{tpu_custom_call.1} parent=5 // pred_fallthru
        _
      %p678 = scmp.le.s32.totalorder 1, %s36
      %p679 = scmp.lt.s32.totalorder %s36, 3
      %p680 = pnand %p678, %p679
      %p681 = pneg %p680
      // Predicated region
      $region105: #{tpu_custom_call.1} parent=5 // pred_check
        _
      $region106: #{tpu_custom_call.1} parent=5 // pred_check_branch
        %683 = sbr.rel (%p680) target = $region108
      $region107: #{tpu_custom_call.1} parent=5 // pred_region
        %s684 = ssub.s32 %s36, 1
        %s685 = sand.u32 %s75, 1
        %s686 = scalar_lea.sflag [#allocation3], %s685
        %s687 = sand.u32 %s75, 1
        %s688 = smul.addr %s687, 4
        %s689 = scalar_lea.vmem [#allocation2], %s688
        // Predicated region
        $region109: #{tpu_custom_call.1} parent=107 // pred_check
          %p690 = pneg %p88
        $region110: #{tpu_custom_call.1} parent=107 // pred_check_branch
          %692 = sbr.rel (%p690) target = $region112
        $region111: #{tpu_custom_call.1} parent=107 // pred_region
          %693 = dma.done %s686, 64
        $region112: #{tpu_custom_call.1} parent=107 // pred_fallthru
          _
        // Predicated region
        $region113: #{tpu_custom_call.1} parent=107 // pred_check
          %p694 = pneg %p193
        $region114: #{tpu_custom_call.1} parent=107 // pred_check_branch
          %696 = sbr.rel (%p694) target = $region116
        $region115: #{tpu_custom_call.1} parent=107 // pred_region
          %697 = dma.done [#allocation6], 256
        $region116: #{tpu_custom_call.1} parent=107 // pred_fallthru
          _
        // Predicated region
        $region117: #{tpu_custom_call.1} parent=107 // pred_check
          %p698 = pneg %p235
        $region118: #{tpu_custom_call.1} parent=107 // pred_check_branch
          %700 = sbr.rel (%p698) target = $region120
        $region119: #{tpu_custom_call.1} parent=107 // pred_region
          %701 = dma.done [#allocation6], 256
        $region120: #{tpu_custom_call.1} parent=107 // pred_fallthru
          _
        // Predicated region
        $region121: #{tpu_custom_call.1} parent=107 // pred_check
          %p702 = pneg %p277
        $region122: #{tpu_custom_call.1} parent=107 // pred_check_branch
          %704 = sbr.rel (%p702) target = $region124
        $region123: #{tpu_custom_call.1} parent=107 // pred_region
          %705 = dma.done [#allocation9], 256
        $region124: #{tpu_custom_call.1} parent=107 // pred_fallthru
          _
        // Predicated region
        $region125: #{tpu_custom_call.1} parent=107 // pred_check
          %p706 = pneg %p319
        $region126: #{tpu_custom_call.1} parent=107 // pred_check_branch
          %708 = sbr.rel (%p706) target = $region128
        $region127: #{tpu_custom_call.1} parent=107 // pred_region
          %709 = dma.done [#allocation9], 256
        $region128: #{tpu_custom_call.1} parent=107 // pred_fallthru
          _
        %p710 = scmp.lt.s32.totalorder %s41, 1
        %s711 = scalar_select %p710, %s41, 1
        %s712 = smul.addr %s711, 8
        %s713 = scalar_lea.vmem %s0, %s712
        %p714 = pneg %p62
        %p715 = pneg %p59
        %s716 = sand.u32 %s75, 1
        %s717 = scalar_lea.sflag [#allocation3], %s716
        %s718 = sand.u32 %s75, 1
        %s719 = smul.addr %s718, 4
        %s720 = scalar_lea.vmem [#allocation2], %s719
        %p721 = pneg %p88
        %p722 = pneg %p85
        %p723 = pneg %p109
        %p724 = pneg %p106
        %p725 = pneg %p130
        %p726 = pneg %p127
        %p727 = pneg %p151
        %p728 = pneg %p148
        %p729 = pneg %p172
        %p730 = pneg %p169
        %p731 = pneg %p193
        %p732 = pneg %p190
        %p733 = pneg %p214
        %p734 = pneg %p211
        %p735 = pneg %p235
        %p736 = pneg %p232
        %p737 = pneg %p256
        %p738 = pneg %p253
        %p739 = pneg %p277
        %p740 = pneg %p274
        %p741 = pneg %p298
        %p742 = pneg %p295
        %p743 = pneg %p319
        %p744 = pneg %p316
        %p745 = pneg %p340
        %p746 = pneg %p337
        %p747 = pneg %p361
        %p748 = pneg %p358
        %p749 = pneg %p382
        %p750 = pneg %p379
        %p751 = pneg %p403
        %p752 = pneg %p400
        %p753 = pneg %p424
        %p754 = pneg %p421
        %p755 = pneg %p445
        %p756 = pneg %p442
        %p757 = pneg %p466
        %p758 = pneg %p463
        %p759 = pneg %p487
        %p760 = pneg %p484
        %p761 = pneg %p508
        %p762 = pneg %p505
        %p763 = pneg %p534
        %p764 = pneg %p531
        %s765 = sand.u32 %s521, 1
        %s766 = scalar_lea.sflag [#allocation4], %s765
        %s767 = sand.u32 %s521, 1
        %s768 = smul.addr %s767, 8
        %s769 = scalar_lea.vmem [#allocation11], %s768
        %p770 = scmp.lt.s32.totalorder %s41, 1
        %s771 = scalar_select %p770, %s41, 1
        %s772 = smul.addr %s771, 8
        %s773 = scalar_lea.vmem %s0, %s772
        %v775 = vld [vmem:[%s773] sm:$0xff]
        %v776 = vld [vmem:[%s689] sm:$0xf]
        %v777 = vld [vmem:[%s2] sm:$0xf]
        %v778 = vld [vmem:[%s2 + $0x4] sm:$0xf]
        %v779 = vld [vmem:[%s2 + $0x8] sm:$0xf]
        %v780 = vld [vmem:[%s2 + $0xc] sm:$0xf]
        %v781 = vld [vmem:[%s4] sm:$0xf]
        %v782 = vld [vmem:[%s4 + $0x4] sm:$0xf]
        %v783 = vld [vmem:[%s4 + $0x8] sm:$0xf]
        %v784 = vld [vmem:[%s4 + $0xc] sm:$0xf]
        %v785 = vld [vmem:[#allocation5] sm:$0xf]
        %v786 = vld [vmem:[#allocation5 + $0x4] sm:$0xf]
        %v787 = vld [vmem:[#allocation5 + $0x8] sm:$0xf]
        %v788 = vld [vmem:[#allocation5 + $0xc] sm:$0xf]
        %v789 = vld [vmem:[#allocation7] sm:$0xf]
        %v790 = vld [vmem:[#allocation7 + $0x4] sm:$0xf]
        %v791 = vld [vmem:[#allocation7 + $0x8] sm:$0xf]
        %v792 = vld [vmem:[#allocation7 + $0xc] sm:$0xf]
        %v793 = vld [vmem:[#allocation8] sm:$0xf]
        %v794 = vld [vmem:[#allocation8 + $0x4] sm:$0xf]
        %v795 = vld [vmem:[#allocation8 + $0x8] sm:$0xf]
        %v796 = vld [vmem:[#allocation8 + $0xc] sm:$0xf]
        %v797 = vld [vmem:[#allocation10] sm:$0xf]
        %v798 = vld [vmem:[#allocation10 + $0x4] sm:$0xf]
        %v799 = vld [vmem:[#allocation10 + $0x8] sm:$0xf]
        %v800 = vld [vmem:[#allocation10 + $0xc] sm:$0xf]
        %v801 = vld [vmem:[%s14] sm:$0xf]
        %v802 = vld [vmem:[%s14 + $0x4] sm:$0xf]
        %v803 = vld [vmem:[%s14 + $0x8] sm:$0xf]
        %v804 = vld [vmem:[%s14 + $0xc] sm:$0xf]
        %v805 = vld [vmem:[%s14 + $0x10] sm:$0xf]
        %v806 = vld [vmem:[%s14 + $0x14] sm:$0xf]
        %v807 = vld [vmem:[%s14 + $0x18] sm:$0xf]
        %v808 = vld [vmem:[%s14 + $0x1c] sm:$0xf]
        %v809 = vld [vmem:[%s3] sm:$0x1]
        %v811 = vlaneseq
        %v812 = vshrl.u32 %v811, 7
        %v813 = vsub.s32 0, %v812
        %v814 = vrot.slane %v809, %v813
        %v816 = vld [vmem:[%s5] sm:$0x1]
        %v818 = vlaneseq
        %v819 = vshrl.u32 %v818, 7
        %v820 = vsub.s32 0, %v819
        %v821 = vrot.slane %v816, %v820
        %v823 = vld [vmem:[%s7] sm:$0x1]
        %v825 = vlaneseq
        %v826 = vshrl.u32 %v825, 7
        %v827 = vsub.s32 0, %v826
        %v828 = vrot.slane %v823, %v827
        %v830 = vld [vmem:[%s11] sm:$0x1]
        %v832 = vlaneseq
        %v833 = vshrl.u32 %v832, 7
        %v834 = vsub.s32 0, %v833
        %v835 = vrot.slane %v830, %v834
        %v837 = vld [vmem:[%s13] sm:$0x1]
        %v839 = vlaneseq
        %v840 = vshrl.u32 %v839, 7
        %v841 = vsub.s32 0, %v840
        %v842 = vrot.slane %v837, %v841
        %v844 = vld [vmem:[%s15] sm:$0x1]
        %v846 = vlaneseq
        %v847 = vshrl.u32 %v846, 7
        %v848 = vsub.s32 0, %v847
        %v849 = vrot.slane %v844, %v848
        %v851 = vld [vmem:[%s16] sm:$0x1]
        %v853 = vlaneseq
        %v854 = vshrl.u32 %v853, 7
        %v855 = vsub.s32 0, %v854
        %v856 = vrot.slane %v851, %v855
        %v858 = vld [vmem:[%s17] sm:$0x1]
        %v860 = vlaneseq
        %v861 = vshrl.u32 %v860, 7
        %v862 = vsub.s32 0, %v861
        %v863 = vrot.slane %v858, %v862
        %v865 = vld [vmem:[%s18] sm:$0x1]
        %v867 = vlaneseq
        %v868 = vshrl.u32 %v867, 7
        %v869 = vsub.s32 0, %v868
        %v870 = vrot.slane %v865, %v869
        %v872 = vld [vmem:[%s19] sm:$0x1]
        %v874 = vlaneseq
        %v875 = vshrl.u32 %v874, 7
        %v876 = vsub.s32 0, %v875
        %v877 = vrot.slane %v872, %v876
        %v879 = vld [vmem:[%s20] sm:$0x1]
        %v881 = vlaneseq
        %v882 = vshrl.u32 %v881, 7
        %v883 = vsub.s32 0, %v882
        %v884 = vrot.slane %v879, %v883
        %v886 = vld [vmem:[%s21] sm:$0x1]
        %v888 = vlaneseq
        %v889 = vshrl.u32 %v888, 7
        %v890 = vsub.s32 0, %v889
        %v891 = vrot.slane %v886, %v890
        %v893 = vld [vmem:[%s9] sm:$0x1]
        %v895 = vlaneseq
        %v896 = vshrl.u32 %v895, 7
        %v897 = vsub.s32 0, %v896
        %v898 = vrot.slane %v893, %v897
        %v904 = vunpack.c.l.b16 %v789
        %v905 = vunpack.c.l.b16 %v790
        %v906 = vunpack.c.l.b16 %v791
        %v907 = vunpack.c.l.b16 %v792
        %v908 = vpack.c.b16 %v905, %v904
        %v909 = vpack.c.b16 %v907, %v906
        %vm912 = vcmask 261120
        %v914 = vsel %vm912, %v776, 0
        %916 = vmatprep.subr.bf16.mxu0 0
        %917 = vmatpush1.bf16.msra.mxu0 0
        %918 = vmatprep.subr.bf16.mxu0 0
        %919 = vmatpush1.bf16.msra.mxu0 0
        %920 = vmatprep.subr.bf16.mxu0 0
        %921 = vmatpush1.bf16.msra.mxu0 0
        %922 = vmatprep.subr.bf16.mxu0 0
        %923 = vmatpush1.bf16.msra.mxu0 0
        %924 = vmatprep.subr.bf16.mxu0 0
        %925 = vmatpush1.bf16.msra.mxu0 0
        %926 = vmatprep.subr.bf16.mxu0 0
        %927 = vmatpush1.bf16.msra.mxu0 0
        %928 = vmatprep.subr.bf16.mxu0 0
        %929 = vmatpush1.bf16.msra.mxu0 %v909
        %930 = vmatprep.subr.bf16.mxu0 0
        %931 = vmatpush1.bf16.msra.mxu0 %v908
        %932 = vmatprep.subr.bf16.mxu0 0
        %933 = vmatpush2.bf16.msra.mxu0 0
        %934 = vmatprep.subr.bf16.mxu0 0
        %935 = vmatpush2.bf16.msra.mxu0 0
        %936 = vmatprep.subr.bf16.mxu0 0
        %937 = vmatpush2.bf16.msra.mxu0 0
        %938 = vmatprep.subr.bf16.mxu0 0
        %939 = vmatpush2.bf16.msra.mxu0 0
        %940 = vmatprep.subr.bf16.mxu0 0
        %941 = vmatpush2.bf16.msra.mxu0 0
        %942 = vmatprep.subr.bf16.mxu0 0
        %943 = vmatpush2.bf16.msra.mxu0 0
        %944 = vmatprep.subr.bf16.mxu0 0
        %945 = vmatpush2.bf16.msra.mxu0 0
        %946 = vmatprep.subr.bf16.mxu0 0
        %947 = vmatpush2.bf16.msra.mxu0 0
        %948 = vmatprep.mubr.bf16.mxu0 0
        %949 = vmatmul.mubr.bf16.gmra.mxu0 %v914
        %v950 = vpop.f32.mrf.mxu0
        %v951 = vadd.f32 %v898, %v950
        %v952 = vpop.f32.mrf.mxu0
        %v953 = vpop.f32.mrf.mxu0
        %v954 = vpop.f32.mrf.mxu0
        %955 = vdwg.mxu0
        %v956 = vpack.c.bf16 %v951, %v951
        %v957 = vpack.c.bf16 %v775, %v775
        %v962 = vunpack.c.l.b16 %v777
        %v963 = vunpack.c.l.b16 %v778
        %v964 = vunpack.c.l.b16 %v779
        %v965 = vunpack.c.l.b16 %v780
        %v966 = vpack.c.b16 %v963, %v962
        %v967 = vpack.c.b16 %v965, %v964
        %v971 = vsel %vm912, %v957, 0
        %973 = vmatprep.subr.bf16.mxu0 0
        %974 = vmatpush1.bf16.msra.mxu0 0
        %975 = vmatprep.subr.bf16.mxu0 0
        %976 = vmatpush1.bf16.msra.mxu0 0
        %977 = vmatprep.subr.bf16.mxu0 0
        %978 = vmatpush1.bf16.msra.mxu0 0
        %979 = vmatprep.subr.bf16.mxu0 0
        %980 = vmatpush1.bf16.msra.mxu0 0
        %981 = vmatprep.subr.bf16.mxu0 0
        %982 = vmatpush1.bf16.msra.mxu0 0
        %983 = vmatprep.subr.bf16.mxu0 0
        %984 = vmatpush1.bf16.msra.mxu0 0
        %985 = vmatprep.subr.bf16.mxu0 0
        %986 = vmatpush1.bf16.msra.mxu0 %v967
        %987 = vmatprep.subr.bf16.mxu0 0
        %988 = vmatpush1.bf16.msra.mxu0 %v966
        %989 = vmatprep.subr.bf16.mxu0 0
        %990 = vmatpush2.bf16.msra.mxu0 0
        %991 = vmatprep.subr.bf16.mxu0 0
        %992 = vmatpush2.bf16.msra.mxu0 0
        %993 = vmatprep.subr.bf16.mxu0 0
        %994 = vmatpush2.bf16.msra.mxu0 0
        %995 = vmatprep.subr.bf16.mxu0 0
        %996 = vmatpush2.bf16.msra.mxu0 0
        %997 = vmatprep.subr.bf16.mxu0 0
        %998 = vmatpush2.bf16.msra.mxu0 0
        %999 = vmatprep.subr.bf16.mxu0 0
        %1000 = vmatpush2.bf16.msra.mxu0 0
        %1001 = vmatprep.subr.bf16.mxu0 0
        %1002 = vmatpush2.bf16.msra.mxu0 0
        %1003 = vmatprep.subr.bf16.mxu0 0
        %1004 = vmatpush2.bf16.msra.mxu0 0
        %1005 = vmatprep.mubr.bf16.mxu0 0
        %1006 = vmatmul.mubr.bf16.gmra.mxu0 %v971
        %v1007 = vpop.f32.mrf.mxu0
        %v1008 = vadd.f32 %v814, %v1007
        %v1009 = vpop.f32.mrf.mxu0
        %v1010 = vpop.f32.mrf.mxu0
        %v1011 = vpop.f32.mrf.mxu0
        %1012 = vdwg.mxu0
        %v1013 = vpack.c.bf16 %v1008, %v1008
        %1015 = vrot.lane.b32.xlu0 %v1013, 96
        %v1016 = vpop.permute.xlu0 %1015
        %vm1017 = vcmask 64512
        %v1019 = vsel %vm1017, %v1013, 0
        %v1022 = vsel %vm1017, %v1016, 0
        %1024 = vmatprep.subr.bf16.mxu0 0
        %1025 = vmatpush1.bf16.xpose.msra.mxu0 0
        %1026 = vmatprep.subr.bf16.mxu0 0
        %1027 = vmatpush1.bf16.xpose.msra.mxu0 0
        %1028 = vmatprep.subr.bf16.mxu0 0
        %1029 = vmatpush1.bf16.xpose.msra.mxu0 0
        %1030 = vmatprep.subr.bf16.mxu0 0
        %1031 = vmatpush1.bf16.xpose.msra.mxu0 0
        %1032 = vmatprep.subr.bf16.mxu0 0
        %1033 = vmatpush1.bf16.xpose.msra.mxu0 0
        %1034 = vmatprep.subr.bf16.mxu0 0
        %1035 = vmatpush1.bf16.xpose.msra.mxu0 0
        %1036 = vmatprep.subr.bf16.mxu0 0
        %1037 = vmatpush1.bf16.xpose.msra.mxu0 0
        %1038 = vmatprep.subr.bf16.mxu0 0
        %1039 = vmatpush1.bf16.xpose.msra.mxu0 %v1022
        %1040 = vmatprep.subr.bf16.mxu0 0
        %1041 = vmatpush2.bf16.xpose.msra.mxu0 0
        %1042 = vmatprep.subr.bf16.mxu0 0
        %1043 = vmatpush2.bf16.xpose.msra.mxu0 0
        %1044 = vmatprep.subr.bf16.mxu0 0
        %1045 = vmatpush2.bf16.xpose.msra.mxu0 0
        %1046 = vmatprep.subr.bf16.mxu0 0
        %1047 = vmatpush2.bf16.xpose.msra.mxu0 0
        %1048 = vmatprep.subr.bf16.mxu0 0
        %1049 = vmatpush2.bf16.xpose.msra.mxu0 0
        %1050 = vmatprep.subr.bf16.mxu0 0
        %1051 = vmatpush2.bf16.xpose.msra.mxu0 0
        %1052 = vmatprep.subr.bf16.mxu0 0
        %1053 = vmatpush2.bf16.xpose.msra.mxu0 0
        %1054 = vmatprep.subr.bf16.mxu0 0
        %1055 = vmatpush2.bf16.xpose.msra.mxu0 0
        %1056 = vmatprep.mubr.bf16.mxu0 0
        %1057 = vmatmul.mubr.bf16.gmra.mxu0 %v1019
        %v1058 = vpop.f32.mrf.mxu0
        %v1059 = vadd.f32 0.0, %v1058
        %v1060 = vpop.f32.mrf.mxu0
        %v1061 = vpop.f32.mrf.mxu0
        %v1062 = vpop.f32.mrf.mxu0
        %1063 = vdwg.mxu0
        %v1064 = vsel %vm1017, %v1059, -inf
        %1065 = vmax.xlane.f32.xlu0 %v1064
        %v1066 = vpop.xlane.xlu0 %1065
        %v1067 = vsub.f32 %v1059, %v1066
        %v1068 = vmul.f32 %v1067, 1.442695
        %v1069 = vpow.pop %v1068
        %v1070 = vsel %vm1017, %v1069, 0.0
        %1071 = vadd.xlane.f32.xlu0 %v1070
        %v1072 = vpop.xlane.xlu0 %1071
        %v1073 = vrcp.pop %v1072
        %v1074 = vmul.f32 %v1072, %v1073
        %v1075 = vsub.f32 2.0, %v1074
        %v1076 = vmul.f32 %v1073, %v1075
        %v1077 = vmul.f32 %v1069, %v1076
        %v1078 = vpack.c.bf16 %v1077, %v1077
        %1079 = vrot.lane.b32.xlu0 %v1013, 64
        %v1080 = vpop.permute.xlu0 %1079
        %v1082 = vsel %vm1017, %v1078, 0
        %vm1084 = vcmask 1043456
        %v1086 = vsel %vm1084, %v1080, 0
        %1088 = vmatprep.subr.bf16.mxu0 0
        %1089 = vmatpush1.bf16.msra.mxu0 0
        %1090 = vmatprep.subr.bf16.mxu0 0
        %1091 = vmatpush1.bf16.msra.mxu0 0
        %1092 = vmatprep.subr.bf16.mxu0 0
        %1093 = vmatpush1.bf16.msra.mxu0 0
        %1094 = vmatprep.subr.bf16.mxu0 0
        %1095 = vmatpush1.bf16.msra.mxu0 0
        %1096 = vmatprep.subr.bf16.mxu0 0
        %1097 = vmatpush1.bf16.msra.mxu0 0
        %1098 = vmatprep.subr.bf16.mxu0 0
        %1099 = vmatpush1.bf16.msra.mxu0 0
        %1100 = vmatprep.subr.bf16.mxu0 0
        %1101 = vmatpush1.bf16.msra.mxu0 0
        %1102 = vmatprep.subr.bf16.mxu0 0
        %1103 = vmatpush1.bf16.msra.mxu0 %v1086
        %1104 = vmatprep.subr.bf16.mxu0 0
        %1105 = vmatpush2.bf16.msra.mxu0 0
        %1106 = vmatprep.subr.bf16.mxu0 0
        %1107 = vmatpush2.bf16.msra.mxu0 0
        %1108 = vmatprep.subr.bf16.mxu0 0
        %1109 = vmatpush2.bf16.msra.mxu0 0
        %1110 = vmatprep.subr.bf16.mxu0 0
        %1111 = vmatpush2.bf16.msra.mxu0 0
        %1112 = vmatprep.subr.bf16.mxu0 0
        %1113 = vmatpush2.bf16.msra.mxu0 0
        %1114 = vmatprep.subr.bf16.mxu0 0
        %1115 = vmatpush2.bf16.msra.mxu0 0
        %1116 = vmatprep.subr.bf16.mxu0 0
        %1117 = vmatpush2.bf16.msra.mxu0 0
        %1118 = vmatprep.subr.bf16.mxu0 0
        %1119 = vmatpush2.bf16.msra.mxu0 0
        %1120 = vmatprep.mubr.bf16.mxu0 0
        %1121 = vmatmul.mubr.bf16.gmra.mxu0 %v1082
        %v1122 = vpop.f32.mrf.mxu0
        %v1123 = vadd.f32 0.0, %v1122
        %v1124 = vpop.f32.mrf.mxu0
        %v1125 = vpop.f32.mrf.mxu0
        %v1126 = vpop.f32.mrf.mxu0
        %1127 = vdwg.mxu0
        %1128 = vrot.lane.b32.xlu0 %v1013, 120
        %v1129 = vpop.permute.xlu0 %1128
        %1130 = vrot.lane.b32.xlu0 %v1013, 88
        %v1131 = vpop.permute.xlu0 %1130
        %v1133 = vsel %vm1017, %v1129, 0
        %v1136 = vsel %vm1017, %v1131, 0
        %1138 = vmatprep.subr.bf16.mxu0 0
        %1139 = vmatpush1.bf16.xpose.msra.mxu0 0
        %1140 = vmatprep.subr.bf16.mxu0 0
        %1141 = vmatpush1.bf16.xpose.msra.mxu0 0
        %1142 = vmatprep.subr.bf16.mxu0 0
        %1143 = vmatpush1.bf16.xpose.msra.mxu0 0
        %1144 = vmatprep.subr.bf16.mxu0 0
        %1145 = vmatpush1.bf16.xpose.msra.mxu0 0
        %1146 = vmatprep.subr.bf16.mxu0 0
        %1147 = vmatpush1.bf16.xpose.msra.mxu0 0
        %1148 = vmatprep.subr.bf16.mxu0 0
        %1149 = vmatpush1.bf16.xpose.msra.mxu0 0
        %1150 = vmatprep.subr.bf16.mxu0 0
        %1151 = vmatpush1.bf16.xpose.msra.mxu0 0
        %1152 = vmatprep.subr.bf16.mxu0 0
        %1153 = vmatpush1.bf16.xpose.msra.mxu0 %v1136
        %1154 = vmatprep.subr.bf16.mxu0 0
        %1155 = vmatpush2.bf16.xpose.msra.mxu0 0
        %1156 = vmatprep.subr.bf16.mxu0 0
        %1157 = vmatpush2.bf16.xpose.msra.mxu0 0
        %1158 = vmatprep.subr.bf16.mxu0 0
        %1159 = vmatpush2.bf16.xpose.msra.mxu0 0
        %1160 = vmatprep.subr.bf16.mxu0 0
        %1161 = vmatpush2.bf16.xpose.msra.mxu0 0
        %1162 = vmatprep.subr.bf16.mxu0 0
        %1163 = vmatpush2.bf16.xpose.msra.mxu0 0
        %1164 = vmatprep.subr.bf16.mxu0 0
        %1165 = vmatpush2.bf16.xpose.msra.mxu0 0
        %1166 = vmatprep.subr.bf16.mxu0 0
        %1167 = vmatpush2.bf16.xpose.msra.mxu0 0
        %1168 = vmatprep.subr.bf16.mxu0 0
        %1169 = vmatpush2.bf16.xpose.msra.mxu0 0
        %1170 = vmatprep.mubr.bf16.mxu0 0
        %1171 = vmatmul.mubr.bf16.gmra.mxu0 %v1133
        %v1172 = vpop.f32.mrf.mxu0
        %v1173 = vadd.f32 0.0, %v1172
        %v1174 = vpop.f32.mrf.mxu0
        %v1175 = vpop.f32.mrf.mxu0
        %v1176 = vpop.f32.mrf.mxu0
        %1177 = vdwg.mxu0
        %v1178 = vsel %vm1017, %v1173, -inf
        %1179 = vmax.xlane.f32.xlu0 %v1178
        %v1180 = vpop.xlane.xlu0 %1179
        %v1181 = vsub.f32 %v1173, %v1180
        %v1182 = vmul.f32 %v1181, 1.442695
        %v1183 = vpow.pop %v1182
        %v1184 = vsel %vm1017, %v1183, 0.0
        %1185 = vadd.xlane.f32.xlu0 %v1184
        %v1186 = vpop.xlane.xlu0 %1185
        %v1187 = vrcp.pop %v1186
        %v1188 = vmul.f32 %v1186, %v1187
        %v1189 = vsub.f32 2.0, %v1188
        %v1190 = vmul.f32 %v1187, %v1189
        %v1191 = vmul.f32 %v1183, %v1190
        %v1192 = vpack.c.bf16 %v1191, %v1191
        %1193 = vrot.lane.b32.xlu0 %v1013, 56
        %v1194 = vpop.permute.xlu0 %1193
        %v1196 = vsel %vm1017, %v1192, 0
        %v1199 = vsel %vm1084, %v1194, 0
        %1201 = vmatprep.subr.bf16.mxu0 0
        %1202 = vmatpush1.bf16.msra.mxu0 0
        %1203 = vmatprep.subr.bf16.mxu0 0
        %1204 = vmatpush1.bf16.msra.mxu0 0
        %1205 = vmatprep.subr.bf16.mxu0 0
        %1206 = vmatpush1.bf16.msra.mxu0 0
        %1207 = vmatprep.subr.bf16.mxu0 0
        %1208 = vmatpush1.bf16.msra.mxu0 0
        %1209 = vmatprep.subr.bf16.mxu0 0
        %1210 = vmatpush1.bf16.msra.mxu0 0
        %1211 = vmatprep.subr.bf16.mxu0 0
        %1212 = vmatpush1.bf16.msra.mxu0 0
        %1213 = vmatprep.subr.bf16.mxu0 0
        %1214 = vmatpush1.bf16.msra.mxu0 0
        %1215 = vmatprep.subr.bf16.mxu0 0
        %1216 = vmatpush1.bf16.msra.mxu0 %v1199
        %1217 = vmatprep.subr.bf16.mxu0 0
        %1218 = vmatpush2.bf16.msra.mxu0 0
        %1219 = vmatprep.subr.bf16.mxu0 0
        %1220 = vmatpush2.bf16.msra.mxu0 0
        %1221 = vmatprep.subr.bf16.mxu0 0
        %1222 = vmatpush2.bf16.msra.mxu0 0
        %1223 = vmatprep.subr.bf16.mxu0 0
        %1224 = vmatpush2.bf16.msra.mxu0 0
        %1225 = vmatprep.subr.bf16.mxu0 0
        %1226 = vmatpush2.bf16.msra.mxu0 0
        %1227 = vmatprep.subr.bf16.mxu0 0
        %1228 = vmatpush2.bf16.msra.mxu0 0
        %1229 = vmatprep.subr.bf16.mxu0 0
        %1230 = vmatpush2.bf16.msra.mxu0 0
        %1231 = vmatprep.subr.bf16.mxu0 0
        %1232 = vmatpush2.bf16.msra.mxu0 0
        %1233 = vmatprep.mubr.bf16.mxu0 0
        %1234 = vmatmul.mubr.bf16.gmra.mxu0 %v1196
        %v1235 = vpop.f32.mrf.mxu0
        %v1236 = vadd.f32 0.0, %v1235
        %v1237 = vpop.f32.mrf.mxu0
        %v1238 = vpop.f32.mrf.mxu0
        %v1239 = vpop.f32.mrf.mxu0
        %1240 = vdwg.mxu0
        %1241 = vrot.lane.b32.xlu0 %v1013, 112
        %v1242 = vpop.permute.xlu0 %1241
        %1243 = vrot.lane.b32.xlu0 %v1013, 80
        %v1244 = vpop.permute.xlu0 %1243
        %v1246 = vsel %vm1017, %v1242, 0
        %v1249 = vsel %vm1017, %v1244, 0
        %1251 = vmatprep.subr.bf16.mxu0 0
        %1252 = vmatpush1.bf16.xpose.msra.mxu0 0
        %1253 = vmatprep.subr.bf16.mxu0 0
        %1254 = vmatpush1.bf16.xpose.msra.mxu0 0
        %1255 = vmatprep.subr.bf16.mxu0 0
        %1256 = vmatpush1.bf16.xpose.msra.mxu0 0
        %1257 = vmatprep.subr.bf16.mxu0 0
        %1258 = vmatpush1.bf16.xpose.msra.mxu0 0
        %1259 = vmatprep.subr.bf16.mxu0 0
        %1260 = vmatpush1.bf16.xpose.msra.mxu0 0
        %1261 = vmatprep.subr.bf16.mxu0 0
        %1262 = vmatpush1.bf16.xpose.msra.mxu0 0
        %1263 = vmatprep.subr.bf16.mxu0 0
        %1264 = vmatpush1.bf16.xpose.msra.mxu0 0
        %1265 = vmatprep.subr.bf16.mxu0 0
        %1266 = vmatpush1.bf16.xpose.msra.mxu0 %v1249
        %1267 = vmatprep.subr.bf16.mxu0 0
        %1268 = vmatpush2.bf16.xpose.msra.mxu0 0
        %1269 = vmatprep.subr.bf16.mxu0 0
        %1270 = vmatpush2.bf16.xpose.msra.mxu0 0
        %1271 = vmatprep.subr.bf16.mxu0 0
        %1272 = vmatpush2.bf16.xpose.msra.mxu0 0
        %1273 = vmatprep.subr.bf16.mxu0 0
        %1274 = vmatpush2.bf16.xpose.msra.mxu0 0
        %1275 = vmatprep.subr.bf16.mxu0 0
        %1276 = vmatpush2.bf16.xpose.msra.mxu0 0
        %1277 = vmatprep.subr.bf16.mxu0 0
        %1278 = vmatpush2.bf16.xpose.msra.mxu0 0
        %1279 = vmatprep.subr.bf16.mxu0 0
        %1280 = vmatpush2.bf16.xpose.msra.mxu0 0
        %1281 = vmatprep.subr.bf16.mxu0 0
        %1282 = vmatpush2.bf16.xpose.msra.mxu0 0
        %1283 = vmatprep.mubr.bf16.mxu0 0
        %1284 = vmatmul.mubr.bf16.gmra.mxu0 %v1246
        %v1285 = vpop.f32.mrf.mxu0
        %v1286 = vadd.f32 0.0, %v1285
        %v1287 = vpop.f32.mrf.mxu0
        %v1288 = vpop.f32.mrf.mxu0
        %v1289 = vpop.f32.mrf.mxu0
        %1290 = vdwg.mxu0
        %v1291 = vsel %vm1017, %v1286, -inf
        %1292 = vmax.xlane.f32.xlu0 %v1291
        %v1293 = vpop.xlane.xlu0 %1292
        %v1294 = vsub.f32 %v1286, %v1293
        %v1295 = vmul.f32 %v1294, 1.442695
        %v1296 = vpow.pop %v1295
        %v1297 = vsel %vm1017, %v1296, 0.0
        %1298 = vadd.xlane.f32.xlu0 %v1297
        %v1299 = vpop.xlane.xlu0 %1298
        %v1300 = vrcp.pop %v1299
        %v1301 = vmul.f32 %v1299, %v1300
        %v1302 = vsub.f32 2.0, %v1301
        %v1303 = vmul.f32 %v1300, %v1302
        %v1304 = vmul.f32 %v1296, %v1303
        %v1305 = vpack.c.bf16 %v1304, %v1304
        %1306 = vrot.lane.b32.xlu0 %v1013, 48
        %v1307 = vpop.permute.xlu0 %1306
        %v1309 = vsel %vm1017, %v1305, 0
        %v1312 = vsel %vm1084, %v1307, 0
        %1314 = vmatprep.subr.bf16.mxu0 0
        %1315 = vmatpush1.bf16.msra.mxu0 0
        %1316 = vmatprep.subr.bf16.mxu0 0
        %1317 = vmatpush1.bf16.msra.mxu0 0
        %1318 = vmatprep.subr.bf16.mxu0 0
        %1319 = vmatpush1.bf16.msra.mxu0 0
        %1320 = vmatprep.subr.bf16.mxu0 0
        %1321 = vmatpush1.bf16.msra.mxu0 0
        %1322 = vmatprep.subr.bf16.mxu0 0
        %1323 = vmatpush1.bf16.msra.mxu0 0
        %1324 = vmatprep.subr.bf16.mxu0 0
        %1325 = vmatpush1.bf16.msra.mxu0 0
        %1326 = vmatprep.subr.bf16.mxu0 0
        %1327 = vmatpush1.bf16.msra.mxu0 0
        %1328 = vmatprep.subr.bf16.mxu0 0
        %1329 = vmatpush1.bf16.msra.mxu0 %v1312
        %1330 = vmatprep.subr.bf16.mxu0 0
        %1331 = vmatpush2.bf16.msra.mxu0 0
        %1332 = vmatprep.subr.bf16.mxu0 0
        %1333 = vmatpush2.bf16.msra.mxu0 0
        %1334 = vmatprep.subr.bf16.mxu0 0
        %1335 = vmatpush2.bf16.msra.mxu0 0
        %1336 = vmatprep.subr.bf16.mxu0 0
        %1337 = vmatpush2.bf16.msra.mxu0 0
        %1338 = vmatprep.subr.bf16.mxu0 0
        %1339 = vmatpush2.bf16.msra.mxu0 0
        %1340 = vmatprep.subr.bf16.mxu0 0
        %1341 = vmatpush2.bf16.msra.mxu0 0
        %1342 = vmatprep.subr.bf16.mxu0 0
        %1343 = vmatpush2.bf16.msra.mxu0 0
        %1344 = vmatprep.subr.bf16.mxu0 0
        %1345 = vmatpush2.bf16.msra.mxu0 0
        %1346 = vmatprep.mubr.bf16.mxu0 0
        %1347 = vmatmul.mubr.bf16.gmra.mxu0 %v1309
        %v1348 = vpop.f32.mrf.mxu0
        %v1349 = vadd.f32 0.0, %v1348
        %v1350 = vpop.f32.mrf.mxu0
        %v1351 = vpop.f32.mrf.mxu0
        %v1352 = vpop.f32.mrf.mxu0
        %1353 = vdwg.mxu0
        %1354 = vrot.lane.b32.xlu0 %v1013, 104
        %v1355 = vpop.permute.xlu0 %1354
        %1356 = vrot.lane.b32.xlu0 %v1013, 72
        %v1357 = vpop.permute.xlu0 %1356
        %v1359 = vsel %vm1017, %v1355, 0
        %v1362 = vsel %vm1017, %v1357, 0
        %1364 = vmatprep.subr.bf16.mxu0 0
        %1365 = vmatpush1.bf16.xpose.msra.mxu0 0
        %1366 = vmatprep.subr.bf16.mxu0 0
        %1367 = vmatpush1.bf16.xpose.msra.mxu0 0
        %1368 = vmatprep.subr.bf16.mxu0 0
        %1369 = vmatpush1.bf16.xpose.msra.mxu0 0
        %1370 = vmatprep.subr.bf16.mxu0 0
        %1371 = vmatpush1.bf16.xpose.msra.mxu0 0
        %1372 = vmatprep.subr.bf16.mxu0 0
        %1373 = vmatpush1.bf16.xpose.msra.mxu0 0
        %1374 = vmatprep.subr.bf16.mxu0 0
        %1375 = vmatpush1.bf16.xpose.msra.mxu0 0
        %1376 = vmatprep.subr.bf16.mxu0 0
        %1377 = vmatpush1.bf16.xpose.msra.mxu0 0
        %1378 = vmatprep.subr.bf16.mxu0 0
        %1379 = vmatpush1.bf16.xpose.msra.mxu0 %v1362
        %1380 = vmatprep.subr.bf16.mxu0 0
        %1381 = vmatpush2.bf16.xpose.msra.mxu0 0
        %1382 = vmatprep.subr.bf16.mxu0 0
        %1383 = vmatpush2.bf16.xpose.msra.mxu0 0
        %1384 = vmatprep.subr.bf16.mxu0 0
        %1385 = vmatpush2.bf16.xpose.msra.mxu0 0
        %1386 = vmatprep.subr.bf16.mxu0 0
        %1387 = vmatpush2.bf16.xpose.msra.mxu0 0
        %1388 = vmatprep.subr.bf16.mxu0 0
        %1389 = vmatpush2.bf16.xpose.msra.mxu0 0
        %1390 = vmatprep.subr.bf16.mxu0 0
        %1391 = vmatpush2.bf16.xpose.msra.mxu0 0
        %1392 = vmatprep.subr.bf16.mxu0 0
        %1393 = vmatpush2.bf16.xpose.msra.mxu0 0
        %1394 = vmatprep.subr.bf16.mxu0 0
        %1395 = vmatpush2.bf16.xpose.msra.mxu0 0
        %1396 = vmatprep.mubr.bf16.mxu0 0
        %1397 = vmatmul.mubr.bf16.gmra.mxu0 %v1359
        %v1398 = vpop.f32.mrf.mxu0
        %v1399 = vadd.f32 0.0, %v1398
        %v1400 = vpop.f32.mrf.mxu0
        %v1401 = vpop.f32.mrf.mxu0
        %v1402 = vpop.f32.mrf.mxu0
        %1403 = vdwg.mxu0
        %v1404 = vsel %vm1017, %v1399, -inf
        %1405 = vmax.xlane.f32.xlu0 %v1404
        %v1406 = vpop.xlane.xlu0 %1405
        %v1407 = vsub.f32 %v1399, %v1406
        %v1408 = vmul.f32 %v1407, 1.442695
        %v1409 = vpow.pop %v1408
        %v1410 = vsel %vm1017, %v1409, 0.0
        %1411 = vadd.xlane.f32.xlu0 %v1410
        %v1412 = vpop.xlane.xlu0 %1411
        %v1413 = vrcp.pop %v1412
        %v1414 = vmul.f32 %v1412, %v1413
        %v1415 = vsub.f32 2.0, %v1414
        %v1416 = vmul.f32 %v1413, %v1415
        %v1417 = vmul.f32 %v1409, %v1416
        %v1418 = vpack.c.bf16 %v1417, %v1417
        %1419 = vrot.lane.b32.xlu0 %v1013, 40
        %v1420 = vpop.permute.xlu0 %1419
        %v1422 = vsel %vm1017, %v1418, 0
        %v1425 = vsel %vm1084, %v1420, 0
        %1427 = vmatprep.subr.bf16.mxu0 0
        %1428 = vmatpush1.bf16.msra.mxu0 0
        %1429 = vmatprep.subr.bf16.mxu0 0
        %1430 = vmatpush1.bf16.msra.mxu0 0
        %1431 = vmatprep.subr.bf16.mxu0 0
        %1432 = vmatpush1.bf16.msra.mxu0 0
        %1433 = vmatprep.subr.bf16.mxu0 0
        %1434 = vmatpush1.bf16.msra.mxu0 0
        %1435 = vmatprep.subr.bf16.mxu0 0
        %1436 = vmatpush1.bf16.msra.mxu0 0
        %1437 = vmatprep.subr.bf16.mxu0 0
        %1438 = vmatpush1.bf16.msra.mxu0 0
        %1439 = vmatprep.subr.bf16.mxu0 0
        %1440 = vmatpush1.bf16.msra.mxu0 0
        %1441 = vmatprep.subr.bf16.mxu0 0
        %1442 = vmatpush1.bf16.msra.mxu0 %v1425
        %1443 = vmatprep.subr.bf16.mxu0 0
        %1444 = vmatpush2.bf16.msra.mxu0 0
        %1445 = vmatprep.subr.bf16.mxu0 0
        %1446 = vmatpush2.bf16.msra.mxu0 0
        %1447 = vmatprep.subr.bf16.mxu0 0
        %1448 = vmatpush2.bf16.msra.mxu0 0
        %1449 = vmatprep.subr.bf16.mxu0 0
        %1450 = vmatpush2.bf16.msra.mxu0 0
        %1451 = vmatprep.subr.bf16.mxu0 0
        %1452 = vmatpush2.bf16.msra.mxu0 0
        %1453 = vmatprep.subr.bf16.mxu0 0
        %1454 = vmatpush2.bf16.msra.mxu0 0
        %1455 = vmatprep.subr.bf16.mxu0 0
        %1456 = vmatpush2.bf16.msra.mxu0 0
        %1457 = vmatprep.subr.bf16.mxu0 0
        %1458 = vmatpush2.bf16.msra.mxu0 0
        %1459 = vmatprep.mubr.bf16.mxu0 0
        %1460 = vmatmul.mubr.bf16.gmra.mxu0 %v1422
        %v1461 = vpop.f32.mrf.mxu0
        %v1462 = vadd.f32 0.0, %v1461
        %v1463 = vpop.f32.mrf.mxu0
        %v1464 = vpop.f32.mrf.mxu0
        %v1465 = vpop.f32.mrf.mxu0
        %1466 = vdwg.mxu0
        %1468 = vrot.lane.b32.xlu0 %v1236, 8
        %v1469 = vpop.permute.xlu0 %1468
        %1472 = vrot.lane.b32.xlu0 %v1349, 16
        %v1473 = vpop.permute.xlu0 %1472
        %1476 = vrot.lane.b32.xlu0 %v1462, 24
        %v1477 = vpop.permute.xlu0 %1476
        %v1479 = vsel %vm1017, %v1123, %v1469
        %vm1480 = vcmask 130048
        %v1481 = vsel %vm1480, %v1479, %v1473
        %vm1482 = vcmask 195584
        %v1483 = vsel %vm1482, %v1481, %v1477
        %v1484 = vpack.c.bf16 %v1483, %v1483
        %v1489 = vunpack.c.l.b16 %v781
        %v1490 = vunpack.c.l.b16 %v782
        %v1491 = vunpack.c.l.b16 %v783
        %v1492 = vunpack.c.l.b16 %v784
        %v1493 = vpack.c.b16 %v1490, %v1489
        %v1494 = vpack.c.b16 %v1492, %v1491
        %v1498 = vsel %vm912, %v1484, 0
        %1500 = vmatprep.subr.bf16.mxu0 0
        %1501 = vmatpush1.bf16.msra.mxu0 0
        %1502 = vmatprep.subr.bf16.mxu0 0
        %1503 = vmatpush1.bf16.msra.mxu0 0
        %1504 = vmatprep.subr.bf16.mxu0 0
        %1505 = vmatpush1.bf16.msra.mxu0 0
        %1506 = vmatprep.subr.bf16.mxu0 0
        %1507 = vmatpush1.bf16.msra.mxu0 0
        %1508 = vmatprep.subr.bf16.mxu0 0
        %1509 = vmatpush1.bf16.msra.mxu0 0
        %1510 = vmatprep.subr.bf16.mxu0 0
        %1511 = vmatpush1.bf16.msra.mxu0 0
        %1512 = vmatprep.subr.bf16.mxu0 0
        %1513 = vmatpush1.bf16.msra.mxu0 %v1494
        %1514 = vmatprep.subr.bf16.mxu0 0
        %1515 = vmatpush1.bf16.msra.mxu0 %v1493
        %1516 = vmatprep.subr.bf16.mxu0 0
        %1517 = vmatpush2.bf16.msra.mxu0 0
        %1518 = vmatprep.subr.bf16.mxu0 0
        %1519 = vmatpush2.bf16.msra.mxu0 0
        %1520 = vmatprep.subr.bf16.mxu0 0
        %1521 = vmatpush2.bf16.msra.mxu0 0
        %1522 = vmatprep.subr.bf16.mxu0 0
        %1523 = vmatpush2.bf16.msra.mxu0 0
        %1524 = vmatprep.subr.bf16.mxu0 0
        %1525 = vmatpush2.bf16.msra.mxu0 0
        %1526 = vmatprep.subr.bf16.mxu0 0
        %1527 = vmatpush2.bf16.msra.mxu0 0
        %1528 = vmatprep.subr.bf16.mxu0 0
        %1529 = vmatpush2.bf16.msra.mxu0 0
        %1530 = vmatprep.subr.bf16.mxu0 0
        %1531 = vmatpush2.bf16.msra.mxu0 0
        %1532 = vmatprep.mubr.bf16.mxu0 0
        %1533 = vmatmul.mubr.bf16.gmra.mxu0 %v1498
        %v1534 = vpop.f32.mrf.mxu0
        %v1535 = vadd.f32 %v821, %v1534
        %v1536 = vpop.f32.mrf.mxu0
        %v1537 = vpop.f32.mrf.mxu0
        %v1538 = vpop.f32.mrf.mxu0
        %1539 = vdwg.mxu0
        %v1540 = vadd.f32 %v775, %v1535
        %v1541 = vsel %vm912, %v1540, 0.0
        %1542 = vadd.xlane.f32.xlu0 %v1541
        %v1543 = vpop.xlane.xlu0 %1542
        %v1544 = vrcp.pop 32.0
        %v1545 = vmul.f32 %v1543, %v1544
        %v1546 = vsub.f32 %v1540, %v1545
        %v1547 = vmul.f32 %v1546, %v1546
        %v1548 = vsel %vm912, %v1547, 0.0
        %1549 = vadd.xlane.f32.xlu0 %v1548
        %v1550 = vpop.xlane.xlu0 %1549
        %v1551 = vmul.f32 %v1550, %v1544
        %v1552 = vadd.f32 %v1551, 1e-05
        %v1553 = vrsqrt.pop %v1552
        %v1554 = vmul.f32 %v1546, %v1553
        %v1555 = vmul.f32 %v1554, %v856
        %v1556 = vadd.f32 %v1555, %v863
        %v1557 = vpack.c.bf16 %v1556, %v1556
        %v1562 = vunpack.c.l.b16 %v785
        %v1563 = vunpack.c.l.b16 %v786
        %v1564 = vunpack.c.l.b16 %v787
        %v1565 = vunpack.c.l.b16 %v788
        %v1566 = vpack.c.b16 %v1563, %v1562
        %v1567 = vpack.c.b16 %v1565, %v1564
        %v1571 = vsel %vm912, %v1557, 0
        %1573 = vmatprep.subr.bf16.mxu0 0
        %1574 = vmatpush1.bf16.msra.mxu0 0
        %1575 = vmatprep.subr.bf16.mxu0 0
        %1576 = vmatpush1.bf16.msra.mxu0 0
        %1577 = vmatprep.subr.bf16.mxu0 0
        %1578 = vmatpush1.bf16.msra.mxu0 0
        %1579 = vmatprep.subr.bf16.mxu0 0
        %1580 = vmatpush1.bf16.msra.mxu0 0
        %1581 = vmatprep.subr.bf16.mxu0 0
        %1582 = vmatpush1.bf16.msra.mxu0 0
        %1583 = vmatprep.subr.bf16.mxu0 0
        %1584 = vmatpush1.bf16.msra.mxu0 0
        %1585 = vmatprep.subr.bf16.mxu0 0
        %1586 = vmatpush1.bf16.msra.mxu0 %v1567
        %1587 = vmatprep.subr.bf16.mxu0 0
        %1588 = vmatpush1.bf16.msra.mxu0 %v1566
        %1589 = vmatprep.subr.bf16.mxu0 0
        %1590 = vmatpush2.bf16.msra.mxu0 0
        %1591 = vmatprep.subr.bf16.mxu0 0
        %1592 = vmatpush2.bf16.msra.mxu0 0
        %1593 = vmatprep.subr.bf16.mxu0 0
        %1594 = vmatpush2.bf16.msra.mxu0 0
        %1595 = vmatprep.subr.bf16.mxu0 0
        %1596 = vmatpush2.bf16.msra.mxu0 0
        %1597 = vmatprep.subr.bf16.mxu0 0
        %1598 = vmatpush2.bf16.msra.mxu0 0
        %1599 = vmatprep.subr.bf16.mxu0 0
        %1600 = vmatpush2.bf16.msra.mxu0 0
        %1601 = vmatprep.subr.bf16.mxu0 0
        %1602 = vmatpush2.bf16.msra.mxu0 0
        %1603 = vmatprep.subr.bf16.mxu0 0
        %1604 = vmatpush2.bf16.msra.mxu0 0
        %1605 = vmatprep.mubr.bf16.mxu0 0
        %1606 = vmatmul.mubr.bf16.gmra.mxu0 %v1571
        %v1607 = vpop.f32.mrf.mxu0
        %v1608 = vadd.f32 %v828, %v1607
        %v1609 = vpop.f32.mrf.mxu0
        %v1610 = vpop.f32.mrf.mxu0
        %v1611 = vpop.f32.mrf.mxu0
        %1612 = vdwg.mxu0
        %v1613 = vpack.c.bf16 %v1608, %v1608
        %v1615 = vsel %vm1017, %v1613, 0
        %v1618 = vsel %vm1017, %v956, 0
        %1620 = vmatprep.subr.bf16.mxu0 0
        %1621 = vmatpush1.bf16.xpose.msra.mxu0 0
        %1622 = vmatprep.subr.bf16.mxu0 0
        %1623 = vmatpush1.bf16.xpose.msra.mxu0 0
        %1624 = vmatprep.subr.bf16.mxu0 0
        %1625 = vmatpush1.bf16.xpose.msra.mxu0 0
        %1626 = vmatprep.subr.bf16.mxu0 0
        %1627 = vmatpush1.bf16.xpose.msra.mxu0 0
        %1628 = vmatprep.subr.bf16.mxu0 0
        %1629 = vmatpush1.bf16.xpose.msra.mxu0 0
        %1630 = vmatprep.subr.bf16.mxu0 0
        %1631 = vmatpush1.bf16.xpose.msra.mxu0 0
        %1632 = vmatprep.subr.bf16.mxu0 0
        %1633 = vmatpush1.bf16.xpose.msra.mxu0 0
        %1634 = vmatprep.subr.bf16.mxu0 0
        %1635 = vmatpush1.bf16.xpose.msra.mxu0 %v1618
        %1636 = vmatprep.subr.bf16.mxu0 0
        %1637 = vmatpush2.bf16.xpose.msra.mxu0 0
        %1638 = vmatprep.subr.bf16.mxu0 0
        %1639 = vmatpush2.bf16.xpose.msra.mxu0 0
        %1640 = vmatprep.subr.bf16.mxu0 0
        %1641 = vmatpush2.bf16.xpose.msra.mxu0 0
        %1642 = vmatprep.subr.bf16.mxu0 0
        %1643 = vmatpush2.bf16.xpose.msra.mxu0 0
        %1644 = vmatprep.subr.bf16.mxu0 0
        %1645 = vmatpush2.bf16.xpose.msra.mxu0 0
        %1646 = vmatprep.subr.bf16.mxu0 0
        %1647 = vmatpush2.bf16.xpose.msra.mxu0 0
        %1648 = vmatprep.subr.bf16.mxu0 0
        %1649 = vmatpush2.bf16.xpose.msra.mxu0 0
        %1650 = vmatprep.subr.bf16.mxu0 0
        %1651 = vmatpush2.bf16.xpose.msra.mxu0 0
        %1652 = vmatprep.mubr.bf16.mxu0 0
        %1653 = vmatmul.mubr.bf16.gmra.mxu0 %v1615
        %v1654 = vpop.f32.mrf.mxu0
        %v1655 = vadd.f32 0.0, %v1654
        %v1656 = vpop.f32.mrf.mxu0
        %v1657 = vpop.f32.mrf.mxu0
        %v1658 = vpop.f32.mrf.mxu0
        %1659 = vdwg.mxu0
        %v1660 = vsel %vm1017, %v1655, -inf
        %1661 = vmax.xlane.f32.xlu0 %v1660
        %v1662 = vpop.xlane.xlu0 %1661
        %v1663 = vsub.f32 %v1655, %v1662
        %v1664 = vmul.f32 %v1663, 1.442695
        %v1665 = vpow.pop %v1664
        %v1666 = vsel %vm1017, %v1665, 0.0
        %1667 = vadd.xlane.f32.xlu0 %v1666
        %v1668 = vpop.xlane.xlu0 %1667
        %v1669 = vrcp.pop %v1668
        %v1670 = vmul.f32 %v1668, %v1669
        %v1671 = vsub.f32 2.0, %v1670
        %v1672 = vmul.f32 %v1669, %v1671
        %v1673 = vmul.f32 %v1665, %v1672
        %v1674 = vpack.c.bf16 %v1673, %v1673
        %1676 = vrot.lane.b32.xlu0 %v956, 96
        %v1677 = vpop.permute.xlu0 %1676
        %v1679 = vsel %vm1017, %v1674, 0
        %v1682 = vsel %vm1084, %v1677, 0
        %1684 = vmatprep.subr.bf16.mxu0 0
        %1685 = vmatpush1.bf16.msra.mxu0 0
        %1686 = vmatprep.subr.bf16.mxu0 0
        %1687 = vmatpush1.bf16.msra.mxu0 0
        %1688 = vmatprep.subr.bf16.mxu0 0
        %1689 = vmatpush1.bf16.msra.mxu0 0
        %1690 = vmatprep.subr.bf16.mxu0 0
        %1691 = vmatpush1.bf16.msra.mxu0 0
        %1692 = vmatprep.subr.bf16.mxu0 0
        %1693 = vmatpush1.bf16.msra.mxu0 0
        %1694 = vmatprep.subr.bf16.mxu0 0
        %1695 = vmatpush1.bf16.msra.mxu0 0
        %1696 = vmatprep.subr.bf16.mxu0 0
        %1697 = vmatpush1.bf16.msra.mxu0 0
        %1698 = vmatprep.subr.bf16.mxu0 0
        %1699 = vmatpush1.bf16.msra.mxu0 %v1682
        %1700 = vmatprep.subr.bf16.mxu0 0
        %1701 = vmatpush2.bf16.msra.mxu0 0
        %1702 = vmatprep.subr.bf16.mxu0 0
        %1703 = vmatpush2.bf16.msra.mxu0 0
        %1704 = vmatprep.subr.bf16.mxu0 0
        %1705 = vmatpush2.bf16.msra.mxu0 0
        %1706 = vmatprep.subr.bf16.mxu0 0
        %1707 = vmatpush2.bf16.msra.mxu0 0
        %1708 = vmatprep.subr.bf16.mxu0 0
        %1709 = vmatpush2.bf16.msra.mxu0 0
        %1710 = vmatprep.subr.bf16.mxu0 0
        %1711 = vmatpush2.bf16.msra.mxu0 0
        %1712 = vmatprep.subr.bf16.mxu0 0
        %1713 = vmatpush2.bf16.msra.mxu0 0
        %1714 = vmatprep.subr.bf16.mxu0 0
        %1715 = vmatpush2.bf16.msra.mxu0 0
        %1716 = vmatprep.mubr.bf16.mxu0 0
        %1717 = vmatmul.mubr.bf16.gmra.mxu0 %v1679
        %v1718 = vpop.f32.mrf.mxu0
        %v1719 = vadd.f32 0.0, %v1718
        %v1720 = vpop.f32.mrf.mxu0
        %v1721 = vpop.f32.mrf.mxu0
        %v1722 = vpop.f32.mrf.mxu0
        %1723 = vdwg.mxu0
        %1725 = vrot.lane.b32.xlu0 %v1613, 120
        %v1726 = vpop.permute.xlu0 %1725
        %1727 = vrot.lane.b32.xlu0 %v956, 120
        %v1728 = vpop.permute.xlu0 %1727
        %v1730 = vsel %vm1017, %v1726, 0
        %v1733 = vsel %vm1017, %v1728, 0
        %1735 = vmatprep.subr.bf16.mxu0 0
        %1736 = vmatpush1.bf16.xpose.msra.mxu0 0
        %1737 = vmatprep.subr.bf16.mxu0 0
        %1738 = vmatpush1.bf16.xpose.msra.mxu0 0
        %1739 = vmatprep.subr.bf16.mxu0 0
        %1740 = vmatpush1.bf16.xpose.msra.mxu0 0
        %1741 = vmatprep.subr.bf16.mxu0 0
        %1742 = vmatpush1.bf16.xpose.msra.mxu0 0
        %1743 = vmatprep.subr.bf16.mxu0 0
        %1744 = vmatpush1.bf16.xpose.msra.mxu0 0
        %1745 = vmatprep.subr.bf16.mxu0 0
        %1746 = vmatpush1.bf16.xpose.msra.mxu0 0
        %1747 = vmatprep.subr.bf16.mxu0 0
        %1748 = vmatpush1.bf16.xpose.msra.mxu0 0
        %1749 = vmatprep.subr.bf16.mxu0 0
        %1750 = vmatpush1.bf16.xpose.msra.mxu0 %v1733
        %1751 = vmatprep.subr.bf16.mxu0 0
        %1752 = vmatpush2.bf16.xpose.msra.mxu0 0
        %1753 = vmatprep.subr.bf16.mxu0 0
        %1754 = vmatpush2.bf16.xpose.msra.mxu0 0
        %1755 = vmatprep.subr.bf16.mxu0 0
        %1756 = vmatpush2.bf16.xpose.msra.mxu0 0
        %1757 = vmatprep.subr.bf16.mxu0 0
        %1758 = vmatpush2.bf16.xpose.msra.mxu0 0
        %1759 = vmatprep.subr.bf16.mxu0 0
        %1760 = vmatpush2.bf16.xpose.msra.mxu0 0
        %1761 = vmatprep.subr.bf16.mxu0 0
        %1762 = vmatpush2.bf16.xpose.msra.mxu0 0
        %1763 = vmatprep.subr.bf16.mxu0 0
        %1764 = vmatpush2.bf16.xpose.msra.mxu0 0
        %1765 = vmatprep.subr.bf16.mxu0 0
        %1766 = vmatpush2.bf16.xpose.msra.mxu0 0
        %1767 = vmatprep.mubr.bf16.mxu0 0
        %1768 = vmatmul.mubr.bf16.gmra.mxu0 %v1730
        %v1769 = vpop.f32.mrf.mxu0
        %v1770 = vadd.f32 0.0, %v1769
        %v1771 = vpop.f32.mrf.mxu0
        %v1772 = vpop.f32.mrf.mxu0
        %v1773 = vpop.f32.mrf.mxu0
        %1774 = vdwg.mxu0
        %v1775 = vsel %vm1017, %v1770, -inf
        %1776 = vmax.xlane.f32.xlu0 %v1775
        %v1777 = vpop.xlane.xlu0 %1776
        %v1778 = vsub.f32 %v1770, %v1777
        %v1779 = vmul.f32 %v1778, 1.442695
        %v1780 = vpow.pop %v1779
        %v1781 = vsel %vm1017, %v1780, 0.0
        %1782 = vadd.xlane.f32.xlu0 %v1781
        %v1783 = vpop.xlane.xlu0 %1782
        %v1784 = vrcp.pop %v1783
        %v1785 = vmul.f32 %v1783, %v1784
        %v1786 = vsub.f32 2.0, %v1785
        %v1787 = vmul.f32 %v1784, %v1786
        %v1788 = vmul.f32 %v1780, %v1787
        %v1789 = vpack.c.bf16 %v1788, %v1788
        %1790 = vrot.lane.b32.xlu0 %v956, 88
        %v1791 = vpop.permute.xlu0 %1790
        %v1793 = vsel %vm1017, %v1789, 0
        %v1796 = vsel %vm1084, %v1791, 0
        %1798 = vmatprep.subr.bf16.mxu0 0
        %1799 = vmatpush1.bf16.msra.mxu0 0
        %1800 = vmatprep.subr.bf16.mxu0 0
        %1801 = vmatpush1.bf16.msra.mxu0 0
        %1802 = vmatprep.subr.bf16.mxu0 0
        %1803 = vmatpush1.bf16.msra.mxu0 0
        %1804 = vmatprep.subr.bf16.mxu0 0
        %1805 = vmatpush1.bf16.msra.mxu0 0
        %1806 = vmatprep.subr.bf16.mxu0 0
        %1807 = vmatpush1.bf16.msra.mxu0 0
        %1808 = vmatprep.subr.bf16.mxu0 0
        %1809 = vmatpush1.bf16.msra.mxu0 0
        %1810 = vmatprep.subr.bf16.mxu0 0
        %1811 = vmatpush1.bf16.msra.mxu0 0
        %1812 = vmatprep.subr.bf16.mxu0 0
        %1813 = vmatpush1.bf16.msra.mxu0 %v1796
        %1814 = vmatprep.subr.bf16.mxu0 0
        %1815 = vmatpush2.bf16.msra.mxu0 0
        %1816 = vmatprep.subr.bf16.mxu0 0
        %1817 = vmatpush2.bf16.msra.mxu0 0
        %1818 = vmatprep.subr.bf16.mxu0 0
        %1819 = vmatpush2.bf16.msra.mxu0 0
        %1820 = vmatprep.subr.bf16.mxu0 0
        %1821 = vmatpush2.bf16.msra.mxu0 0
        %1822 = vmatprep.subr.bf16.mxu0 0
        %1823 = vmatpush2.bf16.msra.mxu0 0
        %1824 = vmatprep.subr.bf16.mxu0 0
        %1825 = vmatpush2.bf16.msra.mxu0 0
        %1826 = vmatprep.subr.bf16.mxu0 0
        %1827 = vmatpush2.bf16.msra.mxu0 0
        %1828 = vmatprep.subr.bf16.mxu0 0
        %1829 = vmatpush2.bf16.msra.mxu0 0
        %1830 = vmatprep.mubr.bf16.mxu0 0
        %1831 = vmatmul.mubr.bf16.gmra.mxu0 %v1793
        %v1832 = vpop.f32.mrf.mxu0
        %v1833 = vadd.f32 0.0, %v1832
        %v1834 = vpop.f32.mrf.mxu0
        %v1835 = vpop.f32.mrf.mxu0
        %v1836 = vpop.f32.mrf.mxu0
        %1837 = vdwg.mxu0
        %1838 = vrot.lane.b32.xlu0 %v1613, 112
        %v1839 = vpop.permute.xlu0 %1838
        %1840 = vrot.lane.b32.xlu0 %v956, 112
        %v1841 = vpop.permute.xlu0 %1840
        %v1843 = vsel %vm1017, %v1839, 0
        %v1846 = vsel %vm1017, %v1841, 0
        %1848 = vmatprep.subr.bf16.mxu0 0
        %1849 = vmatpush1.bf16.xpose.msra.mxu0 0
        %1850 = vmatprep.subr.bf16.mxu0 0
        %1851 = vmatpush1.bf16.xpose.msra.mxu0 0
        %1852 = vmatprep.subr.bf16.mxu0 0
        %1853 = vmatpush1.bf16.xpose.msra.mxu0 0
        %1854 = vmatprep.subr.bf16.mxu0 0
        %1855 = vmatpush1.bf16.xpose.msra.mxu0 0
        %1856 = vmatprep.subr.bf16.mxu0 0
        %1857 = vmatpush1.bf16.xpose.msra.mxu0 0
        %1858 = vmatprep.subr.bf16.mxu0 0
        %1859 = vmatpush1.bf16.xpose.msra.mxu0 0
        %1860 = vmatprep.subr.bf16.mxu0 0
        %1861 = vmatpush1.bf16.xpose.msra.mxu0 0
        %1862 = vmatprep.subr.bf16.mxu0 0
        %1863 = vmatpush1.bf16.xpose.msra.mxu0 %v1846
        %1864 = vmatprep.subr.bf16.mxu0 0
        %1865 = vmatpush2.bf16.xpose.msra.mxu0 0
        %1866 = vmatprep.subr.bf16.mxu0 0
        %1867 = vmatpush2.bf16.xpose.msra.mxu0 0
        %1868 = vmatprep.subr.bf16.mxu0 0
        %1869 = vmatpush2.bf16.xpose.msra.mxu0 0
        %1870 = vmatprep.subr.bf16.mxu0 0
        %1871 = vmatpush2.bf16.xpose.msra.mxu0 0
        %1872 = vmatprep.subr.bf16.mxu0 0
        %1873 = vmatpush2.bf16.xpose.msra.mxu0 0
        %1874 = vmatprep.subr.bf16.mxu0 0
        %1875 = vmatpush2.bf16.xpose.msra.mxu0 0
        %1876 = vmatprep.subr.bf16.mxu0 0
        %1877 = vmatpush2.bf16.xpose.msra.mxu0 0
        %1878 = vmatprep.subr.bf16.mxu0 0
        %1879 = vmatpush2.bf16.xpose.msra.mxu0 0
        %1880 = vmatprep.mubr.bf16.mxu0 0
        %1881 = vmatmul.mubr.bf16.gmra.mxu0 %v1843
        %v1882 = vpop.f32.mrf.mxu0
        %v1883 = vadd.f32 0.0, %v1882
        %v1884 = vpop.f32.mrf.mxu0
        %v1885 = vpop.f32.mrf.mxu0
        %v1886 = vpop.f32.mrf.mxu0
        %1887 = vdwg.mxu0
        %v1888 = vsel %vm1017, %v1883, -inf
        %1889 = vmax.xlane.f32.xlu0 %v1888
        %v1890 = vpop.xlane.xlu0 %1889
        %v1891 = vsub.f32 %v1883, %v1890
        %v1892 = vmul.f32 %v1891, 1.442695
        %v1893 = vpow.pop %v1892
        %v1894 = vsel %vm1017, %v1893, 0.0
        %1895 = vadd.xlane.f32.xlu0 %v1894
        %v1896 = vpop.xlane.xlu0 %1895
        %v1897 = vrcp.pop %v1896
        %v1898 = vmul.f32 %v1896, %v1897
        %v1899 = vsub.f32 2.0, %v1898
        %v1900 = vmul.f32 %v1897, %v1899
        %v1901 = vmul.f32 %v1893, %v1900
        %v1902 = vpack.c.bf16 %v1901, %v1901
        %1903 = vrot.lane.b32.xlu0 %v956, 80
        %v1904 = vpop.permute.xlu0 %1903
        %v1906 = vsel %vm1017, %v1902, 0
        %v1909 = vsel %vm1084, %v1904, 0
        %1911 = vmatprep.subr.bf16.mxu0 0
        %1912 = vmatpush1.bf16.msra.mxu0 0
        %1913 = vmatprep.subr.bf16.mxu0 0
        %1914 = vmatpush1.bf16.msra.mxu0 0
        %1915 = vmatprep.subr.bf16.mxu0 0
        %1916 = vmatpush1.bf16.msra.mxu0 0
        %1917 = vmatprep.subr.bf16.mxu0 0
        %1918 = vmatpush1.bf16.msra.mxu0 0
        %1919 = vmatprep.subr.bf16.mxu0 0
        %1920 = vmatpush1.bf16.msra.mxu0 0
        %1921 = vmatprep.subr.bf16.mxu0 0
        %1922 = vmatpush1.bf16.msra.mxu0 0
        %1923 = vmatprep.subr.bf16.mxu0 0
        %1924 = vmatpush1.bf16.msra.mxu0 0
        %1925 = vmatprep.subr.bf16.mxu0 0
        %1926 = vmatpush1.bf16.msra.mxu0 %v1909
        %1927 = vmatprep.subr.bf16.mxu0 0
        %1928 = vmatpush2.bf16.msra.mxu0 0
        %1929 = vmatprep.subr.bf16.mxu0 0
        %1930 = vmatpush2.bf16.msra.mxu0 0
        %1931 = vmatprep.subr.bf16.mxu0 0
        %1932 = vmatpush2.bf16.msra.mxu0 0
        %1933 = vmatprep.subr.bf16.mxu0 0
        %1934 = vmatpush2.bf16.msra.mxu0 0
        %1935 = vmatprep.subr.bf16.mxu0 0
        %1936 = vmatpush2.bf16.msra.mxu0 0
        %1937 = vmatprep.subr.bf16.mxu0 0
        %1938 = vmatpush2.bf16.msra.mxu0 0
        %1939 = vmatprep.subr.bf16.mxu0 0
        %1940 = vmatpush2.bf16.msra.mxu0 0
        %1941 = vmatprep.subr.bf16.mxu0 0
        %1942 = vmatpush2.bf16.msra.mxu0 0
        %1943 = vmatprep.mubr.bf16.mxu0 0
        %1944 = vmatmul.mubr.bf16.gmra.mxu0 %v1906
        %v1945 = vpop.f32.mrf.mxu0
        %v1946 = vadd.f32 0.0, %v1945
        %v1947 = vpop.f32.mrf.mxu0
        %v1948 = vpop.f32.mrf.mxu0
        %v1949 = vpop.f32.mrf.mxu0
        %1950 = vdwg.mxu0
        %1951 = vrot.lane.b32.xlu0 %v1613, 104
        %v1952 = vpop.permute.xlu0 %1951
        %1953 = vrot.lane.b32.xlu0 %v956, 104
        %v1954 = vpop.permute.xlu0 %1953
        %v1956 = vsel %vm1017, %v1952, 0
        %v1959 = vsel %vm1017, %v1954, 0
        %1961 = vmatprep.subr.bf16.mxu0 0
        %1962 = vmatpush1.bf16.xpose.msra.mxu0 0
        %1963 = vmatprep.subr.bf16.mxu0 0
        %1964 = vmatpush1.bf16.xpose.msra.mxu0 0
        %1965 = vmatprep.subr.bf16.mxu0 0
        %1966 = vmatpush1.bf16.xpose.msra.mxu0 0
        %1967 = vmatprep.subr.bf16.mxu0 0
        %1968 = vmatpush1.bf16.xpose.msra.mxu0 0
        %1969 = vmatprep.subr.bf16.mxu0 0
        %1970 = vmatpush1.bf16.xpose.msra.mxu0 0
        %1971 = vmatprep.subr.bf16.mxu0 0
        %1972 = vmatpush1.bf16.xpose.msra.mxu0 0
        %1973 = vmatprep.subr.bf16.mxu0 0
        %1974 = vmatpush1.bf16.xpose.msra.mxu0 0
        %1975 = vmatprep.subr.bf16.mxu0 0
        %1976 = vmatpush1.bf16.xpose.msra.mxu0 %v1959
        %1977 = vmatprep.subr.bf16.mxu0 0
        %1978 = vmatpush2.bf16.xpose.msra.mxu0 0
        %1979 = vmatprep.subr.bf16.mxu0 0
        %1980 = vmatpush2.bf16.xpose.msra.mxu0 0
        %1981 = vmatprep.subr.bf16.mxu0 0
        %1982 = vmatpush2.bf16.xpose.msra.mxu0 0
        %1983 = vmatprep.subr.bf16.mxu0 0
        %1984 = vmatpush2.bf16.xpose.msra.mxu0 0
        %1985 = vmatprep.subr.bf16.mxu0 0
        %1986 = vmatpush2.bf16.xpose.msra.mxu0 0
        %1987 = vmatprep.subr.bf16.mxu0 0
        %1988 = vmatpush2.bf16.xpose.msra.mxu0 0
        %1989 = vmatprep.subr.bf16.mxu0 0
        %1990 = vmatpush2.bf16.xpose.msra.mxu0 0
        %1991 = vmatprep.subr.bf16.mxu0 0
        %1992 = vmatpush2.bf16.xpose.msra.mxu0 0
        %1993 = vmatprep.mubr.bf16.mxu0 0
        %1994 = vmatmul.mubr.bf16.gmra.mxu0 %v1956
        %v1995 = vpop.f32.mrf.mxu0
        %v1996 = vadd.f32 0.0, %v1995
        %v1997 = vpop.f32.mrf.mxu0
        %v1998 = vpop.f32.mrf.mxu0
        %v1999 = vpop.f32.mrf.mxu0
        %2000 = vdwg.mxu0
        %v2001 = vsel %vm1017, %v1996, -inf
        %2002 = vmax.xlane.f32.xlu0 %v2001
        %v2003 = vpop.xlane.xlu0 %2002
        %v2004 = vsub.f32 %v1996, %v2003
        %v2005 = vmul.f32 %v2004, 1.442695
        %v2006 = vpow.pop %v2005
        %v2007 = vsel %vm1017, %v2006, 0.0
        %2008 = vadd.xlane.f32.xlu0 %v2007
        %v2009 = vpop.xlane.xlu0 %2008
        %v2010 = vrcp.pop %v2009
        %v2011 = vmul.f32 %v2009, %v2010
        %v2012 = vsub.f32 2.0, %v2011
        %v2013 = vmul.f32 %v2010, %v2012
        %v2014 = vmul.f32 %v2006, %v2013
        %v2015 = vpack.c.bf16 %v2014, %v2014
        %2016 = vrot.lane.b32.xlu0 %v956, 72
        %v2017 = vpop.permute.xlu0 %2016
        %v2019 = vsel %vm1017, %v2015, 0
        %v2022 = vsel %vm1084, %v2017, 0
        %2024 = vmatprep.subr.bf16.mxu0 0
        %2025 = vmatpush1.bf16.msra.mxu0 0
        %2026 = vmatprep.subr.bf16.mxu0 0
        %2027 = vmatpush1.bf16.msra.mxu0 0
        %2028 = vmatprep.subr.bf16.mxu0 0
        %2029 = vmatpush1.bf16.msra.mxu0 0
        %2030 = vmatprep.subr.bf16.mxu0 0
        %2031 = vmatpush1.bf16.msra.mxu0 0
        %2032 = vmatprep.subr.bf16.mxu0 0
        %2033 = vmatpush1.bf16.msra.mxu0 0
        %2034 = vmatprep.subr.bf16.mxu0 0
        %2035 = vmatpush1.bf16.msra.mxu0 0
        %2036 = vmatprep.subr.bf16.mxu0 0
        %2037 = vmatpush1.bf16.msra.mxu0 0
        %2038 = vmatprep.subr.bf16.mxu0 0
        %2039 = vmatpush1.bf16.msra.mxu0 %v2022
        %2040 = vmatprep.subr.bf16.mxu0 0
        %2041 = vmatpush2.bf16.msra.mxu0 0
        %2042 = vmatprep.subr.bf16.mxu0 0
        %2043 = vmatpush2.bf16.msra.mxu0 0
        %2044 = vmatprep.subr.bf16.mxu0 0
        %2045 = vmatpush2.bf16.msra.mxu0 0
        %2046 = vmatprep.subr.bf16.mxu0 0
        %2047 = vmatpush2.bf16.msra.mxu0 0
        %2048 = vmatprep.subr.bf16.mxu0 0
        %2049 = vmatpush2.bf16.msra.mxu0 0
        %2050 = vmatprep.subr.bf16.mxu0 0
        %2051 = vmatpush2.bf16.msra.mxu0 0
        %2052 = vmatprep.subr.bf16.mxu0 0
        %2053 = vmatpush2.bf16.msra.mxu0 0
        %2054 = vmatprep.subr.bf16.mxu0 0
        %2055 = vmatpush2.bf16.msra.mxu0 0
        %2056 = vmatprep.mubr.bf16.mxu0 0
        %2057 = vmatmul.mubr.bf16.gmra.mxu0 %v2019
        %v2058 = vpop.f32.mrf.mxu0
        %v2059 = vadd.f32 0.0, %v2058
        %v2060 = vpop.f32.mrf.mxu0
        %v2061 = vpop.f32.mrf.mxu0
        %v2062 = vpop.f32.mrf.mxu0
        %2063 = vdwg.mxu0
        %2065 = vrot.lane.b32.xlu0 %v1833, 8
        %v2066 = vpop.permute.xlu0 %2065
        %2069 = vrot.lane.b32.xlu0 %v1946, 16
        %v2070 = vpop.permute.xlu0 %2069
        %2073 = vrot.lane.b32.xlu0 %v2059, 24
        %v2074 = vpop.permute.xlu0 %2073
        %v2076 = vsel %vm1017, %v1719, %v2066
        %v2077 = vsel %vm1480, %v2076, %v2070
        %v2078 = vsel %vm1482, %v2077, %v2074
        %v2079 = vpack.c.bf16 %v2078, %v2078
        %v2084 = vunpack.c.l.b16 %v793
        %v2085 = vunpack.c.l.b16 %v794
        %v2086 = vunpack.c.l.b16 %v795
        %v2087 = vunpack.c.l.b16 %v796
        %v2088 = vpack.c.b16 %v2085, %v2084
        %v2089 = vpack.c.b16 %v2087, %v2086
        %v2093 = vsel %vm912, %v2079, 0
        %2095 = vmatprep.subr.bf16.mxu0 0
        %2096 = vmatpush1.bf16.msra.mxu0 0
        %2097 = vmatprep.subr.bf16.mxu0 0
        %2098 = vmatpush1.bf16.msra.mxu0 0
        %2099 = vmatprep.subr.bf16.mxu0 0
        %2100 = vmatpush1.bf16.msra.mxu0 0
        %2101 = vmatprep.subr.bf16.mxu0 0
        %2102 = vmatpush1.bf16.msra.mxu0 0
        %2103 = vmatprep.subr.bf16.mxu0 0
        %2104 = vmatpush1.bf16.msra.mxu0 0
        %2105 = vmatprep.subr.bf16.mxu0 0
        %2106 = vmatpush1.bf16.msra.mxu0 0
        %2107 = vmatprep.subr.bf16.mxu0 0
        %2108 = vmatpush1.bf16.msra.mxu0 %v2089
        %2109 = vmatprep.subr.bf16.mxu0 0
        %2110 = vmatpush1.bf16.msra.mxu0 %v2088
        %2111 = vmatprep.subr.bf16.mxu0 0
        %2112 = vmatpush2.bf16.msra.mxu0 0
        %2113 = vmatprep.subr.bf16.mxu0 0
        %2114 = vmatpush2.bf16.msra.mxu0 0
        %2115 = vmatprep.subr.bf16.mxu0 0
        %2116 = vmatpush2.bf16.msra.mxu0 0
        %2117 = vmatprep.subr.bf16.mxu0 0
        %2118 = vmatpush2.bf16.msra.mxu0 0
        %2119 = vmatprep.subr.bf16.mxu0 0
        %2120 = vmatpush2.bf16.msra.mxu0 0
        %2121 = vmatprep.subr.bf16.mxu0 0
        %2122 = vmatpush2.bf16.msra.mxu0 0
        %2123 = vmatprep.subr.bf16.mxu0 0
        %2124 = vmatpush2.bf16.msra.mxu0 0
        %2125 = vmatprep.subr.bf16.mxu0 0
        %2126 = vmatpush2.bf16.msra.mxu0 0
        %2127 = vmatprep.mubr.bf16.mxu0 0
        %2128 = vmatmul.mubr.bf16.gmra.mxu0 %v2093
        %v2129 = vpop.f32.mrf.mxu0
        %v2130 = vadd.f32 %v835, %v2129
        %v2131 = vpop.f32.mrf.mxu0
        %v2132 = vpop.f32.mrf.mxu0
        %v2133 = vpop.f32.mrf.mxu0
        %2134 = vdwg.mxu0
        %v2135 = vadd.f32 %v1556, %v2130
        %v2136 = vsel %vm912, %v2135, 0.0
        %2137 = vadd.xlane.f32.xlu0 %v2136
        %v2138 = vpop.xlane.xlu0 %2137
        %v2139 = vmul.f32 %v2138, %v1544
        %v2140 = vsub.f32 %v2135, %v2139
        %v2141 = vmul.f32 %v2140, %v2140
        %v2142 = vsel %vm912, %v2141, 0.0
        %2143 = vadd.xlane.f32.xlu0 %v2142
        %v2144 = vpop.xlane.xlu0 %2143
        %v2145 = vmul.f32 %v2144, %v1544
        %v2146 = vadd.f32 %v2145, 1e-05
        %v2147 = vrsqrt.pop %v2146
        %v2148 = vmul.f32 %v2140, %v2147
        %v2149 = vmul.f32 %v2148, %v870
        %v2150 = vadd.f32 %v2149, %v877
        %v2151 = vpack.c.bf16 %v2150, %v2150
        %v2156 = vunpack.c.l.b16 %v797
        %v2157 = vunpack.c.l.b16 %v798
        %v2158 = vunpack.c.l.b16 %v799
        %v2159 = vunpack.c.l.b16 %v800
        %v2160 = vpack.c.b16 %v2157, %v2156
        %v2161 = vpack.c.b16 %v2159, %v2158
        %v2165 = vsel %vm912, %v2151, 0
        %2167 = vmatprep.subr.bf16.mxu0 0
        %2168 = vmatpush1.bf16.msra.mxu0 0
        %2169 = vmatprep.subr.bf16.mxu0 0
        %2170 = vmatpush1.bf16.msra.mxu0 0
        %2171 = vmatprep.subr.bf16.mxu0 0
        %2172 = vmatpush1.bf16.msra.mxu0 0
        %2173 = vmatprep.subr.bf16.mxu0 0
        %2174 = vmatpush1.bf16.msra.mxu0 0
        %2175 = vmatprep.subr.bf16.mxu0 0
        %2176 = vmatpush1.bf16.msra.mxu0 0
        %2177 = vmatprep.subr.bf16.mxu0 0
        %2178 = vmatpush1.bf16.msra.mxu0 0
        %2179 = vmatprep.subr.bf16.mxu0 0
        %2180 = vmatpush1.bf16.msra.mxu0 %v2161
        %2181 = vmatprep.subr.bf16.mxu0 0
        %2182 = vmatpush1.bf16.msra.mxu0 %v2160
        %2183 = vmatprep.subr.bf16.mxu0 0
        %2184 = vmatpush2.bf16.msra.mxu0 0
        %2185 = vmatprep.subr.bf16.mxu0 0
        %2186 = vmatpush2.bf16.msra.mxu0 0
        %2187 = vmatprep.subr.bf16.mxu0 0
        %2188 = vmatpush2.bf16.msra.mxu0 0
        %2189 = vmatprep.subr.bf16.mxu0 0
        %2190 = vmatpush2.bf16.msra.mxu0 0
        %2191 = vmatprep.subr.bf16.mxu0 0
        %2192 = vmatpush2.bf16.msra.mxu0 0
        %2193 = vmatprep.subr.bf16.mxu0 0
        %2194 = vmatpush2.bf16.msra.mxu0 0
        %2195 = vmatprep.subr.bf16.mxu0 0
        %2196 = vmatpush2.bf16.msra.mxu0 0
        %2197 = vmatprep.subr.bf16.mxu0 0
        %2198 = vmatpush2.bf16.msra.mxu0 0
        %2199 = vmatprep.mubr.bf16.mxu0 0
        %2200 = vmatmul.mubr.bf16.gmra.mxu0 %v2165
        %v2201 = vpop.f32.mrf.mxu0
        %v2202 = vadd.f32 %v842, %v2201
        %v2203 = vpop.f32.mrf.mxu0
        %v2204 = vpop.f32.mrf.mxu0
        %v2205 = vpop.f32.mrf.mxu0
        %2206 = vdwg.mxu0
        %v2207 = vmax.f32 %v2202, 0.0
        %v2208 = vpack.c.bf16 %v2207, %v2207
        %v2217 = vunpack.c.l.b16 %v801
        %v2218 = vunpack.c.l.b16 %v802
        %v2219 = vunpack.c.l.b16 %v803
        %v2220 = vunpack.c.l.b16 %v804
        %v2221 = vunpack.c.l.b16 %v805
        %v2222 = vunpack.c.l.b16 %v806
        %v2223 = vunpack.c.l.b16 %v807
        %v2224 = vunpack.c.l.b16 %v808
        %v2225 = vpack.c.b16 %v2218, %v2217
        %v2226 = vpack.c.b16 %v2220, %v2219
        %v2227 = vpack.c.b16 %v2222, %v2221
        %v2228 = vpack.c.b16 %v2224, %v2223
        %vm2233 = vcmask 523264
        %v2235 = vsel %vm2233, %v2208, 0
        %2237 = vmatprep.subr.bf16.mxu0 0
        %2238 = vmatpush1.bf16.msra.mxu0 0
        %2239 = vmatprep.subr.bf16.mxu0 0
        %2240 = vmatpush1.bf16.msra.mxu0 0
        %2241 = vmatprep.subr.bf16.mxu0 0
        %2242 = vmatpush1.bf16.msra.mxu0 0
        %2243 = vmatprep.subr.bf16.mxu0 0
        %2244 = vmatpush1.bf16.msra.mxu0 0
        %2245 = vmatprep.subr.bf16.mxu0 0
        %2246 = vmatpush1.bf16.msra.mxu0 %v2228
        %2247 = vmatprep.subr.bf16.mxu0 0
        %2248 = vmatpush1.bf16.msra.mxu0 %v2227
        %2249 = vmatprep.subr.bf16.mxu0 0
        %2250 = vmatpush1.bf16.msra.mxu0 %v2226
        %2251 = vmatprep.subr.bf16.mxu0 0
        %2252 = vmatpush1.bf16.msra.mxu0 %v2225
        %2253 = vmatprep.subr.bf16.mxu0 0
        %2254 = vmatpush2.bf16.msra.mxu0 0
        %2255 = vmatprep.subr.bf16.mxu0 0
        %2256 = vmatpush2.bf16.msra.mxu0 0
        %2257 = vmatprep.subr.bf16.mxu0 0
        %2258 = vmatpush2.bf16.msra.mxu0 0
        %2259 = vmatprep.subr.bf16.mxu0 0
        %2260 = vmatpush2.bf16.msra.mxu0 0
        %2261 = vmatprep.subr.bf16.mxu0 0
        %2262 = vmatpush2.bf16.msra.mxu0 0
        %2263 = vmatprep.subr.bf16.mxu0 0
        %2264 = vmatpush2.bf16.msra.mxu0 0
        %2265 = vmatprep.subr.bf16.mxu0 0
        %2266 = vmatpush2.bf16.msra.mxu0 0
        %2267 = vmatprep.subr.bf16.mxu0 0
        %2268 = vmatpush2.bf16.msra.mxu0 0
        %2269 = vmatprep.mubr.bf16.mxu0 0
        %2270 = vmatmul.mubr.bf16.gmra.mxu0 %v2235
        %v2271 = vpop.f32.mrf.mxu0
        %v2272 = vadd.f32 %v849, %v2271
        %v2273 = vpop.f32.mrf.mxu0
        %v2274 = vpop.f32.mrf.mxu0
        %v2275 = vpop.f32.mrf.mxu0
        %2276 = vdwg.mxu0
        %v2277 = vadd.f32 %v2150, %v2272
        %v2278 = vsel %vm912, %v2277, 0.0
        %2279 = vadd.xlane.f32.xlu0 %v2278
        %v2280 = vpop.xlane.xlu0 %2279
        %v2281 = vmul.f32 %v2280, %v1544
        %v2282 = vsub.f32 %v2277, %v2281
        %v2283 = vmul.f32 %v2282, %v2282
        %v2284 = vsel %vm912, %v2283, 0.0
        %2285 = vadd.xlane.f32.xlu0 %v2284
        %v2286 = vpop.xlane.xlu0 %2285
        %v2287 = vmul.f32 %v2286, %v1544
        %v2288 = vadd.f32 %v2287, 1e-05
        %v2289 = vrsqrt.pop %v2288
        %v2290 = vmul.f32 %v2282, %v2289
        %v2291 = vmul.f32 %v2290, %v884
        %v2292 = vadd.f32 %v2291, %v891
        %v2293 = vpack.c.bf16 %v2292, %v2292
        %v2295 = vsel %vm912, %v2293, 0
        %2297 = vmatprep.subr.bf16.mxu0 0
        %2298 = vmatpush1.bf16.msra.mxu0 0
        %2299 = vmatprep.subr.bf16.mxu0 0
        %2300 = vmatpush1.bf16.msra.mxu0 0
        %2301 = vmatprep.subr.bf16.mxu0 0
        %2302 = vmatpush1.bf16.msra.mxu0 0
        %2303 = vmatprep.subr.bf16.mxu0 0
        %2304 = vmatpush1.bf16.msra.mxu0 0
        %2305 = vmatprep.subr.bf16.mxu0 0
        %2306 = vmatpush1.bf16.msra.mxu0 0
        %2307 = vmatprep.subr.bf16.mxu0 0
        %2308 = vmatpush1.bf16.msra.mxu0 0
        %2309 = vmatprep.subr.bf16.mxu0 0
        %2310 = vmatpush1.bf16.msra.mxu0 %v967
        %2311 = vmatprep.subr.bf16.mxu0 0
        %2312 = vmatpush1.bf16.msra.mxu0 %v966
        %2313 = vmatprep.subr.bf16.mxu0 0
        %2314 = vmatpush2.bf16.msra.mxu0 0
        %2315 = vmatprep.subr.bf16.mxu0 0
        %2316 = vmatpush2.bf16.msra.mxu0 0
        %2317 = vmatprep.subr.bf16.mxu0 0
        %2318 = vmatpush2.bf16.msra.mxu0 0
        %2319 = vmatprep.subr.bf16.mxu0 0
        %2320 = vmatpush2.bf16.msra.mxu0 0
        %2321 = vmatprep.subr.bf16.mxu0 0
        %2322 = vmatpush2.bf16.msra.mxu0 0
        %2323 = vmatprep.subr.bf16.mxu0 0
        %2324 = vmatpush2.bf16.msra.mxu0 0
        %2325 = vmatprep.subr.bf16.mxu0 0
        %2326 = vmatpush2.bf16.msra.mxu0 0
        %2327 = vmatprep.subr.bf16.mxu0 0
        %2328 = vmatpush2.bf16.msra.mxu0 0
        %2329 = vmatprep.mubr.bf16.mxu0 0
        %2330 = vmatmul.mubr.bf16.gmra.mxu0 %v2295
        %v2331 = vpop.f32.mrf.mxu0
        %v2332 = vadd.f32 %v814, %v2331
        %v2333 = vpop.f32.mrf.mxu0
        %v2334 = vpop.f32.mrf.mxu0
        %v2335 = vpop.f32.mrf.mxu0
        %2336 = vdwg.mxu0
        %v2337 = vpack.c.bf16 %v2332, %v2332
        %2339 = vrot.lane.b32.xlu0 %v2337, 96
        %v2340 = vpop.permute.xlu0 %2339
        %v2342 = vsel %vm1017, %v2337, 0
        %v2345 = vsel %vm1017, %v2340, 0
        %2347 = vmatprep.subr.bf16.mxu0 0
        %2348 = vmatpush1.bf16.xpose.msra.mxu0 0
        %2349 = vmatprep.subr.bf16.mxu0 0
        %2350 = vmatpush1.bf16.xpose.msra.mxu0 0
        %2351 = vmatprep.subr.bf16.mxu0 0
        %2352 = vmatpush1.bf16.xpose.msra.mxu0 0
        %2353 = vmatprep.subr.bf16.mxu0 0
        %2354 = vmatpush1.bf16.xpose.msra.mxu0 0
        %2355 = vmatprep.subr.bf16.mxu0 0
        %2356 = vmatpush1.bf16.xpose.msra.mxu0 0
        %2357 = vmatprep.subr.bf16.mxu0 0
        %2358 = vmatpush1.bf16.xpose.msra.mxu0 0
        %2359 = vmatprep.subr.bf16.mxu0 0
        %2360 = vmatpush1.bf16.xpose.msra.mxu0 0
        %2361 = vmatprep.subr.bf16.mxu0 0
        %2362 = vmatpush1.bf16.xpose.msra.mxu0 %v2345
        %2363 = vmatprep.subr.bf16.mxu0 0
        %2364 = vmatpush2.bf16.xpose.msra.mxu0 0
        %2365 = vmatprep.subr.bf16.mxu0 0
        %2366 = vmatpush2.bf16.xpose.msra.mxu0 0
        %2367 = vmatprep.subr.bf16.mxu0 0
        %2368 = vmatpush2.bf16.xpose.msra.mxu0 0
        %2369 = vmatprep.subr.bf16.mxu0 0
        %2370 = vmatpush2.bf16.xpose.msra.mxu0 0
        %2371 = vmatprep.subr.bf16.mxu0 0
        %2372 = vmatpush2.bf16.xpose.msra.mxu0 0
        %2373 = vmatprep.subr.bf16.mxu0 0
        %2374 = vmatpush2.bf16.xpose.msra.mxu0 0
        %2375 = vmatprep.subr.bf16.mxu0 0
        %2376 = vmatpush2.bf16.xpose.msra.mxu0 0
        %2377 = vmatprep.subr.bf16.mxu0 0
        %2378 = vmatpush2.bf16.xpose.msra.mxu0 0
        %2379 = vmatprep.mubr.bf16.mxu0 0
        %2380 = vmatmul.mubr.bf16.gmra.mxu0 %v2342
        %v2381 = vpop.f32.mrf.mxu0
        %v2382 = vadd.f32 0.0, %v2381
        %v2383 = vpop.f32.mrf.mxu0
        %v2384 = vpop.f32.mrf.mxu0
        %v2385 = vpop.f32.mrf.mxu0
        %2386 = vdwg.mxu0
        %v2387 = vsel %vm1017, %v2382, -inf
        %2388 = vmax.xlane.f32.xlu0 %v2387
        %v2389 = vpop.xlane.xlu0 %2388
        %v2390 = vsub.f32 %v2382, %v2389
        %v2391 = vmul.f32 %v2390, 1.442695
        %v2392 = vpow.pop %v2391
        %v2393 = vsel %vm1017, %v2392, 0.0
        %2394 = vadd.xlane.f32.xlu0 %v2393
        %v2395 = vpop.xlane.xlu0 %2394
        %v2396 = vrcp.pop %v2395
        %v2397 = vmul.f32 %v2395, %v2396
        %v2398 = vsub.f32 2.0, %v2397
        %v2399 = vmul.f32 %v2396, %v2398
        %v2400 = vmul.f32 %v2392, %v2399
        %v2401 = vpack.c.bf16 %v2400, %v2400
        %2402 = vrot.lane.b32.xlu0 %v2337, 64
        %v2403 = vpop.permute.xlu0 %2402
        %v2405 = vsel %vm1017, %v2401, 0
        %v2408 = vsel %vm1084, %v2403, 0
        %2410 = vmatprep.subr.bf16.mxu0 0
        %2411 = vmatpush1.bf16.msra.mxu0 0
        %2412 = vmatprep.subr.bf16.mxu0 0
        %2413 = vmatpush1.bf16.msra.mxu0 0
        %2414 = vmatprep.subr.bf16.mxu0 0
        %2415 = vmatpush1.bf16.msra.mxu0 0
        %2416 = vmatprep.subr.bf16.mxu0 0
        %2417 = vmatpush1.bf16.msra.mxu0 0
        %2418 = vmatprep.subr.bf16.mxu0 0
        %2419 = vmatpush1.bf16.msra.mxu0 0
        %2420 = vmatprep.subr.bf16.mxu0 0
        %2421 = vmatpush1.bf16.msra.mxu0 0
        %2422 = vmatprep.subr.bf16.mxu0 0
        %2423 = vmatpush1.bf16.msra.mxu0 0
        %2424 = vmatprep.subr.bf16.mxu0 0
        %2425 = vmatpush1.bf16.msra.mxu0 %v2408
        %2426 = vmatprep.subr.bf16.mxu0 0
        %2427 = vmatpush2.bf16.msra.mxu0 0
        %2428 = vmatprep.subr.bf16.mxu0 0
        %2429 = vmatpush2.bf16.msra.mxu0 0
        %2430 = vmatprep.subr.bf16.mxu0 0
        %2431 = vmatpush2.bf16.msra.mxu0 0
        %2432 = vmatprep.subr.bf16.mxu0 0
        %2433 = vmatpush2.bf16.msra.mxu0 0
        %2434 = vmatprep.subr.bf16.mxu0 0
        %2435 = vmatpush2.bf16.msra.mxu0 0
        %2436 = vmatprep.subr.bf16.mxu0 0
        %2437 = vmatpush2.bf16.msra.mxu0 0
        %2438 = vmatprep.subr.bf16.mxu0 0
        %2439 = vmatpush2.bf16.msra.mxu0 0
        %2440 = vmatprep.subr.bf16.mxu0 0
        %2441 = vmatpush2.bf16.msra.mxu0 0
        %2442 = vmatprep.mubr.bf16.mxu0 0
        %2443 = vmatmul.mubr.bf16.gmra.mxu0 %v2405
        %v2444 = vpop.f32.mrf.mxu0
        %v2445 = vadd.f32 0.0, %v2444
        %v2446 = vpop.f32.mrf.mxu0
        %v2447 = vpop.f32.mrf.mxu0
        %v2448 = vpop.f32.mrf.mxu0
        %2449 = vdwg.mxu0
        %2450 = vrot.lane.b32.xlu0 %v2337, 120
        %v2451 = vpop.permute.xlu0 %2450
        %2452 = vrot.lane.b32.xlu0 %v2337, 88
        %v2453 = vpop.permute.xlu0 %2452
        %v2455 = vsel %vm1017, %v2451, 0
        %v2458 = vsel %vm1017, %v2453, 0
        %2460 = vmatprep.subr.bf16.mxu0 0
        %2461 = vmatpush1.bf16.xpose.msra.mxu0 0
        %2462 = vmatprep.subr.bf16.mxu0 0
        %2463 = vmatpush1.bf16.xpose.msra.mxu0 0
        %2464 = vmatprep.subr.bf16.mxu0 0
        %2465 = vmatpush1.bf16.xpose.msra.mxu0 0
        %2466 = vmatprep.subr.bf16.mxu0 0
        %2467 = vmatpush1.bf16.xpose.msra.mxu0 0
        %2468 = vmatprep.subr.bf16.mxu0 0
        %2469 = vmatpush1.bf16.xpose.msra.mxu0 0
        %2470 = vmatprep.subr.bf16.mxu0 0
        %2471 = vmatpush1.bf16.xpose.msra.mxu0 0
        %2472 = vmatprep.subr.bf16.mxu0 0
        %2473 = vmatpush1.bf16.xpose.msra.mxu0 0
        %2474 = vmatprep.subr.bf16.mxu0 0
        %2475 = vmatpush1.bf16.xpose.msra.mxu0 %v2458
        %2476 = vmatprep.subr.bf16.mxu0 0
        %2477 = vmatpush2.bf16.xpose.msra.mxu0 0
        %2478 = vmatprep.subr.bf16.mxu0 0
        %2479 = vmatpush2.bf16.xpose.msra.mxu0 0
        %2480 = vmatprep.subr.bf16.mxu0 0
        %2481 = vmatpush2.bf16.xpose.msra.mxu0 0
        %2482 = vmatprep.subr.bf16.mxu0 0
        %2483 = vmatpush2.bf16.xpose.msra.mxu0 0
        %2484 = vmatprep.subr.bf16.mxu0 0
        %2485 = vmatpush2.bf16.xpose.msra.mxu0 0
        %2486 = vmatprep.subr.bf16.mxu0 0
        %2487 = vmatpush2.bf16.xpose.msra.mxu0 0
        %2488 = vmatprep.subr.bf16.mxu0 0
        %2489 = vmatpush2.bf16.xpose.msra.mxu0 0
        %2490 = vmatprep.subr.bf16.mxu0 0
        %2491 = vmatpush2.bf16.xpose.msra.mxu0 0
        %2492 = vmatprep.mubr.bf16.mxu0 0
        %2493 = vmatmul.mubr.bf16.gmra.mxu0 %v2455
        %v2494 = vpop.f32.mrf.mxu0
        %v2495 = vadd.f32 0.0, %v2494
        %v2496 = vpop.f32.mrf.mxu0
        %v2497 = vpop.f32.mrf.mxu0
        %v2498 = vpop.f32.mrf.mxu0
        %2499 = vdwg.mxu0
        %v2500 = vsel %vm1017, %v2495, -inf
        %2501 = vmax.xlane.f32.xlu0 %v2500
        %v2502 = vpop.xlane.xlu0 %2501
        %v2503 = vsub.f32 %v2495, %v2502
        %v2504 = vmul.f32 %v2503, 1.442695
        %v2505 = vpow.pop %v2504
        %v2506 = vsel %vm1017, %v2505, 0.0
        %2507 = vadd.xlane.f32.xlu0 %v2506
        %v2508 = vpop.xlane.xlu0 %2507
        %v2509 = vrcp.pop %v2508
        %v2510 = vmul.f32 %v2508, %v2509
        %v2511 = vsub.f32 2.0, %v2510
        %v2512 = vmul.f32 %v2509, %v2511
        %v2513 = vmul.f32 %v2505, %v2512
        %v2514 = vpack.c.bf16 %v2513, %v2513
        %2515 = vrot.lane.b32.xlu0 %v2337, 56
        %v2516 = vpop.permute.xlu0 %2515
        %v2518 = vsel %vm1017, %v2514, 0
        %v2521 = vsel %vm1084, %v2516, 0
        %2523 = vmatprep.subr.bf16.mxu0 0
        %2524 = vmatpush1.bf16.msra.mxu0 0
        %2525 = vmatprep.subr.bf16.mxu0 0
        %2526 = vmatpush1.bf16.msra.mxu0 0
        %2527 = vmatprep.subr.bf16.mxu0 0
        %2528 = vmatpush1.bf16.msra.mxu0 0
        %2529 = vmatprep.subr.bf16.mxu0 0
        %2530 = vmatpush1.bf16.msra.mxu0 0
        %2531 = vmatprep.subr.bf16.mxu0 0
        %2532 = vmatpush1.bf16.msra.mxu0 0
        %2533 = vmatprep.subr.bf16.mxu0 0
        %2534 = vmatpush1.bf16.msra.mxu0 0
        %2535 = vmatprep.subr.bf16.mxu0 0
        %2536 = vmatpush1.bf16.msra.mxu0 0
        %2537 = vmatprep.subr.bf16.mxu0 0
        %2538 = vmatpush1.bf16.msra.mxu0 %v2521
        %2539 = vmatprep.subr.bf16.mxu0 0
        %2540 = vmatpush2.bf16.msra.mxu0 0
        %2541 = vmatprep.subr.bf16.mxu0 0
        %2542 = vmatpush2.bf16.msra.mxu0 0
        %2543 = vmatprep.subr.bf16.mxu0 0
        %2544 = vmatpush2.bf16.msra.mxu0 0
        %2545 = vmatprep.subr.bf16.mxu0 0
        %2546 = vmatpush2.bf16.msra.mxu0 0
        %2547 = vmatprep.subr.bf16.mxu0 0
        %2548 = vmatpush2.bf16.msra.mxu0 0
        %2549 = vmatprep.subr.bf16.mxu0 0
        %2550 = vmatpush2.bf16.msra.mxu0 0
        %2551 = vmatprep.subr.bf16.mxu0 0
        %2552 = vmatpush2.bf16.msra.mxu0 0
        %2553 = vmatprep.subr.bf16.mxu0 0
        %2554 = vmatpush2.bf16.msra.mxu0 0
        %2555 = vmatprep.mubr.bf16.mxu0 0
        %2556 = vmatmul.mubr.bf16.gmra.mxu0 %v2518
        %v2557 = vpop.f32.mrf.mxu0
        %v2558 = vadd.f32 0.0, %v2557
        %v2559 = vpop.f32.mrf.mxu0
        %v2560 = vpop.f32.mrf.mxu0
        %v2561 = vpop.f32.mrf.mxu0
        %2562 = vdwg.mxu0
        %2563 = vrot.lane.b32.xlu0 %v2337, 112
        %v2564 = vpop.permute.xlu0 %2563
        %2565 = vrot.lane.b32.xlu0 %v2337, 80
        %v2566 = vpop.permute.xlu0 %2565
        %v2568 = vsel %vm1017, %v2564, 0
        %v2571 = vsel %vm1017, %v2566, 0
        %2573 = vmatprep.subr.bf16.mxu0 0
        %2574 = vmatpush1.bf16.xpose.msra.mxu0 0
        %2575 = vmatprep.subr.bf16.mxu0 0
        %2576 = vmatpush1.bf16.xpose.msra.mxu0 0
        %2577 = vmatprep.subr.bf16.mxu0 0
        %2578 = vmatpush1.bf16.xpose.msra.mxu0 0
        %2579 = vmatprep.subr.bf16.mxu0 0
        %2580 = vmatpush1.bf16.xpose.msra.mxu0 0
        %2581 = vmatprep.subr.bf16.mxu0 0
        %2582 = vmatpush1.bf16.xpose.msra.mxu0 0
        %2583 = vmatprep.subr.bf16.mxu0 0
        %2584 = vmatpush1.bf16.xpose.msra.mxu0 0
        %2585 = vmatprep.subr.bf16.mxu0 0
        %2586 = vmatpush1.bf16.xpose.msra.mxu0 0
        %2587 = vmatprep.subr.bf16.mxu0 0
        %2588 = vmatpush1.bf16.xpose.msra.mxu0 %v2571
        %2589 = vmatprep.subr.bf16.mxu0 0
        %2590 = vmatpush2.bf16.xpose.msra.mxu0 0
        %2591 = vmatprep.subr.bf16.mxu0 0
        %2592 = vmatpush2.bf16.xpose.msra.mxu0 0
        %2593 = vmatprep.subr.bf16.mxu0 0
        %2594 = vmatpush2.bf16.xpose.msra.mxu0 0
        %2595 = vmatprep.subr.bf16.mxu0 0
        %2596 = vmatpush2.bf16.xpose.msra.mxu0 0
        %2597 = vmatprep.subr.bf16.mxu0 0
        %2598 = vmatpush2.bf16.xpose.msra.mxu0 0
        %2599 = vmatprep.subr.bf16.mxu0 0
        %2600 = vmatpush2.bf16.xpose.msra.mxu0 0
        %2601 = vmatprep.subr.bf16.mxu0 0
        %2602 = vmatpush2.bf16.xpose.msra.mxu0 0
        %2603 = vmatprep.subr.bf16.mxu0 0
        %2604 = vmatpush2.bf16.xpose.msra.mxu0 0
        %2605 = vmatprep.mubr.bf16.mxu0 0
        %2606 = vmatmul.mubr.bf16.gmra.mxu0 %v2568
        %v2607 = vpop.f32.mrf.mxu0
        %v2608 = vadd.f32 0.0, %v2607
        %v2609 = vpop.f32.mrf.mxu0
        %v2610 = vpop.f32.mrf.mxu0
        %v2611 = vpop.f32.mrf.mxu0
        %2612 = vdwg.mxu0
        %v2613 = vsel %vm1017, %v2608, -inf
        %2614 = vmax.xlane.f32.xlu0 %v2613
        %v2615 = vpop.xlane.xlu0 %2614
        %v2616 = vsub.f32 %v2608, %v2615
        %v2617 = vmul.f32 %v2616, 1.442695
        %v2618 = vpow.pop %v2617
        %v2619 = vsel %vm1017, %v2618, 0.0
        %2620 = vadd.xlane.f32.xlu0 %v2619
        %v2621 = vpop.xlane.xlu0 %2620
        %v2622 = vrcp.pop %v2621
        %v2623 = vmul.f32 %v2621, %v2622
        %v2624 = vsub.f32 2.0, %v2623
        %v2625 = vmul.f32 %v2622, %v2624
        %v2626 = vmul.f32 %v2618, %v2625
        %v2627 = vpack.c.bf16 %v2626, %v2626
        %2628 = vrot.lane.b32.xlu0 %v2337, 48
        %v2629 = vpop.permute.xlu0 %2628
        %v2631 = vsel %vm1017, %v2627, 0
        %v2634 = vsel %vm1084, %v2629, 0
        %2636 = vmatprep.subr.bf16.mxu0 0
        %2637 = vmatpush1.bf16.msra.mxu0 0
        %2638 = vmatprep.subr.bf16.mxu0 0
        %2639 = vmatpush1.bf16.msra.mxu0 0
        %2640 = vmatprep.subr.bf16.mxu0 0
        %2641 = vmatpush1.bf16.msra.mxu0 0
        %2642 = vmatprep.subr.bf16.mxu0 0
        %2643 = vmatpush1.bf16.msra.mxu0 0
        %2644 = vmatprep.subr.bf16.mxu0 0
        %2645 = vmatpush1.bf16.msra.mxu0 0
        %2646 = vmatprep.subr.bf16.mxu0 0
        %2647 = vmatpush1.bf16.msra.mxu0 0
        %2648 = vmatprep.subr.bf16.mxu0 0
        %2649 = vmatpush1.bf16.msra.mxu0 0
        %2650 = vmatprep.subr.bf16.mxu0 0
        %2651 = vmatpush1.bf16.msra.mxu0 %v2634
        %2652 = vmatprep.subr.bf16.mxu0 0
        %2653 = vmatpush2.bf16.msra.mxu0 0
        %2654 = vmatprep.subr.bf16.mxu0 0
        %2655 = vmatpush2.bf16.msra.mxu0 0
        %2656 = vmatprep.subr.bf16.mxu0 0
        %2657 = vmatpush2.bf16.msra.mxu0 0
        %2658 = vmatprep.subr.bf16.mxu0 0
        %2659 = vmatpush2.bf16.msra.mxu0 0
        %2660 = vmatprep.subr.bf16.mxu0 0
        %2661 = vmatpush2.bf16.msra.mxu0 0
        %2662 = vmatprep.subr.bf16.mxu0 0
        %2663 = vmatpush2.bf16.msra.mxu0 0
        %2664 = vmatprep.subr.bf16.mxu0 0
        %2665 = vmatpush2.bf16.msra.mxu0 0
        %2666 = vmatprep.subr.bf16.mxu0 0
        %2667 = vmatpush2.bf16.msra.mxu0 0
        %2668 = vmatprep.mubr.bf16.mxu0 0
        %2669 = vmatmul.mubr.bf16.gmra.mxu0 %v2631
        %v2670 = vpop.f32.mrf.mxu0
        %v2671 = vadd.f32 0.0, %v2670
        %v2672 = vpop.f32.mrf.mxu0
        %v2673 = vpop.f32.mrf.mxu0
        %v2674 = vpop.f32.mrf.mxu0
        %2675 = vdwg.mxu0
        %2676 = vrot.lane.b32.xlu0 %v2337, 104
        %v2677 = vpop.permute.xlu0 %2676
        %2678 = vrot.lane.b32.xlu0 %v2337, 72
        %v2679 = vpop.permute.xlu0 %2678
        %v2681 = vsel %vm1017, %v2677, 0
        %v2684 = vsel %vm1017, %v2679, 0
        %2686 = vmatprep.subr.bf16.mxu0 0
        %2687 = vmatpush1.bf16.xpose.msra.mxu0 0
        %2688 = vmatprep.subr.bf16.mxu0 0
        %2689 = vmatpush1.bf16.xpose.msra.mxu0 0
        %2690 = vmatprep.subr.bf16.mxu0 0
        %2691 = vmatpush1.bf16.xpose.msra.mxu0 0
        %2692 = vmatprep.subr.bf16.mxu0 0
        %2693 = vmatpush1.bf16.xpose.msra.mxu0 0
        %2694 = vmatprep.subr.bf16.mxu0 0
        %2695 = vmatpush1.bf16.xpose.msra.mxu0 0
        %2696 = vmatprep.subr.bf16.mxu0 0
        %2697 = vmatpush1.bf16.xpose.msra.mxu0 0
        %2698 = vmatprep.subr.bf16.mxu0 0
        %2699 = vmatpush1.bf16.xpose.msra.mxu0 0
        %2700 = vmatprep.subr.bf16.mxu0 0
        %2701 = vmatpush1.bf16.xpose.msra.mxu0 %v2684
        %2702 = vmatprep.subr.bf16.mxu0 0
        %2703 = vmatpush2.bf16.xpose.msra.mxu0 0
        %2704 = vmatprep.subr.bf16.mxu0 0
        %2705 = vmatpush2.bf16.xpose.msra.mxu0 0
        %2706 = vmatprep.subr.bf16.mxu0 0
        %2707 = vmatpush2.bf16.xpose.msra.mxu0 0
        %2708 = vmatprep.subr.bf16.mxu0 0
        %2709 = vmatpush2.bf16.xpose.msra.mxu0 0
        %2710 = vmatprep.subr.bf16.mxu0 0
        %2711 = vmatpush2.bf16.xpose.msra.mxu0 0
        %2712 = vmatprep.subr.bf16.mxu0 0
        %2713 = vmatpush2.bf16.xpose.msra.mxu0 0
        %2714 = vmatprep.subr.bf16.mxu0 0
        %2715 = vmatpush2.bf16.xpose.msra.mxu0 0
        %2716 = vmatprep.subr.bf16.mxu0 0
        %2717 = vmatpush2.bf16.xpose.msra.mxu0 0
        %2718 = vmatprep.mubr.bf16.mxu0 0
        %2719 = vmatmul.mubr.bf16.gmra.mxu0 %v2681
        %v2720 = vpop.f32.mrf.mxu0
        %v2721 = vadd.f32 0.0, %v2720
        %v2722 = vpop.f32.mrf.mxu0
        %v2723 = vpop.f32.mrf.mxu0
        %v2724 = vpop.f32.mrf.mxu0
        %2725 = vdwg.mxu0
        %v2726 = vsel %vm1017, %v2721, -inf
        %2727 = vmax.xlane.f32.xlu0 %v2726
        %v2728 = vpop.xlane.xlu0 %2727
        %v2729 = vsub.f32 %v2721, %v2728
        %v2730 = vmul.f32 %v2729, 1.442695
        %v2731 = vpow.pop %v2730
        %v2732 = vsel %vm1017, %v2731, 0.0
        %2733 = vadd.xlane.f32.xlu0 %v2732
        %v2734 = vpop.xlane.xlu0 %2733
        %v2735 = vrcp.pop %v2734
        %v2736 = vmul.f32 %v2734, %v2735
        %v2737 = vsub.f32 2.0, %v2736
        %v2738 = vmul.f32 %v2735, %v2737
        %v2739 = vmul.f32 %v2731, %v2738
        %v2740 = vpack.c.bf16 %v2739, %v2739
        %2741 = vrot.lane.b32.xlu0 %v2337, 40
        %v2742 = vpop.permute.xlu0 %2741
        %v2744 = vsel %vm1017, %v2740, 0
        %v2747 = vsel %vm1084, %v2742, 0
        %2749 = vmatprep.subr.bf16.mxu0 0
        %2750 = vmatpush1.bf16.msra.mxu0 0
        %2751 = vmatprep.subr.bf16.mxu0 0
        %2752 = vmatpush1.bf16.msra.mxu0 0
        %2753 = vmatprep.subr.bf16.mxu0 0
        %2754 = vmatpush1.bf16.msra.mxu0 0
        %2755 = vmatprep.subr.bf16.mxu0 0
        %2756 = vmatpush1.bf16.msra.mxu0 0
        %2757 = vmatprep.subr.bf16.mxu0 0
        %2758 = vmatpush1.bf16.msra.mxu0 0
        %2759 = vmatprep.subr.bf16.mxu0 0
        %2760 = vmatpush1.bf16.msra.mxu0 0
        %2761 = vmatprep.subr.bf16.mxu0 0
        %2762 = vmatpush1.bf16.msra.mxu0 0
        %2763 = vmatprep.subr.bf16.mxu0 0
        %2764 = vmatpush1.bf16.msra.mxu0 %v2747
        %2765 = vmatprep.subr.bf16.mxu0 0
        %2766 = vmatpush2.bf16.msra.mxu0 0
        %2767 = vmatprep.subr.bf16.mxu0 0
        %2768 = vmatpush2.bf16.msra.mxu0 0
        %2769 = vmatprep.subr.bf16.mxu0 0
        %2770 = vmatpush2.bf16.msra.mxu0 0
        %2771 = vmatprep.subr.bf16.mxu0 0
        %2772 = vmatpush2.bf16.msra.mxu0 0
        %2773 = vmatprep.subr.bf16.mxu0 0
        %2774 = vmatpush2.bf16.msra.mxu0 0
        %2775 = vmatprep.subr.bf16.mxu0 0
        %2776 = vmatpush2.bf16.msra.mxu0 0
        %2777 = vmatprep.subr.bf16.mxu0 0
        %2778 = vmatpush2.bf16.msra.mxu0 0
        %2779 = vmatprep.subr.bf16.mxu0 0
        %2780 = vmatpush2.bf16.msra.mxu0 0
        %2781 = vmatprep.mubr.bf16.mxu0 0
        %2782 = vmatmul.mubr.bf16.gmra.mxu0 %v2744
        %v2783 = vpop.f32.mrf.mxu0
        %v2784 = vadd.f32 0.0, %v2783
        %v2785 = vpop.f32.mrf.mxu0
        %v2786 = vpop.f32.mrf.mxu0
        %v2787 = vpop.f32.mrf.mxu0
        %2788 = vdwg.mxu0
        %2790 = vrot.lane.b32.xlu0 %v2558, 8
        %v2791 = vpop.permute.xlu0 %2790
        %2794 = vrot.lane.b32.xlu0 %v2671, 16
        %v2795 = vpop.permute.xlu0 %2794
        %2798 = vrot.lane.b32.xlu0 %v2784, 24
        %v2799 = vpop.permute.xlu0 %2798
        %v2801 = vsel %vm1017, %v2445, %v2791
        %v2802 = vsel %vm1480, %v2801, %v2795
        %v2803 = vsel %vm1482, %v2802, %v2799
        %v2804 = vpack.c.bf16 %v2803, %v2803
        %v2806 = vsel %vm912, %v2804, 0
        %2808 = vmatprep.subr.bf16.mxu0 0
        %2809 = vmatpush1.bf16.msra.mxu0 0
        %2810 = vmatprep.subr.bf16.mxu0 0
        %2811 = vmatpush1.bf16.msra.mxu0 0
        %2812 = vmatprep.subr.bf16.mxu0 0
        %2813 = vmatpush1.bf16.msra.mxu0 0
        %2814 = vmatprep.subr.bf16.mxu0 0
        %2815 = vmatpush1.bf16.msra.mxu0 0
        %2816 = vmatprep.subr.bf16.mxu0 0
        %2817 = vmatpush1.bf16.msra.mxu0 0
        %2818 = vmatprep.subr.bf16.mxu0 0
        %2819 = vmatpush1.bf16.msra.mxu0 0
        %2820 = vmatprep.subr.bf16.mxu0 0
        %2821 = vmatpush1.bf16.msra.mxu0 %v1494
        %2822 = vmatprep.subr.bf16.mxu0 0
        %2823 = vmatpush1.bf16.msra.mxu0 %v1493
        %2824 = vmatprep.subr.bf16.mxu0 0
        %2825 = vmatpush2.bf16.msra.mxu0 0
        %2826 = vmatprep.subr.bf16.mxu0 0
        %2827 = vmatpush2.bf16.msra.mxu0 0
        %2828 = vmatprep.subr.bf16.mxu0 0
        %2829 = vmatpush2.bf16.msra.mxu0 0
        %2830 = vmatprep.subr.bf16.mxu0 0
        %2831 = vmatpush2.bf16.msra.mxu0 0
        %2832 = vmatprep.subr.bf16.mxu0 0
        %2833 = vmatpush2.bf16.msra.mxu0 0
        %2834 = vmatprep.subr.bf16.mxu0 0
        %2835 = vmatpush2.bf16.msra.mxu0 0
        %2836 = vmatprep.subr.bf16.mxu0 0
        %2837 = vmatpush2.bf16.msra.mxu0 0
        %2838 = vmatprep.subr.bf16.mxu0 0
        %2839 = vmatpush2.bf16.msra.mxu0 0
        %2840 = vmatprep.mubr.bf16.mxu0 0
        %2841 = vmatmul.mubr.bf16.gmra.mxu0 %v2806
        %v2842 = vpop.f32.mrf.mxu0
        %v2843 = vadd.f32 %v821, %v2842
        %v2844 = vpop.f32.mrf.mxu0
        %v2845 = vpop.f32.mrf.mxu0
        %v2846 = vpop.f32.mrf.mxu0
        %2847 = vdwg.mxu0
        %v2848 = vadd.f32 %v2292, %v2843
        %v2849 = vsel %vm912, %v2848, 0.0
        %2850 = vadd.xlane.f32.xlu0 %v2849
        %v2851 = vpop.xlane.xlu0 %2850
        %v2852 = vmul.f32 %v2851, %v1544
        %v2853 = vsub.f32 %v2848, %v2852
        %v2854 = vmul.f32 %v2853, %v2853
        %v2855 = vsel %vm912, %v2854, 0.0
        %2856 = vadd.xlane.f32.xlu0 %v2855
        %v2857 = vpop.xlane.xlu0 %2856
        %v2858 = vmul.f32 %v2857, %v1544
        %v2859 = vadd.f32 %v2858, 1e-05
        %v2860 = vrsqrt.pop %v2859
        %v2861 = vmul.f32 %v2853, %v2860
        %v2862 = vmul.f32 %v2861, %v856
        %v2863 = vadd.f32 %v2862, %v863
        %v2864 = vpack.c.bf16 %v2863, %v2863
        %v2866 = vsel %vm912, %v2864, 0
        %2868 = vmatprep.subr.bf16.mxu0 0
        %2869 = vmatpush1.bf16.msra.mxu0 0
        %2870 = vmatprep.subr.bf16.mxu0 0
        %2871 = vmatpush1.bf16.msra.mxu0 0
        %2872 = vmatprep.subr.bf16.mxu0 0
        %2873 = vmatpush1.bf16.msra.mxu0 0
        %2874 = vmatprep.subr.bf16.mxu0 0
        %2875 = vmatpush1.bf16.msra.mxu0 0
        %2876 = vmatprep.subr.bf16.mxu0 0
        %2877 = vmatpush1.bf16.msra.mxu0 0
        %2878 = vmatprep.subr.bf16.mxu0 0
        %2879 = vmatpush1.bf16.msra.mxu0 0
        %2880 = vmatprep.subr.bf16.mxu0 0
        %2881 = vmatpush1.bf16.msra.mxu0 %v1567
        %2882 = vmatprep.subr.bf16.mxu0 0
        %2883 = vmatpush1.bf16.msra.mxu0 %v1566
        %2884 = vmatprep.subr.bf16.mxu0 0
        %2885 = vmatpush2.bf16.msra.mxu0 0
        %2886 = vmatprep.subr.bf16.mxu0 0
        %2887 = vmatpush2.bf16.msra.mxu0 0
        %2888 = vmatprep.subr.bf16.mxu0 0
        %2889 = vmatpush2.bf16.msra.mxu0 0
        %2890 = vmatprep.subr.bf16.mxu0 0
        %2891 = vmatpush2.bf16.msra.mxu0 0
        %2892 = vmatprep.subr.bf16.mxu0 0
        %2893 = vmatpush2.bf16.msra.mxu0 0
        %2894 = vmatprep.subr.bf16.mxu0 0
        %2895 = vmatpush2.bf16.msra.mxu0 0
        %2896 = vmatprep.subr.bf16.mxu0 0
        %2897 = vmatpush2.bf16.msra.mxu0 0
        %2898 = vmatprep.subr.bf16.mxu0 0
        %2899 = vmatpush2.bf16.msra.mxu0 0
        %2900 = vmatprep.mubr.bf16.mxu0 0
        %2901 = vmatmul.mubr.bf16.gmra.mxu0 %v2866
        %v2902 = vpop.f32.mrf.mxu0
        %v2903 = vadd.f32 %v828, %v2902
        %v2904 = vpop.f32.mrf.mxu0
        %v2905 = vpop.f32.mrf.mxu0
        %v2906 = vpop.f32.mrf.mxu0
        %2907 = vdwg.mxu0
        %v2908 = vpack.c.bf16 %v2903, %v2903
        %v2910 = vsel %vm1017, %v2908, 0
        %2912 = vmatprep.subr.bf16.mxu0 0
        %2913 = vmatpush1.bf16.xpose.msra.mxu0 0
        %2914 = vmatprep.subr.bf16.mxu0 0
        %2915 = vmatpush1.bf16.xpose.msra.mxu0 0
        %2916 = vmatprep.subr.bf16.mxu0 0
        %2917 = vmatpush1.bf16.xpose.msra.mxu0 0
        %2918 = vmatprep.subr.bf16.mxu0 0
        %2919 = vmatpush1.bf16.xpose.msra.mxu0 0
        %2920 = vmatprep.subr.bf16.mxu0 0
        %2921 = vmatpush1.bf16.xpose.msra.mxu0 0
        %2922 = vmatprep.subr.bf16.mxu0 0
        %2923 = vmatpush1.bf16.xpose.msra.mxu0 0
        %2924 = vmatprep.subr.bf16.mxu0 0
        %2925 = vmatpush1.bf16.xpose.msra.mxu0 0
        %2926 = vmatprep.subr.bf16.mxu0 0
        %2927 = vmatpush1.bf16.xpose.msra.mxu0 %v1618
        %2928 = vmatprep.subr.bf16.mxu0 0
        %2929 = vmatpush2.bf16.xpose.msra.mxu0 0
        %2930 = vmatprep.subr.bf16.mxu0 0
        %2931 = vmatpush2.bf16.xpose.msra.mxu0 0
        %2932 = vmatprep.subr.bf16.mxu0 0
        %2933 = vmatpush2.bf16.xpose.msra.mxu0 0
        %2934 = vmatprep.subr.bf16.mxu0 0
        %2935 = vmatpush2.bf16.xpose.msra.mxu0 0
        %2936 = vmatprep.subr.bf16.mxu0 0
        %2937 = vmatpush2.bf16.xpose.msra.mxu0 0
        %2938 = vmatprep.subr.bf16.mxu0 0
        %2939 = vmatpush2.bf16.xpose.msra.mxu0 0
        %2940 = vmatprep.subr.bf16.mxu0 0
        %2941 = vmatpush2.bf16.xpose.msra.mxu0 0
        %2942 = vmatprep.subr.bf16.mxu0 0
        %2943 = vmatpush2.bf16.xpose.msra.mxu0 0
        %2944 = vmatprep.mubr.bf16.mxu0 0
        %2945 = vmatmul.mubr.bf16.gmra.mxu0 %v2910
        %v2946 = vpop.f32.mrf.mxu0
        %v2947 = vadd.f32 0.0, %v2946
        %v2948 = vpop.f32.mrf.mxu0
        %v2949 = vpop.f32.mrf.mxu0
        %v2950 = vpop.f32.mrf.mxu0
        %2951 = vdwg.mxu0
        %v2952 = vsel %vm1017, %v2947, -inf
        %2953 = vmax.xlane.f32.xlu0 %v2952
        %v2954 = vpop.xlane.xlu0 %2953
        %v2955 = vsub.f32 %v2947, %v2954
        %v2956 = vmul.f32 %v2955, 1.442695
        %v2957 = vpow.pop %v2956
        %v2958 = vsel %vm1017, %v2957, 0.0
        %2959 = vadd.xlane.f32.xlu0 %v2958
        %v2960 = vpop.xlane.xlu0 %2959
        %v2961 = vrcp.pop %v2960
        %v2962 = vmul.f32 %v2960, %v2961
        %v2963 = vsub.f32 2.0, %v2962
        %v2964 = vmul.f32 %v2961, %v2963
        %v2965 = vmul.f32 %v2957, %v2964
        %v2966 = vpack.c.bf16 %v2965, %v2965
        %v2968 = vsel %vm1017, %v2966, 0
        %2970 = vmatprep.subr.bf16.mxu0 0
        %2971 = vmatpush1.bf16.msra.mxu0 0
        %2972 = vmatprep.subr.bf16.mxu0 0
        %2973 = vmatpush1.bf16.msra.mxu0 0
        %2974 = vmatprep.subr.bf16.mxu0 0
        %2975 = vmatpush1.bf16.msra.mxu0 0
        %2976 = vmatprep.subr.bf16.mxu0 0
        %2977 = vmatpush1.bf16.msra.mxu0 0
        %2978 = vmatprep.subr.bf16.mxu0 0
        %2979 = vmatpush1.bf16.msra.mxu0 0
        %2980 = vmatprep.subr.bf16.mxu0 0
        %2981 = vmatpush1.bf16.msra.mxu0 0
        %2982 = vmatprep.subr.bf16.mxu0 0
        %2983 = vmatpush1.bf16.msra.mxu0 0
        %2984 = vmatprep.subr.bf16.mxu0 0
        %2985 = vmatpush1.bf16.msra.mxu0 %v1682
        %2986 = vmatprep.subr.bf16.mxu0 0
        %2987 = vmatpush2.bf16.msra.mxu0 0
        %2988 = vmatprep.subr.bf16.mxu0 0
        %2989 = vmatpush2.bf16.msra.mxu0 0
        %2990 = vmatprep.subr.bf16.mxu0 0
        %2991 = vmatpush2.bf16.msra.mxu0 0
        %2992 = vmatprep.subr.bf16.mxu0 0
        %2993 = vmatpush2.bf16.msra.mxu0 0
        %2994 = vmatprep.subr.bf16.mxu0 0
        %2995 = vmatpush2.bf16.msra.mxu0 0
        %2996 = vmatprep.subr.bf16.mxu0 0
        %2997 = vmatpush2.bf16.msra.mxu0 0
        %2998 = vmatprep.subr.bf16.mxu0 0
        %2999 = vmatpush2.bf16.msra.mxu0 0
        %3000 = vmatprep.subr.bf16.mxu0 0
        %3001 = vmatpush2.bf16.msra.mxu0 0
        %3002 = vmatprep.mubr.bf16.mxu0 0
        %3003 = vmatmul.mubr.bf16.gmra.mxu0 %v2968
        %v3004 = vpop.f32.mrf.mxu0
        %v3005 = vadd.f32 0.0, %v3004
        %v3006 = vpop.f32.mrf.mxu0
        %v3007 = vpop.f32.mrf.mxu0
        %v3008 = vpop.f32.mrf.mxu0
        %3009 = vdwg.mxu0
        %3011 = vrot.lane.b32.xlu0 %v2908, 120
        %v3012 = vpop.permute.xlu0 %3011
        %v3014 = vsel %vm1017, %v3012, 0
        %3016 = vmatprep.subr.bf16.mxu0 0
        %3017 = vmatpush1.bf16.xpose.msra.mxu0 0
        %3018 = vmatprep.subr.bf16.mxu0 0
        %3019 = vmatpush1.bf16.xpose.msra.mxu0 0
        %3020 = vmatprep.subr.bf16.mxu0 0
        %3021 = vmatpush1.bf16.xpose.msra.mxu0 0
        %3022 = vmatprep.subr.bf16.mxu0 0
        %3023 = vmatpush1.bf16.xpose.msra.mxu0 0
        %3024 = vmatprep.subr.bf16.mxu0 0
        %3025 = vmatpush1.bf16.xpose.msra.mxu0 0
        %3026 = vmatprep.subr.bf16.mxu0 0
        %3027 = vmatpush1.bf16.xpose.msra.mxu0 0
        %3028 = vmatprep.subr.bf16.mxu0 0
        %3029 = vmatpush1.bf16.xpose.msra.mxu0 0
        %3030 = vmatprep.subr.bf16.mxu0 0
        %3031 = vmatpush1.bf16.xpose.msra.mxu0 %v1733
        %3032 = vmatprep.subr.bf16.mxu0 0
        %3033 = vmatpush2.bf16.xpose.msra.mxu0 0
        %3034 = vmatprep.subr.bf16.mxu0 0
        %3035 = vmatpush2.bf16.xpose.msra.mxu0 0
        %3036 = vmatprep.subr.bf16.mxu0 0
        %3037 = vmatpush2.bf16.xpose.msra.mxu0 0
        %3038 = vmatprep.subr.bf16.mxu0 0
        %3039 = vmatpush2.bf16.xpose.msra.mxu0 0
        %3040 = vmatprep.subr.bf16.mxu0 0
        %3041 = vmatpush2.bf16.xpose.msra.mxu0 0
        %3042 = vmatprep.subr.bf16.mxu0 0
        %3043 = vmatpush2.bf16.xpose.msra.mxu0 0
        %3044 = vmatprep.subr.bf16.mxu0 0
        %3045 = vmatpush2.bf16.xpose.msra.mxu0 0
        %3046 = vmatprep.subr.bf16.mxu0 0
        %3047 = vmatpush2.bf16.xpose.msra.mxu0 0
        %3048 = vmatprep.mubr.bf16.mxu0 0
        %3049 = vmatmul.mubr.bf16.gmra.mxu0 %v3014
        %v3050 = vpop.f32.mrf.mxu0
        %v3051 = vadd.f32 0.0, %v3050
        %v3052 = vpop.f32.mrf.mxu0
        %v3053 = vpop.f32.mrf.mxu0
        %v3054 = vpop.f32.mrf.mxu0
        %3055 = vdwg.mxu0
        %v3056 = vsel %vm1017, %v3051, -inf
        %3057 = vmax.xlane.f32.xlu0 %v3056
        %v3058 = vpop.xlane.xlu0 %3057
        %v3059 = vsub.f32 %v3051, %v3058
        %v3060 = vmul.f32 %v3059, 1.442695
        %v3061 = vpow.pop %v3060
        %v3062 = vsel %vm1017, %v3061, 0.0
        %3063 = vadd.xlane.f32.xlu0 %v3062
        %v3064 = vpop.xlane.xlu0 %3063
        %v3065 = vrcp.pop %v3064
        %v3066 = vmul.f32 %v3064, %v3065
        %v3067 = vsub.f32 2.0, %v3066
        %v3068 = vmul.f32 %v3065, %v3067
        %v3069 = vmul.f32 %v3061, %v3068
        %v3070 = vpack.c.bf16 %v3069, %v3069
        %v3072 = vsel %vm1017, %v3070, 0
        %3074 = vmatprep.subr.bf16.mxu0 0
        %3075 = vmatpush1.bf16.msra.mxu0 0
        %3076 = vmatprep.subr.bf16.mxu0 0
        %3077 = vmatpush1.bf16.msra.mxu0 0
        %3078 = vmatprep.subr.bf16.mxu0 0
        %3079 = vmatpush1.bf16.msra.mxu0 0
        %3080 = vmatprep.subr.bf16.mxu0 0
        %3081 = vmatpush1.bf16.msra.mxu0 0
        %3082 = vmatprep.subr.bf16.mxu0 0
        %3083 = vmatpush1.bf16.msra.mxu0 0
        %3084 = vmatprep.subr.bf16.mxu0 0
        %3085 = vmatpush1.bf16.msra.mxu0 0
        %3086 = vmatprep.subr.bf16.mxu0 0
        %3087 = vmatpush1.bf16.msra.mxu0 0
        %3088 = vmatprep.subr.bf16.mxu0 0
        %3089 = vmatpush1.bf16.msra.mxu0 %v1796
        %3090 = vmatprep.subr.bf16.mxu0 0
        %3091 = vmatpush2.bf16.msra.mxu0 0
        %3092 = vmatprep.subr.bf16.mxu0 0
        %3093 = vmatpush2.bf16.msra.mxu0 0
        %3094 = vmatprep.subr.bf16.mxu0 0
        %3095 = vmatpush2.bf16.msra.mxu0 0
        %3096 = vmatprep.subr.bf16.mxu0 0
        %3097 = vmatpush2.bf16.msra.mxu0 0
        %3098 = vmatprep.subr.bf16.mxu0 0
        %3099 = vmatpush2.bf16.msra.mxu0 0
        %3100 = vmatprep.subr.bf16.mxu0 0
        %3101 = vmatpush2.bf16.msra.mxu0 0
        %3102 = vmatprep.subr.bf16.mxu0 0
        %3103 = vmatpush2.bf16.msra.mxu0 0
        %3104 = vmatprep.subr.bf16.mxu0 0
        %3105 = vmatpush2.bf16.msra.mxu0 0
        %3106 = vmatprep.mubr.bf16.mxu0 0
        %3107 = vmatmul.mubr.bf16.gmra.mxu0 %v3072
        %v3108 = vpop.f32.mrf.mxu0
        %v3109 = vadd.f32 0.0, %v3108
        %v3110 = vpop.f32.mrf.mxu0
        %v3111 = vpop.f32.mrf.mxu0
        %v3112 = vpop.f32.mrf.mxu0
        %3113 = vdwg.mxu0
        %3114 = vrot.lane.b32.xlu0 %v2908, 112
        %v3115 = vpop.permute.xlu0 %3114
        %v3117 = vsel %vm1017, %v3115, 0
        %3119 = vmatprep.subr.bf16.mxu0 0
        %3120 = vmatpush1.bf16.xpose.msra.mxu0 0
        %3121 = vmatprep.subr.bf16.mxu0 0
        %3122 = vmatpush1.bf16.xpose.msra.mxu0 0
        %3123 = vmatprep.subr.bf16.mxu0 0
        %3124 = vmatpush1.bf16.xpose.msra.mxu0 0
        %3125 = vmatprep.subr.bf16.mxu0 0
        %3126 = vmatpush1.bf16.xpose.msra.mxu0 0
        %3127 = vmatprep.subr.bf16.mxu0 0
        %3128 = vmatpush1.bf16.xpose.msra.mxu0 0
        %3129 = vmatprep.subr.bf16.mxu0 0
        %3130 = vmatpush1.bf16.xpose.msra.mxu0 0
        %3131 = vmatprep.subr.bf16.mxu0 0
        %3132 = vmatpush1.bf16.xpose.msra.mxu0 0
        %3133 = vmatprep.subr.bf16.mxu0 0
        %3134 = vmatpush1.bf16.xpose.msra.mxu0 %v1846
        %3135 = vmatprep.subr.bf16.mxu0 0
        %3136 = vmatpush2.bf16.xpose.msra.mxu0 0
        %3137 = vmatprep.subr.bf16.mxu0 0
        %3138 = vmatpush2.bf16.xpose.msra.mxu0 0
        %3139 = vmatprep.subr.bf16.mxu0 0
        %3140 = vmatpush2.bf16.xpose.msra.mxu0 0
        %3141 = vmatprep.subr.bf16.mxu0 0
        %3142 = vmatpush2.bf16.xpose.msra.mxu0 0
        %3143 = vmatprep.subr.bf16.mxu0 0
        %3144 = vmatpush2.bf16.xpose.msra.mxu0 0
        %3145 = vmatprep.subr.bf16.mxu0 0
        %3146 = vmatpush2.bf16.xpose.msra.mxu0 0
        %3147 = vmatprep.subr.bf16.mxu0 0
        %3148 = vmatpush2.bf16.xpose.msra.mxu0 0
        %3149 = vmatprep.subr.bf16.mxu0 0
        %3150 = vmatpush2.bf16.xpose.msra.mxu0 0
        %3151 = vmatprep.mubr.bf16.mxu0 0
        %3152 = vmatmul.mubr.bf16.gmra.mxu0 %v3117
        %v3153 = vpop.f32.mrf.mxu0
        %v3154 = vadd.f32 0.0, %v3153
        %v3155 = vpop.f32.mrf.mxu0
        %v3156 = vpop.f32.mrf.mxu0
        %v3157 = vpop.f32.mrf.mxu0
        %3158 = vdwg.mxu0
        %v3159 = vsel %vm1017, %v3154, -inf
        %3160 = vmax.xlane.f32.xlu0 %v3159
        %v3161 = vpop.xlane.xlu0 %3160
        %v3162 = vsub.f32 %v3154, %v3161
        %v3163 = vmul.f32 %v3162, 1.442695
        %v3164 = vpow.pop %v3163
        %v3165 = vsel %vm1017, %v3164, 0.0
        %3166 = vadd.xlane.f32.xlu0 %v3165
        %v3167 = vpop.xlane.xlu0 %3166
        %v3168 = vrcp.pop %v3167
        %v3169 = vmul.f32 %v3167, %v3168
        %v3170 = vsub.f32 2.0, %v3169
        %v3171 = vmul.f32 %v3168, %v3170
        %v3172 = vmul.f32 %v3164, %v3171
        %v3173 = vpack.c.bf16 %v3172, %v3172
        %v3175 = vsel %vm1017, %v3173, 0
        %3177 = vmatprep.subr.bf16.mxu0 0
        %3178 = vmatpush1.bf16.msra.mxu0 0
        %3179 = vmatprep.subr.bf16.mxu0 0
        %3180 = vmatpush1.bf16.msra.mxu0 0
        %3181 = vmatprep.subr.bf16.mxu0 0
        %3182 = vmatpush1.bf16.msra.mxu0 0
        %3183 = vmatprep.subr.bf16.mxu0 0
        %3184 = vmatpush1.bf16.msra.mxu0 0
        %3185 = vmatprep.subr.bf16.mxu0 0
        %3186 = vmatpush1.bf16.msra.mxu0 0
        %3187 = vmatprep.subr.bf16.mxu0 0
        %3188 = vmatpush1.bf16.msra.mxu0 0
        %3189 = vmatprep.subr.bf16.mxu0 0
        %3190 = vmatpush1.bf16.msra.mxu0 0
        %3191 = vmatprep.subr.bf16.mxu0 0
        %3192 = vmatpush1.bf16.msra.mxu0 %v1909
        %3193 = vmatprep.subr.bf16.mxu0 0
        %3194 = vmatpush2.bf16.msra.mxu0 0
        %3195 = vmatprep.subr.bf16.mxu0 0
        %3196 = vmatpush2.bf16.msra.mxu0 0
        %3197 = vmatprep.subr.bf16.mxu0 0
        %3198 = vmatpush2.bf16.msra.mxu0 0
        %3199 = vmatprep.subr.bf16.mxu0 0
        %3200 = vmatpush2.bf16.msra.mxu0 0
        %3201 = vmatprep.subr.bf16.mxu0 0
        %3202 = vmatpush2.bf16.msra.mxu0 0
        %3203 = vmatprep.subr.bf16.mxu0 0
        %3204 = vmatpush2.bf16.msra.mxu0 0
        %3205 = vmatprep.subr.bf16.mxu0 0
        %3206 = vmatpush2.bf16.msra.mxu0 0
        %3207 = vmatprep.subr.bf16.mxu0 0
        %3208 = vmatpush2.bf16.msra.mxu0 0
        %3209 = vmatprep.mubr.bf16.mxu0 0
        %3210 = vmatmul.mubr.bf16.gmra.mxu0 %v3175
        %v3211 = vpop.f32.mrf.mxu0
        %v3212 = vadd.f32 0.0, %v3211
        %v3213 = vpop.f32.mrf.mxu0
        %v3214 = vpop.f32.mrf.mxu0
        %v3215 = vpop.f32.mrf.mxu0
        %3216 = vdwg.mxu0
        %3217 = vrot.lane.b32.xlu0 %v2908, 104
        %v3218 = vpop.permute.xlu0 %3217
        %v3220 = vsel %vm1017, %v3218, 0
        %3222 = vmatprep.subr.bf16.mxu0 0
        %3223 = vmatpush1.bf16.xpose.msra.mxu0 0
        %3224 = vmatprep.subr.bf16.mxu0 0
        %3225 = vmatpush1.bf16.xpose.msra.mxu0 0
        %3226 = vmatprep.subr.bf16.mxu0 0
        %3227 = vmatpush1.bf16.xpose.msra.mxu0 0
        %3228 = vmatprep.subr.bf16.mxu0 0
        %3229 = vmatpush1.bf16.xpose.msra.mxu0 0
        %3230 = vmatprep.subr.bf16.mxu0 0
        %3231 = vmatpush1.bf16.xpose.msra.mxu0 0
        %3232 = vmatprep.subr.bf16.mxu0 0
        %3233 = vmatpush1.bf16.xpose.msra.mxu0 0
        %3234 = vmatprep.subr.bf16.mxu0 0
        %3235 = vmatpush1.bf16.xpose.msra.mxu0 0
        %3236 = vmatprep.subr.bf16.mxu0 0
        %3237 = vmatpush1.bf16.xpose.msra.mxu0 %v1959
        %3238 = vmatprep.subr.bf16.mxu0 0
        %3239 = vmatpush2.bf16.xpose.msra.mxu0 0
        %3240 = vmatprep.subr.bf16.mxu0 0
        %3241 = vmatpush2.bf16.xpose.msra.mxu0 0
        %3242 = vmatprep.subr.bf16.mxu0 0
        %3243 = vmatpush2.bf16.xpose.msra.mxu0 0
        %3244 = vmatprep.subr.bf16.mxu0 0
        %3245 = vmatpush2.bf16.xpose.msra.mxu0 0
        %3246 = vmatprep.subr.bf16.mxu0 0
        %3247 = vmatpush2.bf16.xpose.msra.mxu0 0
        %3248 = vmatprep.subr.bf16.mxu0 0
        %3249 = vmatpush2.bf16.xpose.msra.mxu0 0
        %3250 = vmatprep.subr.bf16.mxu0 0
        %3251 = vmatpush2.bf16.xpose.msra.mxu0 0
        %3252 = vmatprep.subr.bf16.mxu0 0
        %3253 = vmatpush2.bf16.xpose.msra.mxu0 0
        %3254 = vmatprep.mubr.bf16.mxu0 0
        %3255 = vmatmul.mubr.bf16.gmra.mxu0 %v3220
        %v3256 = vpop.f32.mrf.mxu0
        %v3257 = vadd.f32 0.0, %v3256
        %v3258 = vpop.f32.mrf.mxu0
        %v3259 = vpop.f32.mrf.mxu0
        %v3260 = vpop.f32.mrf.mxu0
        %3261 = vdwg.mxu0
        %v3262 = vsel %vm1017, %v3257, -inf
        %3263 = vmax.xlane.f32.xlu0 %v3262
        %v3264 = vpop.xlane.xlu0 %3263
        %v3265 = vsub.f32 %v3257, %v3264
        %v3266 = vmul.f32 %v3265, 1.442695
        %v3267 = vpow.pop %v3266
        %v3268 = vsel %vm1017, %v3267, 0.0
        %3269 = vadd.xlane.f32.xlu0 %v3268
        %v3270 = vpop.xlane.xlu0 %3269
        %v3271 = vrcp.pop %v3270
        %v3272 = vmul.f32 %v3270, %v3271
        %v3273 = vsub.f32 2.0, %v3272
        %v3274 = vmul.f32 %v3271, %v3273
        %v3275 = vmul.f32 %v3267, %v3274
        %v3276 = vpack.c.bf16 %v3275, %v3275
        %v3278 = vsel %vm1017, %v3276, 0
        %3280 = vmatprep.subr.bf16.mxu0 0
        %3281 = vmatpush1.bf16.msra.mxu0 0
        %3282 = vmatprep.subr.bf16.mxu0 0
        %3283 = vmatpush1.bf16.msra.mxu0 0
        %3284 = vmatprep.subr.bf16.mxu0 0
        %3285 = vmatpush1.bf16.msra.mxu0 0
        %3286 = vmatprep.subr.bf16.mxu0 0
        %3287 = vmatpush1.bf16.msra.mxu0 0
        %3288 = vmatprep.subr.bf16.mxu0 0
        %3289 = vmatpush1.bf16.msra.mxu0 0
        %3290 = vmatprep.subr.bf16.mxu0 0
        %3291 = vmatpush1.bf16.msra.mxu0 0
        %3292 = vmatprep.subr.bf16.mxu0 0
        %3293 = vmatpush1.bf16.msra.mxu0 0
        %3294 = vmatprep.subr.bf16.mxu0 0
        %3295 = vmatpush1.bf16.msra.mxu0 %v2022
        %3296 = vmatprep.subr.bf16.mxu0 0
        %3297 = vmatpush2.bf16.msra.mxu0 0
        %3298 = vmatprep.subr.bf16.mxu0 0
        %3299 = vmatpush2.bf16.msra.mxu0 0
        %3300 = vmatprep.subr.bf16.mxu0 0
        %3301 = vmatpush2.bf16.msra.mxu0 0
        %3302 = vmatprep.subr.bf16.mxu0 0
        %3303 = vmatpush2.bf16.msra.mxu0 0
        %3304 = vmatprep.subr.bf16.mxu0 0
        %3305 = vmatpush2.bf16.msra.mxu0 0
        %3306 = vmatprep.subr.bf16.mxu0 0
        %3307 = vmatpush2.bf16.msra.mxu0 0
        %3308 = vmatprep.subr.bf16.mxu0 0
        %3309 = vmatpush2.bf16.msra.mxu0 0
        %3310 = vmatprep.subr.bf16.mxu0 0
        %3311 = vmatpush2.bf16.msra.mxu0 0
        %3312 = vmatprep.mubr.bf16.mxu0 0
        %3313 = vmatmul.mubr.bf16.gmra.mxu0 %v3278
        %v3314 = vpop.f32.mrf.mxu0
        %v3315 = vadd.f32 0.0, %v3314
        %v3316 = vpop.f32.mrf.mxu0
        %v3317 = vpop.f32.mrf.mxu0
        %v3318 = vpop.f32.mrf.mxu0
        %3319 = vdwg.mxu0
        %3321 = vrot.lane.b32.xlu0 %v3109, 8
        %v3322 = vpop.permute.xlu0 %3321
        %3325 = vrot.lane.b32.xlu0 %v3212, 16
        %v3326 = vpop.permute.xlu0 %3325
        %3329 = vrot.lane.b32.xlu0 %v3315, 24
        %v3330 = vpop.permute.xlu0 %3329
        %v3332 = vsel %vm1017, %v3005, %v3322
        %v3333 = vsel %vm1480, %v3332, %v3326
        %v3334 = vsel %vm1482, %v3333, %v3330
        %v3335 = vpack.c.bf16 %v3334, %v3334
        %v3337 = vsel %vm912, %v3335, 0
        %3339 = vmatprep.subr.bf16.mxu0 0
        %3340 = vmatpush1.bf16.msra.mxu0 0
        %3341 = vmatprep.subr.bf16.mxu0 0
        %3342 = vmatpush1.bf16.msra.mxu0 0
        %3343 = vmatprep.subr.bf16.mxu0 0
        %3344 = vmatpush1.bf16.msra.mxu0 0
        %3345 = vmatprep.subr.bf16.mxu0 0
        %3346 = vmatpush1.bf16.msra.mxu0 0
        %3347 = vmatprep.subr.bf16.mxu0 0
        %3348 = vmatpush1.bf16.msra.mxu0 0
        %3349 = vmatprep.subr.bf16.mxu0 0
        %3350 = vmatpush1.bf16.msra.mxu0 0
        %3351 = vmatprep.subr.bf16.mxu0 0
        %3352 = vmatpush1.bf16.msra.mxu0 %v2089
        %3353 = vmatprep.subr.bf16.mxu0 0
        %3354 = vmatpush1.bf16.msra.mxu0 %v2088
        %3355 = vmatprep.subr.bf16.mxu0 0
        %3356 = vmatpush2.bf16.msra.mxu0 0
        %3357 = vmatprep.subr.bf16.mxu0 0
        %3358 = vmatpush2.bf16.msra.mxu0 0
        %3359 = vmatprep.subr.bf16.mxu0 0
        %3360 = vmatpush2.bf16.msra.mxu0 0
        %3361 = vmatprep.subr.bf16.mxu0 0
        %3362 = vmatpush2.bf16.msra.mxu0 0
        %3363 = vmatprep.subr.bf16.mxu0 0
        %3364 = vmatpush2.bf16.msra.mxu0 0
        %3365 = vmatprep.subr.bf16.mxu0 0
        %3366 = vmatpush2.bf16.msra.mxu0 0
        %3367 = vmatprep.subr.bf16.mxu0 0
        %3368 = vmatpush2.bf16.msra.mxu0 0
        %3369 = vmatprep.subr.bf16.mxu0 0
        %3370 = vmatpush2.bf16.msra.mxu0 0
        %3371 = vmatprep.mubr.bf16.mxu0 0
        %3372 = vmatmul.mubr.bf16.gmra.mxu0 %v3337
        %v3373 = vpop.f32.mrf.mxu0
        %v3374 = vadd.f32 %v835, %v3373
        %v3375 = vpop.f32.mrf.mxu0
        %v3376 = vpop.f32.mrf.mxu0
        %v3377 = vpop.f32.mrf.mxu0
        %3378 = vdwg.mxu0
        %v3379 = vadd.f32 %v2863, %v3374
        %v3380 = vsel %vm912, %v3379, 0.0
        %3381 = vadd.xlane.f32.xlu0 %v3380
        %v3382 = vpop.xlane.xlu0 %3381
        %v3383 = vmul.f32 %v3382, %v1544
        %v3384 = vsub.f32 %v3379, %v3383
        %v3385 = vmul.f32 %v3384, %v3384
        %v3386 = vsel %vm912, %v3385, 0.0
        %3387 = vadd.xlane.f32.xlu0 %v3386
        %v3388 = vpop.xlane.xlu0 %3387
        %v3389 = vmul.f32 %v3388, %v1544
        %v3390 = vadd.f32 %v3389, 1e-05
        %v3391 = vrsqrt.pop %v3390
        %v3392 = vmul.f32 %v3384, %v3391
        %v3393 = vmul.f32 %v3392, %v870
        %v3394 = vadd.f32 %v3393, %v877
        %v3395 = vpack.c.bf16 %v3394, %v3394
        %v3397 = vsel %vm912, %v3395, 0
        %3399 = vmatprep.subr.bf16.mxu0 0
        %3400 = vmatpush1.bf16.msra.mxu0 0
        %3401 = vmatprep.subr.bf16.mxu0 0
        %3402 = vmatpush1.bf16.msra.mxu0 0
        %3403 = vmatprep.subr.bf16.mxu0 0
        %3404 = vmatpush1.bf16.msra.mxu0 0
        %3405 = vmatprep.subr.bf16.mxu0 0
        %3406 = vmatpush1.bf16.msra.mxu0 0
        %3407 = vmatprep.subr.bf16.mxu0 0
        %3408 = vmatpush1.bf16.msra.mxu0 0
        %3409 = vmatprep.subr.bf16.mxu0 0
        %3410 = vmatpush1.bf16.msra.mxu0 0
        %3411 = vmatprep.subr.bf16.mxu0 0
        %3412 = vmatpush1.bf16.msra.mxu0 %v2161
        %3413 = vmatprep.subr.bf16.mxu0 0
        %3414 = vmatpush1.bf16.msra.mxu0 %v2160
        %3415 = vmatprep.subr.bf16.mxu0 0
        %3416 = vmatpush2.bf16.msra.mxu0 0
        %3417 = vmatprep.subr.bf16.mxu0 0
        %3418 = vmatpush2.bf16.msra.mxu0 0
        %3419 = vmatprep.subr.bf16.mxu0 0
        %3420 = vmatpush2.bf16.msra.mxu0 0
        %3421 = vmatprep.subr.bf16.mxu0 0
        %3422 = vmatpush2.bf16.msra.mxu0 0
        %3423 = vmatprep.subr.bf16.mxu0 0
        %3424 = vmatpush2.bf16.msra.mxu0 0
        %3425 = vmatprep.subr.bf16.mxu0 0
        %3426 = vmatpush2.bf16.msra.mxu0 0
        %3427 = vmatprep.subr.bf16.mxu0 0
        %3428 = vmatpush2.bf16.msra.mxu0 0
        %3429 = vmatprep.subr.bf16.mxu0 0
        %3430 = vmatpush2.bf16.msra.mxu0 0
        %3431 = vmatprep.mubr.bf16.mxu0 0
        %3432 = vmatmul.mubr.bf16.gmra.mxu0 %v3397
        %v3433 = vpop.f32.mrf.mxu0
        %v3434 = vadd.f32 %v842, %v3433
        %v3435 = vpop.f32.mrf.mxu0
        %v3436 = vpop.f32.mrf.mxu0
        %v3437 = vpop.f32.mrf.mxu0
        %3438 = vdwg.mxu0
        %v3439 = vmax.f32 %v3434, 0.0
        %v3440 = vpack.c.bf16 %v3439, %v3439
        %v3442 = vsel %vm2233, %v3440, 0
        %3444 = vmatprep.subr.bf16.mxu0 0
        %3445 = vmatpush1.bf16.msra.mxu0 0
        %3446 = vmatprep.subr.bf16.mxu0 0
        %3447 = vmatpush1.bf16.msra.mxu0 0
        %3448 = vmatprep.subr.bf16.mxu0 0
        %3449 = vmatpush1.bf16.msra.mxu0 0
        %3450 = vmatprep.subr.bf16.mxu0 0
        %3451 = vmatpush1.bf16.msra.mxu0 0
        %3452 = vmatprep.subr.bf16.mxu0 0
        %3453 = vmatpush1.bf16.msra.mxu0 %v2228
        %3454 = vmatprep.subr.bf16.mxu0 0
        %3455 = vmatpush1.bf16.msra.mxu0 %v2227
        %3456 = vmatprep.subr.bf16.mxu0 0
        %3457 = vmatpush1.bf16.msra.mxu0 %v2226
        %3458 = vmatprep.subr.bf16.mxu0 0
        %3459 = vmatpush1.bf16.msra.mxu0 %v2225
        %3460 = vmatprep.subr.bf16.mxu0 0
        %3461 = vmatpush2.bf16.msra.mxu0 0
        %3462 = vmatprep.subr.bf16.mxu0 0
        %3463 = vmatpush2.bf16.msra.mxu0 0
        %3464 = vmatprep.subr.bf16.mxu0 0
        %3465 = vmatpush2.bf16.msra.mxu0 0
        %3466 = vmatprep.subr.bf16.mxu0 0
        %3467 = vmatpush2.bf16.msra.mxu0 0
        %3468 = vmatprep.subr.bf16.mxu0 0
        %3469 = vmatpush2.bf16.msra.mxu0 0
        %3470 = vmatprep.subr.bf16.mxu0 0
        %3471 = vmatpush2.bf16.msra.mxu0 0
        %3472 = vmatprep.subr.bf16.mxu0 0
        %3473 = vmatpush2.bf16.msra.mxu0 0
        %3474 = vmatprep.subr.bf16.mxu0 0
        %3475 = vmatpush2.bf16.msra.mxu0 0
        %3476 = vmatprep.mubr.bf16.mxu0 0
        %3477 = vmatmul.mubr.bf16.gmra.mxu0 %v3442
        %v3478 = vpop.f32.mrf.mxu0
        %v3479 = vadd.f32 %v849, %v3478
        %v3480 = vpop.f32.mrf.mxu0
        %v3481 = vpop.f32.mrf.mxu0
        %v3482 = vpop.f32.mrf.mxu0
        %3483 = vdwg.mxu0
        %v3484 = vadd.f32 %v3394, %v3479
        %v3485 = vsel %vm912, %v3484, 0.0
        %3486 = vadd.xlane.f32.xlu0 %v3485
        %v3487 = vpop.xlane.xlu0 %3486
        %v3488 = vmul.f32 %v3487, %v1544
        %v3489 = vsub.f32 %v3484, %v3488
        %v3490 = vmul.f32 %v3489, %v3489
        %v3491 = vsel %vm912, %v3490, 0.0
        %3492 = vadd.xlane.f32.xlu0 %v3491
        %v3493 = vpop.xlane.xlu0 %3492
        %v3494 = vmul.f32 %v3493, %v1544
        %v3495 = vadd.f32 %v3494, 1e-05
        %v3496 = vrsqrt.pop %v3495
        %v3497 = vmul.f32 %v3489, %v3496
        %v3498 = vmul.f32 %v3497, %v884
        %v3499 = vadd.f32 %v3498, %v891
        %3500 = vst.msk [vmem:[%s769] sm:$0xff] %vm912, %v3499
        %s3501 = sand.u32 %s521, 1
        %s3502 = scalar_lea.sflag [#allocation4], %s3501
        %s3503 = sand.u32 %s521, 1
        %s3504 = smul.addr %s3503, 8
        %s3505 = scalar_lea.vmem [#allocation11], %s3504
        // Predicated region
        $region129: #{tpu_custom_call.1} parent=107 // pred_check
          %p3506 = pneg %p531
        $region130: #{tpu_custom_call.1} parent=107 // pred_check_branch
          %3508 = sbr.rel (%p3506) target = $region132
        $region131: #{tpu_custom_call.1} parent=107 // pred_region
          %s3510 = ssub.s32 128, 128
          %3511 = vsyncadd %s3502, %s3510
          %s3512 = smul.addr %s41, 128
          %s3513 = scalar_lea.hbm %s22, %s3512
          %s3515 = sshll.u32 %s3505, 4
          %s3516 = int_to_ptr.vmem [resolvable:$true] %s3515
          %3518 = dma.vmem_to_hbm [thread:$0]  %s3516, 128, %s3513, %s3502
        $region132: #{tpu_custom_call.1} parent=107 // pred_fallthru
          _
      $region108: #{tpu_custom_call.1} parent=5 // pred_fallthru
        _
      %p3519 = scmp.le.s32.totalorder 2, %s36
      // Predicated region
      $region133: #{tpu_custom_call.1} parent=5 // pred_check
        %p3520 = pneg %p3519
      $region134: #{tpu_custom_call.1} parent=5 // pred_check_branch
        %3522 = sbr.rel (%p3520) target = $region136
      $region135: #{tpu_custom_call.1} parent=5 // pred_region
        %s3523 = ssub.s32 %s36, 2
        // Predicated region
        $region137: #{tpu_custom_call.1} parent=135 // pred_check
          %p3524 = pneg %p537
        $region138: #{tpu_custom_call.1} parent=135 // pred_check_branch
          %3526 = sbr.rel (%p3524) target = $region140
        $region139: #{tpu_custom_call.1} parent=135 // pred_region
          %s3527 = sand.u32 %s522, 1
          %s3528 = scalar_lea.sflag [#allocation4], %s3527
          %s3529 = sand.u32 %s522, 1
          %s3530 = smul.addr %s3529, 8
          %s3531 = scalar_lea.vmem [#allocation11], %s3530
          %3532 = dma.done %s3528, 128
        $region140: #{tpu_custom_call.1} parent=135 // pred_fallthru
          _
      $region136: #{tpu_custom_call.1} parent=5 // pred_fallthru
        _
    $region6: #{tpu_custom_call.1} parent=1 // loop_footer
      %s40 = sadd.s32 1, %s36
    $region7: #{tpu_custom_call.1} parent=1 // loop_footer_branch
      %35 = sbr.rel target = $region3
    $region8: #{tpu_custom_call.1} parent=1 // loop_exit
      _
    %3533 = vsyncpa [#allocation3], 1
    %s3534 = scalar_lea.sflag [#allocation3], 1
    %3535 = vsyncpa %s3534, 1
    %3536 = vsyncpa [#allocation6], 1
    %3537 = vsyncpa [#allocation9], 1
    %3538 = vsyncpa [#allocation4], 1
    %s3539 = scalar_lea.sflag [#allocation4], 1
    %3540 = vsyncpa %s3539, 1

// kernel: tpu_custom_call.1
$region0: #{tpu_custom_call.1}
  #allocation0 [shape = 'u32[]', space=smem, size = 0x4, offset = 0x4, fixed_abs, tag = 'smem constant byte address 0x4 - core index']
  #allocation1 [shape = 'u32[144,128]{1,0:T(1,128)}', space=vmem, size = 0x12000, scoped, tag = 'internal scratch']
  %s0 = inlined_call_operand.vmem [shape: f32[16,32], index: 0, kind: input, shape index: {}]
  %s1 = inlined_call_operand.hbm [shape: bf16[16,32], index: 1, kind: input, shape index: {}]
  %s2 = inlined_call_operand.vmem [shape: bf16[32,96], index: 2, kind: input, shape index: {}]
  %s3 = inlined_call_operand.vmem [shape: f32[1,96], index: 3, kind: input, shape index: {}]
  %s4 = inlined_call_operand.vmem [shape: bf16[32,32], index: 4, kind: input, shape index: {}]
  %s5 = inlined_call_operand.vmem [shape: f32[1,32], index: 5, kind: input, shape index: {}]
  %s6 = inlined_call_operand.hbm [shape: bf16[32,32], index: 6, kind: input, shape index: {}]
  %s7 = inlined_call_operand.vmem [shape: f32[1,32], index: 7, kind: input, shape index: {}]
  %s8 = inlined_call_operand.hbm [shape: bf16[32,64], index: 8, kind: input, shape index: {}]
  %s9 = inlined_call_operand.vmem [shape: f32[1,64], index: 9, kind: input, shape index: {}]
  %s10 = inlined_call_operand.hbm [shape: bf16[32,32], index: 10, kind: input, shape index: {}]
  %s11 = inlined_call_operand.vmem [shape: f32[1,32], index: 11, kind: input, shape index: {}]
  %s12 = inlined_call_operand.hbm [shape: bf16[32,64], index: 12, kind: input, shape index: {}]
  %s13 = inlined_call_operand.vmem [shape: f32[1,64], index: 13, kind: input, shape index: {}]
  %s14 = inlined_call_operand.vmem [shape: bf16[64,32], index: 14, kind: input, shape index: {}]
  %s15 = inlined_call_operand.vmem [shape: f32[1,32], index: 15, kind: input, shape index: {}]
  %s16 = inlined_call_operand.vmem [shape: f32[1,32], index: 16, kind: input, shape index: {}]
  %s17 = inlined_call_operand.vmem [shape: f32[1,32], index: 17, kind: input, shape index: {}]
  %s18 = inlined_call_operand.vmem [shape: f32[1,32], index: 18, kind: input, shape index: {}]
  %s19 = inlined_call_operand.vmem [shape: f32[1,32], index: 19, kind: input, shape index: {}]
  %s20 = inlined_call_operand.vmem [shape: f32[1,32], index: 20, kind: input, shape index: {}]
  %s21 = inlined_call_operand.vmem [shape: f32[1,32], index: 21, kind: input, shape index: {}]
  %s22 = inlined_call_operand.hbm [shape: f32[16,32], index: 22, kind: output, shape index: {}]
  %s23 = sld [smem:[#allocation0]]
  $region141: #{tpu_custom_call.1} parent=0
    _
  %s25 = ssub.s32 1, %s23
  %s26 = scalar_select 0, %s25, %s23
  $region1: #{tpu_custom_call.1} parent=0
    #allocation2 [shape = 'u8[4096]{0}', space=vmem, size = 0x1000, scoped, tag = 'input window, operand 1']
    #allocation3 [shape = 's32[2]{0}', space=sflag, size = 0x8, scoped, tag = 'scoped memory for tpu_custom_call.1']
    #allocation4 [shape = 's32[2]{0}', space=sflag, size = 0x8, scoped, tag = 'scoped memory for tpu_custom_call.1']
    #allocation5 [shape = 'u8[8192]{0}', space=vmem, size = 0x2000, scoped, tag = 'input window, operand 6, single buffered']
    #allocation6 [shape = 's32[1]{0}', space=sflag, size = 0x4, scoped, tag = 'scoped memory for tpu_custom_call.1']
    #allocation7 [shape = 'u8[8192]{0}', space=vmem, size = 0x2000, scoped, tag = 'input window, operand 8, single buffered']
    #allocation8 [shape = 'u8[8192]{0}', space=vmem, size = 0x2000, scoped, tag = 'input window, operand 10, single buffered']
    #allocation9 [shape = 's32[1]{0}', space=sflag, size = 0x4, scoped, tag = 'scoped memory for tpu_custom_call.1']
    #allocation10 [shape = 'u8[8192]{0}', space=vmem, size = 0x2000, scoped, tag = 'input window, operand 12, single buffered']
    #allocation11 [shape = 'u8[8192]{0}', space=vmem, size = 0x2000, scoped, tag = 'output window, operand 0']
    %27 = vsyncpa [#allocation3], 0
    %s28 = scalar_lea.sflag [#allocation3], 1
    %29 = vsyncpa %s28, 0
    %30 = vsyncpa [#allocation6], 0
    %31 = vsyncpa [#allocation9], 0
    %32 = vsyncpa [#allocation4], 0
    %s33 = scalar_lea.sflag [#allocation4], 1
    %34 = vsyncpa %s33, 0
    loop: start=0, step=1, limit=4
    $region2: #{tpu_custom_call.1} parent=1 // loop_pre_header
      _
    $region3: #{tpu_custom_call.1} parent=1 // loop_header
      %s36 = sphi 0, %s40
      %p37 = scmp.ge.s32.totalorder %s36, 4
      %s46 = sphi 0, %s48
      %s49 = sphi 0, %s46
      %s50 = sphi 0, %s49
      %s66 = sphi 0, %s50
      %s72 = sphi 0, %s74
      %s75 = sphi 0, %s72
      %s76 = sphi 0, %s75
      %s92 = sphi 0, %s76
      %s96 = sphi 0, %s96
      %s98 = sphi 0, %s96
      %s99 = sphi 0, %s98
      %s113 = sphi 0, %s99
      %s117 = sphi 0, %s117
      %s119 = sphi 0, %s117
      %s120 = sphi 0, %s119
      %s134 = sphi 0, %s120
      %s138 = sphi 0, %s138
      %s140 = sphi 0, %s138
      %s141 = sphi 0, %s140
      %s155 = sphi 0, %s141
      %s159 = sphi 0, %s159
      %s161 = sphi 0, %s159
      %s162 = sphi 0, %s161
      %s176 = sphi 0, %s162
      %s180 = sphi 0, %s180
      %s182 = sphi 0, %s180
      %s183 = sphi 0, %s182
      %s197 = sphi 0, %s183
      %s201 = sphi 0, %s201
      %s203 = sphi 0, %s201
      %s204 = sphi 0, %s203
      %s218 = sphi 0, %s204
      %s222 = sphi 0, %s222
      %s224 = sphi 0, %s222
      %s225 = sphi 0, %s224
      %s239 = sphi 0, %s225
      %s243 = sphi 0, %s243
      %s245 = sphi 0, %s243
      %s246 = sphi 0, %s245
      %s260 = sphi 0, %s246
      %s264 = sphi 0, %s264
      %s266 = sphi 0, %s264
      %s267 = sphi 0, %s266
      %s281 = sphi 0, %s267
      %s285 = sphi 0, %s285
      %s287 = sphi 0, %s285
      %s288 = sphi 0, %s287
      %s302 = sphi 0, %s288
      %s306 = sphi 0, %s306
      %s308 = sphi 0, %s306
      %s309 = sphi 0, %s308
      %s323 = sphi 0, %s309
      %s327 = sphi 0, %s327
      %s329 = sphi 0, %s327
      %s330 = sphi 0, %s329
      %s344 = sphi 0, %s330
      %s348 = sphi 0, %s348
      %s350 = sphi 0, %s348
      %s351 = sphi 0, %s350
      %s365 = sphi 0, %s351
      %s369 = sphi 0, %s369
      %s371 = sphi 0, %s369
      %s372 = sphi 0, %s371
      %s386 = sphi 0, %s372
      %s390 = sphi 0, %s390
      %s392 = sphi 0, %s390
      %s393 = sphi 0, %s392
      %s407 = sphi 0, %s393
      %s411 = sphi 0, %s411
      %s413 = sphi 0, %s411
      %s414 = sphi 0, %s413
      %s428 = sphi 0, %s414
      %s432 = sphi 0, %s432
      %s434 = sphi 0, %s432
      %s435 = sphi 0, %s434
      %s449 = sphi 0, %s435
      %s453 = sphi 0, %s453
      %s455 = sphi 0, %s453
      %s456 = sphi 0, %s455
      %s470 = sphi 0, %s456
      %s474 = sphi 0, %s474
      %s476 = sphi 0, %s474
      %s477 = sphi 0, %s476
      %s491 = sphi 0, %s477
      %s495 = sphi 0, %s495
      %s497 = sphi 0, %s495
      %s498 = sphi 0, %s497
      %s512 = sphi 0, %s498
      %s518 = sphi 0, %s520
      %s521 = sphi 0, %s518
      %s522 = sphi 0, %s521
      %s538 = sphi 0, %s522
    $region4: #{tpu_custom_call.1} parent=1 // loop_header_branch
      %39 = sbr.rel (%p37) target = $region8
    $region5: #{tpu_custom_call.1} parent=1 // loop_body
      %s41 = ssub.s32 %s36, 1
      %s42 = ssub.s32 %s36, 2
      %s43 = sadd.s32 %s36, 1
      %s44 = ssub.s32 %s36, %s43
      %p45 = scmp.eq.s32.totalorder %s44, 0
      %s47 = sadd.s32 %s46, 1
      %s48 = scalar_select %p45, %s46, %s47
      %p51 = pneg %p45
      %p52 = scmp.eq.s32.totalorder %s36, 1
      %p53 = por %p51, %p52
      %p54 = scmp.ne.s32.totalorder %s46, %s49
      %p55 = scmp.eq.s32.totalorder %s36, 0
      %p56 = por %p54, %p55
      %p57 = scmp.ne.s32.totalorder %s46, %s49
      %p58 = scmp.eq.s32.totalorder %s41, 1
      %p59 = por %p57, %p58
      %p60 = scmp.ne.s32.totalorder %s49, %s50
      %p61 = scmp.eq.s32.totalorder %s41, 0
      %p62 = por %p60, %p61
      %p63 = scmp.ne.s32.totalorder %s49, %s50
      %p64 = scmp.eq.s32.totalorder %s42, 1
      %p65 = por %p63, %p64
      %p67 = scmp.ne.s32.totalorder %s50, %s66
      %p68 = scmp.eq.s32.totalorder %s42, 0
      %p69 = por %p67, %p68
      %s70 = ssub.s32 %s36, %s43
      %p71 = scmp.eq.s32.totalorder %s70, 0
      %s73 = sadd.s32 %s72, 1
      %s74 = scalar_select %p71, %s72, %s73
      %p77 = pneg %p71
      %p78 = scmp.eq.s32.totalorder %s36, 1
      %p79 = por %p77, %p78
      %p80 = scmp.ne.s32.totalorder %s72, %s75
      %p81 = scmp.eq.s32.totalorder %s36, 0
      %p82 = por %p80, %p81
      %p83 = scmp.ne.s32.totalorder %s72, %s75
      %p84 = scmp.eq.s32.totalorder %s41, 1
      %p85 = por %p83, %p84
      %p86 = scmp.ne.s32.totalorder %s75, %s76
      %p87 = scmp.eq.s32.totalorder %s41, 0
      %p88 = por %p86, %p87
      %p89 = scmp.ne.s32.totalorder %s75, %s76
      %p90 = scmp.eq.s32.totalorder %s42, 1
      %p91 = por %p89, %p90
      %p93 = scmp.ne.s32.totalorder %s76, %s92
      %p94 = scmp.eq.s32.totalorder %s42, 0
      %p95 = por %p93, %p94
      %s97 = sadd.s32 %s96, 1
      %p100 = scmp.eq.s32.totalorder %s36, 1
      %p101 = scmp.ne.s32.totalorder %s96, %s98
      %p102 = scmp.eq.s32.totalorder %s36, 0
      %p103 = por %p101, %p102
      %p104 = scmp.ne.s32.totalorder %s96, %s98
      %p105 = scmp.eq.s32.totalorder %s41, 1
      %p106 = por %p104, %p105
      %p107 = scmp.ne.s32.totalorder %s98, %s99
      %p108 = scmp.eq.s32.totalorder %s41, 0
      %p109 = por %p107, %p108
      %p110 = scmp.ne.s32.totalorder %s98, %s99
      %p111 = scmp.eq.s32.totalorder %s42, 1
      %p112 = por %p110, %p111
      %p114 = scmp.ne.s32.totalorder %s99, %s113
      %p115 = scmp.eq.s32.totalorder %s42, 0
      %p116 = por %p114, %p115
      %s118 = sadd.s32 %s117, 1
      %p121 = scmp.eq.s32.totalorder %s36, 1
      %p122 = scmp.ne.s32.totalorder %s117, %s119
      %p123 = scmp.eq.s32.totalorder %s36, 0
      %p124 = por %p122, %p123
      %p125 = scmp.ne.s32.totalorder %s117, %s119
      %p126 = scmp.eq.s32.totalorder %s41, 1
      %p127 = por %p125, %p126
      %p128 = scmp.ne.s32.totalorder %s119, %s120
      %p129 = scmp.eq.s32.totalorder %s41, 0
      %p130 = por %p128, %p129
      %p131 = scmp.ne.s32.totalorder %s119, %s120
      %p132 = scmp.eq.s32.totalorder %s42, 1
      %p133 = por %p131, %p132
      %p135 = scmp.ne.s32.totalorder %s120, %s134
      %p136 = scmp.eq.s32.totalorder %s42, 0
      %p137 = por %p135, %p136
      %s139 = sadd.s32 %s138, 1
      %p142 = scmp.eq.s32.totalorder %s36, 1
      %p143 = scmp.ne.s32.totalorder %s138, %s140
      %p144 = scmp.eq.s32.totalorder %s36, 0
      %p145 = por %p143, %p144
      %p146 = scmp.ne.s32.totalorder %s138, %s140
      %p147 = scmp.eq.s32.totalorder %s41, 1
      %p148 = por %p146, %p147
      %p149 = scmp.ne.s32.totalorder %s140, %s141
      %p150 = scmp.eq.s32.totalorder %s41, 0
      %p151 = por %p149, %p150
      %p152 = scmp.ne.s32.totalorder %s140, %s141
      %p153 = scmp.eq.s32.totalorder %s42, 1
      %p154 = por %p152, %p153
      %p156 = scmp.ne.s32.totalorder %s141, %s155
      %p157 = scmp.eq.s32.totalorder %s42, 0
      %p158 = por %p156, %p157
      %s160 = sadd.s32 %s159, 1
      %p163 = scmp.eq.s32.totalorder %s36, 1
      %p164 = scmp.ne.s32.totalorder %s159, %s161
      %p165 = scmp.eq.s32.totalorder %s36, 0
      %p166 = por %p164, %p165
      %p167 = scmp.ne.s32.totalorder %s159, %s161
      %p168 = scmp.eq.s32.totalorder %s41, 1
      %p169 = por %p167, %p168
      %p170 = scmp.ne.s32.totalorder %s161, %s162
      %p171 = scmp.eq.s32.totalorder %s41, 0
      %p172 = por %p170, %p171
      %p173 = scmp.ne.s32.totalorder %s161, %s162
      %p174 = scmp.eq.s32.totalorder %s42, 1
      %p175 = por %p173, %p174
      %p177 = scmp.ne.s32.totalorder %s162, %s176
      %p178 = scmp.eq.s32.totalorder %s42, 0
      %p179 = por %p177, %p178
      %s181 = sadd.s32 %s180, 1
      %p184 = scmp.eq.s32.totalorder %s36, 1
      %p185 = scmp.ne.s32.totalorder %s180, %s182
      %p186 = scmp.eq.s32.totalorder %s36, 0
      %p187 = por %p185, %p186
      %p188 = scmp.ne.s32.totalorder %s180, %s182
      %p189 = scmp.eq.s32.totalorder %s41, 1
      %p190 = por %p188, %p189
      %p191 = scmp.ne.s32.totalorder %s182, %s183
      %p192 = scmp.eq.s32.totalorder %s41, 0
      %p193 = por %p191, %p192
      %p194 = scmp.ne.s32.totalorder %s182, %s183
      %p195 = scmp.eq.s32.totalorder %s42, 1
      %p196 = por %p194, %p195
      %p198 = scmp.ne.s32.totalorder %s183, %s197
      %p199 = scmp.eq.s32.totalorder %s42, 0
      %p200 = por %p198, %p199
      %s202 = sadd.s32 %s201, 1
      %p205 = scmp.eq.s32.totalorder %s36, 1
      %p206 = scmp.ne.s32.totalorder %s201, %s203
      %p207 = scmp.eq.s32.totalorder %s36, 0
      %p208 = por %p206, %p207
      %p209 = scmp.ne.s32.totalorder %s201, %s203
      %p210 = scmp.eq.s32.totalorder %s41, 1
      %p211 = por %p209, %p210
      %p212 = scmp.ne.s32.totalorder %s203, %s204
      %p213 = scmp.eq.s32.totalorder %s41, 0
      %p214 = por %p212, %p213
      %p215 = scmp.ne.s32.totalorder %s203, %s204
      %p216 = scmp.eq.s32.totalorder %s42, 1
      %p217 = por %p215, %p216
      %p219 = scmp.ne.s32.totalorder %s204, %s218
      %p220 = scmp.eq.s32.totalorder %s42, 0
      %p221 = por %p219, %p220
      %s223 = sadd.s32 %s222, 1
      %p226 = scmp.eq.s32.totalorder %s36, 1
      %p227 = scmp.ne.s32.totalorder %s222, %s224
      %p228 = scmp.eq.s32.totalorder %s36, 0
      %p229 = por %p227, %p228
      %p230 = scmp.ne.s32.totalorder %s222, %s224
      %p231 = scmp.eq.s32.totalorder %s41, 1
      %p232 = por %p230, %p231
      %p233 = scmp.ne.s32.totalorder %s224, %s225
      %p234 = scmp.eq.s32.totalorder %s41, 0
      %p235 = por %p233, %p234
      %p236 = scmp.ne.s32.totalorder %s224, %s225
      %p237 = scmp.eq.s32.totalorder %s42, 1
      %p238 = por %p236, %p237
      %p240 = scmp.ne.s32.totalorder %s225, %s239
      %p241 = scmp.eq.s32.totalorder %s42, 0
      %p242 = por %p240, %p241
      %s244 = sadd.s32 %s243, 1
      %p247 = scmp.eq.s32.totalorder %s36, 1
      %p248 = scmp.ne.s32.totalorder %s243, %s245
      %p249 = scmp.eq.s32.totalorder %s36, 0
      %p250 = por %p248, %p249
      %p251 = scmp.ne.s32.totalorder %s243, %s245
      %p252 = scmp.eq.s32.totalorder %s41, 1
      %p253 = por %p251, %p252
      %p254 = scmp.ne.s32.totalorder %s245, %s246
      %p255 = scmp.eq.s32.totalorder %s41, 0
      %p256 = por %p254, %p255
      %p257 = scmp.ne.s32.totalorder %s245, %s246
      %p258 = scmp.eq.s32.totalorder %s42, 1
      %p259 = por %p257, %p258
      %p261 = scmp.ne.s32.totalorder %s246, %s260
      %p262 = scmp.eq.s32.totalorder %s42, 0
      %p263 = por %p261, %p262
      %s265 = sadd.s32 %s264, 1
      %p268 = scmp.eq.s32.totalorder %s36, 1
      %p269 = scmp.ne.s32.totalorder %s264, %s266
      %p270 = scmp.eq.s32.totalorder %s36, 0
      %p271 = por %p269, %p270
      %p272 = scmp.ne.s32.totalorder %s264, %s266
      %p273 = scmp.eq.s32.totalorder %s41, 1
      %p274 = por %p272, %p273
      %p275 = scmp.ne.s32.totalorder %s266, %s267
      %p276 = scmp.eq.s32.totalorder %s41, 0
      %p277 = por %p275, %p276
      %p278 = scmp.ne.s32.totalorder %s266, %s267
      %p279 = scmp.eq.s32.totalorder %s42, 1
      %p280 = por %p278, %p279
      %p282 = scmp.ne.s32.totalorder %s267, %s281
      %p283 = scmp.eq.s32.totalorder %s42, 0
      %p284 = por %p282, %p283
      %s286 = sadd.s32 %s285, 1
      %p289 = scmp.eq.s32.totalorder %s36, 1
      %p290 = scmp.ne.s32.totalorder %s285, %s287
      %p291 = scmp.eq.s32.totalorder %s36, 0
      %p292 = por %p290, %p291
      %p293 = scmp.ne.s32.totalorder %s285, %s287
      %p294 = scmp.eq.s32.totalorder %s41, 1
      %p295 = por %p293, %p294
      %p296 = scmp.ne.s32.totalorder %s287, %s288
      %p297 = scmp.eq.s32.totalorder %s41, 0
      %p298 = por %p296, %p297
      %p299 = scmp.ne.s32.totalorder %s287, %s288
      %p300 = scmp.eq.s32.totalorder %s42, 1
      %p301 = por %p299, %p300
      %p303 = scmp.ne.s32.totalorder %s288, %s302
      %p304 = scmp.eq.s32.totalorder %s42, 0
      %p305 = por %p303, %p304
      %s307 = sadd.s32 %s306, 1
      %p310 = scmp.eq.s32.totalorder %s36, 1
      %p311 = scmp.ne.s32.totalorder %s306, %s308
      %p312 = scmp.eq.s32.totalorder %s36, 0
      %p313 = por %p311, %p312
      %p314 = scmp.ne.s32.totalorder %s306, %s308
      %p315 = scmp.eq.s32.totalorder %s41, 1
      %p316 = por %p314, %p315
      %p317 = scmp.ne.s32.totalorder %s308, %s309
      %p318 = scmp.eq.s32.totalorder %s41, 0
      %p319 = por %p317, %p318
      %p320 = scmp.ne.s32.totalorder %s308, %s309
      %p321 = scmp.eq.s32.totalorder %s42, 1
      %p322 = por %p320, %p321
      %p324 = scmp.ne.s32.totalorder %s309, %s323
      %p325 = scmp.eq.s32.totalorder %s42, 0
      %p326 = por %p324, %p325
      %s328 = sadd.s32 %s327, 1
      %p331 = scmp.eq.s32.totalorder %s36, 1
      %p332 = scmp.ne.s32.totalorder %s327, %s329
      %p333 = scmp.eq.s32.totalorder %s36, 0
      %p334 = por %p332, %p333
      %p335 = scmp.ne.s32.totalorder %s327, %s329
      %p336 = scmp.eq.s32.totalorder %s41, 1
      %p337 = por %p335, %p336
      %p338 = scmp.ne.s32.totalorder %s329, %s330
      %p339 = scmp.eq.s32.totalorder %s41, 0
      %p340 = por %p338, %p339
      %p341 = scmp.ne.s32.totalorder %s329, %s330
      %p342 = scmp.eq.s32.totalorder %s42, 1
      %p343 = por %p341, %p342
      %p345 = scmp.ne.s32.totalorder %s330, %s344
      %p346 = scmp.eq.s32.totalorder %s42, 0
      %p347 = por %p345, %p346
      %s349 = sadd.s32 %s348, 1
      %p352 = scmp.eq.s32.totalorder %s36, 1
      %p353 = scmp.ne.s32.totalorder %s348, %s350
      %p354 = scmp.eq.s32.totalorder %s36, 0
      %p355 = por %p353, %p354
      %p356 = scmp.ne.s32.totalorder %s348, %s350
      %p357 = scmp.eq.s32.totalorder %s41, 1
      %p358 = por %p356, %p357
      %p359 = scmp.ne.s32.totalorder %s350, %s351
      %p360 = scmp.eq.s32.totalorder %s41, 0
      %p361 = por %p359, %p360
      %p362 = scmp.ne.s32.totalorder %s350, %s351
      %p363 = scmp.eq.s32.totalorder %s42, 1
      %p364 = por %p362, %p363
      %p366 = scmp.ne.s32.totalorder %s351, %s365
      %p367 = scmp.eq.s32.totalorder %s42, 0
      %p368 = por %p366, %p367
      %s370 = sadd.s32 %s369, 1
      %p373 = scmp.eq.s32.totalorder %s36, 1
      %p374 = scmp.ne.s32.totalorder %s369, %s371
      %p375 = scmp.eq.s32.totalorder %s36, 0
      %p376 = por %p374, %p375
      %p377 = scmp.ne.s32.totalorder %s369, %s371
      %p378 = scmp.eq.s32.totalorder %s41, 1
      %p379 = por %p377, %p378
      %p380 = scmp.ne.s32.totalorder %s371, %s372
      %p381 = scmp.eq.s32.totalorder %s41, 0
      %p382 = por %p380, %p381
      %p383 = scmp.ne.s32.totalorder %s371, %s372
      %p384 = scmp.eq.s32.totalorder %s42, 1
      %p385 = por %p383, %p384
      %p387 = scmp.ne.s32.totalorder %s372, %s386
      %p388 = scmp.eq.s32.totalorder %s42, 0
      %p389 = por %p387, %p388
      %s391 = sadd.s32 %s390, 1
      %p394 = scmp.eq.s32.totalorder %s36, 1
      %p395 = scmp.ne.s32.totalorder %s390, %s392
      %p396 = scmp.eq.s32.totalorder %s36, 0
      %p397 = por %p395, %p396
      %p398 = scmp.ne.s32.totalorder %s390, %s392
      %p399 = scmp.eq.s32.totalorder %s41, 1
      %p400 = por %p398, %p399
      %p401 = scmp.ne.s32.totalorder %s392, %s393
      %p402 = scmp.eq.s32.totalorder %s41, 0
      %p403 = por %p401, %p402
      %p404 = scmp.ne.s32.totalorder %s392, %s393
      %p405 = scmp.eq.s32.totalorder %s42, 1
      %p406 = por %p404, %p405
      %p408 = scmp.ne.s32.totalorder %s393, %s407
      %p409 = scmp.eq.s32.totalorder %s42, 0
      %p410 = por %p408, %p409
      %s412 = sadd.s32 %s411, 1
      %p415 = scmp.eq.s32.totalorder %s36, 1
      %p416 = scmp.ne.s32.totalorder %s411, %s413
      %p417 = scmp.eq.s32.totalorder %s36, 0
      %p418 = por %p416, %p417
      %p419 = scmp.ne.s32.totalorder %s411, %s413
      %p420 = scmp.eq.s32.totalorder %s41, 1
      %p421 = por %p419, %p420
      %p422 = scmp.ne.s32.totalorder %s413, %s414
      %p423 = scmp.eq.s32.totalorder %s41, 0
      %p424 = por %p422, %p423
      %p425 = scmp.ne.s32.totalorder %s413, %s414
      %p426 = scmp.eq.s32.totalorder %s42, 1
      %p427 = por %p425, %p426
      %p429 = scmp.ne.s32.totalorder %s414, %s428
      %p430 = scmp.eq.s32.totalorder %s42, 0
      %p431 = por %p429, %p430
      %s433 = sadd.s32 %s432, 1
      %p436 = scmp.eq.s32.totalorder %s36, 1
      %p437 = scmp.ne.s32.totalorder %s432, %s434
      %p438 = scmp.eq.s32.totalorder %s36, 0
      %p439 = por %p437, %p438
      %p440 = scmp.ne.s32.totalorder %s432, %s434
      %p441 = scmp.eq.s32.totalorder %s41, 1
      %p442 = por %p440, %p441
      %p443 = scmp.ne.s32.totalorder %s434, %s435
      %p444 = scmp.eq.s32.totalorder %s41, 0
      %p445 = por %p443, %p444
      %p446 = scmp.ne.s32.totalorder %s434, %s435
      %p447 = scmp.eq.s32.totalorder %s42, 1
      %p448 = por %p446, %p447
      %p450 = scmp.ne.s32.totalorder %s435, %s449
      %p451 = scmp.eq.s32.totalorder %s42, 0
      %p452 = por %p450, %p451
      %s454 = sadd.s32 %s453, 1
      %p457 = scmp.eq.s32.totalorder %s36, 1
      %p458 = scmp.ne.s32.totalorder %s453, %s455
      %p459 = scmp.eq.s32.totalorder %s36, 0
      %p460 = por %p458, %p459
      %p461 = scmp.ne.s32.totalorder %s453, %s455
      %p462 = scmp.eq.s32.totalorder %s41, 1
      %p463 = por %p461, %p462
      %p464 = scmp.ne.s32.totalorder %s455, %s456
      %p465 = scmp.eq.s32.totalorder %s41, 0
      %p466 = por %p464, %p465
      %p467 = scmp.ne.s32.totalorder %s455, %s456
      %p468 = scmp.eq.s32.totalorder %s42, 1
      %p469 = por %p467, %p468
      %p471 = scmp.ne.s32.totalorder %s456, %s470
      %p472 = scmp.eq.s32.totalorder %s42, 0
      %p473 = por %p471, %p472
      %s475 = sadd.s32 %s474, 1
      %p478 = scmp.eq.s32.totalorder %s36, 1
      %p479 = scmp.ne.s32.totalorder %s474, %s476
      %p480 = scmp.eq.s32.totalorder %s36, 0
      %p481 = por %p479, %p480
      %p482 = scmp.ne.s32.totalorder %s474, %s476
      %p483 = scmp.eq.s32.totalorder %s41, 1
      %p484 = por %p482, %p483
      %p485 = scmp.ne.s32.totalorder %s476, %s477
      %p486 = scmp.eq.s32.totalorder %s41, 0
      %p487 = por %p485, %p486
      %p488 = scmp.ne.s32.totalorder %s476, %s477
      %p489 = scmp.eq.s32.totalorder %s42, 1
      %p490 = por %p488, %p489
      %p492 = scmp.ne.s32.totalorder %s477, %s491
      %p493 = scmp.eq.s32.totalorder %s42, 0
      %p494 = por %p492, %p493
      %s496 = sadd.s32 %s495, 1
      %p499 = scmp.eq.s32.totalorder %s36, 1
      %p500 = scmp.ne.s32.totalorder %s495, %s497
      %p501 = scmp.eq.s32.totalorder %s36, 0
      %p502 = por %p500, %p501
      %p503 = scmp.ne.s32.totalorder %s495, %s497
      %p504 = scmp.eq.s32.totalorder %s41, 1
      %p505 = por %p503, %p504
      %p506 = scmp.ne.s32.totalorder %s497, %s498
      %p507 = scmp.eq.s32.totalorder %s41, 0
      %p508 = por %p506, %p507
      %p509 = scmp.ne.s32.totalorder %s497, %s498
      %p510 = scmp.eq.s32.totalorder %s42, 1
      %p511 = por %p509, %p510
      %p513 = scmp.ne.s32.totalorder %s498, %s512
      %p514 = scmp.eq.s32.totalorder %s42, 0
      %p515 = por %p513, %p514
      %s516 = ssub.s32 %s36, %s43
      %p517 = scmp.eq.s32.totalorder %s516, 0
      %s519 = sadd.s32 %s518, 1
      %s520 = scalar_select %p517, %s518, %s519
      %p523 = pneg %p517
      %p524 = scmp.eq.s32.totalorder %s36, 1
      %p525 = por %p523, %p524
      %p526 = scmp.ne.s32.totalorder %s518, %s521
      %p527 = scmp.eq.s32.totalorder %s36, 0
      %p528 = por %p526, %p527
      %p529 = scmp.ne.s32.totalorder %s518, %s521
      %p530 = scmp.eq.s32.totalorder %s41, 1
      %p531 = por %p529, %p530
      %p532 = scmp.ne.s32.totalorder %s521, %s522
      %p533 = scmp.eq.s32.totalorder %s41, 0
      %p534 = por %p532, %p533
      %p535 = scmp.ne.s32.totalorder %s521, %s522
      %p536 = scmp.eq.s32.totalorder %s42, 1
      %p537 = por %p535, %p536
      %p539 = scmp.ne.s32.totalorder %s522, %s538
      %p540 = scmp.eq.s32.totalorder %s42, 0
      %p541 = por %p539, %p540
      %p542 = scmp.le.s32.totalorder 1, %s36
      %p543 = scmp.lt.s32.totalorder %s36, 3
      %p544 = pnand %p542, %p543
      %p545 = pneg %p544
      // Predicated region
      $region9: #{tpu_custom_call.1} parent=5 // pred_check
        _
      $region10: #{tpu_custom_call.1} parent=5 // pred_check_branch
        %547 = sbr.rel (%p544) target = $region12
      $region11: #{tpu_custom_call.1} parent=5 // pred_region
        %s548 = ssub.s32 %s36, 1
        // Predicated region
        $region13: #{tpu_custom_call.1} parent=11 // pred_check
          %p549 = pneg %p109
        $region14: #{tpu_custom_call.1} parent=11 // pred_check_branch
          %551 = sbr.rel (%p549) target = $region16
        $region15: #{tpu_custom_call.1} parent=11 // pred_region
          _
        $region16: #{tpu_custom_call.1} parent=11 // pred_fallthru
          _
        // Predicated region
        $region17: #{tpu_custom_call.1} parent=11 // pred_check
          %p552 = pneg %p130
        $region18: #{tpu_custom_call.1} parent=11 // pred_check_branch
          %554 = sbr.rel (%p552) target = $region20
        $region19: #{tpu_custom_call.1} parent=11 // pred_region
          _
        $region20: #{tpu_custom_call.1} parent=11 // pred_fallthru
          _
        // Predicated region
        $region21: #{tpu_custom_call.1} parent=11 // pred_check
          %p555 = pneg %p151
        $region22: #{tpu_custom_call.1} parent=11 // pred_check_branch
          %557 = sbr.rel (%p555) target = $region24
        $region23: #{tpu_custom_call.1} parent=11 // pred_region
          _
        $region24: #{tpu_custom_call.1} parent=11 // pred_fallthru
          _
        // Predicated region
        $region25: #{tpu_custom_call.1} parent=11 // pred_check
          %p558 = pneg %p172
        $region26: #{tpu_custom_call.1} parent=11 // pred_check_branch
          %560 = sbr.rel (%p558) target = $region28
        $region27: #{tpu_custom_call.1} parent=11 // pred_region
          _
        $region28: #{tpu_custom_call.1} parent=11 // pred_fallthru
          _
        // Predicated region
        $region29: #{tpu_custom_call.1} parent=11 // pred_check
          %p561 = pneg %p193
        $region30: #{tpu_custom_call.1} parent=11 // pred_check_branch
          %563 = sbr.rel (%p561) target = $region32
        $region31: #{tpu_custom_call.1} parent=11 // pred_region
          %s565 = ssub.s32 256, 256
          %566 = vsyncadd [#allocation6], %s565
          %s567 = sshll.u32 [#allocation5], 4
          %s568 = int_to_ptr.vmem [resolvable:$true] %s567
          %573 = dma.hbm_to_vmem [thread:$0]  %s6, 256, %s568, [#allocation6], 64, 64, 4
        $region32: #{tpu_custom_call.1} parent=11 // pred_fallthru
          _
        // Predicated region
        $region33: #{tpu_custom_call.1} parent=11 // pred_check
          %p574 = pneg %p214
        $region34: #{tpu_custom_call.1} parent=11 // pred_check_branch
          %576 = sbr.rel (%p574) target = $region36
        $region35: #{tpu_custom_call.1} parent=11 // pred_region
          _
        $region36: #{tpu_custom_call.1} parent=11 // pred_fallthru
          _
        // Predicated region
        $region37: #{tpu_custom_call.1} parent=11 // pred_check
          %p577 = pneg %p235
        $region38: #{tpu_custom_call.1} parent=11 // pred_check_branch
          %579 = sbr.rel (%p577) target = $region40
        $region39: #{tpu_custom_call.1} parent=11 // pred_region
          %s581 = ssub.s32 256, 256
          %582 = vsyncadd [#allocation6], %s581
          %s583 = sshll.u32 [#allocation7], 4
          %s584 = int_to_ptr.vmem [resolvable:$true] %s583
          %589 = dma.hbm_to_vmem [thread:$0]  %s8, 256, %s584, [#allocation6], 64, 64, 4
        $region40: #{tpu_custom_call.1} parent=11 // pred_fallthru
          _
        // Predicated region
        $region41: #{tpu_custom_call.1} parent=11 // pred_check
          %p590 = pneg %p256
        $region42: #{tpu_custom_call.1} parent=11 // pred_check_branch
          %592 = sbr.rel (%p590) target = $region44
        $region43: #{tpu_custom_call.1} parent=11 // pred_region
          _
        $region44: #{tpu_custom_call.1} parent=11 // pred_fallthru
          _
        // Predicated region
        $region45: #{tpu_custom_call.1} parent=11 // pred_check
          %p593 = pneg %p277
        $region46: #{tpu_custom_call.1} parent=11 // pred_check_branch
          %595 = sbr.rel (%p593) target = $region48
        $region47: #{tpu_custom_call.1} parent=11 // pred_region
          %s597 = ssub.s32 256, 256
          %598 = vsyncadd [#allocation9], %s597
          %s599 = sshll.u32 [#allocation8], 4
          %s600 = int_to_ptr.vmem [resolvable:$true] %s599
          %605 = dma.hbm_to_vmem [thread:$0]  %s10, 256, %s600, [#allocation9], 64, 64, 4
        $region48: #{tpu_custom_call.1} parent=11 // pred_fallthru
          _
        // Predicated region
        $region49: #{tpu_custom_call.1} parent=11 // pred_check
          %p606 = pneg %p298
        $region50: #{tpu_custom_call.1} parent=11 // pred_check_branch
          %608 = sbr.rel (%p606) target = $region52
        $region51: #{tpu_custom_call.1} parent=11 // pred_region
          _
        $region52: #{tpu_custom_call.1} parent=11 // pred_fallthru
          _
        // Predicated region
        $region53: #{tpu_custom_call.1} parent=11 // pred_check
          %p609 = pneg %p319
        $region54: #{tpu_custom_call.1} parent=11 // pred_check_branch
          %611 = sbr.rel (%p609) target = $region56
        $region55: #{tpu_custom_call.1} parent=11 // pred_region
          %s613 = ssub.s32 256, 256
          %614 = vsyncadd [#allocation9], %s613
          %s615 = sshll.u32 [#allocation10], 4
          %s616 = int_to_ptr.vmem [resolvable:$true] %s615
          %621 = dma.hbm_to_vmem [thread:$0]  %s12, 256, %s616, [#allocation9], 64, 64, 4
        $region56: #{tpu_custom_call.1} parent=11 // pred_fallthru
          _
        // Predicated region
        $region57: #{tpu_custom_call.1} parent=11 // pred_check
          %p622 = pneg %p340
        $region58: #{tpu_custom_call.1} parent=11 // pred_check_branch
          %624 = sbr.rel (%p622) target = $region60
        $region59: #{tpu_custom_call.1} parent=11 // pred_region
          _
        $region60: #{tpu_custom_call.1} parent=11 // pred_fallthru
          _
        // Predicated region
        $region61: #{tpu_custom_call.1} parent=11 // pred_check
          %p625 = pneg %p361
        $region62: #{tpu_custom_call.1} parent=11 // pred_check_branch
          %627 = sbr.rel (%p625) target = $region64
        $region63: #{tpu_custom_call.1} parent=11 // pred_region
          _
        $region64: #{tpu_custom_call.1} parent=11 // pred_fallthru
          _
        // Predicated region
        $region65: #{tpu_custom_call.1} parent=11 // pred_check
          %p628 = pneg %p382
        $region66: #{tpu_custom_call.1} parent=11 // pred_check_branch
          %630 = sbr.rel (%p628) target = $region68
        $region67: #{tpu_custom_call.1} parent=11 // pred_region
          _
        $region68: #{tpu_custom_call.1} parent=11 // pred_fallthru
          _
        // Predicated region
        $region69: #{tpu_custom_call.1} parent=11 // pred_check
          %p631 = pneg %p403
        $region70: #{tpu_custom_call.1} parent=11 // pred_check_branch
          %633 = sbr.rel (%p631) target = $region72
        $region71: #{tpu_custom_call.1} parent=11 // pred_region
          _
        $region72: #{tpu_custom_call.1} parent=11 // pred_fallthru
          _
        // Predicated region
        $region73: #{tpu_custom_call.1} parent=11 // pred_check
          %p634 = pneg %p424
        $region74: #{tpu_custom_call.1} parent=11 // pred_check_branch
          %636 = sbr.rel (%p634) target = $region76
        $region75: #{tpu_custom_call.1} parent=11 // pred_region
          _
        $region76: #{tpu_custom_call.1} parent=11 // pred_fallthru
          _
        // Predicated region
        $region77: #{tpu_custom_call.1} parent=11 // pred_check
          %p637 = pneg %p445
        $region78: #{tpu_custom_call.1} parent=11 // pred_check_branch
          %639 = sbr.rel (%p637) target = $region80
        $region79: #{tpu_custom_call.1} parent=11 // pred_region
          _
        $region80: #{tpu_custom_call.1} parent=11 // pred_fallthru
          _
        // Predicated region
        $region81: #{tpu_custom_call.1} parent=11 // pred_check
          %p640 = pneg %p466
        $region82: #{tpu_custom_call.1} parent=11 // pred_check_branch
          %642 = sbr.rel (%p640) target = $region84
        $region83: #{tpu_custom_call.1} parent=11 // pred_region
          _
        $region84: #{tpu_custom_call.1} parent=11 // pred_fallthru
          _
        // Predicated region
        $region85: #{tpu_custom_call.1} parent=11 // pred_check
          %p643 = pneg %p487
        $region86: #{tpu_custom_call.1} parent=11 // pred_check_branch
          %645 = sbr.rel (%p643) target = $region88
        $region87: #{tpu_custom_call.1} parent=11 // pred_region
          _
        $region88: #{tpu_custom_call.1} parent=11 // pred_fallthru
          _
        // Predicated region
        $region89: #{tpu_custom_call.1} parent=11 // pred_check
          %p646 = pneg %p508
        $region90: #{tpu_custom_call.1} parent=11 // pred_check_branch
          %648 = sbr.rel (%p646) target = $region92
        $region91: #{tpu_custom_call.1} parent=11 // pred_region
          _
        $region92: #{tpu_custom_call.1} parent=11 // pred_fallthru
          _
      $region12: #{tpu_custom_call.1} parent=5 // pred_fallthru
        _
      %p649 = scmp.lt.s32.totalorder %s36, 2
      // Predicated region
      $region93: #{tpu_custom_call.1} parent=5 // pred_check
        %p650 = pneg %p649
      $region94: #{tpu_custom_call.1} parent=5 // pred_check_branch
        %652 = sbr.rel (%p650) target = $region96
      $region95: #{tpu_custom_call.1} parent=5 // pred_region
        // Predicated region
        $region97: #{tpu_custom_call.1} parent=95 // pred_check
          %p653 = pneg %p56
        $region98: #{tpu_custom_call.1} parent=95 // pred_check_branch
          %655 = sbr.rel (%p653) target = $region100
        $region99: #{tpu_custom_call.1} parent=95 // pred_region
          %p656 = scmp.lt.s32.totalorder %s36, 1
          %s657 = scalar_select %p656, %s36, 1
          %s658 = smul.addr %s657, 8
          %s659 = scalar_lea.vmem %s0, %s658
        $region100: #{tpu_custom_call.1} parent=95 // pred_fallthru
          _
        // Predicated region
        $region101: #{tpu_custom_call.1} parent=95 // pred_check
          %p660 = pneg %p82
        $region102: #{tpu_custom_call.1} parent=95 // pred_check_branch
          %662 = sbr.rel (%p660) target = $region104
        $region103: #{tpu_custom_call.1} parent=95 // pred_region
          %s663 = sand.u32 %s72, 1
          %s664 = scalar_lea.sflag [#allocation3], %s663
          %s665 = sand.u32 %s72, 1
          %s666 = smul.addr %s665, 4
          %s667 = scalar_lea.vmem [#allocation2], %s666
          %s669 = ssub.s32 64, 64
          %670 = vsyncadd %s664, %s669
          %s671 = smul.addr %s36, 64
          %s672 = scalar_lea.hbm %s1, %s671
          %s674 = sshll.u32 %s667, 4
          %s675 = int_to_ptr.vmem [resolvable:$true] %s674
          %677 = dma.hbm_to_vmem [thread:$0]  %s672, 64, %s675, %s664
        $region104: #{tpu_custom_call.1} parent=95 // pred_fallthru
          _
      $region96: #{tpu_custom_call.1} parent=5 // pred_fallthru
        _
      %p678 = scmp.le.s32.totalorder 1, %s36
      %p679 = scmp.lt.s32.totalorder %s36, 3
      %p680 = pnand %p678, %p679
      %p681 = pneg %p680
      // Predicated region
      $region105: #{tpu_custom_call.1} parent=5 // pred_check
        _
      $region106: #{tpu_custom_call.1} parent=5 // pred_check_branch
        %683 = sbr.rel (%p680) target = $region108
      $region107: #{tpu_custom_call.1} parent=5 // pred_region
        %s684 = ssub.s32 %s36, 1
        %s685 = sand.u32 %s75, 1
        %s686 = scalar_lea.sflag [#allocation3], %s685
        %s687 = sand.u32 %s75, 1
        %s688 = smul.addr %s687, 4
        %s689 = scalar_lea.vmem [#allocation2], %s688
        // Predicated region
        $region109: #{tpu_custom_call.1} parent=107 // pred_check
          %p690 = pneg %p88
        $region110: #{tpu_custom_call.1} parent=107 // pred_check_branch
          %692 = sbr.rel (%p690) target = $region112
        $region111: #{tpu_custom_call.1} parent=107 // pred_region
          %693 = dma.done %s686, 64
        $region112: #{tpu_custom_call.1} parent=107 // pred_fallthru
          _
        // Predicated region
        $region113: #{tpu_custom_call.1} parent=107 // pred_check
          %p694 = pneg %p193
        $region114: #{tpu_custom_call.1} parent=107 // pred_check_branch
          %696 = sbr.rel (%p694) target = $region116
        $region115: #{tpu_custom_call.1} parent=107 // pred_region
          %697 = dma.done [#allocation6], 256
        $region116: #{tpu_custom_call.1} parent=107 // pred_fallthru
          _
        // Predicated region
        $region117: #{tpu_custom_call.1} parent=107 // pred_check
          %p698 = pneg %p235
        $region118: #{tpu_custom_call.1} parent=107 // pred_check_branch
          %700 = sbr.rel (%p698) target = $region120
        $region119: #{tpu_custom_call.1} parent=107 // pred_region
          %701 = dma.done [#allocation6], 256
        $region120: #{tpu_custom_call.1} parent=107 // pred_fallthru
          _
        // Predicated region
        $region121: #{tpu_custom_call.1} parent=107 // pred_check
          %p702 = pneg %p277
        $region122: #{tpu_custom_call.1} parent=107 // pred_check_branch
          %704 = sbr.rel (%p702) target = $region124
        $region123: #{tpu_custom_call.1} parent=107 // pred_region
          %705 = dma.done [#allocation9], 256
        $region124: #{tpu_custom_call.1} parent=107 // pred_fallthru
          _
        // Predicated region
        $region125: #{tpu_custom_call.1} parent=107 // pred_check
          %p706 = pneg %p319
        $region126: #{tpu_custom_call.1} parent=107 // pred_check_branch
          %708 = sbr.rel (%p706) target = $region128
        $region127: #{tpu_custom_call.1} parent=107 // pred_region
          %709 = dma.done [#allocation9], 256
        $region128: #{tpu_custom_call.1} parent=107 // pred_fallthru
          _
        %p710 = scmp.lt.s32.totalorder %s41, 1
        %s711 = scalar_select %p710, %s41, 1
        %s712 = smul.addr %s711, 8
        %s713 = scalar_lea.vmem %s0, %s712
        %p714 = pneg %p62
        %p715 = pneg %p59
        %s716 = sand.u32 %s75, 1
        %s717 = scalar_lea.sflag [#allocation3], %s716
        %s718 = sand.u32 %s75, 1
        %s719 = smul.addr %s718, 4
        %s720 = scalar_lea.vmem [#allocation2], %s719
        %p721 = pneg %p88
        %p722 = pneg %p85
        %p723 = pneg %p109
        %p724 = pneg %p106
        %p725 = pneg %p130
        %p726 = pneg %p127
        %p727 = pneg %p151
        %p728 = pneg %p148
        %p729 = pneg %p172
        %p730 = pneg %p169
        %p731 = pneg %p193
        %p732 = pneg %p190
        %p733 = pneg %p214
        %p734 = pneg %p211
        %p735 = pneg %p235
        %p736 = pneg %p232
        %p737 = pneg %p256
        %p738 = pneg %p253
        %p739 = pneg %p277
        %p740 = pneg %p274
        %p741 = pneg %p298
        %p742 = pneg %p295
        %p743 = pneg %p319
        %p744 = pneg %p316
        %p745 = pneg %p340
        %p746 = pneg %p337
        %p747 = pneg %p361
        %p748 = pneg %p358
        %p749 = pneg %p382
        %p750 = pneg %p379
        %p751 = pneg %p403
        %p752 = pneg %p400
        %p753 = pneg %p424
        %p754 = pneg %p421
        %p755 = pneg %p445
        %p756 = pneg %p442
        %p757 = pneg %p466
        %p758 = pneg %p463
        %p759 = pneg %p487
        %p760 = pneg %p484
        %p761 = pneg %p508
        %p762 = pneg %p505
        %p763 = pneg %p534
        %p764 = pneg %p531
        %s765 = sand.u32 %s521, 1
        %s766 = scalar_lea.sflag [#allocation4], %s765
        %s767 = sand.u32 %s521, 1
        %s768 = smul.addr %s767, 8
        %s769 = scalar_lea.vmem [#allocation11], %s768
        %p770 = scmp.lt.s32.totalorder %s41, 1
        %s771 = scalar_select %p770, %s41, 1
        %s772 = smul.addr %s771, 8
        %s773 = scalar_lea.vmem %s0, %s772
        %v775 = vld [vmem:[%s773] sm:$0xff]
        %v776 = vld [vmem:[%s689] sm:$0xf]
        %v777 = vld [vmem:[%s2] sm:$0xf]
        %v778 = vld [vmem:[%s2 + $0x4] sm:$0xf]
        %v779 = vld [vmem:[%s2 + $0x8] sm:$0xf]
        %v780 = vld [vmem:[%s2 + $0xc] sm:$0xf]
        %v781 = vld [vmem:[%s4] sm:$0xf]
        %v782 = vld [vmem:[%s4 + $0x4] sm:$0xf]
        %v783 = vld [vmem:[%s4 + $0x8] sm:$0xf]
        %v784 = vld [vmem:[%s4 + $0xc] sm:$0xf]
        %v785 = vld [vmem:[#allocation5] sm:$0xf]
        %v786 = vld [vmem:[#allocation5 + $0x4] sm:$0xf]
        %v787 = vld [vmem:[#allocation5 + $0x8] sm:$0xf]
        %v788 = vld [vmem:[#allocation5 + $0xc] sm:$0xf]
        %v789 = vld [vmem:[#allocation7] sm:$0xf]
        %v790 = vld [vmem:[#allocation7 + $0x4] sm:$0xf]
        %v791 = vld [vmem:[#allocation7 + $0x8] sm:$0xf]
        %v792 = vld [vmem:[#allocation7 + $0xc] sm:$0xf]
        %v793 = vld [vmem:[#allocation8] sm:$0xf]
        %v794 = vld [vmem:[#allocation8 + $0x4] sm:$0xf]
        %v795 = vld [vmem:[#allocation8 + $0x8] sm:$0xf]
        %v796 = vld [vmem:[#allocation8 + $0xc] sm:$0xf]
        %v797 = vld [vmem:[#allocation10] sm:$0xf]
        %v798 = vld [vmem:[#allocation10 + $0x4] sm:$0xf]
        %v799 = vld [vmem:[#allocation10 + $0x8] sm:$0xf]
        %v800 = vld [vmem:[#allocation10 + $0xc] sm:$0xf]
        %v801 = vld [vmem:[%s14] sm:$0xf]
        %v802 = vld [vmem:[%s14 + $0x4] sm:$0xf]
        %v803 = vld [vmem:[%s14 + $0x8] sm:$0xf]
        %v804 = vld [vmem:[%s14 + $0xc] sm:$0xf]
        %v805 = vld [vmem:[%s14 + $0x10] sm:$0xf]
        %v806 = vld [vmem:[%s14 + $0x14] sm:$0xf]
        %v807 = vld [vmem:[%s14 + $0x18] sm:$0xf]
        %v808 = vld [vmem:[%s14 + $0x1c] sm:$0xf]
        %v809 = vld [vmem:[%s3] sm:$0x1]
        %v811 = vlaneseq
        %v812 = vshrl.u32 %v811, 7
        %v813 = vsub.s32 0, %v812
        %v814 = vrot.slane %v809, %v813
        %v816 = vld [vmem:[%s5] sm:$0x1]
        %v818 = vlaneseq
        %v819 = vshrl.u32 %v818, 7
        %v820 = vsub.s32 0, %v819
        %v821 = vrot.slane %v816, %v820
        %v823 = vld [vmem:[%s7] sm:$0x1]
        %v825 = vlaneseq
        %v826 = vshrl.u32 %v825, 7
        %v827 = vsub.s32 0, %v826
        %v828 = vrot.slane %v823, %v827
        %v830 = vld [vmem:[%s11] sm:$0x1]
        %v832 = vlaneseq
        %v833 = vshrl.u32 %v832, 7
        %v834 = vsub.s32 0, %v833
        %v835 = vrot.slane %v830, %v834
        %v837 = vld [vmem:[%s13] sm:$0x1]
        %v839 = vlaneseq
        %v840 = vshrl.u32 %v839, 7
        %v841 = vsub.s32 0, %v840
        %v842 = vrot.slane %v837, %v841
        %v844 = vld [vmem:[%s15] sm:$0x1]
        %v846 = vlaneseq
        %v847 = vshrl.u32 %v846, 7
        %v848 = vsub.s32 0, %v847
        %v849 = vrot.slane %v844, %v848
        %v851 = vld [vmem:[%s16] sm:$0x1]
        %v853 = vlaneseq
        %v854 = vshrl.u32 %v853, 7
        %v855 = vsub.s32 0, %v854
        %v856 = vrot.slane %v851, %v855
        %v858 = vld [vmem:[%s17] sm:$0x1]
        %v860 = vlaneseq
        %v861 = vshrl.u32 %v860, 7
        %v862 = vsub.s32 0, %v861
        %v863 = vrot.slane %v858, %v862
        %v865 = vld [vmem:[%s18] sm:$0x1]
        %v867 = vlaneseq
        %v868 = vshrl.u32 %v867, 7
        %v869 = vsub.s32 0, %v868
        %v870 = vrot.slane %v865, %v869
        %v872 = vld [vmem:[%s19] sm:$0x1]
        %v874 = vlaneseq
        %v875 = vshrl.u32 %v874, 7
        %v876 = vsub.s32 0, %v875
        %v877 = vrot.slane %v872, %v876
        %v879 = vld [vmem:[%s20] sm:$0x1]
        %v881 = vlaneseq
        %v882 = vshrl.u32 %v881, 7
        %v883 = vsub.s32 0, %v882
        %v884 = vrot.slane %v879, %v883
        %v886 = vld [vmem:[%s21] sm:$0x1]
        %v888 = vlaneseq
        %v889 = vshrl.u32 %v888, 7
        %v890 = vsub.s32 0, %v889
        %v891 = vrot.slane %v886, %v890
        %v893 = vld [vmem:[%s9] sm:$0x1]
        %v895 = vlaneseq
        %v896 = vshrl.u32 %v895, 7
        %v897 = vsub.s32 0, %v896
        %v898 = vrot.slane %v893, %v897
        %v904 = vunpack.c.l.b16 %v789
        %v905 = vunpack.c.l.b16 %v790
        %v906 = vunpack.c.l.b16 %v791
        %v907 = vunpack.c.l.b16 %v792
        %v908 = vpack.c.b16 %v905, %v904
        %v909 = vpack.c.b16 %v907, %v906
        %vm912 = vcmask 261120
        %v914 = vsel %vm912, %v776, 0
        %916 = vmatprep.subr.bf16.mxu0 0
        %917 = vmatpush1.bf16.msra.mxu0 0
        %918 = vmatprep.subr.bf16.mxu0 0
        %919 = vmatpush1.bf16.msra.mxu0 0
        %920 = vmatprep.subr.bf16.mxu0 0
        %921 = vmatpush1.bf16.msra.mxu0 0
        %922 = vmatprep.subr.bf16.mxu0 0
        %923 = vmatpush1.bf16.msra.mxu0 0
        %924 = vmatprep.subr.bf16.mxu0 0
        %925 = vmatpush1.bf16.msra.mxu0 0
        %926 = vmatprep.subr.bf16.mxu0 0
        %927 = vmatpush1.bf16.msra.mxu0 0
        %928 = vmatprep.subr.bf16.mxu0 0
        %929 = vmatpush1.bf16.msra.mxu0 %v909
        %930 = vmatprep.subr.bf16.mxu0 0
        %931 = vmatpush1.bf16.msra.mxu0 %v908
        %932 = vmatprep.subr.bf16.mxu0 0
        %933 = vmatpush2.bf16.msra.mxu0 0
        %934 = vmatprep.subr.bf16.mxu0 0
        %935 = vmatpush2.bf16.msra.mxu0 0
        %936 = vmatprep.subr.bf16.mxu0 0
        %937 = vmatpush2.bf16.msra.mxu0 0
        %938 = vmatprep.subr.bf16.mxu0 0
        %939 = vmatpush2.bf16.msra.mxu0 0
        %940 = vmatprep.subr.bf16.mxu0 0
        %941 = vmatpush2.bf16.msra.mxu0 0
        %942 = vmatprep.subr.bf16.mxu0 0
        %943 = vmatpush2.bf16.msra.mxu0 0
        %944 = vmatprep.subr.bf16.mxu0 0
        %945 = vmatpush2.bf16.msra.mxu0 0
        %946 = vmatprep.subr.bf16.mxu0 0
        %947 = vmatpush2.bf16.msra.mxu0 0
        %948 = vmatprep.mubr.bf16.mxu0 0
        %949 = vmatmul.mubr.bf16.gmra.mxu0 %v914
        %v950 = vpop.f32.mrf.mxu0
        %v951 = vadd.f32 %v898, %v950
        %v952 = vpop.f32.mrf.mxu0
        %v953 = vpop.f32.mrf.mxu0
        %v954 = vpop.f32.mrf.mxu0
        %955 = vdwg.mxu0
        %v956 = vpack.c.bf16 %v951, %v951
        %v957 = vpack.c.bf16 %v775, %v775
        %v962 = vunpack.c.l.b16 %v777
        %v963 = vunpack.c.l.b16 %v778
        %v964 = vunpack.c.l.b16 %v779
        %v965 = vunpack.c.l.b16 %v780
        %v966 = vpack.c.b16 %v963, %v962
        %v967 = vpack.c.b16 %v965, %v964
        %v971 = vsel %vm912, %v957, 0
        %973 = vmatprep.subr.bf16.mxu0 0
        %974 = vmatpush1.bf16.msra.mxu0 0
        %975 = vmatprep.subr.bf16.mxu0 0
        %976 = vmatpush1.bf16.msra.mxu0 0
        %977 = vmatprep.subr.bf16.mxu0 0
        %978 = vmatpush1.bf16.msra.mxu0 0
        %979 = vmatprep.subr.bf16.mxu0 0
        %980 = vmatpush1.bf16.msra.mxu0 0
        %981 = vmatprep.subr.bf16.mxu0 0
        %982 = vmatpush1.bf16.msra.mxu0 0
        %983 = vmatprep.subr.bf16.mxu0 0
        %984 = vmatpush1.bf16.msra.mxu0 0
        %985 = vmatprep.subr.bf16.mxu0 0
        %986 = vmatpush1.bf16.msra.mxu0 %v967
        %987 = vmatprep.subr.bf16.mxu0 0
        %988 = vmatpush1.bf16.msra.mxu0 %v966
        %989 = vmatprep.subr.bf16.mxu0 0
        %990 = vmatpush2.bf16.msra.mxu0 0
        %991 = vmatprep.subr.bf16.mxu0 0
        %992 = vmatpush2.bf16.msra.mxu0 0
        %993 = vmatprep.subr.bf16.mxu0 0
        %994 = vmatpush2.bf16.msra.mxu0 0
        %995 = vmatprep.subr.bf16.mxu0 0
        %996 = vmatpush2.bf16.msra.mxu0 0
        %997 = vmatprep.subr.bf16.mxu0 0
        %998 = vmatpush2.bf16.msra.mxu0 0
        %999 = vmatprep.subr.bf16.mxu0 0
        %1000 = vmatpush2.bf16.msra.mxu0 0
        %1001 = vmatprep.subr.bf16.mxu0 0
        %1002 = vmatpush2.bf16.msra.mxu0 0
        %1003 = vmatprep.subr.bf16.mxu0 0
        %1004 = vmatpush2.bf16.msra.mxu0 0
        %1005 = vmatprep.mubr.bf16.mxu0 0
        %1006 = vmatmul.mubr.bf16.gmra.mxu0 %v971
        %v1007 = vpop.f32.mrf.mxu0
        %v1008 = vadd.f32 %v814, %v1007
        %v1009 = vpop.f32.mrf.mxu0
        %v1010 = vpop.f32.mrf.mxu0
        %v1011 = vpop.f32.mrf.mxu0
        %1012 = vdwg.mxu0
        %v1013 = vpack.c.bf16 %v1008, %v1008
        %1015 = vrot.lane.b32.xlu0 %v1013, 96
        %v1016 = vpop.permute.xlu0 %1015
        %vm1017 = vcmask 64512
        %v1019 = vsel %vm1017, %v1013, 0
        %v1022 = vsel %vm1017, %v1016, 0
        %1024 = vmatprep.subr.bf16.mxu0 0
        %1025 = vmatpush1.bf16.xpose.msra.mxu0 0
        %1026 = vmatprep.subr.bf16.mxu0 0
        %1027 = vmatpush1.bf16.xpose.msra.mxu0 0
        %1028 = vmatprep.subr.bf16.mxu0 0
        %1029 = vmatpush1.bf16.xpose.msra.mxu0 0
        %1030 = vmatprep.subr.bf16.mxu0 0
        %1031 = vmatpush1.bf16.xpose.msra.mxu0 0
        %1032 = vmatprep.subr.bf16.mxu0 0
        %1033 = vmatpush1.bf16.xpose.msra.mxu0 0
        %1034 = vmatprep.subr.bf16.mxu0 0
        %1035 = vmatpush1.bf16.xpose.msra.mxu0 0
        %1036 = vmatprep.subr.bf16.mxu0 0
        %1037 = vmatpush1.bf16.xpose.msra.mxu0 0
        %1038 = vmatprep.subr.bf16.mxu0 0
        %1039 = vmatpush1.bf16.xpose.msra.mxu0 %v1022
        %1040 = vmatprep.subr.bf16.mxu0 0
        %1041 = vmatpush2.bf16.xpose.msra.mxu0 0
        %1042 = vmatprep.subr.bf16.mxu0 0
        %1043 = vmatpush2.bf16.xpose.msra.mxu0 0
        %1044 = vmatprep.subr.bf16.mxu0 0
        %1045 = vmatpush2.bf16.xpose.msra.mxu0 0
        %1046 = vmatprep.subr.bf16.mxu0 0
        %1047 = vmatpush2.bf16.xpose.msra.mxu0 0
        %1048 = vmatprep.subr.bf16.mxu0 0
        %1049 = vmatpush2.bf16.xpose.msra.mxu0 0
        %1050 = vmatprep.subr.bf16.mxu0 0
        %1051 = vmatpush2.bf16.xpose.msra.mxu0 0
        %1052 = vmatprep.subr.bf16.mxu0 0
        %1053 = vmatpush2.bf16.xpose.msra.mxu0 0
        %1054 = vmatprep.subr.bf16.mxu0 0
        %1055 = vmatpush2.bf16.xpose.msra.mxu0 0
        %1056 = vmatprep.mubr.bf16.mxu0 0
        %1057 = vmatmul.mubr.bf16.gmra.mxu0 %v1019
        %v1058 = vpop.f32.mrf.mxu0
        %v1059 = vadd.f32 0.0, %v1058
        %v1060 = vpop.f32.mrf.mxu0
        %v1061 = vpop.f32.mrf.mxu0
        %v1062 = vpop.f32.mrf.mxu0
        %1063 = vdwg.mxu0
        %v1064 = vsel %vm1017, %v1059, -inf
        %1065 = vmax.xlane.f32.xlu0 %v1064
        %v1066 = vpop.xlane.xlu0 %1065
        %v1067 = vsub.f32 %v1059, %v1066
        %v1068 = vmul.f32 %v1067, 1.442695
        %v1069 = vpow.pop %v1068
        %v1070 = vsel %vm1017, %v1069, 0.0
        %1071 = vadd.xlane.f32.xlu0 %v1070
        %v1072 = vpop.xlane.xlu0 %1071
        %v1073 = vrcp.pop %v1072
        %v1074 = vmul.f32 %v1072, %v1073
        %v1075 = vsub.f32 2.0, %v1074
        %v1076 = vmul.f32 %v1073, %v1075
        %v1077 = vmul.f32 %v1069, %v1076
        %v1078 = vpack.c.bf16 %v1077, %v1077
        %1079 = vrot.lane.b32.xlu0 %v1013, 64
        %v1080 = vpop.permute.xlu0 %1079
        %v1082 = vsel %vm1017, %v1078, 0
        %vm1084 = vcmask 1043456
        %v1086 = vsel %vm1084, %v1080, 0
        %1088 = vmatprep.subr.bf16.mxu0 0
        %1089 = vmatpush1.bf16.msra.mxu0 0
        %1090 = vmatprep.subr.bf16.mxu0 0
        %1091 = vmatpush1.bf16.msra.mxu0 0
        %1092 = vmatprep.subr.bf16.mxu0 0
        %1093 = vmatpush1.bf16.msra.mxu0 0
        %1094 = vmatprep.subr.bf16.mxu0 0
        %1095 = vmatpush1.bf16.msra.mxu0 0
        %1096 = vmatprep.subr.bf16.mxu0 0
        %1097 = vmatpush1.bf16.msra.mxu0 0
        %1098 = vmatprep.subr.bf16.mxu0 0
        %1099 = vmatpush1.bf16.msra.mxu0 0
        %1100 = vmatprep.subr.bf16.mxu0 0
        %1101 = vmatpush1.bf16.msra.mxu0 0
        %1102 = vmatprep.subr.bf16.mxu0 0
        %1103 = vmatpush1.bf16.msra.mxu0 %v1086
        %1104 = vmatprep.subr.bf16.mxu0 0
        %1105 = vmatpush2.bf16.msra.mxu0 0
        %1106 = vmatprep.subr.bf16.mxu0 0
        %1107 = vmatpush2.bf16.msra.mxu0 0
        %1108 = vmatprep.subr.bf16.mxu0 0
        %1109 = vmatpush2.bf16.msra.mxu0 0
        %1110 = vmatprep.subr.bf16.mxu0 0
        %1111 = vmatpush2.bf16.msra.mxu0 0
        %1112 = vmatprep.subr.bf16.mxu0 0
        %1113 = vmatpush2.bf16.msra.mxu0 0
        %1114 = vmatprep.subr.bf16.mxu0 0
        %1115 = vmatpush2.bf16.msra.mxu0 0
        %1116 = vmatprep.subr.bf16.mxu0 0
        %1117 = vmatpush2.bf16.msra.mxu0 0
        %1118 = vmatprep.subr.bf16.mxu0 0
        %1119 = vmatpush2.bf16.msra.mxu0 0
        %1120 = vmatprep.mubr.bf16.mxu0 0
        %1121 = vmatmul.mubr.bf16.gmra.mxu0 %v1082
        %v1122 = vpop.f32.mrf.mxu0
        %v1123 = vadd.f32 0.0, %v1122
        %v1124 = vpop.f32.mrf.mxu0
        %v1125 = vpop.f32.mrf.mxu0
        %v1126 = vpop.f32.mrf.mxu0
        %1127 = vdwg.mxu0
        %1128 = vrot.lane.b32.xlu0 %v1013, 120
        %v1129 = vpop.permute.xlu0 %1128
        %1130 = vrot.lane.b32.xlu0 %v1013, 88
        %v1131 = vpop.permute.xlu0 %1130
        %v1133 = vsel %vm1017, %v1129, 0
        %v1136 = vsel %vm1017, %v1131, 0
        %1138 = vmatprep.subr.bf16.mxu0 0
        %1139 = vmatpush1.bf16.xpose.msra.mxu0 0
        %1140 = vmatprep.subr.bf16.mxu0 0
        %1141 = vmatpush1.bf16.xpose.msra.mxu0 0
        %1142 = vmatprep.subr.bf16.mxu0 0
        %1143 = vmatpush1.bf16.xpose.msra.mxu0 0
        %1144 = vmatprep.subr.bf16.mxu0 0
        %1145 = vmatpush1.bf16.xpose.msra.mxu0 0
        %1146 = vmatprep.subr.bf16.mxu0 0
        %1147 = vmatpush1.bf16.xpose.msra.mxu0 0
        %1148 = vmatprep.subr.bf16.mxu0 0
        %1149 = vmatpush1.bf16.xpose.msra.mxu0 0
        %1150 = vmatprep.subr.bf16.mxu0 0
        %1151 = vmatpush1.bf16.xpose.msra.mxu0 0
        %1152 = vmatprep.subr.bf16.mxu0 0
        %1153 = vmatpush1.bf16.xpose.msra.mxu0 %v1136
        %1154 = vmatprep.subr.bf16.mxu0 0
        %1155 = vmatpush2.bf16.xpose.msra.mxu0 0
        %1156 = vmatprep.subr.bf16.mxu0 0
        %1157 = vmatpush2.bf16.xpose.msra.mxu0 0
        %1158 = vmatprep.subr.bf16.mxu0 0
        %1159 = vmatpush2.bf16.xpose.msra.mxu0 0
        %1160 = vmatprep.subr.bf16.mxu0 0
        %1161 = vmatpush2.bf16.xpose.msra.mxu0 0
        %1162 = vmatprep.subr.bf16.mxu0 0
        %1163 = vmatpush2.bf16.xpose.msra.mxu0 0
        %1164 = vmatprep.subr.bf16.mxu0 0
        %1165 = vmatpush2.bf16.xpose.msra.mxu0 0
        %1166 = vmatprep.subr.bf16.mxu0 0
        %1167 = vmatpush2.bf16.xpose.msra.mxu0 0
        %1168 = vmatprep.subr.bf16.mxu0 0
        %1169 = vmatpush2.bf16.xpose.msra.mxu0 0
        %1170 = vmatprep.mubr.bf16.mxu0 0
        %1171 = vmatmul.mubr.bf16.gmra.mxu0 %v1133
        %v1172 = vpop.f32.mrf.mxu0
        %v1173 = vadd.f32 0.0, %v1172
        %v1174 = vpop.f32.mrf.mxu0
        %v1175 = vpop.f32.mrf.mxu0
        %v1176 = vpop.f32.mrf.mxu0
        %1177 = vdwg.mxu0
        %v1178 = vsel %vm1017, %v1173, -inf
        %1179 = vmax.xlane.f32.xlu0 %v1178
        %v1180 = vpop.xlane.xlu0 %1179
        %v1181 = vsub.f32 %v1173, %v1180
        %v1182 = vmul.f32 %v1181, 1.442695
        %v1183 = vpow.pop %v1182
        %v1184 = vsel %vm1017, %v1183, 0.0
        %1185 = vadd.xlane.f32.xlu0 %v1184
        %v1186 = vpop.xlane.xlu0 %1185
        %v1187 = vrcp.pop %v1186
        %v1188 = vmul.f32 %v1186, %v1187
        %v1189 = vsub.f32 2.0, %v1188
        %v1190 = vmul.f32 %v1187, %v1189
        %v1191 = vmul.f32 %v1183, %v1190
        %v1192 = vpack.c.bf16 %v1191, %v1191
        %1193 = vrot.lane.b32.xlu0 %v1013, 56
        %v1194 = vpop.permute.xlu0 %1193
        %v1196 = vsel %vm1017, %v1192, 0
        %v1199 = vsel %vm1084, %v1194, 0
        %1201 = vmatprep.subr.bf16.mxu0 0
        %1202 = vmatpush1.bf16.msra.mxu0 0
        %1203 = vmatprep.subr.bf16.mxu0 0
        %1204 = vmatpush1.bf16.msra.mxu0 0
        %1205 = vmatprep.subr.bf16.mxu0 0
        %1206 = vmatpush1.bf16.msra.mxu0 0
        %1207 = vmatprep.subr.bf16.mxu0 0
        %1208 = vmatpush1.bf16.msra.mxu0 0
        %1209 = vmatprep.subr.bf16.mxu0 0
        %1210 = vmatpush1.bf16.msra.mxu0 0
        %1211 = vmatprep.subr.bf16.mxu0 0
        %1212 = vmatpush1.bf16.msra.mxu0 0
        %1213 = vmatprep.subr.bf16.mxu0 0
        %1214 = vmatpush1.bf16.msra.mxu0 0
        %1215 = vmatprep.subr.bf16.mxu0 0
        %1216 = vmatpush1.bf16.msra.mxu0 %v1199
        %1217 = vmatprep.subr.bf16.mxu0 0
        %1218 = vmatpush2.bf16.msra.mxu0 0
        %1219 = vmatprep.subr.bf16.mxu0 0
        %1220 = vmatpush2.bf16.msra.mxu0 0
        %1221 = vmatprep.subr.bf16.mxu0 0
        %1222 = vmatpush2.bf16.msra.mxu0 0
        %1223 = vmatprep.subr.bf16.mxu0 0
        %1224 = vmatpush2.bf16.msra.mxu0 0
        %1225 = vmatprep.subr.bf16.mxu0 0
        %1226 = vmatpush2.bf16.msra.mxu0 0
        %1227 = vmatprep.subr.bf16.mxu0 0
        %1228 = vmatpush2.bf16.msra.mxu0 0
        %1229 = vmatprep.subr.bf16.mxu0 0
        %1230 = vmatpush2.bf16.msra.mxu0 0
        %1231 = vmatprep.subr.bf16.mxu0 0
        %1232 = vmatpush2.bf16.msra.mxu0 0
        %1233 = vmatprep.mubr.bf16.mxu0 0
        %1234 = vmatmul.mubr.bf16.gmra.mxu0 %v1196
        %v1235 = vpop.f32.mrf.mxu0
        %v1236 = vadd.f32 0.0, %v1235
        %v1237 = vpop.f32.mrf.mxu0
        %v1238 = vpop.f32.mrf.mxu0
        %v1239 = vpop.f32.mrf.mxu0
        %1240 = vdwg.mxu0
        %1241 = vrot.lane.b32.xlu0 %v1013, 112
        %v1242 = vpop.permute.xlu0 %1241
        %1243 = vrot.lane.b32.xlu0 %v1013, 80
        %v1244 = vpop.permute.xlu0 %1243
        %v1246 = vsel %vm1017, %v1242, 0
        %v1249 = vsel %vm1017, %v1244, 0
        %1251 = vmatprep.subr.bf16.mxu0 0
        %1252 = vmatpush1.bf16.xpose.msra.mxu0 0
        %1253 = vmatprep.subr.bf16.mxu0 0
        %1254 = vmatpush1.bf16.xpose.msra.mxu0 0
        %1255 = vmatprep.subr.bf16.mxu0 0
        %1256 = vmatpush1.bf16.xpose.msra.mxu0 0
        %1257 = vmatprep.subr.bf16.mxu0 0
        %1258 = vmatpush1.bf16.xpose.msra.mxu0 0
        %1259 = vmatprep.subr.bf16.mxu0 0
        %1260 = vmatpush1.bf16.xpose.msra.mxu0 0
        %1261 = vmatprep.subr.bf16.mxu0 0
        %1262 = vmatpush1.bf16.xpose.msra.mxu0 0
        %1263 = vmatprep.subr.bf16.mxu0 0
        %1264 = vmatpush1.bf16.xpose.msra.mxu0 0
        %1265 = vmatprep.subr.bf16.mxu0 0
        %1266 = vmatpush1.bf16.xpose.msra.mxu0 %v1249
        %1267 = vmatprep.subr.bf16.mxu0 0
        %1268 = vmatpush2.bf16.xpose.msra.mxu0 0
        %1269 = vmatprep.subr.bf16.mxu0 0
        %1270 = vmatpush2.bf16.xpose.msra.mxu0 0
        %1271 = vmatprep.subr.bf16.mxu0 0
        %1272 = vmatpush2.bf16.xpose.msra.mxu0 0
        %1273 = vmatprep.subr.bf16.mxu0 0
        %1274 = vmatpush2.bf16.xpose.msra.mxu0 0
        %1275 = vmatprep.subr.bf16.mxu0 0
        %1276 = vmatpush2.bf16.xpose.msra.mxu0 0
        %1277 = vmatprep.subr.bf16.mxu0 0
        %1278 = vmatpush2.bf16.xpose.msra.mxu0 0
        %1279 = vmatprep.subr.bf16.mxu0 0
        %1280 = vmatpush2.bf16.xpose.msra.mxu0 0
        %1281 = vmatprep.subr.bf16.mxu0 0
        %1282 = vmatpush2.bf16.xpose.msra.mxu0 0
        %1283 = vmatprep.mubr.bf16.mxu0 0
        %1284 = vmatmul.mubr.bf16.gmra.mxu0 %v1246
        %v1285 = vpop.f32.mrf.mxu0
        %v1286 = vadd.f32 0.0, %v1285
        %v1287 = vpop.f32.mrf.mxu0
        %v1288 = vpop.f32.mrf.mxu0
        %v1289 = vpop.f32.mrf.mxu0
        %1290 = vdwg.mxu0
        %v1291 = vsel %vm1017, %v1286, -inf
        %1292 = vmax.xlane.f32.xlu0 %v1291
        %v1293 = vpop.xlane.xlu0 %1292
        %v1294 = vsub.f32 %v1286, %v1293
        %v1295 = vmul.f32 %v1294, 1.442695
        %v1296 = vpow.pop %v1295
        %v1297 = vsel %vm1017, %v1296, 0.0
        %1298 = vadd.xlane.f32.xlu0 %v1297
        %v1299 = vpop.xlane.xlu0 %1298
        %v1300 = vrcp.pop %v1299
        %v1301 = vmul.f32 %v1299, %v1300
        %v1302 = vsub.f32 2.0, %v1301
        %v1303 = vmul.f32 %v1300, %v1302
        %v1304 = vmul.f32 %v1296, %v1303
        %v1305 = vpack.c.bf16 %v1304, %v1304
        %1306 = vrot.lane.b32.xlu0 %v1013, 48
        %v1307 = vpop.permute.xlu0 %1306
        %v1309 = vsel %vm1017, %v1305, 0
        %v1312 = vsel %vm1084, %v1307, 0
        %1314 = vmatprep.subr.bf16.mxu0 0
        %1315 = vmatpush1.bf16.msra.mxu0 0
        %1316 = vmatprep.subr.bf16.mxu0 0
        %1317 = vmatpush1.bf16.msra.mxu0 0
        %1318 = vmatprep.subr.bf16.mxu0 0
        %1319 = vmatpush1.bf16.msra.mxu0 0
        %1320 = vmatprep.subr.bf16.mxu0 0
        %1321 = vmatpush1.bf16.msra.mxu0 0
        %1322 = vmatprep.subr.bf16.mxu0 0
        %1323 = vmatpush1.bf16.msra.mxu0 0
        %1324 = vmatprep.subr.bf16.mxu0 0
        %1325 = vmatpush1.bf16.msra.mxu0 0
        %1326 = vmatprep.subr.bf16.mxu0 0
        %1327 = vmatpush1.bf16.msra.mxu0 0
        %1328 = vmatprep.subr.bf16.mxu0 0
        %1329 = vmatpush1.bf16.msra.mxu0 %v1312
        %1330 = vmatprep.subr.bf16.mxu0 0
        %1331 = vmatpush2.bf16.msra.mxu0 0
        %1332 = vmatprep.subr.bf16.mxu0 0
        %1333 = vmatpush2.bf16.msra.mxu0 0
        %1334 = vmatprep.subr.bf16.mxu0 0
        %1335 = vmatpush2.bf16.msra.mxu0 0
        %1336 = vmatprep.subr.bf16.mxu0 0
        %1337 = vmatpush2.bf16.msra.mxu0 0
        %1338 = vmatprep.subr.bf16.mxu0 0
        %1339 = vmatpush2.bf16.msra.mxu0 0
        %1340 = vmatprep.subr.bf16.mxu0 0
        %1341 = vmatpush2.bf16.msra.mxu0 0
        %1342 = vmatprep.subr.bf16.mxu0 0
        %1343 = vmatpush2.bf16.msra.mxu0 0
        %1344 = vmatprep.subr.bf16.mxu0 0
        %1345 = vmatpush2.bf16.msra.mxu0 0
        %1346 = vmatprep.mubr.bf16.mxu0 0
        %1347 = vmatmul.mubr.bf16.gmra.mxu0 %v1309
        %v1348 = vpop.f32.mrf.mxu0
        %v1349 = vadd.f32 0.0, %v1348
        %v1350 = vpop.f32.mrf.mxu0
        %v1351 = vpop.f32.mrf.mxu0
        %v1352 = vpop.f32.mrf.mxu0
        %1353 = vdwg.mxu0
        %1354 = vrot.lane.b32.xlu0 %v1013, 104
        %v1355 = vpop.permute.xlu0 %1354
        %1356 = vrot.lane.b32.xlu0 %v1013, 72
        %v1357 = vpop.permute.xlu0 %1356
        %v1359 = vsel %vm1017, %v1355, 0
        %v1362 = vsel %vm1017, %v1357, 0
        %1364 = vmatprep.subr.bf16.mxu0 0
        %1365 = vmatpush1.bf16.xpose.msra.mxu0 0
        %1366 = vmatprep.subr.bf16.mxu0 0
        %1367 = vmatpush1.bf16.xpose.msra.mxu0 0
        %1368 = vmatprep.subr.bf16.mxu0 0
        %1369 = vmatpush1.bf16.xpose.msra.mxu0 0
        %1370 = vmatprep.subr.bf16.mxu0 0
        %1371 = vmatpush1.bf16.xpose.msra.mxu0 0
        %1372 = vmatprep.subr.bf16.mxu0 0
        %1373 = vmatpush1.bf16.xpose.msra.mxu0 0
        %1374 = vmatprep.subr.bf16.mxu0 0
        %1375 = vmatpush1.bf16.xpose.msra.mxu0 0
        %1376 = vmatprep.subr.bf16.mxu0 0
        %1377 = vmatpush1.bf16.xpose.msra.mxu0 0
        %1378 = vmatprep.subr.bf16.mxu0 0
        %1379 = vmatpush1.bf16.xpose.msra.mxu0 %v1362
        %1380 = vmatprep.subr.bf16.mxu0 0
        %1381 = vmatpush2.bf16.xpose.msra.mxu0 0
        %1382 = vmatprep.subr.bf16.mxu0 0
        %1383 = vmatpush2.bf16.xpose.msra.mxu0 0
        %1384 = vmatprep.subr.bf16.mxu0 0
        %1385 = vmatpush2.bf16.xpose.msra.mxu0 0
        %1386 = vmatprep.subr.bf16.mxu0 0
        %1387 = vmatpush2.bf16.xpose.msra.mxu0 0
        %1388 = vmatprep.subr.bf16.mxu0 0
        %1389 = vmatpush2.bf16.xpose.msra.mxu0 0
        %1390 = vmatprep.subr.bf16.mxu0 0
        %1391 = vmatpush2.bf16.xpose.msra.mxu0 0
        %1392 = vmatprep.subr.bf16.mxu0 0
        %1393 = vmatpush2.bf16.xpose.msra.mxu0 0
        %1394 = vmatprep.subr.bf16.mxu0 0
        %1395 = vmatpush2.bf16.xpose.msra.mxu0 0
        %1396 = vmatprep.mubr.bf16.mxu0 0
        %1397 = vmatmul.mubr.bf16.gmra.mxu0 %v1359
        %v1398 = vpop.f32.mrf.mxu0
        %v1399 = vadd.f32 0.0, %v1398
        %v1400 = vpop.f32.mrf.mxu0
        %v1401 = vpop.f32.mrf.mxu0
        %v1402 = vpop.f32.mrf.mxu0
        %1403 = vdwg.mxu0
        %v1404 = vsel %vm1017, %v1399, -inf
        %1405 = vmax.xlane.f32.xlu0 %v1404
        %v1406 = vpop.xlane.xlu0 %1405
        %v1407 = vsub.f32 %v1399, %v1406
        %v1408 = vmul.f32 %v1407, 1.442695
        %v1409 = vpow.pop %v1408
        %v1410 = vsel %vm1017, %v1409, 0.0
        %1411 = vadd.xlane.f32.xlu0 %v1410
        %v1412 = vpop.xlane.xlu0 %1411
        %v1413 = vrcp.pop %v1412
        %v1414 = vmul.f32 %v1412, %v1413
        %v1415 = vsub.f32 2.0, %v1414
        %v1416 = vmul.f32 %v1413, %v1415
        %v1417 = vmul.f32 %v1409, %v1416
        %v1418 = vpack.c.bf16 %v1417, %v1417
        %1419 = vrot.lane.b32.xlu0 %v1013, 40
        %v1420 = vpop.permute.xlu0 %1419
        %v1422 = vsel %vm1017, %v1418, 0
        %v1425 = vsel %vm1084, %v1420, 0
        %1427 = vmatprep.subr.bf16.mxu0 0
        %1428 = vmatpush1.bf16.msra.mxu0 0
        %1429 = vmatprep.subr.bf16.mxu0 0
        %1430 = vmatpush1.bf16.msra.mxu0 0
        %1431 = vmatprep.subr.bf16.mxu0 0
        %1432 = vmatpush1.bf16.msra.mxu0 0
        %1433 = vmatprep.subr.bf16.mxu0 0
        %1434 = vmatpush1.bf16.msra.mxu0 0
        %1435 = vmatprep.subr.bf16.mxu0 0
        %1436 = vmatpush1.bf16.msra.mxu0 0
        %1437 = vmatprep.subr.bf16.mxu0 0
        %1438 = vmatpush1.bf16.msra.mxu0 0
        %1439 = vmatprep.subr.bf16.mxu0 0
        %1440 = vmatpush1.bf16.msra.mxu0 0
        %1441 = vmatprep.subr.bf16.mxu0 0
        %1442 = vmatpush1.bf16.msra.mxu0 %v1425
        %1443 = vmatprep.subr.bf16.mxu0 0
        %1444 = vmatpush2.bf16.msra.mxu0 0
        %1445 = vmatprep.subr.bf16.mxu0 0
        %1446 = vmatpush2.bf16.msra.mxu0 0
        %1447 = vmatprep.subr.bf16.mxu0 0
        %1448 = vmatpush2.bf16.msra.mxu0 0
        %1449 = vmatprep.subr.bf16.mxu0 0
        %1450 = vmatpush2.bf16.msra.mxu0 0
        %1451 = vmatprep.subr.bf16.mxu0 0
        %1452 = vmatpush2.bf16.msra.mxu0 0
        %1453 = vmatprep.subr.bf16.mxu0 0
        %1454 = vmatpush2.bf16.msra.mxu0 0
        %1455 = vmatprep.subr.bf16.mxu0 0
        %1456 = vmatpush2.bf16.msra.mxu0 0
        %1457 = vmatprep.subr.bf16.mxu0 0
        %1458 = vmatpush2.bf16.msra.mxu0 0
        %1459 = vmatprep.mubr.bf16.mxu0 0
        %1460 = vmatmul.mubr.bf16.gmra.mxu0 %v1422
        %v1461 = vpop.f32.mrf.mxu0
        %v1462 = vadd.f32 0.0, %v1461
        %v1463 = vpop.f32.mrf.mxu0
        %v1464 = vpop.f32.mrf.mxu0
        %v1465 = vpop.f32.mrf.mxu0
        %1466 = vdwg.mxu0
        %1468 = vrot.lane.b32.xlu0 %v1236, 8
        %v1469 = vpop.permute.xlu0 %1468
        %1472 = vrot.lane.b32.xlu0 %v1349, 16
        %v1473 = vpop.permute.xlu0 %1472
        %1476 = vrot.lane.b32.xlu0 %v1462, 24
        %v1477 = vpop.permute.xlu0 %1476
        %v1479 = vsel %vm1017, %v1123, %v1469
        %vm1480 = vcmask 130048
        %v1481 = vsel %vm1480, %v1479, %v1473
        %vm1482 = vcmask 195584
        %v1483 = vsel %vm1482, %v1481, %v1477
        %v1484 = vpack.c.bf16 %v1483, %v1483
        %v1489 = vunpack.c.l.b16 %v781
        %v1490 = vunpack.c.l.b16 %v782
        %v1491 = vunpack.c.l.b16 %v783
        %v1492 = vunpack.c.l.b16 %v784
        %v1493 = vpack.c.b16 %v1490, %v1489
        %v1494 = vpack.c.b16 %v1492, %v1491
        %v1498 = vsel %vm912, %v1484, 0
        %1500 = vmatprep.subr.bf16.mxu0 0
        %1501 = vmatpush1.bf16.msra.mxu0 0
        %1502 = vmatprep.subr.bf16.mxu0 0
        %1503 = vmatpush1.bf16.msra.mxu0 0
        %1504 = vmatprep.subr.bf16.mxu0 0
        %1505 = vmatpush1.bf16.msra.mxu0 0
        %1506 = vmatprep.subr.bf16.mxu0 0
        %1507 = vmatpush1.bf16.msra.mxu0 0
        %1508 = vmatprep.subr.bf16.mxu0 0
        %1509 = vmatpush1.bf16.msra.mxu0 0
        %1510 = vmatprep.subr.bf16.mxu0 0
        %1511 = vmatpush1.bf16.msra.mxu0 0
        %1512 = vmatprep.subr.bf16.mxu0 0
        %1513 = vmatpush1.bf16.msra.mxu0 %v1494
        %1514 = vmatprep.subr.bf16.mxu0 0
        %1515 = vmatpush1.bf16.msra.mxu0 %v1493
        %1516 = vmatprep.subr.bf16.mxu0 0
        %1517 = vmatpush2.bf16.msra.mxu0 0
        %1518 = vmatprep.subr.bf16.mxu0 0
        %1519 = vmatpush2.bf16.msra.mxu0 0
        %1520 = vmatprep.subr.bf16.mxu0 0
        %1521 = vmatpush2.bf16.msra.mxu0 0
        %1522 = vmatprep.subr.bf16.mxu0 0
        %1523 = vmatpush2.bf16.msra.mxu0 0
        %1524 = vmatprep.subr.bf16.mxu0 0
        %1525 = vmatpush2.bf16.msra.mxu0 0
        %1526 = vmatprep.subr.bf16.mxu0 0
        %1527 = vmatpush2.bf16.msra.mxu0 0
        %1528 = vmatprep.subr.bf16.mxu0 0
        %1529 = vmatpush2.bf16.msra.mxu0 0
        %1530 = vmatprep.subr.bf16.mxu0 0
        %1531 = vmatpush2.bf16.msra.mxu0 0
        %1532 = vmatprep.mubr.bf16.mxu0 0
        %1533 = vmatmul.mubr.bf16.gmra.mxu0 %v1498
        %v1534 = vpop.f32.mrf.mxu0
        %v1535 = vadd.f32 %v821, %v1534
        %v1536 = vpop.f32.mrf.mxu0
        %v1537 = vpop.f32.mrf.mxu0
        %v1538 = vpop.f32.mrf.mxu0
        %1539 = vdwg.mxu0
        %v1540 = vadd.f32 %v775, %v1535
        %v1541 = vsel %vm912, %v1540, 0.0
        %1542 = vadd.xlane.f32.xlu0 %v1541
        %v1543 = vpop.xlane.xlu0 %1542
        %v1544 = vrcp.pop 32.0
        %v1545 = vmul.f32 %v1543, %v1544
        %v1546 = vsub.f32 %v1540, %v1545
        %v1547 = vmul.f32 %v1546, %v1546
        %v1548 = vsel %vm912, %v1547, 0.0
        %1549 = vadd.xlane.f32.xlu0 %v1548
        %v1550 = vpop.xlane.xlu0 %1549
        %v1551 = vmul.f32 %v1550, %v1544
        %v1552 = vadd.f32 %v1551, 1e-05
        %v1553 = vrsqrt.pop %v1552
        %v1554 = vmul.f32 %v1546, %v1553
        %v1555 = vmul.f32 %v1554, %v856
        %v1556 = vadd.f32 %v1555, %v863
        %v1557 = vpack.c.bf16 %v1556, %v1556
        %v1562 = vunpack.c.l.b16 %v785
        %v1563 = vunpack.c.l.b16 %v786
        %v1564 = vunpack.c.l.b16 %v787
        %v1565 = vunpack.c.l.b16 %v788
        %v1566 = vpack.c.b16 %v1563, %v1562
        %v1567 = vpack.c.b16 %v1565, %v1564
        %v1571 = vsel %vm912, %v1557, 0
        %1573 = vmatprep.subr.bf16.mxu0 0
        %1574 = vmatpush1.bf16.msra.mxu0 0
        %1575 = vmatprep.subr.bf16.mxu0 0
        %1576 = vmatpush1.bf16.msra.mxu0 0
        %1577 = vmatprep.subr.bf16.mxu0 0
        %1578 = vmatpush1.bf16.msra.mxu0 0
        %1579 = vmatprep.subr.bf16.mxu0 0
        %1580 = vmatpush1.bf16.msra.mxu0 0
        %1581 = vmatprep.subr.bf16.mxu0 0
        %1582 = vmatpush1.bf16.msra.mxu0 0
        %1583 = vmatprep.subr.bf16.mxu0 0
        %1584 = vmatpush1.bf16.msra.mxu0 0
        %1585 = vmatprep.subr.bf16.mxu0 0
        %1586 = vmatpush1.bf16.msra.mxu0 %v1567
        %1587 = vmatprep.subr.bf16.mxu0 0
        %1588 = vmatpush1.bf16.msra.mxu0 %v1566
        %1589 = vmatprep.subr.bf16.mxu0 0
        %1590 = vmatpush2.bf16.msra.mxu0 0
        %1591 = vmatprep.subr.bf16.mxu0 0
        %1592 = vmatpush2.bf16.msra.mxu0 0
        %1593 = vmatprep.subr.bf16.mxu0 0
        %1594 = vmatpush2.bf16.msra.mxu0 0
        %1595 = vmatprep.subr.bf16.mxu0 0
        %1596 = vmatpush2.bf16.msra.mxu0 0
        %1597 = vmatprep.subr.bf16.mxu0 0
        %1598 = vmatpush2.bf16.msra.mxu0 0
        %1599 = vmatprep.subr.bf16.mxu0 0
        %1600 = vmatpush2.bf16.msra.mxu0 0
        %1601 = vmatprep.subr.bf16.mxu0 0
        %1602 = vmatpush2.bf16.msra.mxu0 0
        %1603 = vmatprep.subr.bf16.mxu0 0
        %1604 = vmatpush2.bf16.msra.mxu0 0
        %1605 = vmatprep.mubr.bf16.mxu0 0
        %1606 = vmatmul.mubr.bf16.gmra.mxu0 %v1571
        %v1607 = vpop.f32.mrf.mxu0
        %v1608 = vadd.f32 %v828, %v1607
        %v1609 = vpop.f32.mrf.mxu0
        %v1610 = vpop.f32.mrf.mxu0
        %v1611 = vpop.f32.mrf.mxu0
        %1612 = vdwg.mxu0
        %v1613 = vpack.c.bf16 %v1608, %v1608
        %v1615 = vsel %vm1017, %v1613, 0
        %v1618 = vsel %vm1017, %v956, 0
        %1620 = vmatprep.subr.bf16.mxu0 0
        %1621 = vmatpush1.bf16.xpose.msra.mxu0 0
        %1622 = vmatprep.subr.bf16.mxu0 0
        %1623 = vmatpush1.bf16.xpose.msra.mxu0 0
        %1624 = vmatprep.subr.bf16.mxu0 0
        %1625 = vmatpush1.bf16.xpose.msra.mxu0 0
        %1626 = vmatprep.subr.bf16.mxu0 0
        %1627 = vmatpush1.bf16.xpose.msra.mxu0 0
        %1628 = vmatprep.subr.bf16.mxu0 0
        %1629 = vmatpush1.bf16.xpose.msra.mxu0 0
        %1630 = vmatprep.subr.bf16.mxu0 0
        %1631 = vmatpush1.bf16.xpose.msra.mxu0 0
        %1632 = vmatprep.subr.bf16.mxu0 0
        %1633 = vmatpush1.bf16.xpose.msra.mxu0 0
        %1634 = vmatprep.subr.bf16.mxu0 0
        %1635 = vmatpush1.bf16.xpose.msra.mxu0 %v1618
        %1636 = vmatprep.subr.bf16.mxu0 0
        %1637 = vmatpush2.bf16.xpose.msra.mxu0 0
        %1638 = vmatprep.subr.bf16.mxu0 0
        %1639 = vmatpush2.bf16.xpose.msra.mxu0 0
        %1640 = vmatprep.subr.bf16.mxu0 0
        %1641 = vmatpush2.bf16.xpose.msra.mxu0 0
        %1642 = vmatprep.subr.bf16.mxu0 0
        %1643 = vmatpush2.bf16.xpose.msra.mxu0 0
        %1644 = vmatprep.subr.bf16.mxu0 0
        %1645 = vmatpush2.bf16.xpose.msra.mxu0 0
        %1646 = vmatprep.subr.bf16.mxu0 0
        %1647 = vmatpush2.bf16.xpose.msra.mxu0 0
        %1648 = vmatprep.subr.bf16.mxu0 0
        %1649 = vmatpush2.bf16.xpose.msra.mxu0 0
        %1650 = vmatprep.subr.bf16.mxu0 0
        %1651 = vmatpush2.bf16.xpose.msra.mxu0 0
        %1652 = vmatprep.mubr.bf16.mxu0 0
        %1653 = vmatmul.mubr.bf16.gmra.mxu0 %v1615
        %v1654 = vpop.f32.mrf.mxu0
        %v1655 = vadd.f32 0.0, %v1654
        %v1656 = vpop.f32.mrf.mxu0
        %v1657 = vpop.f32.mrf.mxu0
        %v1658 = vpop.f32.mrf.mxu0
        %1659 = vdwg.mxu0
        %v1660 = vsel %vm1017, %v1655, -inf
        %1661 = vmax.xlane.f32.xlu0 %v1660
        %v1662 = vpop.xlane.xlu0 %1661
        %v1663 = vsub.f32 %v1655, %v1662
        %v1664 = vmul.f32 %v1663, 1.442695
        %v1665 = vpow.pop %v1664
        %v1666 = vsel %vm1017, %v1665, 0.0
        %1667 = vadd.xlane.f32.xlu0 %v1666
        %v1668 = vpop.xlane.xlu0 %1667
        %v1669 = vrcp.pop %v1668
        %v1670 = vmul.f32 %v1668, %v1669
        %v1671 = vsub.f32 2.0, %v1670
        %v1672 = vmul.f32 %v1669, %v1671
        %v1673 = vmul.f32 %v1665, %v1672
        %v1674 = vpack.c.bf16 %v1673, %v1673
        %1676 = vrot.lane.b32.xlu0 %v956, 96
        %v1677 = vpop.permute.xlu0 %1676
        %v1679 = vsel %vm1017, %v1674, 0
        %v1682 = vsel %vm1084, %v1677, 0
        %1684 = vmatprep.subr.bf16.mxu0 0
        %1685 = vmatpush1.bf16.msra.mxu0 0
        %1686 = vmatprep.subr.bf16.mxu0 0
        %1687 = vmatpush1.bf16.msra.mxu0 0
        %1688 = vmatprep.subr.bf16.mxu0 0
        %1689 = vmatpush1.bf16.msra.mxu0 0
        %1690 = vmatprep.subr.bf16.mxu0 0
        %1691 = vmatpush1.bf16.msra.mxu0 0
        %1692 = vmatprep.subr.bf16.mxu0 0
        %1693 = vmatpush1.bf16.msra.mxu0 0
        %1694 = vmatprep.subr.bf16.mxu0 0
        %1695 = vmatpush1.bf16.msra.mxu0 0
        %1696 = vmatprep.subr.bf16.mxu0 0
        %1697 = vmatpush1.bf16.msra.mxu0 0
        %1698 = vmatprep.subr.bf16.mxu0 0
        %1699 = vmatpush1.bf16.msra.mxu0 %v1682
        %1700 = vmatprep.subr.bf16.mxu0 0
        %1701 = vmatpush2.bf16.msra.mxu0 0
        %1702 = vmatprep.subr.bf16.mxu0 0
        %1703 = vmatpush2.bf16.msra.mxu0 0
        %1704 = vmatprep.subr.bf16.mxu0 0
        %1705 = vmatpush2.bf16.msra.mxu0 0
        %1706 = vmatprep.subr.bf16.mxu0 0
        %1707 = vmatpush2.bf16.msra.mxu0 0
        %1708 = vmatprep.subr.bf16.mxu0 0
        %1709 = vmatpush2.bf16.msra.mxu0 0
        %1710 = vmatprep.subr.bf16.mxu0 0
        %1711 = vmatpush2.bf16.msra.mxu0 0
        %1712 = vmatprep.subr.bf16.mxu0 0
        %1713 = vmatpush2.bf16.msra.mxu0 0
        %1714 = vmatprep.subr.bf16.mxu0 0
        %1715 = vmatpush2.bf16.msra.mxu0 0
        %1716 = vmatprep.mubr.bf16.mxu0 0
        %1717 = vmatmul.mubr.bf16.gmra.mxu0 %v1679
        %v1718 = vpop.f32.mrf.mxu0
        %v1719 = vadd.f32 0.0, %v1718
        %v1720 = vpop.f32.mrf.mxu0
        %v1721 = vpop.f32.mrf.mxu0
        %v1722 = vpop.f32.mrf.mxu0
        %1723 = vdwg.mxu0
        %1725 = vrot.lane.b32.xlu0 %v1613, 120
        %v1726 = vpop.permute.xlu0 %1725
        %1727 = vrot.lane.b32.xlu0 %v956, 120
        %v1728 = vpop.permute.xlu0 %1727
        %v1730 = vsel %vm1017, %v1726, 0
        %v1733 = vsel %vm1017, %v1728, 0
        %1735 = vmatprep.subr.bf16.mxu0 0
        %1736 = vmatpush1.bf16.xpose.msra.mxu0 0
        %1737 = vmatprep.subr.bf16.mxu0 0
        %1738 = vmatpush1.bf16.xpose.msra.mxu0 0
        %1739 = vmatprep.subr.bf16.mxu0 0
        %1740 = vmatpush1.bf16.xpose.msra.mxu0 0
        %1741 = vmatprep.subr.bf16.mxu0 0
        %1742 = vmatpush1.bf16.xpose.msra.mxu0 0
        %1743 = vmatprep.subr.bf16.mxu0 0
        %1744 = vmatpush1.bf16.xpose.msra.mxu0 0
        %1745 = vmatprep.subr.bf16.mxu0 0
        %1746 = vmatpush1.bf16.xpose.msra.mxu0 0
        %1747 = vmatprep.subr.bf16.mxu0 0
        %1748 = vmatpush1.bf16.xpose.msra.mxu0 0
        %1749 = vmatprep.subr.bf16.mxu0 0
        %1750 = vmatpush1.bf16.xpose.msra.mxu0 %v1733
        %1751 = vmatprep.subr.bf16.mxu0 0
        %1752 = vmatpush2.bf16.xpose.msra.mxu0 0
        %1753 = vmatprep.subr.bf16.mxu0 0
        %1754 = vmatpush2.bf16.xpose.msra.mxu0 0
        %1755 = vmatprep.subr.bf16.mxu0 0
        %1756 = vmatpush2.bf16.xpose.msra.mxu0 0
        %1757 = vmatprep.subr.bf16.mxu0 0
        %1758 = vmatpush2.bf16.xpose.msra.mxu0 0
        %1759 = vmatprep.subr.bf16.mxu0 0
        %1760 = vmatpush2.bf16.xpose.msra.mxu0 0
        %1761 = vmatprep.subr.bf16.mxu0 0
        %1762 = vmatpush2.bf16.xpose.msra.mxu0 0
        %1763 = vmatprep.subr.bf16.mxu0 0
        %1764 = vmatpush2.bf16.xpose.msra.mxu0 0
        %1765 = vmatprep.subr.bf16.mxu0 0
        %1766 = vmatpush2.bf16.xpose.msra.mxu0 0
        %1767 = vmatprep.mubr.bf16.mxu0 0
        %1768 = vmatmul.mubr.bf16.gmra.mxu0 %v1730
        %v1769 = vpop.f32.mrf.mxu0
        %v1770 = vadd.f32 0.0, %v1769
        %v1771 = vpop.f32.mrf.mxu0
        %v1772 = vpop.f32.mrf.mxu0
        %v1773 = vpop.f32.mrf.mxu0
        %1774 = vdwg.mxu0
        %v1775 = vsel %vm1017, %v1770, -inf
        %1776 = vmax.xlane.f32.xlu0 %v1775
        %v1777 = vpop.xlane.xlu0 %1776
        %v1778 = vsub.f32 %v1770, %v1777
        %v1779 = vmul.f32 %v1778, 1.442695
        %v1780 = vpow.pop %v1779
        %v1781 = vsel %vm1017, %v1780, 0.0
        %1782 = vadd.xlane.f32.xlu0 %v1781
        %v1783 = vpop.xlane.xlu0 %1782
        %v1784 = vrcp.pop %v1783
        %v1785 = vmul.f32 %v1783, %v1784
        %v1786 = vsub.f32 2.0, %v1785
        %v1787 = vmul.f32 %v1784, %v1786
        %v1788 = vmul.f32 %v1780, %v1787
        %v1789 = vpack.c.bf16 %v1788, %v1788
        %1790 = vrot.lane.b32.xlu0 %v956, 88
        %v1791 = vpop.permute.xlu0 %1790
        %v1793 = vsel %vm1017, %v1789, 0
        %v1796 = vsel %vm1084, %v1791, 0
        %1798 = vmatprep.subr.bf16.mxu0 0
        %1799 = vmatpush1.bf16.msra.mxu0 0
        %1800 = vmatprep.subr.bf16.mxu0 0
        %1801 = vmatpush1.bf16.msra.mxu0 0
        %1802 = vmatprep.subr.bf16.mxu0 0
        %1803 = vmatpush1.bf16.msra.mxu0 0
        %1804 = vmatprep.subr.bf16.mxu0 0
        %1805 = vmatpush1.bf16.msra.mxu0 0
        %1806 = vmatprep.subr.bf16.mxu0 0
        %1807 = vmatpush1.bf16.msra.mxu0 0
        %1808 = vmatprep.subr.bf16.mxu0 0
        %1809 = vmatpush1.bf16.msra.mxu0 0
        %1810 = vmatprep.subr.bf16.mxu0 0
        %1811 = vmatpush1.bf16.msra.mxu0 0
        %1812 = vmatprep.subr.bf16.mxu0 0
        %1813 = vmatpush1.bf16.msra.mxu0 %v1796
        %1814 = vmatprep.subr.bf16.mxu0 0
        %1815 = vmatpush2.bf16.msra.mxu0 0
        %1816 = vmatprep.subr.bf16.mxu0 0
        %1817 = vmatpush2.bf16.msra.mxu0 0
        %1818 = vmatprep.subr.bf16.mxu0 0
        %1819 = vmatpush2.bf16.msra.mxu0 0
        %1820 = vmatprep.subr.bf16.mxu0 0
        %1821 = vmatpush2.bf16.msra.mxu0 0
        %1822 = vmatprep.subr.bf16.mxu0 0
        %1823 = vmatpush2.bf16.msra.mxu0 0
        %1824 = vmatprep.subr.bf16.mxu0 0
        %1825 = vmatpush2.bf16.msra.mxu0 0
        %1826 = vmatprep.subr.bf16.mxu0 0
        %1827 = vmatpush2.bf16.msra.mxu0 0
        %1828 = vmatprep.subr.bf16.mxu0 0
        %1829 = vmatpush2.bf16.msra.mxu0 0
        %1830 = vmatprep.mubr.bf16.mxu0 0
        %1831 = vmatmul.mubr.bf16.gmra.mxu0 %v1793
        %v1832 = vpop.f32.mrf.mxu0
        %v1833 = vadd.f32 0.0, %v1832
        %v1834 = vpop.f32.mrf.mxu0
        %v1835 = vpop.f32.mrf.mxu0
        %v1836 = vpop.f32.mrf.mxu0
        %1837 = vdwg.mxu0
        %1838 = vrot.lane.b32.xlu0 %v1613, 112
        %v1839 = vpop.permute.xlu0 %1838
        %1840 = vrot.lane.b32.xlu0 %v956, 112
        %v1841 = vpop.permute.xlu0 %1840
        %v1843 = vsel %vm1017, %v1839, 0
        %v1846 = vsel %vm1017, %v1841, 0
        %1848 = vmatprep.subr.bf16.mxu0 0
        %1849 = vmatpush1.bf16.xpose.msra.mxu0 0
        %1850 = vmatprep.subr.bf16.mxu0 0
        %1851 = vmatpush1.bf16.xpose.msra.mxu0 0
        %1852 = vmatprep.subr.bf16.mxu0 0
        %1853 = vmatpush1.bf16.xpose.msra.mxu0 0
        %1854 = vmatprep.subr.bf16.mxu0 0
        %1855 = vmatpush1.bf16.xpose.msra.mxu0 0
        %1856 = vmatprep.subr.bf16.mxu0 0
        %1857 = vmatpush1.bf16.xpose.msra.mxu0 0
        %1858 = vmatprep.subr.bf16.mxu0 0
        %1859 = vmatpush1.bf16.xpose.msra.mxu0 0
        %1860 = vmatprep.subr.bf16.mxu0 0
        %1861 = vmatpush1.bf16.xpose.msra.mxu0 0
        %1862 = vmatprep.subr.bf16.mxu0 0
        %1863 = vmatpush1.bf16.xpose.msra.mxu0 %v1846
        %1864 = vmatprep.subr.bf16.mxu0 0
        %1865 = vmatpush2.bf16.xpose.msra.mxu0 0
        %1866 = vmatprep.subr.bf16.mxu0 0
        %1867 = vmatpush2.bf16.xpose.msra.mxu0 0
        %1868 = vmatprep.subr.bf16.mxu0 0
        %1869 = vmatpush2.bf16.xpose.msra.mxu0 0
        %1870 = vmatprep.subr.bf16.mxu0 0
        %1871 = vmatpush2.bf16.xpose.msra.mxu0 0
        %1872 = vmatprep.subr.bf16.mxu0 0
        %1873 = vmatpush2.bf16.xpose.msra.mxu0 0
        %1874 = vmatprep.subr.bf16.mxu0 0
        %1875 = vmatpush2.bf16.xpose.msra.mxu0 0
        %1876 = vmatprep.subr.bf16.mxu0 0
        %1877 = vmatpush2.bf16.xpose.msra.mxu0 0
        %1878 = vmatprep.subr.bf16.mxu0 0
        %1879 = vmatpush2.bf16.xpose.msra.mxu0 0
        %1880 = vmatprep.mubr.bf16.mxu0 0
        %1881 = vmatmul.mubr.bf16.gmra.mxu0 %v1843
        %v1882 = vpop.f32.mrf.mxu0
        %v1883 = vadd.f32 0.0, %v1882
        %v1884 = vpop.f32.mrf.mxu0
        %v1885 = vpop.f32.mrf.mxu0
        %v1886 = vpop.f32.mrf.mxu0
        %1887 = vdwg.mxu0
        %v1888 = vsel %vm1017, %v1883, -inf
        %1889 = vmax.xlane.f32.xlu0 %v1888
        %v1890 = vpop.xlane.xlu0 %1889
        %v1891 = vsub.f32 %v1883, %v1890
        %v1892 = vmul.f32 %v1891, 1.442695
        %v1893 = vpow.pop %v1892
        %v1894 = vsel %vm1017, %v1893, 0.0
        %1895 = vadd.xlane.f32.xlu0 %v1894
        %v1896 = vpop.xlane.xlu0 %1895
        %v1897 = vrcp.pop %v1896
        %v1898 = vmul.f32 %v1896, %v1897
        %v1899 = vsub.f32 2.0, %v1898
        %v1900 = vmul.f32 %v1897, %v1899
        %v1901 = vmul.f32 %v1893, %v1900
        %v1902 = vpack.c.bf16 %v1901, %v1901
        %1903 = vrot.lane.b32.xlu0 %v956, 80
        %v1904 = vpop.permute.xlu0 %1903
        %v1906 = vsel %vm1017, %v1902, 0
        %v1909 = vsel %vm1084, %v1904, 0
        %1911 = vmatprep.subr.bf16.mxu0 0
        %1912 = vmatpush1.bf16.msra.mxu0 0
        %1913 = vmatprep.subr.bf16.mxu0 0
        %1914 = vmatpush1.bf16.msra.mxu0 0
        %1915 = vmatprep.subr.bf16.mxu0 0
        %1916 = vmatpush1.bf16.msra.mxu0 0
        %1917 = vmatprep.subr.bf16.mxu0 0
        %1918 = vmatpush1.bf16.msra.mxu0 0
        %1919 = vmatprep.subr.bf16.mxu0 0
        %1920 = vmatpush1.bf16.msra.mxu0 0
        %1921 = vmatprep.subr.bf16.mxu0 0
        %1922 = vmatpush1.bf16.msra.mxu0 0
        %1923 = vmatprep.subr.bf16.mxu0 0
        %1924 = vmatpush1.bf16.msra.mxu0 0
        %1925 = vmatprep.subr.bf16.mxu0 0
        %1926 = vmatpush1.bf16.msra.mxu0 %v1909
        %1927 = vmatprep.subr.bf16.mxu0 0
        %1928 = vmatpush2.bf16.msra.mxu0 0
        %1929 = vmatprep.subr.bf16.mxu0 0
        %1930 = vmatpush2.bf16.msra.mxu0 0
        %1931 = vmatprep.subr.bf16.mxu0 0
        %1932 = vmatpush2.bf16.msra.mxu0 0
        %1933 = vmatprep.subr.bf16.mxu0 0
        %1934 = vmatpush2.bf16.msra.mxu0 0
        %1935 = vmatprep.subr.bf16.mxu0 0
        %1936 = vmatpush2.bf16.msra.mxu0 0
        %1937 = vmatprep.subr.bf16.mxu0 0
        %1938 = vmatpush2.bf16.msra.mxu0 0
        %1939 = vmatprep.subr.bf16.mxu0 0
        %1940 = vmatpush2.bf16.msra.mxu0 0
        %1941 = vmatprep.subr.bf16.mxu0 0
        %1942 = vmatpush2.bf16.msra.mxu0 0
        %1943 = vmatprep.mubr.bf16.mxu0 0
        %1944 = vmatmul.mubr.bf16.gmra.mxu0 %v1906
        %v1945 = vpop.f32.mrf.mxu0
        %v1946 = vadd.f32 0.0, %v1945
        %v1947 = vpop.f32.mrf.mxu0
        %v1948 = vpop.f32.mrf.mxu0
        %v1949 = vpop.f32.mrf.mxu0
        %1950 = vdwg.mxu0
        %1951 = vrot.lane.b32.xlu0 %v1613, 104
        %v1952 = vpop.permute.xlu0 %1951
        %1953 = vrot.lane.b32.xlu0 %v956, 104
        %v1954 = vpop.permute.xlu0 %1953
        %v1956 = vsel %vm1017, %v1952, 0
        %v1959 = vsel %vm1017, %v1954, 0
        %1961 = vmatprep.subr.bf16.mxu0 0
        %1962 = vmatpush1.bf16.xpose.msra.mxu0 0
        %1963 = vmatprep.subr.bf16.mxu0 0
        %1964 = vmatpush1.bf16.xpose.msra.mxu0 0
        %1965 = vmatprep.subr.bf16.mxu0 0
        %1966 = vmatpush1.bf16.xpose.msra.mxu0 0
        %1967 = vmatprep.subr.bf16.mxu0 0
        %1968 = vmatpush1.bf16.xpose.msra.mxu0 0
        %1969 = vmatprep.subr.bf16.mxu0 0
        %1970 = vmatpush1.bf16.xpose.msra.mxu0 0
        %1971 = vmatprep.subr.bf16.mxu0 0
        %1972 = vmatpush1.bf16.xpose.msra.mxu0 0
        %1973 = vmatprep.subr.bf16.mxu0 0
        %1974 = vmatpush1.bf16.xpose.msra.mxu0 0
        %1975 = vmatprep.subr.bf16.mxu0 0
        %1976 = vmatpush1.bf16.xpose.msra.mxu0 %v1959
        %1977 = vmatprep.subr.bf16.mxu0 0
        %1978 = vmatpush2.bf16.xpose.msra.mxu0 0
        %1979 = vmatprep.subr.bf16.mxu0 0
        %1980 = vmatpush2.bf16.xpose.msra.mxu0 0
        %1981 = vmatprep.subr.bf16.mxu0 0
        %1982 = vmatpush2.bf16.xpose.msra.mxu0 0
        %1983 = vmatprep.subr.bf16.mxu0 0
        %1984 = vmatpush2.bf16.xpose.msra.mxu0 0
        %1985 = vmatprep.subr.bf16.mxu0 0
        %1986 = vmatpush2.bf16.xpose.msra.mxu0 0
        %1987 = vmatprep.subr.bf16.mxu0 0
        %1988 = vmatpush2.bf16.xpose.msra.mxu0 0
        %1989 = vmatprep.subr.bf16.mxu0 0
        %1990 = vmatpush2.bf16.xpose.msra.mxu0 0
        %1991 = vmatprep.subr.bf16.mxu0 0
        %1992 = vmatpush2.bf16.xpose.msra.mxu0 0
        %1993 = vmatprep.mubr.bf16.mxu0 0
        %1994 = vmatmul.mubr.bf16.gmra.mxu0 %v1956
        %v1995 = vpop.f32.mrf.mxu0
        %v1996 = vadd.f32 0.0, %v1995
        %v1997 = vpop.f32.mrf.mxu0
        %v1998 = vpop.f32.mrf.mxu0
        %v1999 = vpop.f32.mrf.mxu0
        %2000 = vdwg.mxu0
        %v2001 = vsel %vm1017, %v1996, -inf
        %2002 = vmax.xlane.f32.xlu0 %v2001
        %v2003 = vpop.xlane.xlu0 %2002
        %v2004 = vsub.f32 %v1996, %v2003
        %v2005 = vmul.f32 %v2004, 1.442695
        %v2006 = vpow.pop %v2005
        %v2007 = vsel %vm1017, %v2006, 0.0
        %2008 = vadd.xlane.f32.xlu0 %v2007
        %v2009 = vpop.xlane.xlu0 %2008
        %v2010 = vrcp.pop %v2009
        %v2011 = vmul.f32 %v2009, %v2010
        %v2012 = vsub.f32 2.0, %v2011
        %v2013 = vmul.f32 %v2010, %v2012
        %v2014 = vmul.f32 %v2006, %v2013
        %v2015 = vpack.c.bf16 %v2014, %v2014
        %2016 = vrot.lane.b32.xlu0 %v956, 72
        %v2017 = vpop.permute.xlu0 %2016
        %v2019 = vsel %vm1017, %v2015, 0
        %v2022 = vsel %vm1084, %v2017, 0
        %2024 = vmatprep.subr.bf16.mxu0 0
        %2025 = vmatpush1.bf16.msra.mxu0 0
        %2026 = vmatprep.subr.bf16.mxu0 0
        %2027 = vmatpush1.bf16.msra.mxu0 0
        %2028 = vmatprep.subr.bf16.mxu0 0
        %2029 = vmatpush1.bf16.msra.mxu0 0
        %2030 = vmatprep.subr.bf16.mxu0 0
        %2031 = vmatpush1.bf16.msra.mxu0 0
        %2032 = vmatprep.subr.bf16.mxu0 0
        %2033 = vmatpush1.bf16.msra.mxu0 0
        %2034 = vmatprep.subr.bf16.mxu0 0
        %2035 = vmatpush1.bf16.msra.mxu0 0
        %2036 = vmatprep.subr.bf16.mxu0 0
        %2037 = vmatpush1.bf16.msra.mxu0 0
        %2038 = vmatprep.subr.bf16.mxu0 0
        %2039 = vmatpush1.bf16.msra.mxu0 %v2022
        %2040 = vmatprep.subr.bf16.mxu0 0
        %2041 = vmatpush2.bf16.msra.mxu0 0
        %2042 = vmatprep.subr.bf16.mxu0 0
        %2043 = vmatpush2.bf16.msra.mxu0 0
        %2044 = vmatprep.subr.bf16.mxu0 0
        %2045 = vmatpush2.bf16.msra.mxu0 0
        %2046 = vmatprep.subr.bf16.mxu0 0
        %2047 = vmatpush2.bf16.msra.mxu0 0
        %2048 = vmatprep.subr.bf16.mxu0 0
        %2049 = vmatpush2.bf16.msra.mxu0 0
        %2050 = vmatprep.subr.bf16.mxu0 0
        %2051 = vmatpush2.bf16.msra.mxu0 0
        %2052 = vmatprep.subr.bf16.mxu0 0
        %2053 = vmatpush2.bf16.msra.mxu0 0
        %2054 = vmatprep.subr.bf16.mxu0 0
        %2055 = vmatpush2.bf16.msra.mxu0 0
        %2056 = vmatprep.mubr.bf16.mxu0 0
        %2057 = vmatmul.mubr.bf16.gmra.mxu0 %v2019
        %v2058 = vpop.f32.mrf.mxu0
        %v2059 = vadd.f32 0.0, %v2058
        %v2060 = vpop.f32.mrf.mxu0
        %v2061 = vpop.f32.mrf.mxu0
        %v2062 = vpop.f32.mrf.mxu0
        %2063 = vdwg.mxu0
        %2065 = vrot.lane.b32.xlu0 %v1833, 8
        %v2066 = vpop.permute.xlu0 %2065
        %2069 = vrot.lane.b32.xlu0 %v1946, 16
        %v2070 = vpop.permute.xlu0 %2069
        %2073 = vrot.lane.b32.xlu0 %v2059, 24
        %v2074 = vpop.permute.xlu0 %2073
        %v2076 = vsel %vm1017, %v1719, %v2066
        %v2077 = vsel %vm1480, %v2076, %v2070
        %v2078 = vsel %vm1482, %v2077, %v2074
        %v2079 = vpack.c.bf16 %v2078, %v2078
        %v2084 = vunpack.c.l.b16 %v793
        %v2085 = vunpack.c.l.b16 %v794
        %v2086 = vunpack.c.l.b16 %v795
        %v2087 = vunpack.c.l.b16 %v796
        %v2088 = vpack.c.b16 %v2085, %v2084
        %v2089 = vpack.c.b16 %v2087, %v2086
        %v2093 = vsel %vm912, %v2079, 0
        %2095 = vmatprep.subr.bf16.mxu0 0
        %2096 = vmatpush1.bf16.msra.mxu0 0
        %2097 = vmatprep.subr.bf16.mxu0 0
        %2098 = vmatpush1.bf16.msra.mxu0 0
        %2099 = vmatprep.subr.bf16.mxu0 0
        %2100 = vmatpush1.bf16.msra.mxu0 0
        %2101 = vmatprep.subr.bf16.mxu0 0
        %2102 = vmatpush1.bf16.msra.mxu0 0
        %2103 = vmatprep.subr.bf16.mxu0 0
        %2104 = vmatpush1.bf16.msra.mxu0 0
        %2105 = vmatprep.subr.bf16.mxu0 0
        %2106 = vmatpush1.bf16.msra.mxu0 0
        %2107 = vmatprep.subr.bf16.mxu0 0
        %2108 = vmatpush1.bf16.msra.mxu0 %v2089
        %2109 = vmatprep.subr.bf16.mxu0 0
        %2110 = vmatpush1.bf16.msra.mxu0 %v2088
        %2111 = vmatprep.subr.bf16.mxu0 0
        %2112 = vmatpush2.bf16.msra.mxu0 0
        %2113 = vmatprep.subr.bf16.mxu0 0
        %2114 = vmatpush2.bf16.msra.mxu0 0
        %2115 = vmatprep.subr.bf16.mxu0 0
        %2116 = vmatpush2.bf16.msra.mxu0 0
        %2117 = vmatprep.subr.bf16.mxu0 0
        %2118 = vmatpush2.bf16.msra.mxu0 0
        %2119 = vmatprep.subr.bf16.mxu0 0
        %2120 = vmatpush2.bf16.msra.mxu0 0
        %2121 = vmatprep.subr.bf16.mxu0 0
        %2122 = vmatpush2.bf16.msra.mxu0 0
        %2123 = vmatprep.subr.bf16.mxu0 0
        %2124 = vmatpush2.bf16.msra.mxu0 0
        %2125 = vmatprep.subr.bf16.mxu0 0
        %2126 = vmatpush2.bf16.msra.mxu0 0
        %2127 = vmatprep.mubr.bf16.mxu0 0
        %2128 = vmatmul.mubr.bf16.gmra.mxu0 %v2093
        %v2129 = vpop.f32.mrf.mxu0
        %v2130 = vadd.f32 %v835, %v2129
        %v2131 = vpop.f32.mrf.mxu0
        %v2132 = vpop.f32.mrf.mxu0
        %v2133 = vpop.f32.mrf.mxu0
        %2134 = vdwg.mxu0
        %v2135 = vadd.f32 %v1556, %v2130
        %v2136 = vsel %vm912, %v2135, 0.0
        %2137 = vadd.xlane.f32.xlu0 %v2136
        %v2138 = vpop.xlane.xlu0 %2137
        %v2139 = vmul.f32 %v2138, %v1544
        %v2140 = vsub.f32 %v2135, %v2139
        %v2141 = vmul.f32 %v2140, %v2140
        %v2142 = vsel %vm912, %v2141, 0.0
        %2143 = vadd.xlane.f32.xlu0 %v2142
        %v2144 = vpop.xlane.xlu0 %2143
        %v2145 = vmul.f32 %v2144, %v1544
        %v2146 = vadd.f32 %v2145, 1e-05
        %v2147 = vrsqrt.pop %v2146
        %v2148 = vmul.f32 %v2140, %v2147
        %v2149 = vmul.f32 %v2148, %v870
        %v2150 = vadd.f32 %v2149, %v877
        %v2151 = vpack.c.bf16 %v2150, %v2150
        %v2156 = vunpack.c.l.b16 %v797
        %v2157 = vunpack.c.l.b16 %v798
        %v2158 = vunpack.c.l.b16 %v799
        %v2159 = vunpack.c.l.b16 %v800
        %v2160 = vpack.c.b16 %v2157, %v2156
        %v2161 = vpack.c.b16 %v2159, %v2158
        %v2165 = vsel %vm912, %v2151, 0
        %2167 = vmatprep.subr.bf16.mxu0 0
        %2168 = vmatpush1.bf16.msra.mxu0 0
        %2169 = vmatprep.subr.bf16.mxu0 0
        %2170 = vmatpush1.bf16.msra.mxu0 0
        %2171 = vmatprep.subr.bf16.mxu0 0
        %2172 = vmatpush1.bf16.msra.mxu0 0
        %2173 = vmatprep.subr.bf16.mxu0 0
        %2174 = vmatpush1.bf16.msra.mxu0 0
        %2175 = vmatprep.subr.bf16.mxu0 0
        %2176 = vmatpush1.bf16.msra.mxu0 0
        %2177 = vmatprep.subr.bf16.mxu0 0
        %2178 = vmatpush1.bf16.msra.mxu0 0
        %2179 = vmatprep.subr.bf16.mxu0 0
        %2180 = vmatpush1.bf16.msra.mxu0 %v2161
        %2181 = vmatprep.subr.bf16.mxu0 0
        %2182 = vmatpush1.bf16.msra.mxu0 %v2160
        %2183 = vmatprep.subr.bf16.mxu0 0
        %2184 = vmatpush2.bf16.msra.mxu0 0
        %2185 = vmatprep.subr.bf16.mxu0 0
        %2186 = vmatpush2.bf16.msra.mxu0 0
        %2187 = vmatprep.subr.bf16.mxu0 0
        %2188 = vmatpush2.bf16.msra.mxu0 0
        %2189 = vmatprep.subr.bf16.mxu0 0
        %2190 = vmatpush2.bf16.msra.mxu0 0
        %2191 = vmatprep.subr.bf16.mxu0 0
        %2192 = vmatpush2.bf16.msra.mxu0 0
        %2193 = vmatprep.subr.bf16.mxu0 0
        %2194 = vmatpush2.bf16.msra.mxu0 0
        %2195 = vmatprep.subr.bf16.mxu0 0
        %2196 = vmatpush2.bf16.msra.mxu0 0
        %2197 = vmatprep.subr.bf16.mxu0 0
        %2198 = vmatpush2.bf16.msra.mxu0 0
        %2199 = vmatprep.mubr.bf16.mxu0 0
        %2200 = vmatmul.mubr.bf16.gmra.mxu0 %v2165
        %v2201 = vpop.f32.mrf.mxu0
        %v2202 = vadd.f32 %v842, %v2201
        %v2203 = vpop.f32.mrf.mxu0
        %v2204 = vpop.f32.mrf.mxu0
        %v2205 = vpop.f32.mrf.mxu0
        %2206 = vdwg.mxu0
        %v2207 = vmax.f32 %v2202, 0.0
        %v2208 = vpack.c.bf16 %v2207, %v2207
        %v2217 = vunpack.c.l.b16 %v801
        %v2218 = vunpack.c.l.b16 %v802
        %v2219 = vunpack.c.l.b16 %v803
        %v2220 = vunpack.c.l.b16 %v804
        %v2221 = vunpack.c.l.b16 %v805
        %v2222 = vunpack.c.l.b16 %v806
        %v2223 = vunpack.c.l.b16 %v807
        %v2224 = vunpack.c.l.b16 %v808
        %v2225 = vpack.c.b16 %v2218, %v2217
        %v2226 = vpack.c.b16 %v2220, %v2219
        %v2227 = vpack.c.b16 %v2222, %v2221
        %v2228 = vpack.c.b16 %v2224, %v2223
        %vm2233 = vcmask 523264
        %v2235 = vsel %vm2233, %v2208, 0
        %2237 = vmatprep.subr.bf16.mxu0 0
        %2238 = vmatpush1.bf16.msra.mxu0 0
        %2239 = vmatprep.subr.bf16.mxu0 0
        %2240 = vmatpush1.bf16.msra.mxu0 0
        %2241 = vmatprep.subr.bf16.mxu0 0
        %2242 = vmatpush1.bf16.msra.mxu0 0
        %2243 = vmatprep.subr.bf16.mxu0 0
        %2244 = vmatpush1.bf16.msra.mxu0 0
        %2245 = vmatprep.subr.bf16.mxu0 0
        %2246 = vmatpush1.bf16.msra.mxu0 %v2228
        %2247 = vmatprep.subr.bf16.mxu0 0
        %2248 = vmatpush1.bf16.msra.mxu0 %v2227
        %2249 = vmatprep.subr.bf16.mxu0 0
        %2250 = vmatpush1.bf16.msra.mxu0 %v2226
        %2251 = vmatprep.subr.bf16.mxu0 0
        %2252 = vmatpush1.bf16.msra.mxu0 %v2225
        %2253 = vmatprep.subr.bf16.mxu0 0
        %2254 = vmatpush2.bf16.msra.mxu0 0
        %2255 = vmatprep.subr.bf16.mxu0 0
        %2256 = vmatpush2.bf16.msra.mxu0 0
        %2257 = vmatprep.subr.bf16.mxu0 0
        %2258 = vmatpush2.bf16.msra.mxu0 0
        %2259 = vmatprep.subr.bf16.mxu0 0
        %2260 = vmatpush2.bf16.msra.mxu0 0
        %2261 = vmatprep.subr.bf16.mxu0 0
        %2262 = vmatpush2.bf16.msra.mxu0 0
        %2263 = vmatprep.subr.bf16.mxu0 0
        %2264 = vmatpush2.bf16.msra.mxu0 0
        %2265 = vmatprep.subr.bf16.mxu0 0
        %2266 = vmatpush2.bf16.msra.mxu0 0
        %2267 = vmatprep.subr.bf16.mxu0 0
        %2268 = vmatpush2.bf16.msra.mxu0 0
        %2269 = vmatprep.mubr.bf16.mxu0 0
        %2270 = vmatmul.mubr.bf16.gmra.mxu0 %v2235
        %v2271 = vpop.f32.mrf.mxu0
        %v2272 = vadd.f32 %v849, %v2271
        %v2273 = vpop.f32.mrf.mxu0
        %v2274 = vpop.f32.mrf.mxu0
        %v2275 = vpop.f32.mrf.mxu0
        %2276 = vdwg.mxu0
        %v2277 = vadd.f32 %v2150, %v2272
        %v2278 = vsel %vm912, %v2277, 0.0
        %2279 = vadd.xlane.f32.xlu0 %v2278
        %v2280 = vpop.xlane.xlu0 %2279
        %v2281 = vmul.f32 %v2280, %v1544
        %v2282 = vsub.f32 %v2277, %v2281
        %v2283 = vmul.f32 %v2282, %v2282
        %v2284 = vsel %vm912, %v2283, 0.0
        %2285 = vadd.xlane.f32.xlu0 %v2284
        %v2286 = vpop.xlane.xlu0 %2285
        %v2287 = vmul.f32 %v2286, %v1544
        %v2288 = vadd.f32 %v2287, 1e-05
        %v2289 = vrsqrt.pop %v2288
        %v2290 = vmul.f32 %v2282, %v2289
        %v2291 = vmul.f32 %v2290, %v884
        %v2292 = vadd.f32 %v2291, %v891
        %v2293 = vpack.c.bf16 %v2292, %v2292
        %v2295 = vsel %vm912, %v2293, 0
        %2297 = vmatprep.subr.bf16.mxu0 0
        %2298 = vmatpush1.bf16.msra.mxu0 0
        %2299 = vmatprep.subr.bf16.mxu0 0
        %2300 = vmatpush1.bf16.msra.mxu0 0
        %2301 = vmatprep.subr.bf16.mxu0 0
        %2302 = vmatpush1.bf16.msra.mxu0 0
        %2303 = vmatprep.subr.bf16.mxu0 0
        %2304 = vmatpush1.bf16.msra.mxu0 0
        %2305 = vmatprep.subr.bf16.mxu0 0
        %2306 = vmatpush1.bf16.msra.mxu0 0
        %2307 = vmatprep.subr.bf16.mxu0 0
        %2308 = vmatpush1.bf16.msra.mxu0 0
        %2309 = vmatprep.subr.bf16.mxu0 0
        %2310 = vmatpush1.bf16.msra.mxu0 %v967
        %2311 = vmatprep.subr.bf16.mxu0 0
        %2312 = vmatpush1.bf16.msra.mxu0 %v966
        %2313 = vmatprep.subr.bf16.mxu0 0
        %2314 = vmatpush2.bf16.msra.mxu0 0
        %2315 = vmatprep.subr.bf16.mxu0 0
        %2316 = vmatpush2.bf16.msra.mxu0 0
        %2317 = vmatprep.subr.bf16.mxu0 0
        %2318 = vmatpush2.bf16.msra.mxu0 0
        %2319 = vmatprep.subr.bf16.mxu0 0
        %2320 = vmatpush2.bf16.msra.mxu0 0
        %2321 = vmatprep.subr.bf16.mxu0 0
        %2322 = vmatpush2.bf16.msra.mxu0 0
        %2323 = vmatprep.subr.bf16.mxu0 0
        %2324 = vmatpush2.bf16.msra.mxu0 0
        %2325 = vmatprep.subr.bf16.mxu0 0
        %2326 = vmatpush2.bf16.msra.mxu0 0
        %2327 = vmatprep.subr.bf16.mxu0 0
        %2328 = vmatpush2.bf16.msra.mxu0 0
        %2329 = vmatprep.mubr.bf16.mxu0 0
        %2330 = vmatmul.mubr.bf16.gmra.mxu0 %v2295
        %v2331 = vpop.f32.mrf.mxu0
        %v2332 = vadd.f32 %v814, %v2331
        %v2333 = vpop.f32.mrf.mxu0
        %v2334 = vpop.f32.mrf.mxu0
        %v2335 = vpop.f32.mrf.mxu0
        %2336 = vdwg.mxu0
        %v2337 = vpack.c.bf16 %v2332, %v2332
        %2339 = vrot.lane.b32.xlu0 %v2337, 96
        %v2340 = vpop.permute.xlu0 %2339
        %v2342 = vsel %vm1017, %v2337, 0
        %v2345 = vsel %vm1017, %v2340, 0
        %2347 = vmatprep.subr.bf16.mxu0 0
        %2348 = vmatpush1.bf16.xpose.msra.mxu0 0
        %2349 = vmatprep.subr.bf16.mxu0 0
        %2350 = vmatpush1.bf16.xpose.msra.mxu0 0
        %2351 = vmatprep.subr.bf16.mxu0 0
        %2352 = vmatpush1.bf16.xpose.msra.mxu0 0
        %2353 = vmatprep.subr.bf16.mxu0 0
        %2354 = vmatpush1.bf16.xpose.msra.mxu0 0
        %2355 = vmatprep.subr.bf16.mxu0 0
        %2356 = vmatpush1.bf16.xpose.msra.mxu0 0
        %2357 = vmatprep.subr.bf16.mxu0 0
        %2358 = vmatpush1.bf16.xpose.msra.mxu0 0
        %2359 = vmatprep.subr.bf16.mxu0 0
        %2360 = vmatpush1.bf16.xpose.msra.mxu0 0
        %2361 = vmatprep.subr.bf16.mxu0 0
        %2362 = vmatpush1.bf16.xpose.msra.mxu0 %v2345
        %2363 = vmatprep.subr.bf16.mxu0 0
        %2364 = vmatpush2.bf16.xpose.msra.mxu0 0
        %2365 = vmatprep.subr.bf16.mxu0 0
        %2366 = vmatpush2.bf16.xpose.msra.mxu0 0
        %2367 = vmatprep.subr.bf16.mxu0 0
        %2368 = vmatpush2.bf16.xpose.msra.mxu0 0
        %2369 = vmatprep.subr.bf16.mxu0 0
        %2370 = vmatpush2.bf16.xpose.msra.mxu0 0
        %2371 = vmatprep.subr.bf16.mxu0 0
        %2372 = vmatpush2.bf16.xpose.msra.mxu0 0
        %2373 = vmatprep.subr.bf16.mxu0 0
        %2374 = vmatpush2.bf16.xpose.msra.mxu0 0
        %2375 = vmatprep.subr.bf16.mxu0 0
        %2376 = vmatpush2.bf16.xpose.msra.mxu0 0
        %2377 = vmatprep.subr.bf16.mxu0 0
        %2378 = vmatpush2.bf16.xpose.msra.mxu0 0
        %2379 = vmatprep.mubr.bf16.mxu0 0
        %2380 = vmatmul.mubr.bf16.gmra.mxu0 %v2342
        %v2381 = vpop.f32.mrf.mxu0
        %v2382 = vadd.f32 0.0, %v2381
        %v2383 = vpop.f32.mrf.mxu0
        %v2384 = vpop.f32.mrf.mxu0
        %v2385 = vpop.f32.mrf.mxu0
        %2386 = vdwg.mxu0
        %v2387 = vsel %vm1017, %v2382, -inf
        %2388 = vmax.xlane.f32.xlu0 %v2387
        %v2389 = vpop.xlane.xlu0 %2388
        %v2390 = vsub.f32 %v2382, %v2389
        %v2391 = vmul.f32 %v2390, 1.442695
        %v2392 = vpow.pop %v2391
        %v2393 = vsel %vm1017, %v2392, 0.0
        %2394 = vadd.xlane.f32.xlu0 %v2393
        %v2395 = vpop.xlane.xlu0 %2394
        %v2396 = vrcp.pop %v2395
        %v2397 = vmul.f32 %v2395, %v2396
        %v2398 = vsub.f32 2.0, %v2397
        %v2399 = vmul.f32 %v2396, %v2398
        %v2400 = vmul.f32 %v2392, %v2399
        %v2401 = vpack.c.bf16 %v2400, %v2400
        %2402 = vrot.lane.b32.xlu0 %v2337, 64
        %v2403 = vpop.permute.xlu0 %2402
        %v2405 = vsel %vm1017, %v2401, 0
        %v2408 = vsel %vm1084, %v2403, 0
        %2410 = vmatprep.subr.bf16.mxu0 0
        %2411 = vmatpush1.bf16.msra.mxu0 0
        %2412 = vmatprep.subr.bf16.mxu0 0
        %2413 = vmatpush1.bf16.msra.mxu0 0
        %2414 = vmatprep.subr.bf16.mxu0 0
        %2415 = vmatpush1.bf16.msra.mxu0 0
        %2416 = vmatprep.subr.bf16.mxu0 0
        %2417 = vmatpush1.bf16.msra.mxu0 0
        %2418 = vmatprep.subr.bf16.mxu0 0
        %2419 = vmatpush1.bf16.msra.mxu0 0
        %2420 = vmatprep.subr.bf16.mxu0 0
        %2421 = vmatpush1.bf16.msra.mxu0 0
        %2422 = vmatprep.subr.bf16.mxu0 0
        %2423 = vmatpush1.bf16.msra.mxu0 0
        %2424 = vmatprep.subr.bf16.mxu0 0
        %2425 = vmatpush1.bf16.msra.mxu0 %v2408
        %2426 = vmatprep.subr.bf16.mxu0 0
        %2427 = vmatpush2.bf16.msra.mxu0 0
        %2428 = vmatprep.subr.bf16.mxu0 0
        %2429 = vmatpush2.bf16.msra.mxu0 0
        %2430 = vmatprep.subr.bf16.mxu0 0
        %2431 = vmatpush2.bf16.msra.mxu0 0
        %2432 = vmatprep.subr.bf16.mxu0 0
        %2433 = vmatpush2.bf16.msra.mxu0 0
        %2434 = vmatprep.subr.bf16.mxu0 0
        %2435 = vmatpush2.bf16.msra.mxu0 0
        %2436 = vmatprep.subr.bf16.mxu0 0
        %2437 = vmatpush2.bf16.msra.mxu0 0
        %2438 = vmatprep.subr.bf16.mxu0 0
        %2439 = vmatpush2.bf16.msra.mxu0 0
        %2440 = vmatprep.subr.bf16.mxu0 0
        %2441 = vmatpush2.bf16.msra.mxu0 0
        %2442 = vmatprep.mubr.bf16.mxu0 0
        %2443 = vmatmul.mubr.bf16.gmra.mxu0 %v2405
        %v2444 = vpop.f32.mrf.mxu0
        %v2445 = vadd.f32 0.0, %v2444
        %v2446 = vpop.f32.mrf.mxu0
        %v2447 = vpop.f32.mrf.mxu0
        %v2448 = vpop.f32.mrf.mxu0
        %2449 = vdwg.mxu0
        %2450 = vrot.lane.b32.xlu0 %v2337, 120
        %v2451 = vpop.permute.xlu0 %2450
        %2452 = vrot.lane.b32.xlu0 %v2337, 88
        %v2453 = vpop.permute.xlu0 %2452
        %v2455 = vsel %vm1017, %v2451, 0
        %v2458 = vsel %vm1017, %v2453, 0
        %2460 = vmatprep.subr.bf16.mxu0 0
        %2461 = vmatpush1.bf16.xpose.msra.mxu0 0
        %2462 = vmatprep.subr.bf16.mxu0 0
        %2463 = vmatpush1.bf16.xpose.msra.mxu0 0
        %2464 = vmatprep.subr.bf16.mxu0 0
        %2465 = vmatpush1.bf16.xpose.msra.mxu0 0
        %2466 = vmatprep.subr.bf16.mxu0 0
        %2467 = vmatpush1.bf16.xpose.msra.mxu0 0
        %2468 = vmatprep.subr.bf16.mxu0 0
        %2469 = vmatpush1.bf16.xpose.msra.mxu0 0
        %2470 = vmatprep.subr.bf16.mxu0 0
        %2471 = vmatpush1.bf16.xpose.msra.mxu0 0
        %2472 = vmatprep.subr.bf16.mxu0 0
        %2473 = vmatpush1.bf16.xpose.msra.mxu0 0
        %2474 = vmatprep.subr.bf16.mxu0 0
        %2475 = vmatpush1.bf16.xpose.msra.mxu0 %v2458
        %2476 = vmatprep.subr.bf16.mxu0 0
        %2477 = vmatpush2.bf16.xpose.msra.mxu0 0
        %2478 = vmatprep.subr.bf16.mxu0 0
        %2479 = vmatpush2.bf16.xpose.msra.mxu0 0
        %2480 = vmatprep.subr.bf16.mxu0 0
        %2481 = vmatpush2.bf16.xpose.msra.mxu0 0
        %2482 = vmatprep.subr.bf16.mxu0 0
        %2483 = vmatpush2.bf16.xpose.msra.mxu0 0
        %2484 = vmatprep.subr.bf16.mxu0 0
        %2485 = vmatpush2.bf16.xpose.msra.mxu0 0
        %2486 = vmatprep.subr.bf16.mxu0 0
        %2487 = vmatpush2.bf16.xpose.msra.mxu0 0
        %2488 = vmatprep.subr.bf16.mxu0 0
        %2489 = vmatpush2.bf16.xpose.msra.mxu0 0
        %2490 = vmatprep.subr.bf16.mxu0 0
        %2491 = vmatpush2.bf16.xpose.msra.mxu0 0
        %2492 = vmatprep.mubr.bf16.mxu0 0
        %2493 = vmatmul.mubr.bf16.gmra.mxu0 %v2455
        %v2494 = vpop.f32.mrf.mxu0
        %v2495 = vadd.f32 0.0, %v2494
        %v2496 = vpop.f32.mrf.mxu0
        %v2497 = vpop.f32.mrf.mxu0
        %v2498 = vpop.f32.mrf.mxu0
        %2499 = vdwg.mxu0
        %v2500 = vsel %vm1017, %v2495, -inf
        %2501 = vmax.xlane.f32.xlu0 %v2500
        %v2502 = vpop.xlane.xlu0 %2501
        %v2503 = vsub.f32 %v2495, %v2502
        %v2504 = vmul.f32 %v2503, 1.442695
        %v2505 = vpow.pop %v2504
        %v2506 = vsel %vm1017, %v2505, 0.0
        %2507 = vadd.xlane.f32.xlu0 %v2506
        %v2508 = vpop.xlane.xlu0 %2507
        %v2509 = vrcp.pop %v2508
        %v2510 = vmul.f32 %v2508, %v2509
        %v2511 = vsub.f32 2.0, %v2510
        %v2512 = vmul.f32 %v2509, %v2511
        %v2513 = vmul.f32 %v2505, %v2512
        %v2514 = vpack.c.bf16 %v2513, %v2513
        %2515 = vrot.lane.b32.xlu0 %v2337, 56
        %v2516 = vpop.permute.xlu0 %2515
        %v2518 = vsel %vm1017, %v2514, 0
        %v2521 = vsel %vm1084, %v2516, 0
        %2523 = vmatprep.subr.bf16.mxu0 0
        %2524 = vmatpush1.bf16.msra.mxu0 0
        %2525 = vmatprep.subr.bf16.mxu0 0
        %2526 = vmatpush1.bf16.msra.mxu0 0
        %2527 = vmatprep.subr.bf16.mxu0 0
        %2528 = vmatpush1.bf16.msra.mxu0 0
        %2529 = vmatprep.subr.bf16.mxu0 0
        %2530 = vmatpush1.bf16.msra.mxu0 0
        %2531 = vmatprep.subr.bf16.mxu0 0
        %2532 = vmatpush1.bf16.msra.mxu0 0
        %2533 = vmatprep.subr.bf16.mxu0 0
        %2534 = vmatpush1.bf16.msra.mxu0 0
        %2535 = vmatprep.subr.bf16.mxu0 0
        %2536 = vmatpush1.bf16.msra.mxu0 0
        %2537 = vmatprep.subr.bf16.mxu0 0
        %2538 = vmatpush1.bf16.msra.mxu0 %v2521
        %2539 = vmatprep.subr.bf16.mxu0 0
        %2540 = vmatpush2.bf16.msra.mxu0 0
        %2541 = vmatprep.subr.bf16.mxu0 0
        %2542 = vmatpush2.bf16.msra.mxu0 0
        %2543 = vmatprep.subr.bf16.mxu0 0
        %2544 = vmatpush2.bf16.msra.mxu0 0
        %2545 = vmatprep.subr.bf16.mxu0 0
        %2546 = vmatpush2.bf16.msra.mxu0 0
        %2547 = vmatprep.subr.bf16.mxu0 0
        %2548 = vmatpush2.bf16.msra.mxu0 0
        %2549 = vmatprep.subr.bf16.mxu0 0
        %2550 = vmatpush2.bf16.msra.mxu0 0
        %2551 = vmatprep.subr.bf16.mxu0 0
        %2552 = vmatpush2.bf16.msra.mxu0 0
        %2553 = vmatprep.subr.bf16.mxu0 0
        %2554 = vmatpush2.bf16.msra.mxu0 0
        %2555 = vmatprep.mubr.bf16.mxu0 0
        %2556 = vmatmul.mubr.bf16.gmra.mxu0 %v2518
        %v2557 = vpop.f32.mrf.mxu0
        %v2558 = vadd.f32 0.0, %v2557
        %v2559 = vpop.f32.mrf.mxu0
        %v2560 = vpop.f32.mrf.mxu0
        %v2561 = vpop.f32.mrf.mxu0
        %2562 = vdwg.mxu0
        %2563 = vrot.lane.b32.xlu0 %v2337, 112
        %v2564 = vpop.permute.xlu0 %2563
        %2565 = vrot.lane.b32.xlu0 %v2337, 80
        %v2566 = vpop.permute.xlu0 %2565
        %v2568 = vsel %vm1017, %v2564, 0
        %v2571 = vsel %vm1017, %v2566, 0
        %2573 = vmatprep.subr.bf16.mxu0 0
        %2574 = vmatpush1.bf16.xpose.msra.mxu0 0
        %2575 = vmatprep.subr.bf16.mxu0 0
        %2576 = vmatpush1.bf16.xpose.msra.mxu0 0
        %2577 = vmatprep.subr.bf16.mxu0 0
        %2578 = vmatpush1.bf16.xpose.msra.mxu0 0
        %2579 = vmatprep.subr.bf16.mxu0 0
        %2580 = vmatpush1.bf16.xpose.msra.mxu0 0
        %2581 = vmatprep.subr.bf16.mxu0 0
        %2582 = vmatpush1.bf16.xpose.msra.mxu0 0
        %2583 = vmatprep.subr.bf16.mxu0 0
        %2584 = vmatpush1.bf16.xpose.msra.mxu0 0
        %2585 = vmatprep.subr.bf16.mxu0 0
        %2586 = vmatpush1.bf16.xpose.msra.mxu0 0
        %2587 = vmatprep.subr.bf16.mxu0 0
        %2588 = vmatpush1.bf16.xpose.msra.mxu0 %v2571
        %2589 = vmatprep.subr.bf16.mxu0 0
        %2590 = vmatpush2.bf16.xpose.msra.mxu0 0
        %2591 = vmatprep.subr.bf16.mxu0 0
        %2592 = vmatpush2.bf16.xpose.msra.mxu0 0
        %2593 = vmatprep.subr.bf16.mxu0 0
        %2594 = vmatpush2.bf16.xpose.msra.mxu0 0
        %2595 = vmatprep.subr.bf16.mxu0 0
        %2596 = vmatpush2.bf16.xpose.msra.mxu0 0
        %2597 = vmatprep.subr.bf16.mxu0 0
        %2598 = vmatpush2.bf16.xpose.msra.mxu0 0
        %2599 = vmatprep.subr.bf16.mxu0 0
        %2600 = vmatpush2.bf16.xpose.msra.mxu0 0
        %2601 = vmatprep.subr.bf16.mxu0 0
        %2602 = vmatpush2.bf16.xpose.msra.mxu0 0
        %2603 = vmatprep.subr.bf16.mxu0 0
        %2604 = vmatpush2.bf16.xpose.msra.mxu0 0
        %2605 = vmatprep.mubr.bf16.mxu0 0
        %2606 = vmatmul.mubr.bf16.gmra.mxu0 %v2568
        %v2607 = vpop.f32.mrf.mxu0
        %v2608 = vadd.f32 0.0, %v2607
        %v2609 = vpop.f32.mrf.mxu0
        %v2610 = vpop.f32.mrf.mxu0
        %v2611 = vpop.f32.mrf.mxu0
        %2612 = vdwg.mxu0
        %v2613 = vsel %vm1017, %v2608, -inf
        %2614 = vmax.xlane.f32.xlu0 %v2613
        %v2615 = vpop.xlane.xlu0 %2614
        %v2616 = vsub.f32 %v2608, %v2615
        %v2617 = vmul.f32 %v2616, 1.442695
        %v2618 = vpow.pop %v2617
        %v2619 = vsel %vm1017, %v2618, 0.0
        %2620 = vadd.xlane.f32.xlu0 %v2619
        %v2621 = vpop.xlane.xlu0 %2620
        %v2622 = vrcp.pop %v2621
        %v2623 = vmul.f32 %v2621, %v2622
        %v2624 = vsub.f32 2.0, %v2623
        %v2625 = vmul.f32 %v2622, %v2624
        %v2626 = vmul.f32 %v2618, %v2625
        %v2627 = vpack.c.bf16 %v2626, %v2626
        %2628 = vrot.lane.b32.xlu0 %v2337, 48
        %v2629 = vpop.permute.xlu0 %2628
        %v2631 = vsel %vm1017, %v2627, 0
        %v2634 = vsel %vm1084, %v2629, 0
        %2636 = vmatprep.subr.bf16.mxu0 0
        %2637 = vmatpush1.bf16.msra.mxu0 0
        %2638 = vmatprep.subr.bf16.mxu0 0
        %2639 = vmatpush1.bf16.msra.mxu0 0
        %2640 = vmatprep.subr.bf16.mxu0 0
        %2641 = vmatpush1.bf16.msra.mxu0 0
        %2642 = vmatprep.subr.bf16.mxu0 0
        %2643 = vmatpush1.bf16.msra.mxu0 0
        %2644 = vmatprep.subr.bf16.mxu0 0
        %2645 = vmatpush1.bf16.msra.mxu0 0
        %2646 = vmatprep.subr.bf16.mxu0 0
        %2647 = vmatpush1.bf16.msra.mxu0 0
        %2648 = vmatprep.subr.bf16.mxu0 0
        %2649 = vmatpush1.bf16.msra.mxu0 0
        %2650 = vmatprep.subr.bf16.mxu0 0
        %2651 = vmatpush1.bf16.msra.mxu0 %v2634
        %2652 = vmatprep.subr.bf16.mxu0 0
        %2653 = vmatpush2.bf16.msra.mxu0 0
        %2654 = vmatprep.subr.bf16.mxu0 0
        %2655 = vmatpush2.bf16.msra.mxu0 0
        %2656 = vmatprep.subr.bf16.mxu0 0
        %2657 = vmatpush2.bf16.msra.mxu0 0
        %2658 = vmatprep.subr.bf16.mxu0 0
        %2659 = vmatpush2.bf16.msra.mxu0 0
        %2660 = vmatprep.subr.bf16.mxu0 0
        %2661 = vmatpush2.bf16.msra.mxu0 0
        %2662 = vmatprep.subr.bf16.mxu0 0
        %2663 = vmatpush2.bf16.msra.mxu0 0
        %2664 = vmatprep.subr.bf16.mxu0 0
        %2665 = vmatpush2.bf16.msra.mxu0 0
        %2666 = vmatprep.subr.bf16.mxu0 0
        %2667 = vmatpush2.bf16.msra.mxu0 0
        %2668 = vmatprep.mubr.bf16.mxu0 0
        %2669 = vmatmul.mubr.bf16.gmra.mxu0 %v2631
        %v2670 = vpop.f32.mrf.mxu0
        %v2671 = vadd.f32 0.0, %v2670
        %v2672 = vpop.f32.mrf.mxu0
        %v2673 = vpop.f32.mrf.mxu0
        %v2674 = vpop.f32.mrf.mxu0
        %2675 = vdwg.mxu0
        %2676 = vrot.lane.b32.xlu0 %v2337, 104
        %v2677 = vpop.permute.xlu0 %2676
        %2678 = vrot.lane.b32.xlu0 %v2337, 72
        %v2679 = vpop.permute.xlu0 %2678
        %v2681 = vsel %vm1017, %v2677, 0
        %v2684 = vsel %vm1017, %v2679, 0
        %2686 = vmatprep.subr.bf16.mxu0 0
        %2687 = vmatpush1.bf16.xpose.msra.mxu0 0
        %2688 = vmatprep.subr.bf16.mxu0 0
        %2689 = vmatpush1.bf16.xpose.msra.mxu0 0
        %2690 = vmatprep.subr.bf16.mxu0 0
        %2691 = vmatpush1.bf16.xpose.msra.mxu0 0
        %2692 = vmatprep.subr.bf16.mxu0 0
        %2693 = vmatpush1.bf16.xpose.msra.mxu0 0
        %2694 = vmatprep.subr.bf16.mxu0 0
        %2695 = vmatpush1.bf16.xpose.msra.mxu0 0
        %2696 = vmatprep.subr.bf16.mxu0 0
        %2697 = vmatpush1.bf16.xpose.msra.mxu0 0
        %2698 = vmatprep.subr.bf16.mxu0 0
        %2699 = vmatpush1.bf16.xpose.msra.mxu0 0
        %2700 = vmatprep.subr.bf16.mxu0 0
        %2701 = vmatpush1.bf16.xpose.msra.mxu0 %v2684
        %2702 = vmatprep.subr.bf16.mxu0 0
        %2703 = vmatpush2.bf16.xpose.msra.mxu0 0
        %2704 = vmatprep.subr.bf16.mxu0 0
        %2705 = vmatpush2.bf16.xpose.msra.mxu0 0
        %2706 = vmatprep.subr.bf16.mxu0 0
        %2707 = vmatpush2.bf16.xpose.msra.mxu0 0
        %2708 = vmatprep.subr.bf16.mxu0 0
        %2709 = vmatpush2.bf16.xpose.msra.mxu0 0
        %2710 = vmatprep.subr.bf16.mxu0 0
        %2711 = vmatpush2.bf16.xpose.msra.mxu0 0
        %2712 = vmatprep.subr.bf16.mxu0 0
        %2713 = vmatpush2.bf16.xpose.msra.mxu0 0
        %2714 = vmatprep.subr.bf16.mxu0 0
        %2715 = vmatpush2.bf16.xpose.msra.mxu0 0
        %2716 = vmatprep.subr.bf16.mxu0 0
        %2717 = vmatpush2.bf16.xpose.msra.mxu0 0
        %2718 = vmatprep.mubr.bf16.mxu0 0
        %2719 = vmatmul.mubr.bf16.gmra.mxu0 %v2681
        %v2720 = vpop.f32.mrf.mxu0
        %v2721 = vadd.f32 0.0, %v2720
        %v2722 = vpop.f32.mrf.mxu0
        %v2723 = vpop.f32.mrf.mxu0
        %v2724 = vpop.f32.mrf.mxu0
        %2725 = vdwg.mxu0
        %v2726 = vsel %vm1017, %v2721, -inf
        %2727 = vmax.xlane.f32.xlu0 %v2726
        %v2728 = vpop.xlane.xlu0 %2727
        %v2729 = vsub.f32 %v2721, %v2728
        %v2730 = vmul.f32 %v2729, 1.442695
        %v2731 = vpow.pop %v2730
        %v2732 = vsel %vm1017, %v2731, 0.0
        %2733 = vadd.xlane.f32.xlu0 %v2732
        %v2734 = vpop.xlane.xlu0 %2733
        %v2735 = vrcp.pop %v2734
        %v2736 = vmul.f32 %v2734, %v2735
        %v2737 = vsub.f32 2.0, %v2736
        %v2738 = vmul.f32 %v2735, %v2737
        %v2739 = vmul.f32 %v2731, %v2738
        %v2740 = vpack.c.bf16 %v2739, %v2739
        %2741 = vrot.lane.b32.xlu0 %v2337, 40
        %v2742 = vpop.permute.xlu0 %2741
        %v2744 = vsel %vm1017, %v2740, 0
        %v2747 = vsel %vm1084, %v2742, 0
        %2749 = vmatprep.subr.bf16.mxu0 0
        %2750 = vmatpush1.bf16.msra.mxu0 0
        %2751 = vmatprep.subr.bf16.mxu0 0
        %2752 = vmatpush1.bf16.msra.mxu0 0
        %2753 = vmatprep.subr.bf16.mxu0 0
        %2754 = vmatpush1.bf16.msra.mxu0 0
        %2755 = vmatprep.subr.bf16.mxu0 0
        %2756 = vmatpush1.bf16.msra.mxu0 0
        %2757 = vmatprep.subr.bf16.mxu0 0
        %2758 = vmatpush1.bf16.msra.mxu0 0
        %2759 = vmatprep.subr.bf16.mxu0 0
        %2760 = vmatpush1.bf16.msra.mxu0 0
        %2761 = vmatprep.subr.bf16.mxu0 0
        %2762 = vmatpush1.bf16.msra.mxu0 0
        %2763 = vmatprep.subr.bf16.mxu0 0
        %2764 = vmatpush1.bf16.msra.mxu0 %v2747
        %2765 = vmatprep.subr.bf16.mxu0 0
        %2766 = vmatpush2.bf16.msra.mxu0 0
        %2767 = vmatprep.subr.bf16.mxu0 0
        %2768 = vmatpush2.bf16.msra.mxu0 0
        %2769 = vmatprep.subr.bf16.mxu0 0
        %2770 = vmatpush2.bf16.msra.mxu0 0
        %2771 = vmatprep.subr.bf16.mxu0 0
        %2772 = vmatpush2.bf16.msra.mxu0 0
        %2773 = vmatprep.subr.bf16.mxu0 0
        %2774 = vmatpush2.bf16.msra.mxu0 0
        %2775 = vmatprep.subr.bf16.mxu0 0
        %2776 = vmatpush2.bf16.msra.mxu0 0
        %2777 = vmatprep.subr.bf16.mxu0 0
        %2778 = vmatpush2.bf16.msra.mxu0 0
        %2779 = vmatprep.subr.bf16.mxu0 0
        %2780 = vmatpush2.bf16.msra.mxu0 0
        %2781 = vmatprep.mubr.bf16.mxu0 0
        %2782 = vmatmul.mubr.bf16.gmra.mxu0 %v2744
        %v2783 = vpop.f32.mrf.mxu0
        %v2784 = vadd.f32 0.0, %v2783
        %v2785 = vpop.f32.mrf.mxu0
        %v2786 = vpop.f32.mrf.mxu0
        %v2787 = vpop.f32.mrf.mxu0
        %2788 = vdwg.mxu0
        %2790 = vrot.lane.b32.xlu0 %v2558, 8
        %v2791 = vpop.permute.xlu0 %2790
        %2794 = vrot.lane.b32.xlu0 %v2671, 16
        %v2795 = vpop.permute.xlu0 %2794
        %2798 = vrot.lane.b32.xlu0 %v2784, 24
        %v2799 = vpop.permute.xlu0 %2798
        %v2801 = vsel %vm1017, %v2445, %v2791
        %v2802 = vsel %vm1480, %v2801, %v2795
        %v2803 = vsel %vm1482, %v2802, %v2799
        %v2804 = vpack.c.bf16 %v2803, %v2803
        %v2806 = vsel %vm912, %v2804, 0
        %2808 = vmatprep.subr.bf16.mxu0 0
        %2809 = vmatpush1.bf16.msra.mxu0 0
        %2810 = vmatprep.subr.bf16.mxu0 0
        %2811 = vmatpush1.bf16.msra.mxu0 0
        %2812 = vmatprep.subr.bf16.mxu0 0
        %2813 = vmatpush1.bf16.msra.mxu0 0
        %2814 = vmatprep.subr.bf16.mxu0 0
        %2815 = vmatpush1.bf16.msra.mxu0 0
        %2816 = vmatprep.subr.bf16.mxu0 0
        %2817 = vmatpush1.bf16.msra.mxu0 0
        %2818 = vmatprep.subr.bf16.mxu0 0
        %2819 = vmatpush1.bf16.msra.mxu0 0
        %2820 = vmatprep.subr.bf16.mxu0 0
        %2821 = vmatpush1.bf16.msra.mxu0 %v1494
        %2822 = vmatprep.subr.bf16.mxu0 0
        %2823 = vmatpush1.bf16.msra.mxu0 %v1493
        %2824 = vmatprep.subr.bf16.mxu0 0
        %2825 = vmatpush2.bf16.msra.mxu0 0
        %2826 = vmatprep.subr.bf16.mxu0 0
        %2827 = vmatpush2.bf16.msra.mxu0 0
        %2828 = vmatprep.subr.bf16.mxu0 0
        %2829 = vmatpush2.bf16.msra.mxu0 0
        %2830 = vmatprep.subr.bf16.mxu0 0
        %2831 = vmatpush2.bf16.msra.mxu0 0
        %2832 = vmatprep.subr.bf16.mxu0 0
        %2833 = vmatpush2.bf16.msra.mxu0 0
        %2834 = vmatprep.subr.bf16.mxu0 0
        %2835 = vmatpush2.bf16.msra.mxu0 0
        %2836 = vmatprep.subr.bf16.mxu0 0
        %2837 = vmatpush2.bf16.msra.mxu0 0
        %2838 = vmatprep.subr.bf16.mxu0 0
        %2839 = vmatpush2.bf16.msra.mxu0 0
        %2840 = vmatprep.mubr.bf16.mxu0 0
        %2841 = vmatmul.mubr.bf16.gmra.mxu0 %v2806
        %v2842 = vpop.f32.mrf.mxu0
        %v2843 = vadd.f32 %v821, %v2842
        %v2844 = vpop.f32.mrf.mxu0
        %v2845 = vpop.f32.mrf.mxu0
        %v2846 = vpop.f32.mrf.mxu0
        %2847 = vdwg.mxu0
        %v2848 = vadd.f32 %v2292, %v2843
        %v2849 = vsel %vm912, %v2848, 0.0
        %2850 = vadd.xlane.f32.xlu0 %v2849
        %v2851 = vpop.xlane.xlu0 %2850
        %v2852 = vmul.f32 %v2851, %v1544
        %v2853 = vsub.f32 %v2848, %v2852
        %v2854 = vmul.f32 %v2853, %v2853
        %v2855 = vsel %vm912, %v2854, 0.0
        %2856 = vadd.xlane.f32.xlu0 %v2855
        %v2857 = vpop.xlane.xlu0 %2856
        %v2858 = vmul.f32 %v2857, %v1544
        %v2859 = vadd.f32 %v2858, 1e-05
        %v2860 = vrsqrt.pop %v2859
        %v2861 = vmul.f32 %v2853, %v2860
        %v2862 = vmul.f32 %v2861, %v856
        %v2863 = vadd.f32 %v2862, %v863
        %v2864 = vpack.c.bf16 %v2863, %v2863
        %v2866 = vsel %vm912, %v2864, 0
        %2868 = vmatprep.subr.bf16.mxu0 0
        %2869 = vmatpush1.bf16.msra.mxu0 0
        %2870 = vmatprep.subr.bf16.mxu0 0
        %2871 = vmatpush1.bf16.msra.mxu0 0
        %2872 = vmatprep.subr.bf16.mxu0 0
        %2873 = vmatpush1.bf16.msra.mxu0 0
        %2874 = vmatprep.subr.bf16.mxu0 0
        %2875 = vmatpush1.bf16.msra.mxu0 0
        %2876 = vmatprep.subr.bf16.mxu0 0
        %2877 = vmatpush1.bf16.msra.mxu0 0
        %2878 = vmatprep.subr.bf16.mxu0 0
        %2879 = vmatpush1.bf16.msra.mxu0 0
        %2880 = vmatprep.subr.bf16.mxu0 0
        %2881 = vmatpush1.bf16.msra.mxu0 %v1567
        %2882 = vmatprep.subr.bf16.mxu0 0
        %2883 = vmatpush1.bf16.msra.mxu0 %v1566
        %2884 = vmatprep.subr.bf16.mxu0 0
        %2885 = vmatpush2.bf16.msra.mxu0 0
        %2886 = vmatprep.subr.bf16.mxu0 0
        %2887 = vmatpush2.bf16.msra.mxu0 0
        %2888 = vmatprep.subr.bf16.mxu0 0
        %2889 = vmatpush2.bf16.msra.mxu0 0
        %2890 = vmatprep.subr.bf16.mxu0 0
        %2891 = vmatpush2.bf16.msra.mxu0 0
        %2892 = vmatprep.subr.bf16.mxu0 0
        %2893 = vmatpush2.bf16.msra.mxu0 0
        %2894 = vmatprep.subr.bf16.mxu0 0
        %2895 = vmatpush2.bf16.msra.mxu0 0
        %2896 = vmatprep.subr.bf16.mxu0 0
        %2897 = vmatpush2.bf16.msra.mxu0 0
        %2898 = vmatprep.subr.bf16.mxu0 0
        %2899 = vmatpush2.bf16.msra.mxu0 0
        %2900 = vmatprep.mubr.bf16.mxu0 0
        %2901 = vmatmul.mubr.bf16.gmra.mxu0 %v2866
        %v2902 = vpop.f32.mrf.mxu0
        %v2903 = vadd.f32 %v828, %v2902
        %v2904 = vpop.f32.mrf.mxu0
        %v2905 = vpop.f32.mrf.mxu0
        %v2906 = vpop.f32.mrf.mxu0
        %2907 = vdwg.mxu0
        %v2908 = vpack.c.bf16 %v2903, %v2903
        %v2910 = vsel %vm1017, %v2908, 0
        %2912 = vmatprep.subr.bf16.mxu0 0
        %2913 = vmatpush1.bf16.xpose.msra.mxu0 0
        %2914 = vmatprep.subr.bf16.mxu0 0
        %2915 = vmatpush1.bf16.xpose.msra.mxu0 0
        %2916 = vmatprep.subr.bf16.mxu0 0
        %2917 = vmatpush1.bf16.xpose.msra.mxu0 0
        %2918 = vmatprep.subr.bf16.mxu0 0
        %2919 = vmatpush1.bf16.xpose.msra.mxu0 0
        %2920 = vmatprep.subr.bf16.mxu0 0
        %2921 = vmatpush1.bf16.xpose.msra.mxu0 0
        %2922 = vmatprep.subr.bf16.mxu0 0
        %2923 = vmatpush1.bf16.xpose.msra.mxu0 0
        %2924 = vmatprep.subr.bf16.mxu0 0
        %2925 = vmatpush1.bf16.xpose.msra.mxu0 0
        %2926 = vmatprep.subr.bf16.mxu0 0
        %2927 = vmatpush1.bf16.xpose.msra.mxu0 %v1618
        %2928 = vmatprep.subr.bf16.mxu0 0
        %2929 = vmatpush2.bf16.xpose.msra.mxu0 0
        %2930 = vmatprep.subr.bf16.mxu0 0
        %2931 = vmatpush2.bf16.xpose.msra.mxu0 0
        %2932 = vmatprep.subr.bf16.mxu0 0
        %2933 = vmatpush2.bf16.xpose.msra.mxu0 0
        %2934 = vmatprep.subr.bf16.mxu0 0
        %2935 = vmatpush2.bf16.xpose.msra.mxu0 0
        %2936 = vmatprep.subr.bf16.mxu0 0
        %2937 = vmatpush2.bf16.xpose.msra.mxu0 0
        %2938 = vmatprep.subr.bf16.mxu0 0
        %2939 = vmatpush2.bf16.xpose.msra.mxu0 0
        %2940 = vmatprep.subr.bf16.mxu0 0
        %2941 = vmatpush2.bf16.xpose.msra.mxu0 0
        %2942 = vmatprep.subr.bf16.mxu0 0
        %2943 = vmatpush2.bf16.xpose.msra.mxu0 0
        %2944 = vmatprep.mubr.bf16.mxu0 0
        %2945 = vmatmul.mubr.bf16.gmra.mxu0 %v2910
        %v2946 = vpop.f32.mrf.mxu0
        %v2947 = vadd.f32 0.0, %v2946
        %v2948 = vpop.f32.mrf.mxu0
        %v2949 = vpop.f32.mrf.mxu0
        %v2950 = vpop.f32.mrf.mxu0
        %2951 = vdwg.mxu0
        %v2952 = vsel %vm1017, %v2947, -inf
        %2953 = vmax.xlane.f32.xlu0 %v2952
        %v2954 = vpop.xlane.xlu0 %2953
        %v2955 = vsub.f32 %v2947, %v2954
        %v2956 = vmul.f32 %v2955, 1.442695
        %v2957 = vpow.pop %v2956
        %v2958 = vsel %vm1017, %v2957, 0.0
        %2959 = vadd.xlane.f32.xlu0 %v2958
        %v2960 = vpop.xlane.xlu0 %2959
        %v2961 = vrcp.pop %v2960
        %v2962 = vmul.f32 %v2960, %v2961
        %v2963 = vsub.f32 2.0, %v2962
        %v2964 = vmul.f32 %v2961, %v2963
        %v2965 = vmul.f32 %v2957, %v2964
        %v2966 = vpack.c.bf16 %v2965, %v2965
        %v2968 = vsel %vm1017, %v2966, 0
        %2970 = vmatprep.subr.bf16.mxu0 0
        %2971 = vmatpush1.bf16.msra.mxu0 0
        %2972 = vmatprep.subr.bf16.mxu0 0
        %2973 = vmatpush1.bf16.msra.mxu0 0
        %2974 = vmatprep.subr.bf16.mxu0 0
        %2975 = vmatpush1.bf16.msra.mxu0 0
        %2976 = vmatprep.subr.bf16.mxu0 0
        %2977 = vmatpush1.bf16.msra.mxu0 0
        %2978 = vmatprep.subr.bf16.mxu0 0
        %2979 = vmatpush1.bf16.msra.mxu0 0
        %2980 = vmatprep.subr.bf16.mxu0 0
        %2981 = vmatpush1.bf16.msra.mxu0 0
        %2982 = vmatprep.subr.bf16.mxu0 0
        %2983 = vmatpush1.bf16.msra.mxu0 0
        %2984 = vmatprep.subr.bf16.mxu0 0
        %2985 = vmatpush1.bf16.msra.mxu0 %v1682
        %2986 = vmatprep.subr.bf16.mxu0 0
        %2987 = vmatpush2.bf16.msra.mxu0 0
        %2988 = vmatprep.subr.bf16.mxu0 0
        %2989 = vmatpush2.bf16.msra.mxu0 0
        %2990 = vmatprep.subr.bf16.mxu0 0
        %2991 = vmatpush2.bf16.msra.mxu0 0
        %2992 = vmatprep.subr.bf16.mxu0 0
        %2993 = vmatpush2.bf16.msra.mxu0 0
        %2994 = vmatprep.subr.bf16.mxu0 0
        %2995 = vmatpush2.bf16.msra.mxu0 0
        %2996 = vmatprep.subr.bf16.mxu0 0
        %2997 = vmatpush2.bf16.msra.mxu0 0
        %2998 = vmatprep.subr.bf16.mxu0 0
        %2999 = vmatpush2.bf16.msra.mxu0 0
        %3000 = vmatprep.subr.bf16.mxu0 0
        %3001 = vmatpush2.bf16.msra.mxu0 0
        %3002 = vmatprep.mubr.bf16.mxu0 0
        %3003 = vmatmul.mubr.bf16.gmra.mxu0 %v2968
        %v3004 = vpop.f32.mrf.mxu0
        %v3005 = vadd.f32 0.0, %v3004
        %v3006 = vpop.f32.mrf.mxu0
        %v3007 = vpop.f32.mrf.mxu0
        %v3008 = vpop.f32.mrf.mxu0
        %3009 = vdwg.mxu0
        %3011 = vrot.lane.b32.xlu0 %v2908, 120
        %v3012 = vpop.permute.xlu0 %3011
        %v3014 = vsel %vm1017, %v3012, 0
        %3016 = vmatprep.subr.bf16.mxu0 0
        %3017 = vmatpush1.bf16.xpose.msra.mxu0 0
        %3018 = vmatprep.subr.bf16.mxu0 0
        %3019 = vmatpush1.bf16.xpose.msra.mxu0 0
        %3020 = vmatprep.subr.bf16.mxu0 0
        %3021 = vmatpush1.bf16.xpose.msra.mxu0 0
        %3022 = vmatprep.subr.bf16.mxu0 0
        %3023 = vmatpush1.bf16.xpose.msra.mxu0 0
        %3024 = vmatprep.subr.bf16.mxu0 0
        %3025 = vmatpush1.bf16.xpose.msra.mxu0 0
        %3026 = vmatprep.subr.bf16.mxu0 0
        %3027 = vmatpush1.bf16.xpose.msra.mxu0 0
        %3028 = vmatprep.subr.bf16.mxu0 0
        %3029 = vmatpush1.bf16.xpose.msra.mxu0 0
        %3030 = vmatprep.subr.bf16.mxu0 0
        %3031 = vmatpush1.bf16.xpose.msra.mxu0 %v1733
        %3032 = vmatprep.subr.bf16.mxu0 0
        %3033 = vmatpush2.bf16.xpose.msra.mxu0 0
        %3034 = vmatprep.subr.bf16.mxu0 0
        %3035 = vmatpush2.bf16.xpose.msra.mxu0 0
        %3036 = vmatprep.subr.bf16.mxu0 0
        %3037 = vmatpush2.bf16.xpose.msra.mxu0 0
        %3038 = vmatprep.subr.bf16.mxu0 0
        %3039 = vmatpush2.bf16.xpose.msra.mxu0 0
        %3040 = vmatprep.subr.bf16.mxu0 0
        %3041 = vmatpush2.bf16.xpose.msra.mxu0 0
        %3042 = vmatprep.subr.bf16.mxu0 0
        %3043 = vmatpush2.bf16.xpose.msra.mxu0 0
        %3044 = vmatprep.subr.bf16.mxu0 0
        %3045 = vmatpush2.bf16.xpose.msra.mxu0 0
        %3046 = vmatprep.subr.bf16.mxu0 0
        %3047 = vmatpush2.bf16.xpose.msra.mxu0 0
        %3048 = vmatprep.mubr.bf16.mxu0 0
        %3049 = vmatmul.mubr.bf16.gmra.mxu0 %v3014
        %v3050 = vpop.f32.mrf.mxu0
        %v3051 = vadd.f32 0.0, %v3050
        %v3052 = vpop.f32.mrf.mxu0
        %v3053 = vpop.f32.mrf.mxu0
        %v3054 = vpop.f32.mrf.mxu0
        %3055 = vdwg.mxu0
        %v3056 = vsel %vm1017, %v3051, -inf
        %3057 = vmax.xlane.f32.xlu0 %v3056
        %v3058 = vpop.xlane.xlu0 %3057
        %v3059 = vsub.f32 %v3051, %v3058
        %v3060 = vmul.f32 %v3059, 1.442695
        %v3061 = vpow.pop %v3060
        %v3062 = vsel %vm1017, %v3061, 0.0
        %3063 = vadd.xlane.f32.xlu0 %v3062
        %v3064 = vpop.xlane.xlu0 %3063
        %v3065 = vrcp.pop %v3064
        %v3066 = vmul.f32 %v3064, %v3065
        %v3067 = vsub.f32 2.0, %v3066
        %v3068 = vmul.f32 %v3065, %v3067
        %v3069 = vmul.f32 %v3061, %v3068
        %v3070 = vpack.c.bf16 %v3069, %v3069
        %v3072 = vsel %vm1017, %v3070, 0
        %3074 = vmatprep.subr.bf16.mxu0 0
        %3075 = vmatpush1.bf16.msra.mxu0 0
        %3076 = vmatprep.subr.bf16.mxu0 0
        %3077 = vmatpush1.bf16.msra.mxu0 0
        %3078 = vmatprep.subr.bf16.mxu0 0
        %3079 = vmatpush1.bf16.msra.mxu0 0
        %3080 = vmatprep.subr.bf16.mxu0 0
        %3081 = vmatpush1.bf16.msra.mxu0 0
        %3082 = vmatprep.subr.bf16.mxu0 0
        %3083 = vmatpush1.bf16.msra.mxu0 0
        %3084 = vmatprep.subr.bf16.mxu0 0
        %3085 = vmatpush1.bf16.msra.mxu0 0
        %3086 = vmatprep.subr.bf16.mxu0 0
        %3087 = vmatpush1.bf16.msra.mxu0 0
        %3088 = vmatprep.subr.bf16.mxu0 0
        %3089 = vmatpush1.bf16.msra.mxu0 %v1796
        %3090 = vmatprep.subr.bf16.mxu0 0
        %3091 = vmatpush2.bf16.msra.mxu0 0
        %3092 = vmatprep.subr.bf16.mxu0 0
        %3093 = vmatpush2.bf16.msra.mxu0 0
        %3094 = vmatprep.subr.bf16.mxu0 0
        %3095 = vmatpush2.bf16.msra.mxu0 0
        %3096 = vmatprep.subr.bf16.mxu0 0
        %3097 = vmatpush2.bf16.msra.mxu0 0
        %3098 = vmatprep.subr.bf16.mxu0 0
        %3099 = vmatpush2.bf16.msra.mxu0 0
        %3100 = vmatprep.subr.bf16.mxu0 0
        %3101 = vmatpush2.bf16.msra.mxu0 0
        %3102 = vmatprep.subr.bf16.mxu0 0
        %3103 = vmatpush2.bf16.msra.mxu0 0
        %3104 = vmatprep.subr.bf16.mxu0 0
        %3105 = vmatpush2.bf16.msra.mxu0 0
        %3106 = vmatprep.mubr.bf16.mxu0 0
        %3107 = vmatmul.mubr.bf16.gmra.mxu0 %v3072
        %v3108 = vpop.f32.mrf.mxu0
        %v3109 = vadd.f32 0.0, %v3108
        %v3110 = vpop.f32.mrf.mxu0
        %v3111 = vpop.f32.mrf.mxu0
        %v3112 = vpop.f32.mrf.mxu0
        %3113 = vdwg.mxu0
        %3114 = vrot.lane.b32.xlu0 %v2908, 112
        %v3115 = vpop.permute.xlu0 %3114
        %v3117 = vsel %vm1017, %v3115, 0
        %3119 = vmatprep.subr.bf16.mxu0 0
        %3120 = vmatpush1.bf16.xpose.msra.mxu0 0
        %3121 = vmatprep.subr.bf16.mxu0 0
        %3122 = vmatpush1.bf16.xpose.msra.mxu0 0
        %3123 = vmatprep.subr.bf16.mxu0 0
        %3124 = vmatpush1.bf16.xpose.msra.mxu0 0
        %3125 = vmatprep.subr.bf16.mxu0 0
        %3126 = vmatpush1.bf16.xpose.msra.mxu0 0
        %3127 = vmatprep.subr.bf16.mxu0 0
        %3128 = vmatpush1.bf16.xpose.msra.mxu0 0
        %3129 = vmatprep.subr.bf16.mxu0 0
        %3130 = vmatpush1.bf16.xpose.msra.mxu0 0
        %3131 = vmatprep.subr.bf16.mxu0 0
        %3132 = vmatpush1.bf16.xpose.msra.mxu0 0
        %3133 = vmatprep.subr.bf16.mxu0 0
        %3134 = vmatpush1.bf16.xpose.msra.mxu0 %v1846
        %3135 = vmatprep.subr.bf16.mxu0 0
        %3136 = vmatpush2.bf16.xpose.msra.mxu0 0
        %3137 = vmatprep.subr.bf16.mxu0 0
        %3138 = vmatpush2.bf16.xpose.msra.mxu0 0
        %3139 = vmatprep.subr.bf16.mxu0 0
        %3140 = vmatpush2.bf16.xpose.msra.mxu0 0
        %3141 = vmatprep.subr.bf16.mxu0 0
        %3142 = vmatpush2.bf16.xpose.msra.mxu0 0
        %3143 = vmatprep.subr.bf16.mxu0 0
        %3144 = vmatpush2.bf16.xpose.msra.mxu0 0
        %3145 = vmatprep.subr.bf16.mxu0 0
        %3146 = vmatpush2.bf16.xpose.msra.mxu0 0
        %3147 = vmatprep.subr.bf16.mxu0 0
        %3148 = vmatpush2.bf16.xpose.msra.mxu0 0
        %3149 = vmatprep.subr.bf16.mxu0 0
        %3150 = vmatpush2.bf16.xpose.msra.mxu0 0
        %3151 = vmatprep.mubr.bf16.mxu0 0
        %3152 = vmatmul.mubr.bf16.gmra.mxu0 %v3117
        %v3153 = vpop.f32.mrf.mxu0
        %v3154 = vadd.f32 0.0, %v3153
        %v3155 = vpop.f32.mrf.mxu0
        %v3156 = vpop.f32.mrf.mxu0
        %v3157 = vpop.f32.mrf.mxu0
        %3158 = vdwg.mxu0
        %v3159 = vsel %vm1017, %v3154, -inf
        %3160 = vmax.xlane.f32.xlu0 %v3159
        %v3161 = vpop.xlane.xlu0 %3160
        %v3162 = vsub.f32 %v3154, %v3161
        %v3163 = vmul.f32 %v3162, 1.442695
        %v3164 = vpow.pop %v3163
        %v3165 = vsel %vm1017, %v3164, 0.0
        %3166 = vadd.xlane.f32.xlu0 %v3165
        %v3167 = vpop.xlane.xlu0 %3166
        %v3168 = vrcp.pop %v3167
        %v3169 = vmul.f32 %v3167, %v3168
        %v3170 = vsub.f32 2.0, %v3169
        %v3171 = vmul.f32 %v3168, %v3170
        %v3172 = vmul.f32 %v3164, %v3171
        %v3173 = vpack.c.bf16 %v3172, %v3172
        %v3175 = vsel %vm1017, %v3173, 0
        %3177 = vmatprep.subr.bf16.mxu0 0
        %3178 = vmatpush1.bf16.msra.mxu0 0
        %3179 = vmatprep.subr.bf16.mxu0 0
        %3180 = vmatpush1.bf16.msra.mxu0 0
        %3181 = vmatprep.subr.bf16.mxu0 0
        %3182 = vmatpush1.bf16.msra.mxu0 0
        %3183 = vmatprep.subr.bf16.mxu0 0
        %3184 = vmatpush1.bf16.msra.mxu0 0
        %3185 = vmatprep.subr.bf16.mxu0 0
        %3186 = vmatpush1.bf16.msra.mxu0 0
        %3187 = vmatprep.subr.bf16.mxu0 0
        %3188 = vmatpush1.bf16.msra.mxu0 0
        %3189 = vmatprep.subr.bf16.mxu0 0
        %3190 = vmatpush1.bf16.msra.mxu0 0
        %3191 = vmatprep.subr.bf16.mxu0 0
        %3192 = vmatpush1.bf16.msra.mxu0 %v1909
        %3193 = vmatprep.subr.bf16.mxu0 0
        %3194 = vmatpush2.bf16.msra.mxu0 0
        %3195 = vmatprep.subr.bf16.mxu0 0
        %3196 = vmatpush2.bf16.msra.mxu0 0
        %3197 = vmatprep.subr.bf16.mxu0 0
        %3198 = vmatpush2.bf16.msra.mxu0 0
        %3199 = vmatprep.subr.bf16.mxu0 0
        %3200 = vmatpush2.bf16.msra.mxu0 0
        %3201 = vmatprep.subr.bf16.mxu0 0
        %3202 = vmatpush2.bf16.msra.mxu0 0
        %3203 = vmatprep.subr.bf16.mxu0 0
        %3204 = vmatpush2.bf16.msra.mxu0 0
        %3205 = vmatprep.subr.bf16.mxu0 0
        %3206 = vmatpush2.bf16.msra.mxu0 0
        %3207 = vmatprep.subr.bf16.mxu0 0
        %3208 = vmatpush2.bf16.msra.mxu0 0
        %3209 = vmatprep.mubr.bf16.mxu0 0
        %3210 = vmatmul.mubr.bf16.gmra.mxu0 %v3175
        %v3211 = vpop.f32.mrf.mxu0
        %v3212 = vadd.f32 0.0, %v3211
        %v3213 = vpop.f32.mrf.mxu0
        %v3214 = vpop.f32.mrf.mxu0
        %v3215 = vpop.f32.mrf.mxu0
        %3216 = vdwg.mxu0
        %3217 = vrot.lane.b32.xlu0 %v2908, 104
        %v3218 = vpop.permute.xlu0 %3217
        %v3220 = vsel %vm1017, %v3218, 0
        %3222 = vmatprep.subr.bf16.mxu0 0
        %3223 = vmatpush1.bf16.xpose.msra.mxu0 0
        %3224 = vmatprep.subr.bf16.mxu0 0
        %3225 = vmatpush1.bf16.xpose.msra.mxu0 0
        %3226 = vmatprep.subr.bf16.mxu0 0
        %3227 = vmatpush1.bf16.xpose.msra.mxu0 0
        %3228 = vmatprep.subr.bf16.mxu0 0
        %3229 = vmatpush1.bf16.xpose.msra.mxu0 0
        %3230 = vmatprep.subr.bf16.mxu0 0
        %3231 = vmatpush1.bf16.xpose.msra.mxu0 0
        %3232 = vmatprep.subr.bf16.mxu0 0
        %3233 = vmatpush1.bf16.xpose.msra.mxu0 0
        %3234 = vmatprep.subr.bf16.mxu0 0
        %3235 = vmatpush1.bf16.xpose.msra.mxu0 0
        %3236 = vmatprep.subr.bf16.mxu0 0
        %3237 = vmatpush1.bf16.xpose.msra.mxu0 %v1959
        %3238 = vmatprep.subr.bf16.mxu0 0
        %3239 = vmatpush2.bf16.xpose.msra.mxu0 0
        %3240 = vmatprep.subr.bf16.mxu0 0
        %3241 = vmatpush2.bf16.xpose.msra.mxu0 0
        %3242 = vmatprep.subr.bf16.mxu0 0
        %3243 = vmatpush2.bf16.xpose.msra.mxu0 0
        %3244 = vmatprep.subr.bf16.mxu0 0
        %3245 = vmatpush2.bf16.xpose.msra.mxu0 0
        %3246 = vmatprep.subr.bf16.mxu0 0
        %3247 = vmatpush2.bf16.xpose.msra.mxu0 0
        %3248 = vmatprep.subr.bf16.mxu0 0
        %3249 = vmatpush2.bf16.xpose.msra.mxu0 0
        %3250 = vmatprep.subr.bf16.mxu0 0
        %3251 = vmatpush2.bf16.xpose.msra.mxu0 0
        %3252 = vmatprep.subr.bf16.mxu0 0
        %3253 = vmatpush2.bf16.xpose.msra.mxu0 0
        %3254 = vmatprep.mubr.bf16.mxu0 0
        %3255 = vmatmul.mubr.bf16.gmra.mxu0 %v3220
        %v3256 = vpop.f32.mrf.mxu0
        %v3257 = vadd.f32 0.0, %v3256
        %v3258 = vpop.f32.mrf.mxu0
        %v3259 = vpop.f32.mrf.mxu0
        %v3260 = vpop.f32.mrf.mxu0
        %3261 = vdwg.mxu0
        %v3262 = vsel %vm1017, %v3257, -inf
        %3263 = vmax.xlane.f32.xlu0 %v3262
        %v3264 = vpop.xlane.xlu0 %3263
        %v3265 = vsub.f32 %v3257, %v3264
        %v3266 = vmul.f32 %v3265, 1.442695
        %v3267 = vpow.pop %v3266
        %v3268 = vsel %vm1017, %v3267, 0.0
        %3269 = vadd.xlane.f32.xlu0 %v3268
        %v3270 = vpop.xlane.xlu0 %3269
        %v3271 = vrcp.pop %v3270
        %v3272 = vmul.f32 %v3270, %v3271
        %v3273 = vsub.f32 2.0, %v3272
        %v3274 = vmul.f32 %v3271, %v3273
        %v3275 = vmul.f32 %v3267, %v3274
        %v3276 = vpack.c.bf16 %v3275, %v3275
        %v3278 = vsel %vm1017, %v3276, 0
        %3280 = vmatprep.subr.bf16.mxu0 0
        %3281 = vmatpush1.bf16.msra.mxu0 0
        %3282 = vmatprep.subr.bf16.mxu0 0
        %3283 = vmatpush1.bf16.msra.mxu0 0
        %3284 = vmatprep.subr.bf16.mxu0 0
        %3285 = vmatpush1.bf16.msra.mxu0 0
        %3286 = vmatprep.subr.bf16.mxu0 0
        %3287 = vmatpush1.bf16.msra.mxu0 0
        %3288 = vmatprep.subr.bf16.mxu0 0
        %3289 = vmatpush1.bf16.msra.mxu0 0
        %3290 = vmatprep.subr.bf16.mxu0 0
        %3291 = vmatpush1.bf16.msra.mxu0 0
        %3292 = vmatprep.subr.bf16.mxu0 0
        %3293 = vmatpush1.bf16.msra.mxu0 0
        %3294 = vmatprep.subr.bf16.mxu0 0
        %3295 = vmatpush1.bf16.msra.mxu0 %v2022
        %3296 = vmatprep.subr.bf16.mxu0 0
        %3297 = vmatpush2.bf16.msra.mxu0 0
        %3298 = vmatprep.subr.bf16.mxu0 0
        %3299 = vmatpush2.bf16.msra.mxu0 0
        %3300 = vmatprep.subr.bf16.mxu0 0
        %3301 = vmatpush2.bf16.msra.mxu0 0
        %3302 = vmatprep.subr.bf16.mxu0 0
        %3303 = vmatpush2.bf16.msra.mxu0 0
        %3304 = vmatprep.subr.bf16.mxu0 0
        %3305 = vmatpush2.bf16.msra.mxu0 0
        %3306 = vmatprep.subr.bf16.mxu0 0
        %3307 = vmatpush2.bf16.msra.mxu0 0
        %3308 = vmatprep.subr.bf16.mxu0 0
        %3309 = vmatpush2.bf16.msra.mxu0 0
        %3310 = vmatprep.subr.bf16.mxu0 0
        %3311 = vmatpush2.bf16.msra.mxu0 0
        %3312 = vmatprep.mubr.bf16.mxu0 0
        %3313 = vmatmul.mubr.bf16.gmra.mxu0 %v3278
        %v3314 = vpop.f32.mrf.mxu0
        %v3315 = vadd.f32 0.0, %v3314
        %v3316 = vpop.f32.mrf.mxu0
        %v3317 = vpop.f32.mrf.mxu0
        %v3318 = vpop.f32.mrf.mxu0
        %3319 = vdwg.mxu0
        %3321 = vrot.lane.b32.xlu0 %v3109, 8
        %v3322 = vpop.permute.xlu0 %3321
        %3325 = vrot.lane.b32.xlu0 %v3212, 16
        %v3326 = vpop.permute.xlu0 %3325
        %3329 = vrot.lane.b32.xlu0 %v3315, 24
        %v3330 = vpop.permute.xlu0 %3329
        %v3332 = vsel %vm1017, %v3005, %v3322
        %v3333 = vsel %vm1480, %v3332, %v3326
        %v3334 = vsel %vm1482, %v3333, %v3330
        %v3335 = vpack.c.bf16 %v3334, %v3334
        %v3337 = vsel %vm912, %v3335, 0
        %3339 = vmatprep.subr.bf16.mxu0 0
        %3340 = vmatpush1.bf16.msra.mxu0 0
        %3341 = vmatprep.subr.bf16.mxu0 0
        %3342 = vmatpush1.bf16.msra.mxu0 0
        %3343 = vmatprep.subr.bf16.mxu0 0
        %3344 = vmatpush1.bf16.msra.mxu0 0
        %3345 = vmatprep.subr.bf16.mxu0 0
        %3346 = vmatpush1.bf16.msra.mxu0 0
        %3347 = vmatprep.subr.bf16.mxu0 0
        %3348 = vmatpush1.bf16.msra.mxu0 0
        %3349 = vmatprep.subr.bf16.mxu0 0
        %3350 = vmatpush1.bf16.msra.mxu0 0
        %3351 = vmatprep.subr.bf16.mxu0 0
        %3352 = vmatpush1.bf16.msra.mxu0 %v2089
        %3353 = vmatprep.subr.bf16.mxu0 0
        %3354 = vmatpush1.bf16.msra.mxu0 %v2088
        %3355 = vmatprep.subr.bf16.mxu0 0
        %3356 = vmatpush2.bf16.msra.mxu0 0
        %3357 = vmatprep.subr.bf16.mxu0 0
        %3358 = vmatpush2.bf16.msra.mxu0 0
        %3359 = vmatprep.subr.bf16.mxu0 0
        %3360 = vmatpush2.bf16.msra.mxu0 0
        %3361 = vmatprep.subr.bf16.mxu0 0
        %3362 = vmatpush2.bf16.msra.mxu0 0
        %3363 = vmatprep.subr.bf16.mxu0 0
        %3364 = vmatpush2.bf16.msra.mxu0 0
        %3365 = vmatprep.subr.bf16.mxu0 0
        %3366 = vmatpush2.bf16.msra.mxu0 0
        %3367 = vmatprep.subr.bf16.mxu0 0
        %3368 = vmatpush2.bf16.msra.mxu0 0
        %3369 = vmatprep.subr.bf16.mxu0 0
        %3370 = vmatpush2.bf16.msra.mxu0 0
        %3371 = vmatprep.mubr.bf16.mxu0 0
        %3372 = vmatmul.mubr.bf16.gmra.mxu0 %v3337
        %v3373 = vpop.f32.mrf.mxu0
        %v3374 = vadd.f32 %v835, %v3373
        %v3375 = vpop.f32.mrf.mxu0
        %v3376 = vpop.f32.mrf.mxu0
        %v3377 = vpop.f32.mrf.mxu0
        %3378 = vdwg.mxu0
        %v3379 = vadd.f32 %v2863, %v3374
        %v3380 = vsel %vm912, %v3379, 0.0
        %3381 = vadd.xlane.f32.xlu0 %v3380
        %v3382 = vpop.xlane.xlu0 %3381
        %v3383 = vmul.f32 %v3382, %v1544
        %v3384 = vsub.f32 %v3379, %v3383
        %v3385 = vmul.f32 %v3384, %v3384
        %v3386 = vsel %vm912, %v3385, 0.0
        %3387 = vadd.xlane.f32.xlu0 %v3386
        %v3388 = vpop.xlane.xlu0 %3387
        %v3389 = vmul.f32 %v3388, %v1544
        %v3390 = vadd.f32 %v3389, 1e-05
        %v3391 = vrsqrt.pop %v3390
        %v3392 = vmul.f32 %v3384, %v3391
        %v3393 = vmul.f32 %v3392, %v870
        %v3394 = vadd.f32 %v3393, %v877
        %v3395 = vpack.c.bf16 %v3394, %v3394
        %v3397 = vsel %vm912, %v3395, 0
        %3399 = vmatprep.subr.bf16.mxu0 0
        %3400 = vmatpush1.bf16.msra.mxu0 0
        %3401 = vmatprep.subr.bf16.mxu0 0
        %3402 = vmatpush1.bf16.msra.mxu0 0
        %3403 = vmatprep.subr.bf16.mxu0 0
        %3404 = vmatpush1.bf16.msra.mxu0 0
        %3405 = vmatprep.subr.bf16.mxu0 0
        %3406 = vmatpush1.bf16.msra.mxu0 0
        %3407 = vmatprep.subr.bf16.mxu0 0
        %3408 = vmatpush1.bf16.msra.mxu0 0
        %3409 = vmatprep.subr.bf16.mxu0 0
        %3410 = vmatpush1.bf16.msra.mxu0 0
        %3411 = vmatprep.subr.bf16.mxu0 0
        %3412 = vmatpush1.bf16.msra.mxu0 %v2161
        %3413 = vmatprep.subr.bf16.mxu0 0
        %3414 = vmatpush1.bf16.msra.mxu0 %v2160
        %3415 = vmatprep.subr.bf16.mxu0 0
        %3416 = vmatpush2.bf16.msra.mxu0 0
        %3417 = vmatprep.subr.bf16.mxu0 0
        %3418 = vmatpush2.bf16.msra.mxu0 0
        %3419 = vmatprep.subr.bf16.mxu0 0
        %3420 = vmatpush2.bf16.msra.mxu0 0
        %3421 = vmatprep.subr.bf16.mxu0 0
        %3422 = vmatpush2.bf16.msra.mxu0 0
        %3423 = vmatprep.subr.bf16.mxu0 0
        %3424 = vmatpush2.bf16.msra.mxu0 0
        %3425 = vmatprep.subr.bf16.mxu0 0
        %3426 = vmatpush2.bf16.msra.mxu0 0
        %3427 = vmatprep.subr.bf16.mxu0 0
        %3428 = vmatpush2.bf16.msra.mxu0 0
        %3429 = vmatprep.subr.bf16.mxu0 0
        %3430 = vmatpush2.bf16.msra.mxu0 0
        %3431 = vmatprep.mubr.bf16.mxu0 0
        %3432 = vmatmul.mubr.bf16.gmra.mxu0 %v3397
        %v3433 = vpop.f32.mrf.mxu0
        %v3434 = vadd.f32 %v842, %v3433
        %v3435 = vpop.f32.mrf.mxu0
        %v3436 = vpop.f32.mrf.mxu0
        %v3437 = vpop.f32.mrf.mxu0
        %3438 = vdwg.mxu0
        %v3439 = vmax.f32 %v3434, 0.0
        %v3440 = vpack.c.bf16 %v3439, %v3439
        %v3442 = vsel %vm2233, %v3440, 0
        %3444 = vmatprep.subr.bf16.mxu0 0
        %3445 = vmatpush1.bf16.msra.mxu0 0
        %3446 = vmatprep.subr.bf16.mxu0 0
        %3447 = vmatpush1.bf16.msra.mxu0 0
        %3448 = vmatprep.subr.bf16.mxu0 0
        %3449 = vmatpush1.bf16.msra.mxu0 0
        %3450 = vmatprep.subr.bf16.mxu0 0
        %3451 = vmatpush1.bf16.msra.mxu0 0
        %3452 = vmatprep.subr.bf16.mxu0 0
        %3453 = vmatpush1.bf16.msra.mxu0 %v2228
        %3454 = vmatprep.subr.bf16.mxu0 0
        %3455 = vmatpush1.bf16.msra.mxu0 %v2227
        %3456 = vmatprep.subr.bf16.mxu0 0
        %3457 = vmatpush1.bf16.msra.mxu0 %v2226
        %3458 = vmatprep.subr.bf16.mxu0 0
        %3459 = vmatpush1.bf16.msra.mxu0 %v2225
        %3460 = vmatprep.subr.bf16.mxu0 0
        %3461 = vmatpush2.bf16.msra.mxu0 0
        %3462 = vmatprep.subr.bf16.mxu0 0
        %3463 = vmatpush2.bf16.msra.mxu0 0
        %3464 = vmatprep.subr.bf16.mxu0 0
        %3465 = vmatpush2.bf16.msra.mxu0 0
        %3466 = vmatprep.subr.bf16.mxu0 0
        %3467 = vmatpush2.bf16.msra.mxu0 0
        %3468 = vmatprep.subr.bf16.mxu0 0
        %3469 = vmatpush2.bf16.msra.mxu0 0
        %3470 = vmatprep.subr.bf16.mxu0 0
        %3471 = vmatpush2.bf16.msra.mxu0 0
        %3472 = vmatprep.subr.bf16.mxu0 0
        %3473 = vmatpush2.bf16.msra.mxu0 0
        %3474 = vmatprep.subr.bf16.mxu0 0
        %3475 = vmatpush2.bf16.msra.mxu0 0
        %3476 = vmatprep.mubr.bf16.mxu0 0
        %3477 = vmatmul.mubr.bf16.gmra.mxu0 %v3442
        %v3478 = vpop.f32.mrf.mxu0
        %v3479 = vadd.f32 %v849, %v3478
        %v3480 = vpop.f32.mrf.mxu0
        %v3481 = vpop.f32.mrf.mxu0
        %v3482 = vpop.f32.mrf.mxu0
        %3483 = vdwg.mxu0
        %v3484 = vadd.f32 %v3394, %v3479
        %v3485 = vsel %vm912, %v3484, 0.0
        %3486 = vadd.xlane.f32.xlu0 %v3485
        %v3487 = vpop.xlane.xlu0 %3486
        %v3488 = vmul.f32 %v3487, %v1544
        %v3489 = vsub.f32 %v3484, %v3488
        %v3490 = vmul.f32 %v3489, %v3489
        %v3491 = vsel %vm912, %v3490, 0.0
        %3492 = vadd.xlane.f32.xlu0 %v3491
        %v3493 = vpop.xlane.xlu0 %3492
        %v3494 = vmul.f32 %v3493, %v1544
        %v3495 = vadd.f32 %v3494, 1e-05
        %v3496 = vrsqrt.pop %v3495
        %v3497 = vmul.f32 %v3489, %v3496
        %v3498 = vmul.f32 %v3497, %v884
        %v3499 = vadd.f32 %v3498, %v891
        %3500 = vst.msk [vmem:[%s769] sm:$0xff] %vm912, %v3499
        %s3501 = sand.u32 %s521, 1
        %s3502 = scalar_lea.sflag [#allocation4], %s3501
        %s3503 = sand.u32 %s521, 1
        %s3504 = smul.addr %s3503, 8
        %s3505 = scalar_lea.vmem [#allocation11], %s3504
        // Predicated region
        $region129: #{tpu_custom_call.1} parent=107 // pred_check
          %p3506 = pneg %p531
        $region130: #{tpu_custom_call.1} parent=107 // pred_check_branch
          %3508 = sbr.rel (%p3506) target = $region132
        $region131: #{tpu_custom_call.1} parent=107 // pred_region
          %s3510 = ssub.s32 128, 128
          %3511 = vsyncadd %s3502, %s3510
          %s3512 = smul.addr %s41, 128
          %s3513 = scalar_lea.hbm %s22, %s3512
          %s3515 = sshll.u32 %s3505, 4
          %s3516 = int_to_ptr.vmem [resolvable:$true] %s3515
          %3518 = dma.vmem_to_hbm [thread:$0]  %s3516, 128, %s3513, %s3502
        $region132: #{tpu_custom_call.1} parent=107 // pred_fallthru
          _
      $region108: #{tpu_custom_call.1} parent=5 // pred_fallthru
        _
      %p3519 = scmp.le.s32.totalorder 2, %s36
      // Predicated region
      $region133: #{tpu_custom_call.1} parent=5 // pred_check
        %p3520 = pneg %p3519
      $region134: #{tpu_custom_call.1} parent=5 // pred_check_branch
        %3522 = sbr.rel (%p3520) target = $region136
      $region135: #{tpu_custom_call.1} parent=5 // pred_region
        %s3523 = ssub.s32 %s36, 2
        // Predicated region
        $region137: #{tpu_custom_call.1} parent=135 // pred_check
          %p3524 = pneg %p537
        $region138: #{tpu_custom_call.1} parent=135 // pred_check_branch
          %3526 = sbr.rel (%p3524) target = $region140
        $region139: #{tpu_custom_call.1} parent=135 // pred_region
          %s3527 = sand.u32 %s522, 1
          %s3528 = scalar_lea.sflag [#allocation4], %s3527
          %s3529 = sand.u32 %s522, 1
          %s3530 = smul.addr %s3529, 8
          %s3531 = scalar_lea.vmem [#allocation11], %s3530
          %3532 = dma.done %s3528, 128
        $region140: #{tpu_custom_call.1} parent=135 // pred_fallthru
          _
      $region136: #{tpu_custom_call.1} parent=5 // pred_fallthru
        _
    $region6: #{tpu_custom_call.1} parent=1 // loop_footer
      %s40 = sadd.s32 1, %s36
    $region7: #{tpu_custom_call.1} parent=1 // loop_footer_branch
      %35 = sbr.rel target = $region3
    $region8: #{tpu_custom_call.1} parent=1 // loop_exit
      _
    %3533 = vsyncpa [#allocation3], 1
    %s3534 = scalar_lea.sflag [#allocation3], 1
    %3535 = vsyncpa %s3534, 1
    %3536 = vsyncpa [#allocation6], 1
    %3537 = vsyncpa [#allocation9], 1
    %3538 = vsyncpa [#allocation4], 1
    %s3539 = scalar_lea.sflag [#allocation4], 1
    %3540 = vsyncpa %s3539, 1

</llo_original>
